<compile_context>
chip_gen: v7x
topology: tpu7x:2x2x1
jax: 0.10.0
libtpu: 0.0.40
codegen_flags: <defaults>
</compile_context>

<pallas_src>
import jax
import jax.numpy as jnp
from jax.experimental import pallas as pl
from jax.experimental.pallas import tpu as pltpu

BN_EPS = 1e-5
POOLED = 24                 # 48 -> 24 after MaxPool(2,2)
ROWS = POOLED * POOLED      # 576 pooled positions per image
K1 = 5 * 5 * 3              # 75  im2col taps, conv1
K2 = 3 * 3 * 16             # 144 im2col taps, conv2
K1_PAD = 128                # padded K (lane aligned)
K2_PAD = 256


def _elu(x):
    # ELU(alpha=1): x if x > 0 else exp(x) - 1   (min() keeps exp() safe)
    return jnp.where(x > 0, x, jnp.exp(jnp.minimum(x, 0.0)) - 1.0)


# --------------------------- Pallas kernels ---------------------------------

def _stage1_kernel(xcol_ref, w_ref, scale_ref, shift_ref, o_ref):
    """Conv2d(3,16,5,pad=2) + BN2d + ELU + MaxPool(2,2), one image per step.

    xcol_ref : [4*ROWS, 128] bf16  (4 pool parities contiguous per image,
                                    last dim = 75 taps zero-padded to 128)
    w_ref    : [128, 16] bf16
    scale/shift : [1, 16] f32   (conv bias + BN folded)
    o_ref    : [ROWS, 16] f32
    """
    r = o_ref.shape[0]
    acc = jnp.dot(xcol_ref[...], w_ref[...],
                  preferred_element_type=jnp.float32)        # [4*ROWS, 16]
    y = _elu(acc * scale_ref[...] + shift_ref[...])
    # MaxPool(2,2): max over the 4 pool parities (leading-axis split is free).
    o_ref[...] = jnp.max(y.reshape(4, r, 16), axis=0)


def _stage2_classifier_kernel(xcol_ref, w2_ref, s2_ref, t2_ref,
                              lw1_ref, s3_ref, t3_ref, lw2_ref, lb2_ref,
                              o_ref):
    """Conv2d(16,32,3,pad=1)+BN+ELU+MaxPool(24,1) fused with the classifier.

    xcol_ref : [ROWS, 256] bf16 (one image), w2_ref: [256, 32] bf16
    s2/t2    : [1, 32] f32
    lw1      : [32, 8] f32, s3/t3: [1, 8] f32 (Linear bias + BN1d folded)
    lw2      : [8, 128] f32 (zero-padded from 2 cols), lb2: [1, 128] f32
    o_ref    : [1, 1, 128] f32 lane-dense logits (wrapper keeps [:, :, :2])
    """
    y = jnp.dot(xcol_ref[...], w2_ref[...],
                preferred_element_type=jnp.float32)          # [ROWS, 32]
    y = _elu(y * s2_ref[...] + t2_ref[...])
    feat = jnp.max(y, axis=0, keepdims=True)                 # [1, 32] == MaxPool(24,1)+flatten
    # Dropout layers are identity in eval mode.
    h = jnp.dot(feat, lw1_ref[...], preferred_element_type=jnp.float32)   # [1, 8]
    a = _elu(h * s3_ref[...] + t3_ref[...])
    logits = jnp.dot(a, lw2_ref[...],
                     preferred_element_type=jnp.float32) + lb2_ref[...]   # [1, 128]
    o_ref[...] = logits.reshape(1, 1, 128)


# --------------------------- JAX glue ----------------------------------------

def _im2col(xpad, k, out_h, out_w, stride, row_off, col_off):
    """xpad: [B, Hp, Wp, C] -> patches [B*out_h*out_w, k*k*C] (row order b,i,j)."""
    B, _, _, C = xpad.shape
    taps = []
    for ky in range(k):
        for kx in range(k):
            r0, c0 = row_off + ky, col_off + kx
            sl = jax.lax.slice(
                xpad,
                (0, r0, c0, 0),
                (B, r0 + (out_h - 1) * stride + 1, c0 + (out_w - 1) * stride + 1, C),
                (1, stride, stride, 1))
            taps.append(sl)                              # [B, out_h, out_w, C]
    pat = jnp.stack(taps, axis=3)                        # [B, out_h, out_w, k*k, C]
    return pat.reshape(B * out_h * out_w, k * k * C)


def _fold_bn(bias, gamma, beta, mean, var):
    scale = gamma / jnp.sqrt(var + BN_EPS)
    shift = (bias - mean) * scale + beta
    return (scale.reshape(1, -1).astype(jnp.float32),
            shift.reshape(1, -1).astype(jnp.float32))


def _pad_last(x, target):
    return jnp.pad(x, [(0, 0)] * (x.ndim - 1) + [(0, target - x.shape[-1])])


def terry_crews_forward(x_nchw, p):
    B = x_nchw.shape[0]
    x = jnp.transpose(x_nchw, (0, 2, 3, 1)).astype(jnp.float32)    # NHWC [B,48,48,3]
    P1 = B * ROWS

    # ---- stage 1: Conv(3->16,5x5,pad2) + BN + ELU + MaxPool(2,2) -------------
    xpad1 = jnp.pad(x, ((0, 0), (2, 2), (2, 2), (0, 0)))
    # 4 pool parities, laid out contiguously per image: [B, 4, ROWS, 75]
    xcol1 = jnp.stack(
        [_im2col(xpad1, 5, POOLED, POOLED, stride=2, row_off=di, col_off=dj
                 ).reshape(B, ROWS, K1)
         for di in (0, 1) for dj in (0, 1)], axis=1)
    xcol1 = xcol1.reshape(B * 4 * ROWS, K1)
    xcol1 = _pad_last(xcol1, K1_PAD).astype(jnp.bfloat16)          # [B*4*ROWS, 128]
    w1col = jnp.pad(p["w1"].reshape(K1, 16),
                    ((0, K1_PAD - K1), (0, 0))).astype(jnp.bfloat16)
    s1, t1 = _fold_bn(p["b1"], p["g1"], p["be1"], p["m1"], p["v1"])

    y1 = pl.pallas_call(
        _stage1_kernel,
        out_shape=jax.ShapeDtypeStruct((P1, 16), jnp.float32),
        grid=(B,),
        in_specs=[
            pl.BlockSpec((4 * ROWS, K1_PAD), lambda b: (b, 0)),
            pl.BlockSpec((K1_PAD, 16), lambda b: (0, 0)),
            pl.BlockSpec((1, 16), lambda b: (0, 0)),
            pl.BlockSpec((1, 16), lambda b: (0, 0)),
        ],
        out_specs=pl.BlockSpec((ROWS, 16), lambda b: (b, 0)),
        compiler_params=pltpu.CompilerParams(
            dimension_semantics=("parallel",)),
    )(xcol1, w1col, s1, t1)
    y1 = y1.reshape(B, POOLED, POOLED, 16)

    # ---- stage 2 + classifier (single fused kernel) --------------------------
    xpad2 = jnp.pad(y1, ((0, 0), (1, 1), (1, 1), (0, 0)))
    xcol2 = _im2col(xpad2, 3, POOLED, POOLED, stride=1, row_off=0, col_off=0)  # [P1,144]
    xcol2 = _pad_last(xcol2, K2_PAD).astype(jnp.bfloat16)          # [P1, 256]
    w2col = jnp.pad(p["w2"].reshape(K2, 32),
                    ((0, K2_PAD - K2), (0, 0))).astype(jnp.bfloat16)
    s2, t2 = _fold_bn(p["b2"], p["g2"], p["be2"], p["m2"], p["v2"])
    s3, t3 = _fold_bn(p["lb1"], p["g3"], p["be3"], p["m3"], p["v3"])
    lw2 = jnp.pad(p["lw2"], ((0, 0), (0, 128 - 2)))                # [8, 128] lane-dense
    lb2 = jnp.pad(p["lb2"].reshape(1, -1), ((0, 0), (0, 128 - 2)))  # [1, 128]

    out = pl.pallas_call(
        _stage2_classifier_kernel,
        out_shape=jax.ShapeDtypeStruct((B, 1, 128), jnp.float32),
        grid=(B,),
        in_specs=[
            pl.BlockSpec((ROWS, K2_PAD), lambda b: (b, 0)),
            pl.BlockSpec((K2_PAD, 32), lambda b: (0, 0)),
            pl.BlockSpec((1, 32), lambda b: (0, 0)),
            pl.BlockSpec((1, 32), lambda b: (0, 0)),
            pl.BlockSpec((32, 8), lambda b: (0, 0)),
            pl.BlockSpec((1, 8), lambda b: (0, 0)),
            pl.BlockSpec((1, 8), lambda b: (0, 0)),
            pl.BlockSpec((8, 128), lambda b: (0, 0)),
            pl.BlockSpec((1, 128), lambda b: (0, 0)),
        ],
        out_specs=pl.BlockSpec((1, 1, 128), lambda b: (b, 0, 0)),
        compiler_params=pltpu.CompilerParams(
            dimension_semantics=("parallel",)),
    )(xcol2, w2col, s2, t2, p["lw1"], s3, t3, lw2, lb2)
    return out[:, 0, :2]                                           # [B, 2]


# --------------------------- reference & params ------------------------------

def reference_forward(x_nchw, p):
    x = jnp.transpose(x_nchw, (0, 2, 3, 1)).astype(jnp.float32)

    def bn(y, g, b, m, v):
        return (y - m) / jnp.sqrt(v + BN_EPS) * g + b

    y = jax.lax.conv_general_dilated(
        x, p["w1"], (1, 1), ((2, 2), (2, 2)),
        dimension_numbers=("NHWC", "HWIO", "NHWC")) + p["b1"]
    y = _elu(bn(y, p["g1"], p["be1"], p["m1"], p["v1"]))
    y = jax.lax.reduce_window(y, -jnp.inf, jax.lax.max,
                              (1, 2, 2, 1), (1, 2, 2, 1), "VALID")
    y = jax.lax.conv_general_dilated(
        y, p["w2"], (1, 1), ((1, 1), (1, 1)),
        dimension_numbers=("NHWC", "HWIO", "NHWC")) + p["b2"]
    y = _elu(bn(y, p["g2"], p["be2"], p["m2"], p["v2"]))
    y = jnp.max(y, axis=(1, 2))                    # MaxPool2d(24,1) -> 1x1, then view
    h = y @ p["lw1"] + p["lb1"]
    h = _elu(bn(h, p["g3"], p["be3"], p["m3"], p["v3"]))
    return h @ p["lw2"] + p["lb2"]


def init_params(key):
    ks = jax.random.split(key, 20)

    def normal(k, shape, scale):
        return scale * jax.random.normal(k, shape, dtype=jnp.float32)

    p = {}
    p["w1"] = normal(ks[0], (5, 5, 3, 16), (5 * 5 * 3) ** -0.5)    # HWIO
    p["b1"] = normal(ks[1], (16,), 0.1)
    p["g1"] = 1.0 + normal(ks[2], (16,), 0.1)
    p["be1"] = normal(ks[3], (16,), 0.1)
    p["m1"] = normal(ks[4], (16,), 0.1)
    p["v1"] = 0.5 + jax.random.uniform(ks[5], (16,), dtype=jnp.float32)
    p["w2"] = normal(ks[6], (3, 3, 16, 32), (3 * 3 * 16) ** -0.5)  # HWIO
    p["b2"] = normal(ks[7], (32,), 0.1)
    p["g2"] = 1.0 + normal(ks[8], (32,), 0.1)
    p["be2"] = normal(ks[9], (32,), 0.1)
    p["m2"] = normal(ks[10], (32,), 0.1)
    p["v2"] = 0.5 + jax.random.uniform(ks[11], (32,), dtype=jnp.float32)
    p["lw1"] = normal(ks[12], (32, 8), 32 ** -0.5)
    p["lb1"] = normal(ks[13], (8,), 0.1)
    p["g3"] = 1.0 + normal(ks[14], (8,), 0.1)
    p["be3"] = normal(ks[15], (8,), 0.1)
    p["m3"] = normal(ks[16], (8,), 0.1)
    p["v3"] = 0.5 + jax.random.uniform(ks[17], (8,), dtype=jnp.float32)
    p["lw2"] = normal(ks[18], (8, 2), 8 ** -0.5)
    p["lb2"] = normal(ks[19], (2,), 0.1)
    return p


if __name__ == "__main__":
    key = jax.random.PRNGKey(0)
    kx, kp = jax.random.split(key)
    # Spatial size 48x48 is required by the module: 48 -> (pool 2x2) 24 ->
    # MaxPool2d(24,1) -> 1x1, so the flatten yields 32 features for Linear(32,8).
    x = jax.random.normal(kx, (2, 3, 48, 48), dtype=jnp.float32)   # NCHW input
    params = init_params(kp)

    out = jax.jit(terry_crews_forward)(x, params)
    out = jax.block_until_ready(out)

    ref = reference_forward(x, params)
    assert out.shape == (2, 2), out.shape
    # bf16 patches/weights (f32 accumulation & epilogue) => bf16-level tolerance.
    assert jnp.allclose(out, ref, rtol=5e-2, atol=5e-2), (out, ref)
    print("KERNEL_OK")
</pallas_src>

<mosaic_0001>
module attributes {stable_mosaic.version = 11 : i64} {
  func.func @_stage1_kernel(%arg0: i32, %arg1: memref<2304x128xbf16, #tpu.memory_space<vmem>>, %arg2: memref<128x16xbf16, #tpu.memory_space<vmem>>, %arg3: memref<1x16xf32, #tpu.memory_space<vmem>>, %arg4: memref<1x16xf32, #tpu.memory_space<vmem>>, %arg5: memref<576x16xf32, #tpu.memory_space<vmem>>) attributes {dimension_semantics = [#tpu.dimension_semantics<parallel>], iteration_bounds = array<i64: 2>, scalar_prefetch = 0 : i64, scratch_operands = 0 : i64, tpu.core_type = #tpu.core_type<tc>, window_params = [{transform_indices = @transform_0, window_bounds = array<i64: 2304, 128>}, {pipeline_mode = #tpu.pipeline_mode<synchronous>, transform_indices = @transform_1, window_bounds = array<i64: 128, 16>}, {pipeline_mode = #tpu.pipeline_mode<synchronous>, transform_indices = @transform_2, window_bounds = array<i64: 1, 16>}, {pipeline_mode = #tpu.pipeline_mode<synchronous>, transform_indices = @transform_3, window_bounds = array<i64: 1, 16>}, {transform_indices = @transform_4, window_bounds = array<i64: 576, 16>}]} {
    %c0 = arith.constant 0 : index
    %c0_0 = arith.constant 0 : index
    %0 = vector.load %arg1[%c0, %c0_0] : memref<2304x128xbf16, #tpu.memory_space<vmem>>, vector<2304x128xbf16>
    %c0_1 = arith.constant 0 : index
    %c0_2 = arith.constant 0 : index
    %1 = vector.load %arg2[%c0_1, %c0_2] : memref<128x16xbf16, #tpu.memory_space<vmem>>, vector<128x16xbf16>
    %cst = arith.constant dense<0.000000e+00> : vector<2304x16xf32>
    %2 = tpu.matmul %0, %1, %cst {dimension_numbers = #tpu.dot_dimension_numbers<[1], [0], [0], [1], [0, 0, 1, 1], [], []>} : vector<2304x128xbf16>, vector<128x16xbf16>, vector<2304x16xf32> -> vector<2304x16xf32>
    %c0_3 = arith.constant 0 : index
    %c0_4 = arith.constant 0 : index
    %3 = vector.load %arg3[%c0_3, %c0_4] : memref<1x16xf32, #tpu.memory_space<vmem>>, vector<1x16xf32>
    %4 = vector.broadcast %3 : vector<1x16xf32> to vector<2304x16xf32>
    %5 = arith.mulf %2, %4 : vector<2304x16xf32>
    %c0_5 = arith.constant 0 : index
    %c0_6 = arith.constant 0 : index
    %6 = vector.load %arg4[%c0_5, %c0_6] : memref<1x16xf32, #tpu.memory_space<vmem>>, vector<1x16xf32>
    %7 = vector.broadcast %6 : vector<1x16xf32> to vector<2304x16xf32>
    %8 = arith.addf %5, %7 : vector<2304x16xf32>
    %cst_7 = arith.constant 0.000000e+00 : f32
    %9 = vector.broadcast %cst_7 : f32 to vector<2304x16xf32>
    %10 = arith.cmpf ogt, %8, %9 : vector<2304x16xf32>
    %cst_8 = arith.constant 0.000000e+00 : f32
    %11 = vector.broadcast %cst_8 : f32 to vector<2304x16xf32>
    %12 = arith.minimumf %8, %11 : vector<2304x16xf32>
    %13 = math.exp %12 : vector<2304x16xf32>
    %cst_9 = arith.constant 1.000000e+00 : f32
    %14 = vector.broadcast %cst_9 : f32 to vector<2304x16xf32>
    %15 = arith.subf %13, %14 : vector<2304x16xf32>
    %16 = arith.select %10, %8, %15 : vector<2304x16xi1>, vector<2304x16xf32>
    %17 = vector.shape_cast %16 : vector<2304x16xf32> to vector<4x576x16xf32>
    %cst_10 = arith.constant dense<0xFF800000> : vector<576x16xf32>
    %18 = vector.multi_reduction <maximumf>, %17, %cst_10 [0] : vector<4x576x16xf32> to vector<576x16xf32>
    %c0_11 = arith.constant 0 : index
    %c0_12 = arith.constant 0 : index
    %19 = vector.load %arg5[%c0_11, %c0_12] : memref<576x16xf32, #tpu.memory_space<vmem>>, vector<576x16xf32>
    tpu.vector_store %arg5[%c0_11, %c0_12], %18 {strides = array<i32>} : memref<576x16xf32, #tpu.memory_space<vmem>>, vector<576x16xf32>,
    return
  }
  func.func @transform_0(%arg0: i32) -> (i32, i32) {
    %c0_i32 = arith.constant 0 : i32
    %c0_i32_0 = arith.constant 0 : i32
    return %arg0, %c0_i32 : i32, i32
  }
  func.func @transform_1(%arg0: i32) -> (i32, i32) {
    %c0_i32 = arith.constant 0 : i32
    %c0_i32_0 = arith.constant 0 : i32
    %c0_i32_1 = arith.constant 0 : i32
    return %c0_i32, %c0_i32_0 : i32, i32
  }
  func.func @transform_2(%arg0: i32) -> (i32, i32) {
    %c0_i32 = arith.constant 0 : i32
    %c0_i32_0 = arith.constant 0 : i32
    %c0_i32_1 = arith.constant 0 : i32
    return %c0_i32, %c0_i32_0 : i32, i32
  }
  func.func @transform_3(%arg0: i32) -> (i32, i32) {
    %c0_i32 = arith.constant 0 : i32
    %c0_i32_0 = arith.constant 0 : i32
    %c0_i32_1 = arith.constant 0 : i32
    return %c0_i32, %c0_i32_0 : i32, i32
  }
  func.func @transform_4(%arg0: i32) -> (i32, i32) {
    %c0_i32 = arith.constant 0 : i32
    %c0_i32_0 = arith.constant 0 : i32
    return %arg0, %c0_i32 : i32, i32
  }
}

module attributes {stable_mosaic.version = 11 : i64} {
  func.func @_stage2_classifier_kernel(%arg0: i32, %arg1: memref<576x256xbf16, #tpu.memory_space<vmem>>, %arg2: memref<256x32xbf16, #tpu.memory_space<vmem>>, %arg3: memref<1x32xf32, #tpu.memory_space<vmem>>, %arg4: memref<1x32xf32, #tpu.memory_space<vmem>>, %arg5: memref<32x8xf32, #tpu.memory_space<vmem>>, %arg6: memref<1x8xf32, #tpu.memory_space<vmem>>, %arg7: memref<1x8xf32, #tpu.memory_space<vmem>>, %arg8: memref<8x128xf32, #tpu.memory_space<vmem>>, %arg9: memref<1x128xf32, #tpu.memory_space<vmem>>, %arg10: memref<1x1x128xf32, #tpu.memory_space<vmem>>) attributes {dimension_semantics = [#tpu.dimension_semantics<parallel>], iteration_bounds = array<i64: 2>, scalar_prefetch = 0 : i64, scratch_operands = 0 : i64, tpu.core_type = #tpu.core_type<tc>, window_params = [{transform_indices = @transform_0, window_bounds = array<i64: 576, 256>}, {pipeline_mode = #tpu.pipeline_mode<synchronous>, transform_indices = @transform_1, window_bounds = array<i64: 256, 32>}, {pipeline_mode = #tpu.pipeline_mode<synchronous>, transform_indices = @transform_2, window_bounds = array<i64: 1, 32>}, {pipeline_mode = #tpu.pipeline_mode<synchronous>, transform_indices = @transform_3, window_bounds = array<i64: 1, 32>}, {pipeline_mode = #tpu.pipeline_mode<synchronous>, transform_indices = @transform_4, window_bounds = array<i64: 32, 8>}, {pipeline_mode = #tpu.pipeline_mode<synchronous>, transform_indices = @transform_5, window_bounds = array<i64: 1, 8>}, {pipeline_mode = #tpu.pipeline_mode<synchronous>, transform_indices = @transform_6, window_bounds = array<i64: 1, 8>}, {pipeline_mode = #tpu.pipeline_mode<synchronous>, transform_indices = @transform_7, window_bounds = array<i64: 8, 128>}, {pipeline_mode = #tpu.pipeline_mode<synchronous>, transform_indices = @transform_8, window_bounds = array<i64: 1, 128>}, {transform_indices = @transform_9, window_bounds = array<i64: 1, 1, 128>}]} {
    %c0 = arith.constant 0 : index
    %c0_0 = arith.constant 0 : index
    %0 = vector.load %arg1[%c0, %c0_0] : memref<576x256xbf16, #tpu.memory_space<vmem>>, vector<576x256xbf16>
    %c0_1 = arith.constant 0 : index
    %c0_2 = arith.constant 0 : index
    %1 = vector.load %arg2[%c0_1, %c0_2] : memref<256x32xbf16, #tpu.memory_space<vmem>>, vector<256x32xbf16>
    %cst = arith.constant dense<0.000000e+00> : vector<576x32xf32>
    %2 = tpu.matmul %0, %1, %cst {dimension_numbers = #tpu.dot_dimension_numbers<[1], [0], [0], [1], [0, 0, 1, 1], [], []>} : vector<576x256xbf16>, vector<256x32xbf16>, vector<576x32xf32> -> vector<576x32xf32>
    %c0_3 = arith.constant 0 : index
    %c0_4 = arith.constant 0 : index
    %3 = vector.load %arg3[%c0_3, %c0_4] : memref<1x32xf32, #tpu.memory_space<vmem>>, vector<1x32xf32>
    %4 = vector.broadcast %3 : vector<1x32xf32> to vector<576x32xf32>
    %5 = arith.mulf %2, %4 : vector<576x32xf32>
    %c0_5 = arith.constant 0 : index
    %c0_6 = arith.constant 0 : index
    %6 = vector.load %arg4[%c0_5, %c0_6] : memref<1x32xf32, #tpu.memory_space<vmem>>, vector<1x32xf32>
    %7 = vector.broadcast %6 : vector<1x32xf32> to vector<576x32xf32>
    %8 = arith.addf %5, %7 : vector<576x32xf32>
    %cst_7 = arith.constant 0.000000e+00 : f32
    %9 = vector.broadcast %cst_7 : f32 to vector<576x32xf32>
    %10 = arith.cmpf ogt, %8, %9 : vector<576x32xf32>
    %cst_8 = arith.constant 0.000000e+00 : f32
    %11 = vector.broadcast %cst_8 : f32 to vector<576x32xf32>
    %12 = arith.minimumf %8, %11 : vector<576x32xf32>
    %13 = math.exp %12 : vector<576x32xf32>
    %cst_9 = arith.constant 1.000000e+00 : f32
    %14 = vector.broadcast %cst_9 : f32 to vector<576x32xf32>
    %15 = arith.subf %13, %14 : vector<576x32xf32>
    %16 = arith.select %10, %8, %15 : vector<576x32xi1>, vector<576x32xf32>
    %cst_10 = arith.constant dense<0xFF800000> : vector<32xf32>
    %17 = vector.multi_reduction <maximumf>, %16, %cst_10 [0] : vector<576x32xf32> to vector<32xf32>
    %18 = vector.shape_cast %17 : vector<32xf32> to vector<1x32xf32>
    %c0_11 = arith.constant 0 : index
    %c0_12 = arith.constant 0 : index
    %19 = vector.load %arg5[%c0_11, %c0_12] : memref<32x8xf32, #tpu.memory_space<vmem>>, vector<32x8xf32>
    %cst_13 = arith.constant dense<0.000000e+00> : vector<1x8xf32>
    %20 = tpu.matmul %18, %19, %cst_13 {dimension_numbers = #tpu.dot_dimension_numbers<[1], [0], [0], [1], [0, 0, 1, 1], [], []>} : vector<1x32xf32>, vector<32x8xf32>, vector<1x8xf32> -> vector<1x8xf32>
    %c0_14 = arith.constant 0 : index
    %c0_15 = arith.constant 0 : index
    %21 = vector.load %arg6[%c0_14, %c0_15] : memref<1x8xf32, #tpu.memory_space<vmem>>, vector<1x8xf32>
    %22 = arith.mulf %20, %21 : vector<1x8xf32>
    %c0_16 = arith.constant 0 : index
    %c0_17 = arith.constant 0 : index
    %23 = vector.load %arg7[%c0_16, %c0_17] : memref<1x8xf32, #tpu.memory_space<vmem>>, vector<1x8xf32>
    %24 = arith.addf %22, %23 : vector<1x8xf32>
    %cst_18 = arith.constant 0.000000e+00 : f32
    %25 = vector.broadcast %cst_18 : f32 to vector<1x8xf32>
    %26 = arith.cmpf ogt, %24, %25 : vector<1x8xf32>
    %cst_19 = arith.constant 0.000000e+00 : f32
    %27 = vector.broadcast %cst_19 : f32 to vector<1x8xf32>
    %28 = arith.minimumf %24, %27 : vector<1x8xf32>
    %29 = math.exp %28 : vector<1x8xf32>
    %cst_20 = arith.constant 1.000000e+00 : f32
    %30 = vector.broadcast %cst_20 : f32 to vector<1x8xf32>
    %31 = arith.subf %29, %30 : vector<1x8xf32>
    %32 = arith.select %26, %24, %31 : vector<1x8xi1>, vector<1x8xf32>
    %c0_21 = arith.constant 0 : index
    %c0_22 = arith.constant 0 : index
    %33 = vector.load %arg8[%c0_21, %c0_22] : memref<8x128xf32, #tpu.memory_space<vmem>>, vector<8x128xf32>
    %cst_23 = arith.constant dense<0.000000e+00> : vector<1x128xf32>
    %34 = tpu.matmul %32, %33, %cst_23 {dimension_numbers = #tpu.dot_dimension_numbers<[1], [0], [0], [1], [0, 0, 1, 1], [], []>} : vector<1x8xf32>, vector<8x128xf32>, vector<1x128xf32> -> vector<1x128xf32>
    %c0_24 = arith.constant 0 : index
    %c0_25 = arith.constant 0 : index
    %35 = vector.load %arg9[%c0_24, %c0_25] : memref<1x128xf32, #tpu.memory_space<vmem>>, vector<1x128xf32>
    %36 = arith.addf %34, %35 : vector<1x128xf32>
    %37 = vector.shape_cast %36 : vector<1x128xf32> to vector<1x1x128xf32>
    %c0_26 = arith.constant 0 : index
    %c0_27 = arith.constant 0 : index
    %c0_28 = arith.constant 0 : index
    %38 = vector.load %arg10[%c0_26, %c0_27, %c0_28] : memref<1x1x128xf32, #tpu.memory_space<vmem>>, vector<1x1x128xf32>
    tpu.vector_store %arg10[%c0_26, %c0_27, %c0_28], %37 {strides = array<i32>} : memref<1x1x128xf32, #tpu.memory_space<vmem>>, vector<1x1x128xf32>,
    return
  }
  func.func @transform_0(%arg0: i32) -> (i32, i32) {
    %c0_i32 = arith.constant 0 : i32
    %c0_i32_0 = arith.constant 0 : i32
    return %arg0, %c0_i32 : i32, i32
  }
  func.func @transform_1(%arg0: i32) -> (i32, i32) {
    %c0_i32 = arith.constant 0 : i32
    %c0_i32_0 = arith.constant 0 : i32
    %c0_i32_1 = arith.constant 0 : i32
    return %c0_i32, %c0_i32_0 : i32, i32
  }
  func.func @transform_2(%arg0: i32) -> (i32, i32) {
    %c0_i32 = arith.constant 0 : i32
    %c0_i32_0 = arith.constant 0 : i32
    %c0_i32_1 = arith.constant 0 : i32
    return %c0_i32, %c0_i32_0 : i32, i32
  }
  func.func @transform_3(%arg0: i32) -> (i32, i32) {
    %c0_i32 = arith.constant 0 : i32
    %c0_i32_0 = arith.constant 0 : i32
    %c0_i32_1 = arith.constant 0 : i32
    return %c0_i32, %c0_i32_0 : i32, i32
  }
  func.func @transform_4(%arg0: i32) -> (i32, i32) {
    %c0_i32 = arith.constant 0 : i32
    %c0_i32_0 = arith.constant 0 : i32
    %c0_i32_1 = arith.constant 0 : i32
    return %c0_i32, %c0_i32_0 : i32, i32
  }
  func.func @transform_5(%arg0: i32) -> (i32, i32) {
    %c0_i32 = arith.constant 0 : i32
    %c0_i32_0 = arith.constant 0 : i32
    %c0_i32_1 = arith.constant 0 : i32
    return %c0_i32, %c0_i32_0 : i32, i32
  }
  func.func @transform_6(%arg0: i32) -> (i32, i32) {
    %c0_i32 = arith.constant 0 : i32
    %c0_i32_0 = arith.constant 0 : i32
    %c0_i32_1 = arith.constant 0 : i32
    return %c0_i32, %c0_i32_0 : i32, i32
  }
  func.func @transform_7(%arg0: i32) -> (i32, i32) {
    %c0_i32 = arith.constant 0 : i32
    %c0_i32_0 = arith.constant 0 : i32
    %c0_i32_1 = arith.constant 0 : i32
    return %c0_i32, %c0_i32_0 : i32, i32
  }
  func.func @transform_8(%arg0: i32) -> (i32, i32) {
    %c0_i32 = arith.constant 0 : i32
    %c0_i32_0 = arith.constant 0 : i32
    %c0_i32_1 = arith.constant 0 : i32
    return %c0_i32, %c0_i32_0 : i32, i32
  }
  func.func @transform_9(%arg0: i32) -> (i32, i32, i32) {
    %c0_i32 = arith.constant 0 : i32
    %c0_i32_0 = arith.constant 0 : i32
    %c0_i32_1 = arith.constant 0 : i32
    return %arg0, %c0_i32, %c0_i32_0 : i32, i32, i32
  }
}

</mosaic_0001>

<llo_original>
// kernel: terry_crews_forward.2
$region0: #{terry_crews_forward.2}
  #allocation0 [shape = 'u32[]', space=smem, size = 0x4, offset = 0x4, fixed_abs, tag = 'smem constant byte address 0x4 - core index']
  #allocation1 [shape = 'u32[144,128]{1,0:T(1,128)}', space=vmem, size = 0x12000, scoped, tag = 'internal scratch']
  %s0 = inlined_call_operand.vmem [shape: bf16[4608,128], index: 0, kind: input, shape index: {}]
  %s1 = inlined_call_operand.vmem [shape: bf16[128,16], index: 1, kind: input, shape index: {}]
  %s2 = inlined_call_operand.vmem [shape: f32[1,16], index: 2, kind: input, shape index: {}]
  %s3 = inlined_call_operand.vmem [shape: f32[1,16], index: 3, kind: input, shape index: {}]
  %s4 = inlined_call_operand.vmem [shape: f32[1152,16], index: 4, kind: output, shape index: {}]
  %s5 = sld [smem:[#allocation0]]
  $region49: #{terry_crews_forward.2} parent=0
    _
  %s7 = ssub.s32 1, %s5
  %s8 = scalar_select 0, %s7, %s5
  loop: start=0, step=1, limit=4
  $region2: #{terry_crews_forward.2} parent=0 // loop_pre_header
    _
  $region3: #{terry_crews_forward.2} parent=0 // loop_header
    %s10 = sphi 0, %s14
    %p11 = scmp.ge.s32.totalorder %s10, 4
    %s20 = sphi 0, %s22
    %s23 = sphi 0, %s20
    %s24 = sphi 0, %s23
    %s40 = sphi 0, %s24
    %s44 = sphi 0, %s44
    %s46 = sphi 0, %s44
    %s47 = sphi 0, %s46
    %s61 = sphi 0, %s47
    %s65 = sphi 0, %s65
    %s67 = sphi 0, %s65
    %s68 = sphi 0, %s67
    %s82 = sphi 0, %s68
    %s86 = sphi 0, %s86
    %s88 = sphi 0, %s86
    %s89 = sphi 0, %s88
    %s103 = sphi 0, %s89
    %s109 = sphi 0, %s111
    %s112 = sphi 0, %s109
    %s113 = sphi 0, %s112
    %s129 = sphi 0, %s113
  $region4: #{terry_crews_forward.2} parent=0 // loop_header_branch
    %13 = sbr.rel (%p11) target = $region8
  $region5: #{terry_crews_forward.2} parent=0 // loop_body
    %s15 = ssub.s32 %s10, 1
    %s16 = ssub.s32 %s10, 2
    %s17 = sadd.s32 %s10, 1
    %s18 = ssub.s32 %s10, %s17
    %p19 = scmp.eq.s32.totalorder %s18, 0
    %s21 = sadd.s32 %s20, 1
    %s22 = scalar_select %p19, %s20, %s21
    %p25 = pneg %p19
    %p26 = scmp.eq.s32.totalorder %s10, 1
    %p27 = por %p25, %p26
    %p28 = scmp.ne.s32.totalorder %s20, %s23
    %p29 = scmp.eq.s32.totalorder %s10, 0
    %p30 = por %p28, %p29
    %p31 = scmp.ne.s32.totalorder %s20, %s23
    %p32 = scmp.eq.s32.totalorder %s15, 1
    %p33 = por %p31, %p32
    %p34 = scmp.ne.s32.totalorder %s23, %s24
    %p35 = scmp.eq.s32.totalorder %s15, 0
    %p36 = por %p34, %p35
    %p37 = scmp.ne.s32.totalorder %s23, %s24
    %p38 = scmp.eq.s32.totalorder %s16, 1
    %p39 = por %p37, %p38
    %p41 = scmp.ne.s32.totalorder %s24, %s40
    %p42 = scmp.eq.s32.totalorder %s16, 0
    %p43 = por %p41, %p42
    %s45 = sadd.s32 %s44, 1
    %p48 = scmp.eq.s32.totalorder %s10, 1
    %p49 = scmp.ne.s32.totalorder %s44, %s46
    %p50 = scmp.eq.s32.totalorder %s10, 0
    %p51 = por %p49, %p50
    %p52 = scmp.ne.s32.totalorder %s44, %s46
    %p53 = scmp.eq.s32.totalorder %s15, 1
    %p54 = por %p52, %p53
    %p55 = scmp.ne.s32.totalorder %s46, %s47
    %p56 = scmp.eq.s32.totalorder %s15, 0
    %p57 = por %p55, %p56
    %p58 = scmp.ne.s32.totalorder %s46, %s47
    %p59 = scmp.eq.s32.totalorder %s16, 1
    %p60 = por %p58, %p59
    %p62 = scmp.ne.s32.totalorder %s47, %s61
    %p63 = scmp.eq.s32.totalorder %s16, 0
    %p64 = por %p62, %p63
    %s66 = sadd.s32 %s65, 1
    %p69 = scmp.eq.s32.totalorder %s10, 1
    %p70 = scmp.ne.s32.totalorder %s65, %s67
    %p71 = scmp.eq.s32.totalorder %s10, 0
    %p72 = por %p70, %p71
    %p73 = scmp.ne.s32.totalorder %s65, %s67
    %p74 = scmp.eq.s32.totalorder %s15, 1
    %p75 = por %p73, %p74
    %p76 = scmp.ne.s32.totalorder %s67, %s68
    %p77 = scmp.eq.s32.totalorder %s15, 0
    %p78 = por %p76, %p77
    %p79 = scmp.ne.s32.totalorder %s67, %s68
    %p80 = scmp.eq.s32.totalorder %s16, 1
    %p81 = por %p79, %p80
    %p83 = scmp.ne.s32.totalorder %s68, %s82
    %p84 = scmp.eq.s32.totalorder %s16, 0
    %p85 = por %p83, %p84
    %s87 = sadd.s32 %s86, 1
    %p90 = scmp.eq.s32.totalorder %s10, 1
    %p91 = scmp.ne.s32.totalorder %s86, %s88
    %p92 = scmp.eq.s32.totalorder %s10, 0
    %p93 = por %p91, %p92
    %p94 = scmp.ne.s32.totalorder %s86, %s88
    %p95 = scmp.eq.s32.totalorder %s15, 1
    %p96 = por %p94, %p95
    %p97 = scmp.ne.s32.totalorder %s88, %s89
    %p98 = scmp.eq.s32.totalorder %s15, 0
    %p99 = por %p97, %p98
    %p100 = scmp.ne.s32.totalorder %s88, %s89
    %p101 = scmp.eq.s32.totalorder %s16, 1
    %p102 = por %p100, %p101
    %p104 = scmp.ne.s32.totalorder %s89, %s103
    %p105 = scmp.eq.s32.totalorder %s16, 0
    %p106 = por %p104, %p105
    %s107 = ssub.s32 %s10, %s17
    %p108 = scmp.eq.s32.totalorder %s107, 0
    %s110 = sadd.s32 %s109, 1
    %s111 = scalar_select %p108, %s109, %s110
    %p114 = pneg %p108
    %p115 = scmp.eq.s32.totalorder %s10, 1
    %p116 = por %p114, %p115
    %p117 = scmp.ne.s32.totalorder %s109, %s112
    %p118 = scmp.eq.s32.totalorder %s10, 0
    %p119 = por %p117, %p118
    %p120 = scmp.ne.s32.totalorder %s109, %s112
    %p121 = scmp.eq.s32.totalorder %s15, 1
    %p122 = por %p120, %p121
    %p123 = scmp.ne.s32.totalorder %s112, %s113
    %p124 = scmp.eq.s32.totalorder %s15, 0
    %p125 = por %p123, %p124
    %p126 = scmp.ne.s32.totalorder %s112, %s113
    %p127 = scmp.eq.s32.totalorder %s16, 1
    %p128 = por %p126, %p127
    %p130 = scmp.ne.s32.totalorder %s113, %s129
    %p131 = scmp.eq.s32.totalorder %s16, 0
    %p132 = por %p130, %p131
    %p133 = scmp.le.s32.totalorder 1, %s10
    %p134 = scmp.lt.s32.totalorder %s10, 3
    %p135 = pnand %p133, %p134
    %p136 = pneg %p135
    // Predicated region
    $region9: #{terry_crews_forward.2} parent=5 // pred_check
      _
    $region10: #{terry_crews_forward.2} parent=5 // pred_check_branch
      %138 = sbr.rel (%p135) target = $region12
    $region11: #{terry_crews_forward.2} parent=5 // pred_region
      %s139 = ssub.s32 %s10, 1
      // Predicated region
      $region13: #{terry_crews_forward.2} parent=11 // pred_check
        %p140 = pneg %p57
      $region14: #{terry_crews_forward.2} parent=11 // pred_check_branch
        %142 = sbr.rel (%p140) target = $region16
      $region15: #{terry_crews_forward.2} parent=11 // pred_region
        _
      $region16: #{terry_crews_forward.2} parent=11 // pred_fallthru
        _
      // Predicated region
      $region17: #{terry_crews_forward.2} parent=11 // pred_check
        %p143 = pneg %p78
      $region18: #{terry_crews_forward.2} parent=11 // pred_check_branch
        %145 = sbr.rel (%p143) target = $region20
      $region19: #{terry_crews_forward.2} parent=11 // pred_region
        _
      $region20: #{terry_crews_forward.2} parent=11 // pred_fallthru
        _
      // Predicated region
      $region21: #{terry_crews_forward.2} parent=11 // pred_check
        %p146 = pneg %p99
      $region22: #{terry_crews_forward.2} parent=11 // pred_check_branch
        %148 = sbr.rel (%p146) target = $region24
      $region23: #{terry_crews_forward.2} parent=11 // pred_region
        _
      $region24: #{terry_crews_forward.2} parent=11 // pred_fallthru
        _
    $region12: #{terry_crews_forward.2} parent=5 // pred_fallthru
      _
    %p149 = scmp.lt.s32.totalorder %s10, 2
    // Predicated region
    $region25: #{terry_crews_forward.2} parent=5 // pred_check
      %p150 = pneg %p149
    $region26: #{terry_crews_forward.2} parent=5 // pred_check_branch
      %152 = sbr.rel (%p150) target = $region28
    $region27: #{terry_crews_forward.2} parent=5 // pred_region
      // Predicated region
      $region29: #{terry_crews_forward.2} parent=27 // pred_check
        %p153 = pneg %p30
      $region30: #{terry_crews_forward.2} parent=27 // pred_check_branch
        %155 = sbr.rel (%p153) target = $region32
      $region31: #{terry_crews_forward.2} parent=27 // pred_region
        %s156 = smul.u32 288, %s10
        %p157 = scmp.lt.s32.totalorder %s156, 575
        %s158 = scalar_select %p157, %s156, 575
        %s159 = smul.addr %s158, 4
        %s160 = scalar_lea.vmem %s0, %s159
        %s161 = smul.u32 288, %s10
      $region32: #{terry_crews_forward.2} parent=27 // pred_fallthru
        _
    $region28: #{terry_crews_forward.2} parent=5 // pred_fallthru
      _
    %p162 = scmp.le.s32.totalorder 1, %s10
    %p163 = scmp.lt.s32.totalorder %s10, 3
    %p164 = pnand %p162, %p163
    %p165 = pneg %p164
    // Predicated region
    $region33: #{terry_crews_forward.2} parent=5 // pred_check
      _
    $region34: #{terry_crews_forward.2} parent=5 // pred_check_branch
      %167 = sbr.rel (%p164) target = $region36
    $region35: #{terry_crews_forward.2} parent=5 // pred_region
      %s168 = ssub.s32 %s10, 1
      %s169 = smul.u32 288, %s15
      %p170 = scmp.lt.s32.totalorder %s169, 575
      %s171 = scalar_select %p170, %s169, 575
      %s172 = smul.addr %s171, 4
      %s173 = scalar_lea.vmem %s0, %s172
      %p174 = pneg %p36
      %p175 = pneg %p33
      %p176 = pneg %p57
      %p177 = pneg %p54
      %p178 = pneg %p78
      %p179 = pneg %p75
      %p180 = pneg %p99
      %p181 = pneg %p96
      %p182 = pneg %p125
      %p183 = pneg %p122
      %s184 = smul.u32 72, %s15
      %p185 = scmp.lt.s32.totalorder %s184, 143
      %s186 = scalar_select %p185, %s184, 143
      %s187 = smul.addr %s186, 8
      %s188 = scalar_lea.vmem %s4, %s187
      %s189 = smul.u32 288, %s15
      %p190 = scmp.lt.s32.totalorder %s189, 575
      %s191 = scalar_select %p190, %s189, 575
      %s192 = smul.addr %s191, 4
      %s193 = scalar_lea.vmem %s0, %s192
      %s194 = smul.u32 288, %s15
      %s195 = smul.u32 72, %s15
      %p196 = scmp.lt.s32.totalorder %s195, 143
      %s197 = scalar_select %p196, %s195, 143
      %s198 = smul.addr %s197, 8
      %s199 = scalar_lea.vmem %s4, %s198
      %s200 = smul.u32 72, %s15
      %v202 = vld [vmem:[%s193] sm:$0xf]
      %v203 = vld [vmem:[%s193 + $0x4] sm:$0xf]
      %v204 = vld [vmem:[%s193 + $0x8] sm:$0xf]
      %v205 = vld [vmem:[%s193 + $0xc] sm:$0xf]
      %v206 = vld [vmem:[%s193 + $0x10] sm:$0xf]
      %v207 = vld [vmem:[%s193 + $0x14] sm:$0xf]
      %v208 = vld [vmem:[%s193 + $0x18] sm:$0xf]
      %v209 = vld [vmem:[%s193 + $0x1c] sm:$0xf]
      %v210 = vld [vmem:[%s193 + $0x20] sm:$0xf]
      %v211 = vld [vmem:[%s193 + $0x24] sm:$0xf]
      %v212 = vld [vmem:[%s193 + $0x28] sm:$0xf]
      %v213 = vld [vmem:[%s193 + $0x2c] sm:$0xf]
      %v214 = vld [vmem:[%s193 + $0x30] sm:$0xf]
      %v215 = vld [vmem:[%s193 + $0x34] sm:$0xf]
      %v216 = vld [vmem:[%s193 + $0x38] sm:$0xf]
      %v217 = vld [vmem:[%s193 + $0x3c] sm:$0xf]
      %v218 = vld [vmem:[%s193 + $0x40] sm:$0xf]
      %v219 = vld [vmem:[%s193 + $0x44] sm:$0xf]
      %v220 = vld [vmem:[%s193 + $0x48] sm:$0xf]
      %v221 = vld [vmem:[%s193 + $0x4c] sm:$0xf]
      %v222 = vld [vmem:[%s193 + $0x50] sm:$0xf]
      %v223 = vld [vmem:[%s193 + $0x54] sm:$0xf]
      %v224 = vld [vmem:[%s193 + $0x58] sm:$0xf]
      %v225 = vld [vmem:[%s193 + $0x5c] sm:$0xf]
      %v226 = vld [vmem:[%s193 + $0x60] sm:$0xf]
      %v227 = vld [vmem:[%s193 + $0x64] sm:$0xf]
      %v228 = vld [vmem:[%s193 + $0x68] sm:$0xf]
      %v229 = vld [vmem:[%s193 + $0x6c] sm:$0xf]
      %v230 = vld [vmem:[%s193 + $0x70] sm:$0xf]
      %v231 = vld [vmem:[%s193 + $0x74] sm:$0xf]
      %v232 = vld [vmem:[%s193 + $0x78] sm:$0xf]
      %v233 = vld [vmem:[%s193 + $0x7c] sm:$0xf]
      %v234 = vld [vmem:[%s193 + $0x80] sm:$0xf]
      %v235 = vld [vmem:[%s193 + $0x84] sm:$0xf]
      %v236 = vld [vmem:[%s193 + $0x88] sm:$0xf]
      %v237 = vld [vmem:[%s193 + $0x8c] sm:$0xf]
      %v238 = vld [vmem:[%s193 + $0x90] sm:$0xf]
      %v239 = vld [vmem:[%s193 + $0x94] sm:$0xf]
      %v240 = vld [vmem:[%s193 + $0x98] sm:$0xf]
      %v241 = vld [vmem:[%s193 + $0x9c] sm:$0xf]
      %v242 = vld [vmem:[%s193 + $0xa0] sm:$0xf]
      %v243 = vld [vmem:[%s193 + $0xa4] sm:$0xf]
      %v244 = vld [vmem:[%s193 + $0xa8] sm:$0xf]
      %v245 = vld [vmem:[%s193 + $0xac] sm:$0xf]
      %v246 = vld [vmem:[%s193 + $0xb0] sm:$0xf]
      %v247 = vld [vmem:[%s193 + $0xb4] sm:$0xf]
      %v248 = vld [vmem:[%s193 + $0xb8] sm:$0xf]
      %v249 = vld [vmem:[%s193 + $0xbc] sm:$0xf]
      %v250 = vld [vmem:[%s193 + $0xc0] sm:$0xf]
      %v251 = vld [vmem:[%s193 + $0xc4] sm:$0xf]
      %v252 = vld [vmem:[%s193 + $0xc8] sm:$0xf]
      %v253 = vld [vmem:[%s193 + $0xcc] sm:$0xf]
      %v254 = vld [vmem:[%s193 + $0xd0] sm:$0xf]
      %v255 = vld [vmem:[%s193 + $0xd4] sm:$0xf]
      %v256 = vld [vmem:[%s193 + $0xd8] sm:$0xf]
      %v257 = vld [vmem:[%s193 + $0xdc] sm:$0xf]
      %v258 = vld [vmem:[%s193 + $0xe0] sm:$0xf]
      %v259 = vld [vmem:[%s193 + $0xe4] sm:$0xf]
      %v260 = vld [vmem:[%s193 + $0xe8] sm:$0xf]
      %v261 = vld [vmem:[%s193 + $0xec] sm:$0xf]
      %v262 = vld [vmem:[%s193 + $0xf0] sm:$0xf]
      %v263 = vld [vmem:[%s193 + $0xf4] sm:$0xf]
      %v264 = vld [vmem:[%s193 + $0xf8] sm:$0xf]
      %v265 = vld [vmem:[%s193 + $0xfc] sm:$0xf]
      %v266 = vld [vmem:[%s193 + $0x100] sm:$0xf]
      %v267 = vld [vmem:[%s193 + $0x104] sm:$0xf]
      %v268 = vld [vmem:[%s193 + $0x108] sm:$0xf]
      %v269 = vld [vmem:[%s193 + $0x10c] sm:$0xf]
      %v270 = vld [vmem:[%s193 + $0x110] sm:$0xf]
      %v271 = vld [vmem:[%s193 + $0x114] sm:$0xf]
      %v272 = vld [vmem:[%s193 + $0x118] sm:$0xf]
      %v273 = vld [vmem:[%s193 + $0x11c] sm:$0xf]
      %v274 = vld [vmem:[%s193 + $0x120] sm:$0xf]
      %v275 = vld [vmem:[%s193 + $0x124] sm:$0xf]
      %v276 = vld [vmem:[%s193 + $0x128] sm:$0xf]
      %v277 = vld [vmem:[%s193 + $0x12c] sm:$0xf]
      %v278 = vld [vmem:[%s193 + $0x130] sm:$0xf]
      %v279 = vld [vmem:[%s193 + $0x134] sm:$0xf]
      %v280 = vld [vmem:[%s193 + $0x138] sm:$0xf]
      %v281 = vld [vmem:[%s193 + $0x13c] sm:$0xf]
      %v282 = vld [vmem:[%s193 + $0x140] sm:$0xf]
      %v283 = vld [vmem:[%s193 + $0x144] sm:$0xf]
      %v284 = vld [vmem:[%s193 + $0x148] sm:$0xf]
      %v285 = vld [vmem:[%s193 + $0x14c] sm:$0xf]
      %v286 = vld [vmem:[%s193 + $0x150] sm:$0xf]
      %v287 = vld [vmem:[%s193 + $0x154] sm:$0xf]
      %v288 = vld [vmem:[%s193 + $0x158] sm:$0xf]
      %v289 = vld [vmem:[%s193 + $0x15c] sm:$0xf]
      %v290 = vld [vmem:[%s193 + $0x160] sm:$0xf]
      %v291 = vld [vmem:[%s193 + $0x164] sm:$0xf]
      %v292 = vld [vmem:[%s193 + $0x168] sm:$0xf]
      %v293 = vld [vmem:[%s193 + $0x16c] sm:$0xf]
      %v294 = vld [vmem:[%s193 + $0x170] sm:$0xf]
      %v295 = vld [vmem:[%s193 + $0x174] sm:$0xf]
      %v296 = vld [vmem:[%s193 + $0x178] sm:$0xf]
      %v297 = vld [vmem:[%s193 + $0x17c] sm:$0xf]
      %v298 = vld [vmem:[%s193 + $0x180] sm:$0xf]
      %v299 = vld [vmem:[%s193 + $0x184] sm:$0xf]
      %v300 = vld [vmem:[%s193 + $0x188] sm:$0xf]
      %v301 = vld [vmem:[%s193 + $0x18c] sm:$0xf]
      %v302 = vld [vmem:[%s193 + $0x190] sm:$0xf]
      %v303 = vld [vmem:[%s193 + $0x194] sm:$0xf]
      %v304 = vld [vmem:[%s193 + $0x198] sm:$0xf]
      %v305 = vld [vmem:[%s193 + $0x19c] sm:$0xf]
      %v306 = vld [vmem:[%s193 + $0x1a0] sm:$0xf]
      %v307 = vld [vmem:[%s193 + $0x1a4] sm:$0xf]
      %v308 = vld [vmem:[%s193 + $0x1a8] sm:$0xf]
      %v309 = vld [vmem:[%s193 + $0x1ac] sm:$0xf]
      %v310 = vld [vmem:[%s193 + $0x1b0] sm:$0xf]
      %v311 = vld [vmem:[%s193 + $0x1b4] sm:$0xf]
      %v312 = vld [vmem:[%s193 + $0x1b8] sm:$0xf]
      %v313 = vld [vmem:[%s193 + $0x1bc] sm:$0xf]
      %v314 = vld [vmem:[%s193 + $0x1c0] sm:$0xf]
      %v315 = vld [vmem:[%s193 + $0x1c4] sm:$0xf]
      %v316 = vld [vmem:[%s193 + $0x1c8] sm:$0xf]
      %v317 = vld [vmem:[%s193 + $0x1cc] sm:$0xf]
      %v318 = vld [vmem:[%s193 + $0x1d0] sm:$0xf]
      %v319 = vld [vmem:[%s193 + $0x1d4] sm:$0xf]
      %v320 = vld [vmem:[%s193 + $0x1d8] sm:$0xf]
      %v321 = vld [vmem:[%s193 + $0x1dc] sm:$0xf]
      %v322 = vld [vmem:[%s193 + $0x1e0] sm:$0xf]
      %v323 = vld [vmem:[%s193 + $0x1e4] sm:$0xf]
      %v324 = vld [vmem:[%s193 + $0x1e8] sm:$0xf]
      %v325 = vld [vmem:[%s193 + $0x1ec] sm:$0xf]
      %v326 = vld [vmem:[%s193 + $0x1f0] sm:$0xf]
      %v327 = vld [vmem:[%s193 + $0x1f4] sm:$0xf]
      %v328 = vld [vmem:[%s193 + $0x1f8] sm:$0xf]
      %v329 = vld [vmem:[%s193 + $0x1fc] sm:$0xf]
      %v330 = vld [vmem:[%s193 + $0x200] sm:$0xf]
      %v331 = vld [vmem:[%s193 + $0x204] sm:$0xf]
      %v332 = vld [vmem:[%s193 + $0x208] sm:$0xf]
      %v333 = vld [vmem:[%s193 + $0x20c] sm:$0xf]
      %v334 = vld [vmem:[%s193 + $0x210] sm:$0xf]
      %v335 = vld [vmem:[%s193 + $0x214] sm:$0xf]
      %v336 = vld [vmem:[%s193 + $0x218] sm:$0xf]
      %v337 = vld [vmem:[%s193 + $0x21c] sm:$0xf]
      %v338 = vld [vmem:[%s193 + $0x220] sm:$0xf]
      %v339 = vld [vmem:[%s193 + $0x224] sm:$0xf]
      %v340 = vld [vmem:[%s193 + $0x228] sm:$0xf]
      %v341 = vld [vmem:[%s193 + $0x22c] sm:$0xf]
      %v342 = vld [vmem:[%s193 + $0x230] sm:$0xf]
      %v343 = vld [vmem:[%s193 + $0x234] sm:$0xf]
      %v344 = vld [vmem:[%s193 + $0x238] sm:$0xf]
      %v345 = vld [vmem:[%s193 + $0x23c] sm:$0xf]
      %v346 = vld [vmem:[%s193 + $0x240] sm:$0xf]
      %v347 = vld [vmem:[%s193 + $0x244] sm:$0xf]
      %v348 = vld [vmem:[%s193 + $0x248] sm:$0xf]
      %v349 = vld [vmem:[%s193 + $0x24c] sm:$0xf]
      %v350 = vld [vmem:[%s193 + $0x250] sm:$0xf]
      %v351 = vld [vmem:[%s193 + $0x254] sm:$0xf]
      %v352 = vld [vmem:[%s193 + $0x258] sm:$0xf]
      %v353 = vld [vmem:[%s193 + $0x25c] sm:$0xf]
      %v354 = vld [vmem:[%s193 + $0x260] sm:$0xf]
      %v355 = vld [vmem:[%s193 + $0x264] sm:$0xf]
      %v356 = vld [vmem:[%s193 + $0x268] sm:$0xf]
      %v357 = vld [vmem:[%s193 + $0x26c] sm:$0xf]
      %v358 = vld [vmem:[%s193 + $0x270] sm:$0xf]
      %v359 = vld [vmem:[%s193 + $0x274] sm:$0xf]
      %v360 = vld [vmem:[%s193 + $0x278] sm:$0xf]
      %v361 = vld [vmem:[%s193 + $0x27c] sm:$0xf]
      %v362 = vld [vmem:[%s193 + $0x280] sm:$0xf]
      %v363 = vld [vmem:[%s193 + $0x284] sm:$0xf]
      %v364 = vld [vmem:[%s193 + $0x288] sm:$0xf]
      %v365 = vld [vmem:[%s193 + $0x28c] sm:$0xf]
      %v366 = vld [vmem:[%s193 + $0x290] sm:$0xf]
      %v367 = vld [vmem:[%s193 + $0x294] sm:$0xf]
      %v368 = vld [vmem:[%s193 + $0x298] sm:$0xf]
      %v369 = vld [vmem:[%s193 + $0x29c] sm:$0xf]
      %v370 = vld [vmem:[%s193 + $0x2a0] sm:$0xf]
      %v371 = vld [vmem:[%s193 + $0x2a4] sm:$0xf]
      %v372 = vld [vmem:[%s193 + $0x2a8] sm:$0xf]
      %v373 = vld [vmem:[%s193 + $0x2ac] sm:$0xf]
      %v374 = vld [vmem:[%s193 + $0x2b0] sm:$0xf]
      %v375 = vld [vmem:[%s193 + $0x2b4] sm:$0xf]
      %v376 = vld [vmem:[%s193 + $0x2b8] sm:$0xf]
      %v377 = vld [vmem:[%s193 + $0x2bc] sm:$0xf]
      %v378 = vld [vmem:[%s193 + $0x2c0] sm:$0xf]
      %v379 = vld [vmem:[%s193 + $0x2c4] sm:$0xf]
      %v380 = vld [vmem:[%s193 + $0x2c8] sm:$0xf]
      %v381 = vld [vmem:[%s193 + $0x2cc] sm:$0xf]
      %v382 = vld [vmem:[%s193 + $0x2d0] sm:$0xf]
      %v383 = vld [vmem:[%s193 + $0x2d4] sm:$0xf]
      %v384 = vld [vmem:[%s193 + $0x2d8] sm:$0xf]
      %v385 = vld [vmem:[%s193 + $0x2dc] sm:$0xf]
      %v386 = vld [vmem:[%s193 + $0x2e0] sm:$0xf]
      %v387 = vld [vmem:[%s193 + $0x2e4] sm:$0xf]
      %v388 = vld [vmem:[%s193 + $0x2e8] sm:$0xf]
      %v389 = vld [vmem:[%s193 + $0x2ec] sm:$0xf]
      %v390 = vld [vmem:[%s193 + $0x2f0] sm:$0xf]
      %v391 = vld [vmem:[%s193 + $0x2f4] sm:$0xf]
      %v392 = vld [vmem:[%s193 + $0x2f8] sm:$0xf]
      %v393 = vld [vmem:[%s193 + $0x2fc] sm:$0xf]
      %v394 = vld [vmem:[%s193 + $0x300] sm:$0xf]
      %v395 = vld [vmem:[%s193 + $0x304] sm:$0xf]
      %v396 = vld [vmem:[%s193 + $0x308] sm:$0xf]
      %v397 = vld [vmem:[%s193 + $0x30c] sm:$0xf]
      %v398 = vld [vmem:[%s193 + $0x310] sm:$0xf]
      %v399 = vld [vmem:[%s193 + $0x314] sm:$0xf]
      %v400 = vld [vmem:[%s193 + $0x318] sm:$0xf]
      %v401 = vld [vmem:[%s193 + $0x31c] sm:$0xf]
      %v402 = vld [vmem:[%s193 + $0x320] sm:$0xf]
      %v403 = vld [vmem:[%s193 + $0x324] sm:$0xf]
      %v404 = vld [vmem:[%s193 + $0x328] sm:$0xf]
      %v405 = vld [vmem:[%s193 + $0x32c] sm:$0xf]
      %v406 = vld [vmem:[%s193 + $0x330] sm:$0xf]
      %v407 = vld [vmem:[%s193 + $0x334] sm:$0xf]
      %v408 = vld [vmem:[%s193 + $0x338] sm:$0xf]
      %v409 = vld [vmem:[%s193 + $0x33c] sm:$0xf]
      %v410 = vld [vmem:[%s193 + $0x340] sm:$0xf]
      %v411 = vld [vmem:[%s193 + $0x344] sm:$0xf]
      %v412 = vld [vmem:[%s193 + $0x348] sm:$0xf]
      %v413 = vld [vmem:[%s193 + $0x34c] sm:$0xf]
      %v414 = vld [vmem:[%s193 + $0x350] sm:$0xf]
      %v415 = vld [vmem:[%s193 + $0x354] sm:$0xf]
      %v416 = vld [vmem:[%s193 + $0x358] sm:$0xf]
      %v417 = vld [vmem:[%s193 + $0x35c] sm:$0xf]
      %v418 = vld [vmem:[%s193 + $0x360] sm:$0xf]
      %v419 = vld [vmem:[%s193 + $0x364] sm:$0xf]
      %v420 = vld [vmem:[%s193 + $0x368] sm:$0xf]
      %v421 = vld [vmem:[%s193 + $0x36c] sm:$0xf]
      %v422 = vld [vmem:[%s193 + $0x370] sm:$0xf]
      %v423 = vld [vmem:[%s193 + $0x374] sm:$0xf]
      %v424 = vld [vmem:[%s193 + $0x378] sm:$0xf]
      %v425 = vld [vmem:[%s193 + $0x37c] sm:$0xf]
      %v426 = vld [vmem:[%s193 + $0x380] sm:$0xf]
      %v427 = vld [vmem:[%s193 + $0x384] sm:$0xf]
      %v428 = vld [vmem:[%s193 + $0x388] sm:$0xf]
      %v429 = vld [vmem:[%s193 + $0x38c] sm:$0xf]
      %v430 = vld [vmem:[%s193 + $0x390] sm:$0xf]
      %v431 = vld [vmem:[%s193 + $0x394] sm:$0xf]
      %v432 = vld [vmem:[%s193 + $0x398] sm:$0xf]
      %v433 = vld [vmem:[%s193 + $0x39c] sm:$0xf]
      %v434 = vld [vmem:[%s193 + $0x3a0] sm:$0xf]
      %v435 = vld [vmem:[%s193 + $0x3a4] sm:$0xf]
      %v436 = vld [vmem:[%s193 + $0x3a8] sm:$0xf]
      %v437 = vld [vmem:[%s193 + $0x3ac] sm:$0xf]
      %v438 = vld [vmem:[%s193 + $0x3b0] sm:$0xf]
      %v439 = vld [vmem:[%s193 + $0x3b4] sm:$0xf]
      %v440 = vld [vmem:[%s193 + $0x3b8] sm:$0xf]
      %v441 = vld [vmem:[%s193 + $0x3bc] sm:$0xf]
      %v442 = vld [vmem:[%s193 + $0x3c0] sm:$0xf]
      %v443 = vld [vmem:[%s193 + $0x3c4] sm:$0xf]
      %v444 = vld [vmem:[%s193 + $0x3c8] sm:$0xf]
      %v445 = vld [vmem:[%s193 + $0x3cc] sm:$0xf]
      %v446 = vld [vmem:[%s193 + $0x3d0] sm:$0xf]
      %v447 = vld [vmem:[%s193 + $0x3d4] sm:$0xf]
      %v448 = vld [vmem:[%s193 + $0x3d8] sm:$0xf]
      %v449 = vld [vmem:[%s193 + $0x3dc] sm:$0xf]
      %v450 = vld [vmem:[%s193 + $0x3e0] sm:$0xf]
      %v451 = vld [vmem:[%s193 + $0x3e4] sm:$0xf]
      %v452 = vld [vmem:[%s193 + $0x3e8] sm:$0xf]
      %v453 = vld [vmem:[%s193 + $0x3ec] sm:$0xf]
      %v454 = vld [vmem:[%s193 + $0x3f0] sm:$0xf]
      %v455 = vld [vmem:[%s193 + $0x3f4] sm:$0xf]
      %v456 = vld [vmem:[%s193 + $0x3f8] sm:$0xf]
      %v457 = vld [vmem:[%s193 + $0x3fc] sm:$0xf]
      %v458 = vld [vmem:[%s193 + $0x400] sm:$0xf]
      %v459 = vld [vmem:[%s193 + $0x404] sm:$0xf]
      %v460 = vld [vmem:[%s193 + $0x408] sm:$0xf]
      %v461 = vld [vmem:[%s193 + $0x40c] sm:$0xf]
      %v462 = vld [vmem:[%s193 + $0x410] sm:$0xf]
      %v463 = vld [vmem:[%s193 + $0x414] sm:$0xf]
      %v464 = vld [vmem:[%s193 + $0x418] sm:$0xf]
      %v465 = vld [vmem:[%s193 + $0x41c] sm:$0xf]
      %v466 = vld [vmem:[%s193 + $0x420] sm:$0xf]
      %v467 = vld [vmem:[%s193 + $0x424] sm:$0xf]
      %v468 = vld [vmem:[%s193 + $0x428] sm:$0xf]
      %v469 = vld [vmem:[%s193 + $0x42c] sm:$0xf]
      %v470 = vld [vmem:[%s193 + $0x430] sm:$0xf]
      %v471 = vld [vmem:[%s193 + $0x434] sm:$0xf]
      %v472 = vld [vmem:[%s193 + $0x438] sm:$0xf]
      %v473 = vld [vmem:[%s193 + $0x43c] sm:$0xf]
      %v474 = vld [vmem:[%s193 + $0x440] sm:$0xf]
      %v475 = vld [vmem:[%s193 + $0x444] sm:$0xf]
      %v476 = vld [vmem:[%s193 + $0x448] sm:$0xf]
      %v477 = vld [vmem:[%s193 + $0x44c] sm:$0xf]
      %v478 = vld [vmem:[%s193 + $0x450] sm:$0xf]
      %v479 = vld [vmem:[%s193 + $0x454] sm:$0xf]
      %v480 = vld [vmem:[%s193 + $0x458] sm:$0xf]
      %v481 = vld [vmem:[%s193 + $0x45c] sm:$0xf]
      %v482 = vld [vmem:[%s193 + $0x460] sm:$0xf]
      %v483 = vld [vmem:[%s193 + $0x464] sm:$0xf]
      %v484 = vld [vmem:[%s193 + $0x468] sm:$0xf]
      %v485 = vld [vmem:[%s193 + $0x46c] sm:$0xf]
      %v486 = vld [vmem:[%s193 + $0x470] sm:$0xf]
      %v487 = vld [vmem:[%s193 + $0x474] sm:$0xf]
      %v488 = vld [vmem:[%s193 + $0x478] sm:$0xf]
      %v489 = vld [vmem:[%s193 + $0x47c] sm:$0xf]
      %v490 = vld [vmem:[%s1] sm:$0xf]
      %v491 = vld [vmem:[%s1 + $0x4] sm:$0xf]
      %v492 = vld [vmem:[%s1 + $0x8] sm:$0xf]
      %v493 = vld [vmem:[%s1 + $0xc] sm:$0xf]
      %v494 = vld [vmem:[%s1 + $0x10] sm:$0xf]
      %v495 = vld [vmem:[%s1 + $0x14] sm:$0xf]
      %v496 = vld [vmem:[%s1 + $0x18] sm:$0xf]
      %v497 = vld [vmem:[%s1 + $0x1c] sm:$0xf]
      %v498 = vld [vmem:[%s1 + $0x20] sm:$0xf]
      %v499 = vld [vmem:[%s1 + $0x24] sm:$0xf]
      %v500 = vld [vmem:[%s1 + $0x28] sm:$0xf]
      %v501 = vld [vmem:[%s1 + $0x2c] sm:$0xf]
      %v502 = vld [vmem:[%s1 + $0x30] sm:$0xf]
      %v503 = vld [vmem:[%s1 + $0x34] sm:$0xf]
      %v504 = vld [vmem:[%s1 + $0x38] sm:$0xf]
      %v505 = vld [vmem:[%s1 + $0x3c] sm:$0xf]
      %v794 = vunpack.c.l.b16 %v202
      %v795 = vunpack.c.l.b16 %v203
      %v796 = vunpack.c.l.b16 %v204
      %v797 = vunpack.c.l.b16 %v205
      %v798 = vunpack.c.l.b16 %v206
      %v799 = vunpack.c.l.b16 %v207
      %v800 = vunpack.c.l.b16 %v208
      %v801 = vunpack.c.l.b16 %v209
      %v802 = vunpack.c.l.b16 %v210
      %v803 = vunpack.c.l.b16 %v211
      %v804 = vunpack.c.l.b16 %v212
      %v805 = vunpack.c.l.b16 %v213
      %v806 = vunpack.c.l.b16 %v214
      %v807 = vunpack.c.l.b16 %v215
      %v808 = vunpack.c.l.b16 %v216
      %v809 = vunpack.c.l.b16 %v217
      %v810 = vunpack.c.l.b16 %v218
      %v811 = vunpack.c.l.b16 %v219
      %v812 = vunpack.c.l.b16 %v220
      %v813 = vunpack.c.l.b16 %v221
      %v814 = vunpack.c.l.b16 %v222
      %v815 = vunpack.c.l.b16 %v223
      %v816 = vunpack.c.l.b16 %v224
      %v817 = vunpack.c.l.b16 %v225
      %v818 = vunpack.c.l.b16 %v226
      %v819 = vunpack.c.l.b16 %v227
      %v820 = vunpack.c.l.b16 %v228
      %v821 = vunpack.c.l.b16 %v229
      %v822 = vunpack.c.l.b16 %v230
      %v823 = vunpack.c.l.b16 %v231
      %v824 = vunpack.c.l.b16 %v232
      %v825 = vunpack.c.l.b16 %v233
      %v826 = vunpack.c.l.b16 %v234
      %v827 = vunpack.c.l.b16 %v235
      %v828 = vunpack.c.l.b16 %v236
      %v829 = vunpack.c.l.b16 %v237
      %v830 = vunpack.c.l.b16 %v238
      %v831 = vunpack.c.l.b16 %v239
      %v832 = vunpack.c.l.b16 %v240
      %v833 = vunpack.c.l.b16 %v241
      %v834 = vunpack.c.l.b16 %v242
      %v835 = vunpack.c.l.b16 %v243
      %v836 = vunpack.c.l.b16 %v244
      %v837 = vunpack.c.l.b16 %v245
      %v838 = vunpack.c.l.b16 %v246
      %v839 = vunpack.c.l.b16 %v247
      %v840 = vunpack.c.l.b16 %v248
      %v841 = vunpack.c.l.b16 %v249
      %v842 = vunpack.c.l.b16 %v250
      %v843 = vunpack.c.l.b16 %v251
      %v844 = vunpack.c.l.b16 %v252
      %v845 = vunpack.c.l.b16 %v253
      %v846 = vunpack.c.l.b16 %v254
      %v847 = vunpack.c.l.b16 %v255
      %v848 = vunpack.c.l.b16 %v256
      %v849 = vunpack.c.l.b16 %v257
      %v850 = vunpack.c.l.b16 %v258
      %v851 = vunpack.c.l.b16 %v259
      %v852 = vunpack.c.l.b16 %v260
      %v853 = vunpack.c.l.b16 %v261
      %v854 = vunpack.c.l.b16 %v262
      %v855 = vunpack.c.l.b16 %v263
      %v856 = vunpack.c.l.b16 %v264
      %v857 = vunpack.c.l.b16 %v265
      %v858 = vunpack.c.l.b16 %v266
      %v859 = vunpack.c.l.b16 %v267
      %v860 = vunpack.c.l.b16 %v268
      %v861 = vunpack.c.l.b16 %v269
      %v862 = vunpack.c.l.b16 %v270
      %v863 = vunpack.c.l.b16 %v271
      %v864 = vunpack.c.l.b16 %v272
      %v865 = vunpack.c.l.b16 %v273
      %v866 = vunpack.c.l.b16 %v274
      %v867 = vunpack.c.l.b16 %v275
      %v868 = vunpack.c.l.b16 %v276
      %v869 = vunpack.c.l.b16 %v277
      %v870 = vunpack.c.l.b16 %v278
      %v871 = vunpack.c.l.b16 %v279
      %v872 = vunpack.c.l.b16 %v280
      %v873 = vunpack.c.l.b16 %v281
      %v874 = vunpack.c.l.b16 %v282
      %v875 = vunpack.c.l.b16 %v283
      %v876 = vunpack.c.l.b16 %v284
      %v877 = vunpack.c.l.b16 %v285
      %v878 = vunpack.c.l.b16 %v286
      %v879 = vunpack.c.l.b16 %v287
      %v880 = vunpack.c.l.b16 %v288
      %v881 = vunpack.c.l.b16 %v289
      %v882 = vunpack.c.l.b16 %v290
      %v883 = vunpack.c.l.b16 %v291
      %v884 = vunpack.c.l.b16 %v292
      %v885 = vunpack.c.l.b16 %v293
      %v886 = vunpack.c.l.b16 %v294
      %v887 = vunpack.c.l.b16 %v295
      %v888 = vunpack.c.l.b16 %v296
      %v889 = vunpack.c.l.b16 %v297
      %v890 = vunpack.c.l.b16 %v298
      %v891 = vunpack.c.l.b16 %v299
      %v892 = vunpack.c.l.b16 %v300
      %v893 = vunpack.c.l.b16 %v301
      %v894 = vunpack.c.l.b16 %v302
      %v895 = vunpack.c.l.b16 %v303
      %v896 = vunpack.c.l.b16 %v304
      %v897 = vunpack.c.l.b16 %v305
      %v898 = vunpack.c.l.b16 %v306
      %v899 = vunpack.c.l.b16 %v307
      %v900 = vunpack.c.l.b16 %v308
      %v901 = vunpack.c.l.b16 %v309
      %v902 = vunpack.c.l.b16 %v310
      %v903 = vunpack.c.l.b16 %v311
      %v904 = vunpack.c.l.b16 %v312
      %v905 = vunpack.c.l.b16 %v313
      %v906 = vunpack.c.l.b16 %v314
      %v907 = vunpack.c.l.b16 %v315
      %v908 = vunpack.c.l.b16 %v316
      %v909 = vunpack.c.l.b16 %v317
      %v910 = vunpack.c.l.b16 %v318
      %v911 = vunpack.c.l.b16 %v319
      %v912 = vunpack.c.l.b16 %v320
      %v913 = vunpack.c.l.b16 %v321
      %v914 = vunpack.c.l.b16 %v322
      %v915 = vunpack.c.l.b16 %v323
      %v916 = vunpack.c.l.b16 %v324
      %v917 = vunpack.c.l.b16 %v325
      %v918 = vunpack.c.l.b16 %v326
      %v919 = vunpack.c.l.b16 %v327
      %v920 = vunpack.c.l.b16 %v328
      %v921 = vunpack.c.l.b16 %v329
      %v922 = vunpack.c.l.b16 %v330
      %v923 = vunpack.c.l.b16 %v331
      %v924 = vunpack.c.l.b16 %v332
      %v925 = vunpack.c.l.b16 %v333
      %v926 = vunpack.c.l.b16 %v334
      %v927 = vunpack.c.l.b16 %v335
      %v928 = vunpack.c.l.b16 %v336
      %v929 = vunpack.c.l.b16 %v337
      %v930 = vunpack.c.l.b16 %v338
      %v931 = vunpack.c.l.b16 %v339
      %v932 = vunpack.c.l.b16 %v340
      %v933 = vunpack.c.l.b16 %v341
      %v934 = vunpack.c.l.b16 %v342
      %v935 = vunpack.c.l.b16 %v343
      %v936 = vunpack.c.l.b16 %v344
      %v937 = vunpack.c.l.b16 %v345
      %v938 = vunpack.c.l.b16 %v346
      %v939 = vunpack.c.l.b16 %v347
      %v940 = vunpack.c.l.b16 %v348
      %v941 = vunpack.c.l.b16 %v349
      %v942 = vunpack.c.l.b16 %v350
      %v943 = vunpack.c.l.b16 %v351
      %v944 = vunpack.c.l.b16 %v352
      %v945 = vunpack.c.l.b16 %v353
      %v946 = vunpack.c.l.b16 %v354
      %v947 = vunpack.c.l.b16 %v355
      %v948 = vunpack.c.l.b16 %v356
      %v949 = vunpack.c.l.b16 %v357
      %v950 = vunpack.c.l.b16 %v358
      %v951 = vunpack.c.l.b16 %v359
      %v952 = vunpack.c.l.b16 %v360
      %v953 = vunpack.c.l.b16 %v361
      %v954 = vunpack.c.l.b16 %v362
      %v955 = vunpack.c.l.b16 %v363
      %v956 = vunpack.c.l.b16 %v364
      %v957 = vunpack.c.l.b16 %v365
      %v958 = vunpack.c.l.b16 %v366
      %v959 = vunpack.c.l.b16 %v367
      %v960 = vunpack.c.l.b16 %v368
      %v961 = vunpack.c.l.b16 %v369
      %v962 = vunpack.c.l.b16 %v370
      %v963 = vunpack.c.l.b16 %v371
      %v964 = vunpack.c.l.b16 %v372
      %v965 = vunpack.c.l.b16 %v373
      %v966 = vunpack.c.l.b16 %v374
      %v967 = vunpack.c.l.b16 %v375
      %v968 = vunpack.c.l.b16 %v376
      %v969 = vunpack.c.l.b16 %v377
      %v970 = vunpack.c.l.b16 %v378
      %v971 = vunpack.c.l.b16 %v379
      %v972 = vunpack.c.l.b16 %v380
      %v973 = vunpack.c.l.b16 %v381
      %v974 = vunpack.c.l.b16 %v382
      %v975 = vunpack.c.l.b16 %v383
      %v976 = vunpack.c.l.b16 %v384
      %v977 = vunpack.c.l.b16 %v385
      %v978 = vunpack.c.l.b16 %v386
      %v979 = vunpack.c.l.b16 %v387
      %v980 = vunpack.c.l.b16 %v388
      %v981 = vunpack.c.l.b16 %v389
      %v982 = vunpack.c.l.b16 %v390
      %v983 = vunpack.c.l.b16 %v391
      %v984 = vunpack.c.l.b16 %v392
      %v985 = vunpack.c.l.b16 %v393
      %v986 = vunpack.c.l.b16 %v394
      %v987 = vunpack.c.l.b16 %v395
      %v988 = vunpack.c.l.b16 %v396
      %v989 = vunpack.c.l.b16 %v397
      %v990 = vunpack.c.l.b16 %v398
      %v991 = vunpack.c.l.b16 %v399
      %v992 = vunpack.c.l.b16 %v400
      %v993 = vunpack.c.l.b16 %v401
      %v994 = vunpack.c.l.b16 %v402
      %v995 = vunpack.c.l.b16 %v403
      %v996 = vunpack.c.l.b16 %v404
      %v997 = vunpack.c.l.b16 %v405
      %v998 = vunpack.c.l.b16 %v406
      %v999 = vunpack.c.l.b16 %v407
      %v1000 = vunpack.c.l.b16 %v408
      %v1001 = vunpack.c.l.b16 %v409
      %v1002 = vunpack.c.l.b16 %v410
      %v1003 = vunpack.c.l.b16 %v411
      %v1004 = vunpack.c.l.b16 %v412
      %v1005 = vunpack.c.l.b16 %v413
      %v1006 = vunpack.c.l.b16 %v414
      %v1007 = vunpack.c.l.b16 %v415
      %v1008 = vunpack.c.l.b16 %v416
      %v1009 = vunpack.c.l.b16 %v417
      %v1010 = vunpack.c.l.b16 %v418
      %v1011 = vunpack.c.l.b16 %v419
      %v1012 = vunpack.c.l.b16 %v420
      %v1013 = vunpack.c.l.b16 %v421
      %v1014 = vunpack.c.l.b16 %v422
      %v1015 = vunpack.c.l.b16 %v423
      %v1016 = vunpack.c.l.b16 %v424
      %v1017 = vunpack.c.l.b16 %v425
      %v1018 = vunpack.c.l.b16 %v426
      %v1019 = vunpack.c.l.b16 %v427
      %v1020 = vunpack.c.l.b16 %v428
      %v1021 = vunpack.c.l.b16 %v429
      %v1022 = vunpack.c.l.b16 %v430
      %v1023 = vunpack.c.l.b16 %v431
      %v1024 = vunpack.c.l.b16 %v432
      %v1025 = vunpack.c.l.b16 %v433
      %v1026 = vunpack.c.l.b16 %v434
      %v1027 = vunpack.c.l.b16 %v435
      %v1028 = vunpack.c.l.b16 %v436
      %v1029 = vunpack.c.l.b16 %v437
      %v1030 = vunpack.c.l.b16 %v438
      %v1031 = vunpack.c.l.b16 %v439
      %v1032 = vunpack.c.l.b16 %v440
      %v1033 = vunpack.c.l.b16 %v441
      %v1034 = vunpack.c.l.b16 %v442
      %v1035 = vunpack.c.l.b16 %v443
      %v1036 = vunpack.c.l.b16 %v444
      %v1037 = vunpack.c.l.b16 %v445
      %v1038 = vunpack.c.l.b16 %v446
      %v1039 = vunpack.c.l.b16 %v447
      %v1040 = vunpack.c.l.b16 %v448
      %v1041 = vunpack.c.l.b16 %v449
      %v1042 = vunpack.c.l.b16 %v450
      %v1043 = vunpack.c.l.b16 %v451
      %v1044 = vunpack.c.l.b16 %v452
      %v1045 = vunpack.c.l.b16 %v453
      %v1046 = vunpack.c.l.b16 %v454
      %v1047 = vunpack.c.l.b16 %v455
      %v1048 = vunpack.c.l.b16 %v456
      %v1049 = vunpack.c.l.b16 %v457
      %v1050 = vunpack.c.l.b16 %v458
      %v1051 = vunpack.c.l.b16 %v459
      %v1052 = vunpack.c.l.b16 %v460
      %v1053 = vunpack.c.l.b16 %v461
      %v1054 = vunpack.c.l.b16 %v462
      %v1055 = vunpack.c.l.b16 %v463
      %v1056 = vunpack.c.l.b16 %v464
      %v1057 = vunpack.c.l.b16 %v465
      %v1058 = vunpack.c.l.b16 %v466
      %v1059 = vunpack.c.l.b16 %v467
      %v1060 = vunpack.c.l.b16 %v468
      %v1061 = vunpack.c.l.b16 %v469
      %v1062 = vunpack.c.l.b16 %v470
      %v1063 = vunpack.c.l.b16 %v471
      %v1064 = vunpack.c.l.b16 %v472
      %v1065 = vunpack.c.l.b16 %v473
      %v1066 = vunpack.c.l.b16 %v474
      %v1067 = vunpack.c.l.b16 %v475
      %v1068 = vunpack.c.l.b16 %v476
      %v1069 = vunpack.c.l.b16 %v477
      %v1070 = vunpack.c.l.b16 %v478
      %v1071 = vunpack.c.l.b16 %v479
      %v1072 = vunpack.c.l.b16 %v480
      %v1073 = vunpack.c.l.b16 %v481
      %v1074 = vunpack.c.l.b16 %v482
      %v1075 = vunpack.c.l.b16 %v483
      %v1076 = vunpack.c.l.b16 %v484
      %v1077 = vunpack.c.l.b16 %v485
      %v1078 = vunpack.c.l.b16 %v486
      %v1079 = vunpack.c.l.b16 %v487
      %v1080 = vunpack.c.l.b16 %v488
      %v1081 = vunpack.c.l.b16 %v489
      %v1082 = vpack.c.b16 %v795, %v794
      %v1083 = vpack.c.b16 %v797, %v796
      %v1084 = vpack.c.b16 %v799, %v798
      %v1085 = vpack.c.b16 %v801, %v800
      %v1086 = vpack.c.b16 %v803, %v802
      %v1087 = vpack.c.b16 %v805, %v804
      %v1088 = vpack.c.b16 %v807, %v806
      %v1089 = vpack.c.b16 %v809, %v808
      %v1090 = vpack.c.b16 %v811, %v810
      %v1091 = vpack.c.b16 %v813, %v812
      %v1092 = vpack.c.b16 %v815, %v814
      %v1093 = vpack.c.b16 %v817, %v816
      %v1094 = vpack.c.b16 %v819, %v818
      %v1095 = vpack.c.b16 %v821, %v820
      %v1096 = vpack.c.b16 %v823, %v822
      %v1097 = vpack.c.b16 %v825, %v824
      %v1098 = vpack.c.b16 %v827, %v826
      %v1099 = vpack.c.b16 %v829, %v828
      %v1100 = vpack.c.b16 %v831, %v830
      %v1101 = vpack.c.b16 %v833, %v832
      %v1102 = vpack.c.b16 %v835, %v834
      %v1103 = vpack.c.b16 %v837, %v836
      %v1104 = vpack.c.b16 %v839, %v838
      %v1105 = vpack.c.b16 %v841, %v840
      %v1106 = vpack.c.b16 %v843, %v842
      %v1107 = vpack.c.b16 %v845, %v844
      %v1108 = vpack.c.b16 %v847, %v846
      %v1109 = vpack.c.b16 %v849, %v848
      %v1110 = vpack.c.b16 %v851, %v850
      %v1111 = vpack.c.b16 %v853, %v852
      %v1112 = vpack.c.b16 %v855, %v854
      %v1113 = vpack.c.b16 %v857, %v856
      %v1114 = vpack.c.b16 %v859, %v858
      %v1115 = vpack.c.b16 %v861, %v860
      %v1116 = vpack.c.b16 %v863, %v862
      %v1117 = vpack.c.b16 %v865, %v864
      %v1118 = vpack.c.b16 %v867, %v866
      %v1119 = vpack.c.b16 %v869, %v868
      %v1120 = vpack.c.b16 %v871, %v870
      %v1121 = vpack.c.b16 %v873, %v872
      %v1122 = vpack.c.b16 %v875, %v874
      %v1123 = vpack.c.b16 %v877, %v876
      %v1124 = vpack.c.b16 %v879, %v878
      %v1125 = vpack.c.b16 %v881, %v880
      %v1126 = vpack.c.b16 %v883, %v882
      %v1127 = vpack.c.b16 %v885, %v884
      %v1128 = vpack.c.b16 %v887, %v886
      %v1129 = vpack.c.b16 %v889, %v888
      %v1130 = vpack.c.b16 %v891, %v890
      %v1131 = vpack.c.b16 %v893, %v892
      %v1132 = vpack.c.b16 %v895, %v894
      %v1133 = vpack.c.b16 %v897, %v896
      %v1134 = vpack.c.b16 %v899, %v898
      %v1135 = vpack.c.b16 %v901, %v900
      %v1136 = vpack.c.b16 %v903, %v902
      %v1137 = vpack.c.b16 %v905, %v904
      %v1138 = vpack.c.b16 %v907, %v906
      %v1139 = vpack.c.b16 %v909, %v908
      %v1140 = vpack.c.b16 %v911, %v910
      %v1141 = vpack.c.b16 %v913, %v912
      %v1142 = vpack.c.b16 %v915, %v914
      %v1143 = vpack.c.b16 %v917, %v916
      %v1144 = vpack.c.b16 %v919, %v918
      %v1145 = vpack.c.b16 %v921, %v920
      %v1146 = vpack.c.b16 %v923, %v922
      %v1147 = vpack.c.b16 %v925, %v924
      %v1148 = vpack.c.b16 %v927, %v926
      %v1149 = vpack.c.b16 %v929, %v928
      %v1150 = vpack.c.b16 %v931, %v930
      %v1151 = vpack.c.b16 %v933, %v932
      %v1152 = vpack.c.b16 %v935, %v934
      %v1153 = vpack.c.b16 %v937, %v936
      %v1154 = vpack.c.b16 %v939, %v938
      %v1155 = vpack.c.b16 %v941, %v940
      %v1156 = vpack.c.b16 %v943, %v942
      %v1157 = vpack.c.b16 %v945, %v944
      %v1158 = vpack.c.b16 %v947, %v946
      %v1159 = vpack.c.b16 %v949, %v948
      %v1160 = vpack.c.b16 %v951, %v950
      %v1161 = vpack.c.b16 %v953, %v952
      %v1162 = vpack.c.b16 %v955, %v954
      %v1163 = vpack.c.b16 %v957, %v956
      %v1164 = vpack.c.b16 %v959, %v958
      %v1165 = vpack.c.b16 %v961, %v960
      %v1166 = vpack.c.b16 %v963, %v962
      %v1167 = vpack.c.b16 %v965, %v964
      %v1168 = vpack.c.b16 %v967, %v966
      %v1169 = vpack.c.b16 %v969, %v968
      %v1170 = vpack.c.b16 %v971, %v970
      %v1171 = vpack.c.b16 %v973, %v972
      %v1172 = vpack.c.b16 %v975, %v974
      %v1173 = vpack.c.b16 %v977, %v976
      %v1174 = vpack.c.b16 %v979, %v978
      %v1175 = vpack.c.b16 %v981, %v980
      %v1176 = vpack.c.b16 %v983, %v982
      %v1177 = vpack.c.b16 %v985, %v984
      %v1178 = vpack.c.b16 %v987, %v986
      %v1179 = vpack.c.b16 %v989, %v988
      %v1180 = vpack.c.b16 %v991, %v990
      %v1181 = vpack.c.b16 %v993, %v992
      %v1182 = vpack.c.b16 %v995, %v994
      %v1183 = vpack.c.b16 %v997, %v996
      %v1184 = vpack.c.b16 %v999, %v998
      %v1185 = vpack.c.b16 %v1001, %v1000
      %v1186 = vpack.c.b16 %v1003, %v1002
      %v1187 = vpack.c.b16 %v1005, %v1004
      %v1188 = vpack.c.b16 %v1007, %v1006
      %v1189 = vpack.c.b16 %v1009, %v1008
      %v1190 = vpack.c.b16 %v1011, %v1010
      %v1191 = vpack.c.b16 %v1013, %v1012
      %v1192 = vpack.c.b16 %v1015, %v1014
      %v1193 = vpack.c.b16 %v1017, %v1016
      %v1194 = vpack.c.b16 %v1019, %v1018
      %v1195 = vpack.c.b16 %v1021, %v1020
      %v1196 = vpack.c.b16 %v1023, %v1022
      %v1197 = vpack.c.b16 %v1025, %v1024
      %v1198 = vpack.c.b16 %v1027, %v1026
      %v1199 = vpack.c.b16 %v1029, %v1028
      %v1200 = vpack.c.b16 %v1031, %v1030
      %v1201 = vpack.c.b16 %v1033, %v1032
      %v1202 = vpack.c.b16 %v1035, %v1034
      %v1203 = vpack.c.b16 %v1037, %v1036
      %v1204 = vpack.c.b16 %v1039, %v1038
      %v1205 = vpack.c.b16 %v1041, %v1040
      %v1206 = vpack.c.b16 %v1043, %v1042
      %v1207 = vpack.c.b16 %v1045, %v1044
      %v1208 = vpack.c.b16 %v1047, %v1046
      %v1209 = vpack.c.b16 %v1049, %v1048
      %v1210 = vpack.c.b16 %v1051, %v1050
      %v1211 = vpack.c.b16 %v1053, %v1052
      %v1212 = vpack.c.b16 %v1055, %v1054
      %v1213 = vpack.c.b16 %v1057, %v1056
      %v1214 = vpack.c.b16 %v1059, %v1058
      %v1215 = vpack.c.b16 %v1061, %v1060
      %v1216 = vpack.c.b16 %v1063, %v1062
      %v1217 = vpack.c.b16 %v1065, %v1064
      %v1218 = vpack.c.b16 %v1067, %v1066
      %v1219 = vpack.c.b16 %v1069, %v1068
      %v1220 = vpack.c.b16 %v1071, %v1070
      %v1221 = vpack.c.b16 %v1073, %v1072
      %v1222 = vpack.c.b16 %v1075, %v1074
      %v1223 = vpack.c.b16 %v1077, %v1076
      %v1224 = vpack.c.b16 %v1079, %v1078
      %v1225 = vpack.c.b16 %v1081, %v1080
      %v1386 = vunpack.c.l.b16 %v490
      %v1387 = vunpack.c.l.b16 %v491
      %v1388 = vunpack.c.l.b16 %v492
      %v1389 = vunpack.c.l.b16 %v493
      %v1390 = vunpack.c.l.b16 %v494
      %v1391 = vunpack.c.l.b16 %v495
      %v1392 = vunpack.c.l.b16 %v496
      %v1393 = vunpack.c.l.b16 %v497
      %v1394 = vunpack.c.l.b16 %v498
      %v1395 = vunpack.c.l.b16 %v499
      %v1396 = vunpack.c.l.b16 %v500
      %v1397 = vunpack.c.l.b16 %v501
      %v1398 = vunpack.c.l.b16 %v502
      %v1399 = vunpack.c.l.b16 %v503
      %v1400 = vunpack.c.l.b16 %v504
      %v1401 = vunpack.c.l.b16 %v505
      %v1402 = vpack.c.b16 %v1387, %v1386
      %v1403 = vpack.c.b16 %v1389, %v1388
      %v1404 = vpack.c.b16 %v1391, %v1390
      %v1405 = vpack.c.b16 %v1393, %v1392
      %v1406 = vpack.c.b16 %v1395, %v1394
      %v1407 = vpack.c.b16 %v1397, %v1396
      %v1408 = vpack.c.b16 %v1399, %v1398
      %v1409 = vpack.c.b16 %v1401, %v1400
      %1418 = vmatprep.subr.bf16.mxu0 0
      %1419 = vmatpush1.bf16.msra.mxu0 %v1402
      %1420 = vmatprep.subr.bf16.mxu0 0
      %1421 = vmatpush1.bf16.msra.mxu0 %v1403
      %1422 = vmatprep.subr.bf16.mxu0 0
      %1423 = vmatpush1.bf16.msra.mxu0 %v1404
      %1424 = vmatprep.subr.bf16.mxu0 0
      %1425 = vmatpush1.bf16.msra.mxu0 %v1405
      %1426 = vmatprep.subr.bf16.mxu0 0
      %1427 = vmatpush1.bf16.msra.mxu0 %v1406
      %1428 = vmatprep.subr.bf16.mxu0 0
      %1429 = vmatpush1.bf16.msra.mxu0 %v1407
      %1430 = vmatprep.subr.bf16.mxu0 0
      %1431 = vmatpush1.bf16.msra.mxu0 %v1408
      %1432 = vmatprep.subr.bf16.mxu0 0
      %1433 = vmatpush1.bf16.msra.mxu0 %v1409
      %1434 = vmatprep.subr.bf16.mxu0 0
      %1435 = vmatpush1.bf16.msra.mxu0 0
      %1436 = vmatprep.subr.bf16.mxu0 0
      %1437 = vmatpush1.bf16.msra.mxu0 0
      %1438 = vmatprep.subr.bf16.mxu0 0
      %1439 = vmatpush1.bf16.msra.mxu0 0
      %1440 = vmatprep.subr.bf16.mxu0 0
      %1441 = vmatpush1.bf16.msra.mxu0 0
      %1442 = vmatprep.subr.bf16.mxu0 0
      %1443 = vmatpush1.bf16.msra.mxu0 0
      %1444 = vmatprep.subr.bf16.mxu0 0
      %1445 = vmatpush1.bf16.msra.mxu0 0
      %1446 = vmatprep.subr.bf16.mxu0 0
      %1447 = vmatpush1.bf16.msra.mxu0 0
      %1448 = vmatprep.subr.bf16.mxu0 0
      %1449 = vmatpush1.bf16.msra.mxu0 0
      %1450 = vmatprep.mubr.bf16.mxu0 0
      %1451 = vmatmul.mubr.bf16.gmra.mrb[0].mxu0 %v1082
      %v1452 = vpop.f32.mrb[0].mxu0
      %v1453 = vadd.f32 0.0, %v1452
      %v1454 = vpop.f32.mrb[0].mxu0
      %v1455 = vpop.f32.mrb[0].mxu0
      %v1456 = vadd.f32 0.0, %v1455
      %v1457 = vpop.f32.mrb[0].mxu0
      %1458 = vmatprep.mubr.bf16.mxu0 0
      %1459 = vmatmul.mubr.bf16.gmra.mrb[0].mxu0 %v1083
      %v1460 = vpop.f32.mrb[0].mxu0
      %v1461 = vadd.f32 0.0, %v1460
      %v1462 = vpop.f32.mrb[0].mxu0
      %v1463 = vpop.f32.mrb[0].mxu0
      %v1464 = vadd.f32 0.0, %v1463
      %v1465 = vpop.f32.mrb[0].mxu0
      %1466 = vmatprep.mubr.bf16.mxu0 0
      %1467 = vmatmul.mubr.bf16.gmra.mrb[0].mxu0 %v1084
      %v1468 = vpop.f32.mrb[0].mxu0
      %v1469 = vadd.f32 0.0, %v1468
      %v1470 = vpop.f32.mrb[0].mxu0
      %v1471 = vpop.f32.mrb[0].mxu0
      %v1472 = vadd.f32 0.0, %v1471
      %v1473 = vpop.f32.mrb[0].mxu0
      %1474 = vmatprep.mubr.bf16.mxu0 0
      %1475 = vmatmul.mubr.bf16.gmra.mrb[0].mxu0 %v1085
      %v1476 = vpop.f32.mrb[0].mxu0
      %v1477 = vadd.f32 0.0, %v1476
      %v1478 = vpop.f32.mrb[0].mxu0
      %v1479 = vpop.f32.mrb[0].mxu0
      %v1480 = vadd.f32 0.0, %v1479
      %v1481 = vpop.f32.mrb[0].mxu0
      %1482 = vmatprep.mubr.bf16.mxu0 0
      %1483 = vmatmul.mubr.bf16.gmra.mrb[0].mxu0 %v1086
      %v1484 = vpop.f32.mrb[0].mxu0
      %v1485 = vadd.f32 0.0, %v1484
      %v1486 = vpop.f32.mrb[0].mxu0
      %v1487 = vpop.f32.mrb[0].mxu0
      %v1488 = vadd.f32 0.0, %v1487
      %v1489 = vpop.f32.mrb[0].mxu0
      %1490 = vmatprep.mubr.bf16.mxu0 0
      %1491 = vmatmul.mubr.bf16.gmra.mrb[0].mxu0 %v1087
      %v1492 = vpop.f32.mrb[0].mxu0
      %v1493 = vadd.f32 0.0, %v1492
      %v1494 = vpop.f32.mrb[0].mxu0
      %v1495 = vpop.f32.mrb[0].mxu0
      %v1496 = vadd.f32 0.0, %v1495
      %v1497 = vpop.f32.mrb[0].mxu0
      %1498 = vmatprep.mubr.bf16.mxu0 0
      %1499 = vmatmul.mubr.bf16.gmra.mrb[0].mxu0 %v1088
      %v1500 = vpop.f32.mrb[0].mxu0
      %v1501 = vadd.f32 0.0, %v1500
      %v1502 = vpop.f32.mrb[0].mxu0
      %v1503 = vpop.f32.mrb[0].mxu0
      %v1504 = vadd.f32 0.0, %v1503
      %v1505 = vpop.f32.mrb[0].mxu0
      %1506 = vmatprep.mubr.bf16.mxu0 0
      %1507 = vmatmul.mubr.bf16.gmra.mrb[0].mxu0 %v1089
      %v1508 = vpop.f32.mrb[0].mxu0
      %v1509 = vadd.f32 0.0, %v1508
      %v1510 = vpop.f32.mrb[0].mxu0
      %v1511 = vpop.f32.mrb[0].mxu0
      %v1512 = vadd.f32 0.0, %v1511
      %v1513 = vpop.f32.mrb[0].mxu0
      %1514 = vmatprep.mubr.bf16.mxu0 0
      %1515 = vmatmul.mubr.bf16.gmra.mrb[0].mxu0 %v1090
      %v1516 = vpop.f32.mrb[0].mxu0
      %v1517 = vadd.f32 0.0, %v1516
      %v1518 = vpop.f32.mrb[0].mxu0
      %v1519 = vpop.f32.mrb[0].mxu0
      %v1520 = vadd.f32 0.0, %v1519
      %v1521 = vpop.f32.mrb[0].mxu0
      %1522 = vmatprep.mubr.bf16.mxu0 0
      %1523 = vmatmul.mubr.bf16.gmra.mrb[0].mxu0 %v1091
      %v1524 = vpop.f32.mrb[0].mxu0
      %v1525 = vadd.f32 0.0, %v1524
      %v1526 = vpop.f32.mrb[0].mxu0
      %v1527 = vpop.f32.mrb[0].mxu0
      %v1528 = vadd.f32 0.0, %v1527
      %v1529 = vpop.f32.mrb[0].mxu0
      %1530 = vmatprep.mubr.bf16.mxu0 0
      %1531 = vmatmul.mubr.bf16.gmra.mrb[0].mxu0 %v1092
      %v1532 = vpop.f32.mrb[0].mxu0
      %v1533 = vadd.f32 0.0, %v1532
      %v1534 = vpop.f32.mrb[0].mxu0
      %v1535 = vpop.f32.mrb[0].mxu0
      %v1536 = vadd.f32 0.0, %v1535
      %v1537 = vpop.f32.mrb[0].mxu0
      %1538 = vmatprep.mubr.bf16.mxu0 0
      %1539 = vmatmul.mubr.bf16.gmra.mrb[0].mxu0 %v1093
      %v1540 = vpop.f32.mrb[0].mxu0
      %v1541 = vadd.f32 0.0, %v1540
      %v1542 = vpop.f32.mrb[0].mxu0
      %v1543 = vpop.f32.mrb[0].mxu0
      %v1544 = vadd.f32 0.0, %v1543
      %v1545 = vpop.f32.mrb[0].mxu0
      %1546 = vmatprep.mubr.bf16.mxu0 0
      %1547 = vmatmul.mubr.bf16.gmra.mrb[0].mxu0 %v1094
      %v1548 = vpop.f32.mrb[0].mxu0
      %v1549 = vadd.f32 0.0, %v1548
      %v1550 = vpop.f32.mrb[0].mxu0
      %v1551 = vpop.f32.mrb[0].mxu0
      %v1552 = vadd.f32 0.0, %v1551
      %v1553 = vpop.f32.mrb[0].mxu0
      %1554 = vmatprep.mubr.bf16.mxu0 0
      %1555 = vmatmul.mubr.bf16.gmra.mrb[0].mxu0 %v1095
      %v1556 = vpop.f32.mrb[0].mxu0
      %v1557 = vadd.f32 0.0, %v1556
      %v1558 = vpop.f32.mrb[0].mxu0
      %v1559 = vpop.f32.mrb[0].mxu0
      %v1560 = vadd.f32 0.0, %v1559
      %v1561 = vpop.f32.mrb[0].mxu0
      %1562 = vmatprep.mubr.bf16.mxu0 0
      %1563 = vmatmul.mubr.bf16.gmra.mrb[0].mxu0 %v1096
      %v1564 = vpop.f32.mrb[0].mxu0
      %v1565 = vadd.f32 0.0, %v1564
      %v1566 = vpop.f32.mrb[0].mxu0
      %v1567 = vpop.f32.mrb[0].mxu0
      %v1568 = vadd.f32 0.0, %v1567
      %v1569 = vpop.f32.mrb[0].mxu0
      %1570 = vmatprep.mubr.bf16.mxu0 0
      %1571 = vmatmul.mubr.bf16.gmra.mrb[0].mxu0 %v1097
      %v1572 = vpop.f32.mrb[0].mxu0
      %v1573 = vadd.f32 0.0, %v1572
      %v1574 = vpop.f32.mrb[0].mxu0
      %v1575 = vpop.f32.mrb[0].mxu0
      %v1576 = vadd.f32 0.0, %v1575
      %v1577 = vpop.f32.mrb[0].mxu0
      %1578 = vmatprep.mubr.bf16.mxu0 0
      %1579 = vmatmul.mubr.bf16.gmra.mrb[0].mxu0 %v1098
      %v1580 = vpop.f32.mrb[0].mxu0
      %v1581 = vadd.f32 0.0, %v1580
      %v1582 = vpop.f32.mrb[0].mxu0
      %v1583 = vpop.f32.mrb[0].mxu0
      %v1584 = vadd.f32 0.0, %v1583
      %v1585 = vpop.f32.mrb[0].mxu0
      %1586 = vmatprep.mubr.bf16.mxu0 0
      %1587 = vmatmul.mubr.bf16.gmra.mrb[0].mxu0 %v1099
      %v1588 = vpop.f32.mrb[0].mxu0
      %v1589 = vadd.f32 0.0, %v1588
      %v1590 = vpop.f32.mrb[0].mxu0
      %v1591 = vpop.f32.mrb[0].mxu0
      %v1592 = vadd.f32 0.0, %v1591
      %v1593 = vpop.f32.mrb[0].mxu0
      %1594 = vmatprep.mubr.bf16.mxu0 0
      %1595 = vmatmul.mubr.bf16.gmra.mrb[0].mxu0 %v1100
      %v1596 = vpop.f32.mrb[0].mxu0
      %v1597 = vadd.f32 0.0, %v1596
      %v1598 = vpop.f32.mrb[0].mxu0
      %v1599 = vpop.f32.mrb[0].mxu0
      %v1600 = vadd.f32 0.0, %v1599
      %v1601 = vpop.f32.mrb[0].mxu0
      %1602 = vmatprep.mubr.bf16.mxu0 0
      %1603 = vmatmul.mubr.bf16.gmra.mrb[0].mxu0 %v1101
      %v1604 = vpop.f32.mrb[0].mxu0
      %v1605 = vadd.f32 0.0, %v1604
      %v1606 = vpop.f32.mrb[0].mxu0
      %v1607 = vpop.f32.mrb[0].mxu0
      %v1608 = vadd.f32 0.0, %v1607
      %v1609 = vpop.f32.mrb[0].mxu0
      %1610 = vmatprep.mubr.bf16.mxu0 0
      %1611 = vmatmul.mubr.bf16.gmra.mrb[0].mxu0 %v1102
      %v1612 = vpop.f32.mrb[0].mxu0
      %v1613 = vadd.f32 0.0, %v1612
      %v1614 = vpop.f32.mrb[0].mxu0
      %v1615 = vpop.f32.mrb[0].mxu0
      %v1616 = vadd.f32 0.0, %v1615
      %v1617 = vpop.f32.mrb[0].mxu0
      %1618 = vmatprep.mubr.bf16.mxu0 0
      %1619 = vmatmul.mubr.bf16.gmra.mrb[0].mxu0 %v1103
      %v1620 = vpop.f32.mrb[0].mxu0
      %v1621 = vadd.f32 0.0, %v1620
      %v1622 = vpop.f32.mrb[0].mxu0
      %v1623 = vpop.f32.mrb[0].mxu0
      %v1624 = vadd.f32 0.0, %v1623
      %v1625 = vpop.f32.mrb[0].mxu0
      %1626 = vmatprep.mubr.bf16.mxu0 0
      %1627 = vmatmul.mubr.bf16.gmra.mrb[0].mxu0 %v1104
      %v1628 = vpop.f32.mrb[0].mxu0
      %v1629 = vadd.f32 0.0, %v1628
      %v1630 = vpop.f32.mrb[0].mxu0
      %v1631 = vpop.f32.mrb[0].mxu0
      %v1632 = vadd.f32 0.0, %v1631
      %v1633 = vpop.f32.mrb[0].mxu0
      %1634 = vmatprep.mubr.bf16.mxu0 0
      %1635 = vmatmul.mubr.bf16.gmra.mrb[0].mxu0 %v1105
      %v1636 = vpop.f32.mrb[0].mxu0
      %v1637 = vadd.f32 0.0, %v1636
      %v1638 = vpop.f32.mrb[0].mxu0
      %v1639 = vpop.f32.mrb[0].mxu0
      %v1640 = vadd.f32 0.0, %v1639
      %v1641 = vpop.f32.mrb[0].mxu0
      %1642 = vmatprep.mubr.bf16.mxu0 0
      %1643 = vmatmul.mubr.bf16.gmra.mrb[0].mxu0 %v1106
      %v1644 = vpop.f32.mrb[0].mxu0
      %v1645 = vadd.f32 0.0, %v1644
      %v1646 = vpop.f32.mrb[0].mxu0
      %v1647 = vpop.f32.mrb[0].mxu0
      %v1648 = vadd.f32 0.0, %v1647
      %v1649 = vpop.f32.mrb[0].mxu0
      %1650 = vmatprep.mubr.bf16.mxu0 0
      %1651 = vmatmul.mubr.bf16.gmra.mrb[0].mxu0 %v1107
      %v1652 = vpop.f32.mrb[0].mxu0
      %v1653 = vadd.f32 0.0, %v1652
      %v1654 = vpop.f32.mrb[0].mxu0
      %v1655 = vpop.f32.mrb[0].mxu0
      %v1656 = vadd.f32 0.0, %v1655
      %v1657 = vpop.f32.mrb[0].mxu0
      %1658 = vmatprep.mubr.bf16.mxu0 0
      %1659 = vmatmul.mubr.bf16.gmra.mrb[0].mxu0 %v1108
      %v1660 = vpop.f32.mrb[0].mxu0
      %v1661 = vadd.f32 0.0, %v1660
      %v1662 = vpop.f32.mrb[0].mxu0
      %v1663 = vpop.f32.mrb[0].mxu0
      %v1664 = vadd.f32 0.0, %v1663
      %v1665 = vpop.f32.mrb[0].mxu0
      %1666 = vmatprep.mubr.bf16.mxu0 0
      %1667 = vmatmul.mubr.bf16.gmra.mrb[0].mxu0 %v1109
      %v1668 = vpop.f32.mrb[0].mxu0
      %v1669 = vadd.f32 0.0, %v1668
      %v1670 = vpop.f32.mrb[0].mxu0
      %v1671 = vpop.f32.mrb[0].mxu0
      %v1672 = vadd.f32 0.0, %v1671
      %v1673 = vpop.f32.mrb[0].mxu0
      %1674 = vmatprep.mubr.bf16.mxu0 0
      %1675 = vmatmul.mubr.bf16.gmra.mrb[0].mxu0 %v1110
      %v1676 = vpop.f32.mrb[0].mxu0
      %v1677 = vadd.f32 0.0, %v1676
      %v1678 = vpop.f32.mrb[0].mxu0
      %v1679 = vpop.f32.mrb[0].mxu0
      %v1680 = vadd.f32 0.0, %v1679
      %v1681 = vpop.f32.mrb[0].mxu0
      %1682 = vmatprep.mubr.bf16.mxu0 0
      %1683 = vmatmul.mubr.bf16.gmra.mrb[0].mxu0 %v1111
      %v1684 = vpop.f32.mrb[0].mxu0
      %v1685 = vadd.f32 0.0, %v1684
      %v1686 = vpop.f32.mrb[0].mxu0
      %v1687 = vpop.f32.mrb[0].mxu0
      %v1688 = vadd.f32 0.0, %v1687
      %v1689 = vpop.f32.mrb[0].mxu0
      %1690 = vmatprep.mubr.bf16.mxu0 0
      %1691 = vmatmul.mubr.bf16.gmra.mrb[0].mxu0 %v1112
      %v1692 = vpop.f32.mrb[0].mxu0
      %v1693 = vadd.f32 0.0, %v1692
      %v1694 = vpop.f32.mrb[0].mxu0
      %v1695 = vpop.f32.mrb[0].mxu0
      %v1696 = vadd.f32 0.0, %v1695
      %v1697 = vpop.f32.mrb[0].mxu0
      %1698 = vmatprep.mubr.bf16.mxu0 0
      %1699 = vmatmul.mubr.bf16.gmra.mrb[0].mxu0 %v1113
      %v1700 = vpop.f32.mrb[0].mxu0
      %v1701 = vadd.f32 0.0, %v1700
      %v1702 = vpop.f32.mrb[0].mxu0
      %v1703 = vpop.f32.mrb[0].mxu0
      %v1704 = vadd.f32 0.0, %v1703
      %v1705 = vpop.f32.mrb[0].mxu0
      %1706 = vmatprep.mubr.bf16.mxu0 0
      %1707 = vmatmul.mubr.bf16.gmra.mrb[0].mxu0 %v1114
      %v1708 = vpop.f32.mrb[0].mxu0
      %v1709 = vadd.f32 0.0, %v1708
      %v1710 = vpop.f32.mrb[0].mxu0
      %v1711 = vpop.f32.mrb[0].mxu0
      %v1712 = vadd.f32 0.0, %v1711
      %v1713 = vpop.f32.mrb[0].mxu0
      %1714 = vmatprep.mubr.bf16.mxu0 0
      %1715 = vmatmul.mubr.bf16.gmra.mrb[0].mxu0 %v1115
      %v1716 = vpop.f32.mrb[0].mxu0
      %v1717 = vadd.f32 0.0, %v1716
      %v1718 = vpop.f32.mrb[0].mxu0
      %v1719 = vpop.f32.mrb[0].mxu0
      %v1720 = vadd.f32 0.0, %v1719
      %v1721 = vpop.f32.mrb[0].mxu0
      %1722 = vmatprep.mubr.bf16.mxu0 0
      %1723 = vmatmul.mubr.bf16.gmra.mrb[0].mxu0 %v1116
      %v1724 = vpop.f32.mrb[0].mxu0
      %v1725 = vadd.f32 0.0, %v1724
      %v1726 = vpop.f32.mrb[0].mxu0
      %v1727 = vpop.f32.mrb[0].mxu0
      %v1728 = vadd.f32 0.0, %v1727
      %v1729 = vpop.f32.mrb[0].mxu0
      %1730 = vmatprep.mubr.bf16.mxu0 0
      %1731 = vmatmul.mubr.bf16.gmra.mrb[0].mxu0 %v1117
      %v1732 = vpop.f32.mrb[0].mxu0
      %v1733 = vadd.f32 0.0, %v1732
      %v1734 = vpop.f32.mrb[0].mxu0
      %v1735 = vpop.f32.mrb[0].mxu0
      %v1736 = vadd.f32 0.0, %v1735
      %v1737 = vpop.f32.mrb[0].mxu0
      %1738 = vmatprep.mubr.bf16.mxu0 0
      %1739 = vmatmul.mubr.bf16.gmra.mrb[0].mxu0 %v1118
      %v1740 = vpop.f32.mrb[0].mxu0
      %v1741 = vadd.f32 0.0, %v1740
      %v1742 = vpop.f32.mrb[0].mxu0
      %v1743 = vpop.f32.mrb[0].mxu0
      %v1744 = vadd.f32 0.0, %v1743
      %v1745 = vpop.f32.mrb[0].mxu0
      %1746 = vmatprep.mubr.bf16.mxu0 0
      %1747 = vmatmul.mubr.bf16.gmra.mrb[0].mxu0 %v1119
      %v1748 = vpop.f32.mrb[0].mxu0
      %v1749 = vadd.f32 0.0, %v1748
      %v1750 = vpop.f32.mrb[0].mxu0
      %v1751 = vpop.f32.mrb[0].mxu0
      %v1752 = vadd.f32 0.0, %v1751
      %v1753 = vpop.f32.mrb[0].mxu0
      %1754 = vmatprep.mubr.bf16.mxu0 0
      %1755 = vmatmul.mubr.bf16.gmra.mrb[0].mxu0 %v1120
      %v1756 = vpop.f32.mrb[0].mxu0
      %v1757 = vadd.f32 0.0, %v1756
      %v1758 = vpop.f32.mrb[0].mxu0
      %v1759 = vpop.f32.mrb[0].mxu0
      %v1760 = vadd.f32 0.0, %v1759
      %v1761 = vpop.f32.mrb[0].mxu0
      %1762 = vmatprep.mubr.bf16.mxu0 0
      %1763 = vmatmul.mubr.bf16.gmra.mrb[0].mxu0 %v1121
      %v1764 = vpop.f32.mrb[0].mxu0
      %v1765 = vadd.f32 0.0, %v1764
      %v1766 = vpop.f32.mrb[0].mxu0
      %v1767 = vpop.f32.mrb[0].mxu0
      %v1768 = vadd.f32 0.0, %v1767
      %v1769 = vpop.f32.mrb[0].mxu0
      %1770 = vmatprep.mubr.bf16.mxu0 0
      %1771 = vmatmul.mubr.bf16.gmra.mrb[0].mxu0 %v1122
      %v1772 = vpop.f32.mrb[0].mxu0
      %v1773 = vadd.f32 0.0, %v1772
      %v1774 = vpop.f32.mrb[0].mxu0
      %v1775 = vpop.f32.mrb[0].mxu0
      %v1776 = vadd.f32 0.0, %v1775
      %v1777 = vpop.f32.mrb[0].mxu0
      %1778 = vmatprep.mubr.bf16.mxu0 0
      %1779 = vmatmul.mubr.bf16.gmra.mrb[0].mxu0 %v1123
      %v1780 = vpop.f32.mrb[0].mxu0
      %v1781 = vadd.f32 0.0, %v1780
      %v1782 = vpop.f32.mrb[0].mxu0
      %v1783 = vpop.f32.mrb[0].mxu0
      %v1784 = vadd.f32 0.0, %v1783
      %v1785 = vpop.f32.mrb[0].mxu0
      %1786 = vmatprep.mubr.bf16.mxu0 0
      %1787 = vmatmul.mubr.bf16.gmra.mrb[0].mxu0 %v1124
      %v1788 = vpop.f32.mrb[0].mxu0
      %v1789 = vadd.f32 0.0, %v1788
      %v1790 = vpop.f32.mrb[0].mxu0
      %v1791 = vpop.f32.mrb[0].mxu0
      %v1792 = vadd.f32 0.0, %v1791
      %v1793 = vpop.f32.mrb[0].mxu0
      %1794 = vmatprep.mubr.bf16.mxu0 0
      %1795 = vmatmul.mubr.bf16.gmra.mrb[0].mxu0 %v1125
      %v1796 = vpop.f32.mrb[0].mxu0
      %v1797 = vadd.f32 0.0, %v1796
      %v1798 = vpop.f32.mrb[0].mxu0
      %v1799 = vpop.f32.mrb[0].mxu0
      %v1800 = vadd.f32 0.0, %v1799
      %v1801 = vpop.f32.mrb[0].mxu0
      %1802 = vmatprep.mubr.bf16.mxu0 0
      %1803 = vmatmul.mubr.bf16.gmra.mrb[0].mxu0 %v1126
      %v1804 = vpop.f32.mrb[0].mxu0
      %v1805 = vadd.f32 0.0, %v1804
      %v1806 = vpop.f32.mrb[0].mxu0
      %v1807 = vpop.f32.mrb[0].mxu0
      %v1808 = vadd.f32 0.0, %v1807
      %v1809 = vpop.f32.mrb[0].mxu0
      %1810 = vmatprep.mubr.bf16.mxu0 0
      %1811 = vmatmul.mubr.bf16.gmra.mrb[0].mxu0 %v1127
      %v1812 = vpop.f32.mrb[0].mxu0
      %v1813 = vadd.f32 0.0, %v1812
      %v1814 = vpop.f32.mrb[0].mxu0
      %v1815 = vpop.f32.mrb[0].mxu0
      %v1816 = vadd.f32 0.0, %v1815
      %v1817 = vpop.f32.mrb[0].mxu0
      %1818 = vmatprep.mubr.bf16.mxu0 0
      %1819 = vmatmul.mubr.bf16.gmra.mrb[0].mxu0 %v1128
      %v1820 = vpop.f32.mrb[0].mxu0
      %v1821 = vadd.f32 0.0, %v1820
      %v1822 = vpop.f32.mrb[0].mxu0
      %v1823 = vpop.f32.mrb[0].mxu0
      %v1824 = vadd.f32 0.0, %v1823
      %v1825 = vpop.f32.mrb[0].mxu0
      %1826 = vmatprep.mubr.bf16.mxu0 0
      %1827 = vmatmul.mubr.bf16.gmra.mrb[0].mxu0 %v1129
      %v1828 = vpop.f32.mrb[0].mxu0
      %v1829 = vadd.f32 0.0, %v1828
      %v1830 = vpop.f32.mrb[0].mxu0
      %v1831 = vpop.f32.mrb[0].mxu0
      %v1832 = vadd.f32 0.0, %v1831
      %v1833 = vpop.f32.mrb[0].mxu0
      %1834 = vmatprep.mubr.bf16.mxu0 0
      %1835 = vmatmul.mubr.bf16.gmra.mrb[0].mxu0 %v1130
      %v1836 = vpop.f32.mrb[0].mxu0
      %v1837 = vadd.f32 0.0, %v1836
      %v1838 = vpop.f32.mrb[0].mxu0
      %v1839 = vpop.f32.mrb[0].mxu0
      %v1840 = vadd.f32 0.0, %v1839
      %v1841 = vpop.f32.mrb[0].mxu0
      %1842 = vmatprep.mubr.bf16.mxu0 0
      %1843 = vmatmul.mubr.bf16.gmra.mrb[0].mxu0 %v1131
      %v1844 = vpop.f32.mrb[0].mxu0
      %v1845 = vadd.f32 0.0, %v1844
      %v1846 = vpop.f32.mrb[0].mxu0
      %v1847 = vpop.f32.mrb[0].mxu0
      %v1848 = vadd.f32 0.0, %v1847
      %v1849 = vpop.f32.mrb[0].mxu0
      %1850 = vmatprep.mubr.bf16.mxu0 0
      %1851 = vmatmul.mubr.bf16.gmra.mrb[0].mxu0 %v1132
      %v1852 = vpop.f32.mrb[0].mxu0
      %v1853 = vadd.f32 0.0, %v1852
      %v1854 = vpop.f32.mrb[0].mxu0
      %v1855 = vpop.f32.mrb[0].mxu0
      %v1856 = vadd.f32 0.0, %v1855
      %v1857 = vpop.f32.mrb[0].mxu0
      %1858 = vmatprep.mubr.bf16.mxu0 0
      %1859 = vmatmul.mubr.bf16.gmra.mrb[0].mxu0 %v1133
      %v1860 = vpop.f32.mrb[0].mxu0
      %v1861 = vadd.f32 0.0, %v1860
      %v1862 = vpop.f32.mrb[0].mxu0
      %v1863 = vpop.f32.mrb[0].mxu0
      %v1864 = vadd.f32 0.0, %v1863
      %v1865 = vpop.f32.mrb[0].mxu0
      %1866 = vmatprep.mubr.bf16.mxu0 0
      %1867 = vmatmul.mubr.bf16.gmra.mrb[0].mxu0 %v1134
      %v1868 = vpop.f32.mrb[0].mxu0
      %v1869 = vadd.f32 0.0, %v1868
      %v1870 = vpop.f32.mrb[0].mxu0
      %v1871 = vpop.f32.mrb[0].mxu0
      %v1872 = vadd.f32 0.0, %v1871
      %v1873 = vpop.f32.mrb[0].mxu0
      %1874 = vmatprep.mubr.bf16.mxu0 0
      %1875 = vmatmul.mubr.bf16.gmra.mrb[0].mxu0 %v1135
      %v1876 = vpop.f32.mrb[0].mxu0
      %v1877 = vadd.f32 0.0, %v1876
      %v1878 = vpop.f32.mrb[0].mxu0
      %v1879 = vpop.f32.mrb[0].mxu0
      %v1880 = vadd.f32 0.0, %v1879
      %v1881 = vpop.f32.mrb[0].mxu0
      %1882 = vmatprep.mubr.bf16.mxu0 0
      %1883 = vmatmul.mubr.bf16.gmra.mrb[0].mxu0 %v1136
      %v1884 = vpop.f32.mrb[0].mxu0
      %v1885 = vadd.f32 0.0, %v1884
      %v1886 = vpop.f32.mrb[0].mxu0
      %v1887 = vpop.f32.mrb[0].mxu0
      %v1888 = vadd.f32 0.0, %v1887
      %v1889 = vpop.f32.mrb[0].mxu0
      %1890 = vmatprep.mubr.bf16.mxu0 0
      %1891 = vmatmul.mubr.bf16.gmra.mrb[0].mxu0 %v1137
      %v1892 = vpop.f32.mrb[0].mxu0
      %v1893 = vadd.f32 0.0, %v1892
      %v1894 = vpop.f32.mrb[0].mxu0
      %v1895 = vpop.f32.mrb[0].mxu0
      %v1896 = vadd.f32 0.0, %v1895
      %v1897 = vpop.f32.mrb[0].mxu0
      %1898 = vmatprep.mubr.bf16.mxu0 0
      %1899 = vmatmul.mubr.bf16.gmra.mrb[0].mxu0 %v1138
      %v1900 = vpop.f32.mrb[0].mxu0
      %v1901 = vadd.f32 0.0, %v1900
      %v1902 = vpop.f32.mrb[0].mxu0
      %v1903 = vpop.f32.mrb[0].mxu0
      %v1904 = vadd.f32 0.0, %v1903
      %v1905 = vpop.f32.mrb[0].mxu0
      %1906 = vmatprep.mubr.bf16.mxu0 0
      %1907 = vmatmul.mubr.bf16.gmra.mrb[0].mxu0 %v1139
      %v1908 = vpop.f32.mrb[0].mxu0
      %v1909 = vadd.f32 0.0, %v1908
      %v1910 = vpop.f32.mrb[0].mxu0
      %v1911 = vpop.f32.mrb[0].mxu0
      %v1912 = vadd.f32 0.0, %v1911
      %v1913 = vpop.f32.mrb[0].mxu0
      %1914 = vmatprep.mubr.bf16.mxu0 0
      %1915 = vmatmul.mubr.bf16.gmra.mrb[0].mxu0 %v1140
      %v1916 = vpop.f32.mrb[0].mxu0
      %v1917 = vadd.f32 0.0, %v1916
      %v1918 = vpop.f32.mrb[0].mxu0
      %v1919 = vpop.f32.mrb[0].mxu0
      %v1920 = vadd.f32 0.0, %v1919
      %v1921 = vpop.f32.mrb[0].mxu0
      %1922 = vmatprep.mubr.bf16.mxu0 0
      %1923 = vmatmul.mubr.bf16.gmra.mrb[0].mxu0 %v1141
      %v1924 = vpop.f32.mrb[0].mxu0
      %v1925 = vadd.f32 0.0, %v1924
      %v1926 = vpop.f32.mrb[0].mxu0
      %v1927 = vpop.f32.mrb[0].mxu0
      %v1928 = vadd.f32 0.0, %v1927
      %v1929 = vpop.f32.mrb[0].mxu0
      %1930 = vmatprep.mubr.bf16.mxu0 0
      %1931 = vmatmul.mubr.bf16.gmra.mrb[0].mxu0 %v1142
      %v1932 = vpop.f32.mrb[0].mxu0
      %v1933 = vadd.f32 0.0, %v1932
      %v1934 = vpop.f32.mrb[0].mxu0
      %v1935 = vpop.f32.mrb[0].mxu0
      %v1936 = vadd.f32 0.0, %v1935
      %v1937 = vpop.f32.mrb[0].mxu0
      %1938 = vmatprep.mubr.bf16.mxu0 0
      %1939 = vmatmul.mubr.bf16.gmra.mrb[0].mxu0 %v1143
      %v1940 = vpop.f32.mrb[0].mxu0
      %v1941 = vadd.f32 0.0, %v1940
      %v1942 = vpop.f32.mrb[0].mxu0
      %v1943 = vpop.f32.mrb[0].mxu0
      %v1944 = vadd.f32 0.0, %v1943
      %v1945 = vpop.f32.mrb[0].mxu0
      %1946 = vmatprep.mubr.bf16.mxu0 0
      %1947 = vmatmul.mubr.bf16.gmra.mrb[0].mxu0 %v1144
      %v1948 = vpop.f32.mrb[0].mxu0
      %v1949 = vadd.f32 0.0, %v1948
      %v1950 = vpop.f32.mrb[0].mxu0
      %v1951 = vpop.f32.mrb[0].mxu0
      %v1952 = vadd.f32 0.0, %v1951
      %v1953 = vpop.f32.mrb[0].mxu0
      %1954 = vmatprep.mubr.bf16.mxu0 0
      %1955 = vmatmul.mubr.bf16.gmra.mrb[0].mxu0 %v1145
      %v1956 = vpop.f32.mrb[0].mxu0
      %v1957 = vadd.f32 0.0, %v1956
      %v1958 = vpop.f32.mrb[0].mxu0
      %v1959 = vpop.f32.mrb[0].mxu0
      %v1960 = vadd.f32 0.0, %v1959
      %v1961 = vpop.f32.mrb[0].mxu0
      %1962 = vmatprep.mubr.bf16.mxu0 0
      %1963 = vmatmul.mubr.bf16.gmra.mrb[0].mxu0 %v1146
      %v1964 = vpop.f32.mrb[0].mxu0
      %v1965 = vadd.f32 0.0, %v1964
      %v1966 = vpop.f32.mrb[0].mxu0
      %v1967 = vpop.f32.mrb[0].mxu0
      %v1968 = vadd.f32 0.0, %v1967
      %v1969 = vpop.f32.mrb[0].mxu0
      %1970 = vmatprep.mubr.bf16.mxu0 0
      %1971 = vmatmul.mubr.bf16.gmra.mrb[0].mxu0 %v1147
      %v1972 = vpop.f32.mrb[0].mxu0
      %v1973 = vadd.f32 0.0, %v1972
      %v1974 = vpop.f32.mrb[0].mxu0
      %v1975 = vpop.f32.mrb[0].mxu0
      %v1976 = vadd.f32 0.0, %v1975
      %v1977 = vpop.f32.mrb[0].mxu0
      %1978 = vmatprep.mubr.bf16.mxu0 0
      %1979 = vmatmul.mubr.bf16.gmra.mrb[0].mxu0 %v1148
      %v1980 = vpop.f32.mrb[0].mxu0
      %v1981 = vadd.f32 0.0, %v1980
      %v1982 = vpop.f32.mrb[0].mxu0
      %v1983 = vpop.f32.mrb[0].mxu0
      %v1984 = vadd.f32 0.0, %v1983
      %v1985 = vpop.f32.mrb[0].mxu0
      %1986 = vmatprep.mubr.bf16.mxu0 0
      %1987 = vmatmul.mubr.bf16.gmra.mrb[0].mxu0 %v1149
      %v1988 = vpop.f32.mrb[0].mxu0
      %v1989 = vadd.f32 0.0, %v1988
      %v1990 = vpop.f32.mrb[0].mxu0
      %v1991 = vpop.f32.mrb[0].mxu0
      %v1992 = vadd.f32 0.0, %v1991
      %v1993 = vpop.f32.mrb[0].mxu0
      %1994 = vmatprep.mubr.bf16.mxu0 0
      %1995 = vmatmul.mubr.bf16.gmra.mrb[0].mxu0 %v1150
      %v1996 = vpop.f32.mrb[0].mxu0
      %v1997 = vadd.f32 0.0, %v1996
      %v1998 = vpop.f32.mrb[0].mxu0
      %v1999 = vpop.f32.mrb[0].mxu0
      %v2000 = vadd.f32 0.0, %v1999
      %v2001 = vpop.f32.mrb[0].mxu0
      %2002 = vmatprep.mubr.bf16.mxu0 0
      %2003 = vmatmul.mubr.bf16.gmra.mrb[0].mxu0 %v1151
      %v2004 = vpop.f32.mrb[0].mxu0
      %v2005 = vadd.f32 0.0, %v2004
      %v2006 = vpop.f32.mrb[0].mxu0
      %v2007 = vpop.f32.mrb[0].mxu0
      %v2008 = vadd.f32 0.0, %v2007
      %v2009 = vpop.f32.mrb[0].mxu0
      %2010 = vmatprep.mubr.bf16.mxu0 0
      %2011 = vmatmul.mubr.bf16.gmra.mrb[0].mxu0 %v1152
      %v2012 = vpop.f32.mrb[0].mxu0
      %v2013 = vadd.f32 0.0, %v2012
      %v2014 = vpop.f32.mrb[0].mxu0
      %v2015 = vpop.f32.mrb[0].mxu0
      %v2016 = vadd.f32 0.0, %v2015
      %v2017 = vpop.f32.mrb[0].mxu0
      %2018 = vmatprep.mubr.bf16.mxu0 0
      %2019 = vmatmul.mubr.bf16.gmra.mrb[0].mxu0 %v1153
      %v2020 = vpop.f32.mrb[0].mxu0
      %v2021 = vadd.f32 0.0, %v2020
      %v2022 = vpop.f32.mrb[0].mxu0
      %v2023 = vpop.f32.mrb[0].mxu0
      %v2024 = vadd.f32 0.0, %v2023
      %v2025 = vpop.f32.mrb[0].mxu0
      %2026 = vmatprep.mubr.bf16.mxu0 0
      %2027 = vmatmul.mubr.bf16.gmra.mrb[0].mxu0 %v1154
      %v2028 = vpop.f32.mrb[0].mxu0
      %v2029 = vadd.f32 0.0, %v2028
      %v2030 = vpop.f32.mrb[0].mxu0
      %v2031 = vpop.f32.mrb[0].mxu0
      %v2032 = vadd.f32 0.0, %v2031
      %v2033 = vpop.f32.mrb[0].mxu0
      %2034 = vmatprep.mubr.bf16.mxu0 0
      %2035 = vmatmul.mubr.bf16.gmra.mrb[0].mxu0 %v1155
      %v2036 = vpop.f32.mrb[0].mxu0
      %v2037 = vadd.f32 0.0, %v2036
      %v2038 = vpop.f32.mrb[0].mxu0
      %v2039 = vpop.f32.mrb[0].mxu0
      %v2040 = vadd.f32 0.0, %v2039
      %v2041 = vpop.f32.mrb[0].mxu0
      %2042 = vmatprep.mubr.bf16.mxu0 0
      %2043 = vmatmul.mubr.bf16.gmra.mrb[0].mxu0 %v1156
      %v2044 = vpop.f32.mrb[0].mxu0
      %v2045 = vadd.f32 0.0, %v2044
      %v2046 = vpop.f32.mrb[0].mxu0
      %v2047 = vpop.f32.mrb[0].mxu0
      %v2048 = vadd.f32 0.0, %v2047
      %v2049 = vpop.f32.mrb[0].mxu0
      %2050 = vmatprep.mubr.bf16.mxu0 0
      %2051 = vmatmul.mubr.bf16.gmra.mrb[0].mxu0 %v1157
      %v2052 = vpop.f32.mrb[0].mxu0
      %v2053 = vadd.f32 0.0, %v2052
      %v2054 = vpop.f32.mrb[0].mxu0
      %v2055 = vpop.f32.mrb[0].mxu0
      %v2056 = vadd.f32 0.0, %v2055
      %v2057 = vpop.f32.mrb[0].mxu0
      %2058 = vmatprep.mubr.bf16.mxu0 0
      %2059 = vmatmul.mubr.bf16.gmra.mrb[0].mxu0 %v1158
      %v2060 = vpop.f32.mrb[0].mxu0
      %v2061 = vadd.f32 0.0, %v2060
      %v2062 = vpop.f32.mrb[0].mxu0
      %v2063 = vpop.f32.mrb[0].mxu0
      %v2064 = vadd.f32 0.0, %v2063
      %v2065 = vpop.f32.mrb[0].mxu0
      %2066 = vmatprep.mubr.bf16.mxu0 0
      %2067 = vmatmul.mubr.bf16.gmra.mrb[0].mxu0 %v1159
      %v2068 = vpop.f32.mrb[0].mxu0
      %v2069 = vadd.f32 0.0, %v2068
      %v2070 = vpop.f32.mrb[0].mxu0
      %v2071 = vpop.f32.mrb[0].mxu0
      %v2072 = vadd.f32 0.0, %v2071
      %v2073 = vpop.f32.mrb[0].mxu0
      %2074 = vmatprep.mubr.bf16.mxu0 0
      %2075 = vmatmul.mubr.bf16.gmra.mrb[0].mxu0 %v1160
      %v2076 = vpop.f32.mrb[0].mxu0
      %v2077 = vadd.f32 0.0, %v2076
      %v2078 = vpop.f32.mrb[0].mxu0
      %v2079 = vpop.f32.mrb[0].mxu0
      %v2080 = vadd.f32 0.0, %v2079
      %v2081 = vpop.f32.mrb[0].mxu0
      %2082 = vmatprep.mubr.bf16.mxu0 0
      %2083 = vmatmul.mubr.bf16.gmra.mrb[0].mxu0 %v1161
      %v2084 = vpop.f32.mrb[0].mxu0
      %v2085 = vadd.f32 0.0, %v2084
      %v2086 = vpop.f32.mrb[0].mxu0
      %v2087 = vpop.f32.mrb[0].mxu0
      %v2088 = vadd.f32 0.0, %v2087
      %v2089 = vpop.f32.mrb[0].mxu0
      %2090 = vmatprep.mubr.bf16.mxu0 0
      %2091 = vmatmul.mubr.bf16.gmra.mrb[0].mxu0 %v1162
      %v2092 = vpop.f32.mrb[0].mxu0
      %v2093 = vadd.f32 0.0, %v2092
      %v2094 = vpop.f32.mrb[0].mxu0
      %v2095 = vpop.f32.mrb[0].mxu0
      %v2096 = vadd.f32 0.0, %v2095
      %v2097 = vpop.f32.mrb[0].mxu0
      %2098 = vmatprep.mubr.bf16.mxu0 0
      %2099 = vmatmul.mubr.bf16.gmra.mrb[0].mxu0 %v1163
      %v2100 = vpop.f32.mrb[0].mxu0
      %v2101 = vadd.f32 0.0, %v2100
      %v2102 = vpop.f32.mrb[0].mxu0
      %v2103 = vpop.f32.mrb[0].mxu0
      %v2104 = vadd.f32 0.0, %v2103
      %v2105 = vpop.f32.mrb[0].mxu0
      %2106 = vmatprep.mubr.bf16.mxu0 0
      %2107 = vmatmul.mubr.bf16.gmra.mrb[0].mxu0 %v1164
      %v2108 = vpop.f32.mrb[0].mxu0
      %v2109 = vadd.f32 0.0, %v2108
      %v2110 = vpop.f32.mrb[0].mxu0
      %v2111 = vpop.f32.mrb[0].mxu0
      %v2112 = vadd.f32 0.0, %v2111
      %v2113 = vpop.f32.mrb[0].mxu0
      %2114 = vmatprep.mubr.bf16.mxu0 0
      %2115 = vmatmul.mubr.bf16.gmra.mrb[0].mxu0 %v1165
      %v2116 = vpop.f32.mrb[0].mxu0
      %v2117 = vadd.f32 0.0, %v2116
      %v2118 = vpop.f32.mrb[0].mxu0
      %v2119 = vpop.f32.mrb[0].mxu0
      %v2120 = vadd.f32 0.0, %v2119
      %v2121 = vpop.f32.mrb[0].mxu0
      %2122 = vmatprep.mubr.bf16.mxu0 0
      %2123 = vmatmul.mubr.bf16.gmra.mrb[0].mxu0 %v1166
      %v2124 = vpop.f32.mrb[0].mxu0
      %v2125 = vadd.f32 0.0, %v2124
      %v2126 = vpop.f32.mrb[0].mxu0
      %v2127 = vpop.f32.mrb[0].mxu0
      %v2128 = vadd.f32 0.0, %v2127
      %v2129 = vpop.f32.mrb[0].mxu0
      %2130 = vmatprep.mubr.bf16.mxu0 0
      %2131 = vmatmul.mubr.bf16.gmra.mrb[0].mxu0 %v1167
      %v2132 = vpop.f32.mrb[0].mxu0
      %v2133 = vadd.f32 0.0, %v2132
      %v2134 = vpop.f32.mrb[0].mxu0
      %v2135 = vpop.f32.mrb[0].mxu0
      %v2136 = vadd.f32 0.0, %v2135
      %v2137 = vpop.f32.mrb[0].mxu0
      %2138 = vmatprep.mubr.bf16.mxu0 0
      %2139 = vmatmul.mubr.bf16.gmra.mrb[0].mxu0 %v1168
      %v2140 = vpop.f32.mrb[0].mxu0
      %v2141 = vadd.f32 0.0, %v2140
      %v2142 = vpop.f32.mrb[0].mxu0
      %v2143 = vpop.f32.mrb[0].mxu0
      %v2144 = vadd.f32 0.0, %v2143
      %v2145 = vpop.f32.mrb[0].mxu0
      %2146 = vmatprep.mubr.bf16.mxu0 0
      %2147 = vmatmul.mubr.bf16.gmra.mrb[0].mxu0 %v1169
      %v2148 = vpop.f32.mrb[0].mxu0
      %v2149 = vadd.f32 0.0, %v2148
      %v2150 = vpop.f32.mrb[0].mxu0
      %v2151 = vpop.f32.mrb[0].mxu0
      %v2152 = vadd.f32 0.0, %v2151
      %v2153 = vpop.f32.mrb[0].mxu0
      %2154 = vmatprep.mubr.bf16.mxu0 0
      %2155 = vmatmul.mubr.bf16.gmra.mrb[0].mxu0 %v1170
      %v2156 = vpop.f32.mrb[0].mxu0
      %v2157 = vadd.f32 0.0, %v2156
      %v2158 = vpop.f32.mrb[0].mxu0
      %v2159 = vpop.f32.mrb[0].mxu0
      %v2160 = vadd.f32 0.0, %v2159
      %v2161 = vpop.f32.mrb[0].mxu0
      %2162 = vmatprep.mubr.bf16.mxu0 0
      %2163 = vmatmul.mubr.bf16.gmra.mrb[0].mxu0 %v1171
      %v2164 = vpop.f32.mrb[0].mxu0
      %v2165 = vadd.f32 0.0, %v2164
      %v2166 = vpop.f32.mrb[0].mxu0
      %v2167 = vpop.f32.mrb[0].mxu0
      %v2168 = vadd.f32 0.0, %v2167
      %v2169 = vpop.f32.mrb[0].mxu0
      %2170 = vmatprep.mubr.bf16.mxu0 0
      %2171 = vmatmul.mubr.bf16.gmra.mrb[0].mxu0 %v1172
      %v2172 = vpop.f32.mrb[0].mxu0
      %v2173 = vadd.f32 0.0, %v2172
      %v2174 = vpop.f32.mrb[0].mxu0
      %v2175 = vpop.f32.mrb[0].mxu0
      %v2176 = vadd.f32 0.0, %v2175
      %v2177 = vpop.f32.mrb[0].mxu0
      %2178 = vmatprep.mubr.bf16.mxu0 0
      %2179 = vmatmul.mubr.bf16.gmra.mrb[0].mxu0 %v1173
      %v2180 = vpop.f32.mrb[0].mxu0
      %v2181 = vadd.f32 0.0, %v2180
      %v2182 = vpop.f32.mrb[0].mxu0
      %v2183 = vpop.f32.mrb[0].mxu0
      %v2184 = vadd.f32 0.0, %v2183
      %v2185 = vpop.f32.mrb[0].mxu0
      %2186 = vmatprep.mubr.bf16.mxu0 0
      %2187 = vmatmul.mubr.bf16.gmra.mrb[0].mxu0 %v1174
      %v2188 = vpop.f32.mrb[0].mxu0
      %v2189 = vadd.f32 0.0, %v2188
      %v2190 = vpop.f32.mrb[0].mxu0
      %v2191 = vpop.f32.mrb[0].mxu0
      %v2192 = vadd.f32 0.0, %v2191
      %v2193 = vpop.f32.mrb[0].mxu0
      %2194 = vmatprep.mubr.bf16.mxu0 0
      %2195 = vmatmul.mubr.bf16.gmra.mrb[0].mxu0 %v1175
      %v2196 = vpop.f32.mrb[0].mxu0
      %v2197 = vadd.f32 0.0, %v2196
      %v2198 = vpop.f32.mrb[0].mxu0
      %v2199 = vpop.f32.mrb[0].mxu0
      %v2200 = vadd.f32 0.0, %v2199
      %v2201 = vpop.f32.mrb[0].mxu0
      %2202 = vmatprep.mubr.bf16.mxu0 0
      %2203 = vmatmul.mubr.bf16.gmra.mrb[0].mxu0 %v1176
      %v2204 = vpop.f32.mrb[0].mxu0
      %v2205 = vadd.f32 0.0, %v2204
      %v2206 = vpop.f32.mrb[0].mxu0
      %v2207 = vpop.f32.mrb[0].mxu0
      %v2208 = vadd.f32 0.0, %v2207
      %v2209 = vpop.f32.mrb[0].mxu0
      %2210 = vmatprep.mubr.bf16.mxu0 0
      %2211 = vmatmul.mubr.bf16.gmra.mrb[0].mxu0 %v1177
      %v2212 = vpop.f32.mrb[0].mxu0
      %v2213 = vadd.f32 0.0, %v2212
      %v2214 = vpop.f32.mrb[0].mxu0
      %v2215 = vpop.f32.mrb[0].mxu0
      %v2216 = vadd.f32 0.0, %v2215
      %v2217 = vpop.f32.mrb[0].mxu0
      %2218 = vmatprep.mubr.bf16.mxu0 0
      %2219 = vmatmul.mubr.bf16.gmra.mrb[0].mxu0 %v1178
      %v2220 = vpop.f32.mrb[0].mxu0
      %v2221 = vadd.f32 0.0, %v2220
      %v2222 = vpop.f32.mrb[0].mxu0
      %v2223 = vpop.f32.mrb[0].mxu0
      %v2224 = vadd.f32 0.0, %v2223
      %v2225 = vpop.f32.mrb[0].mxu0
      %2226 = vmatprep.mubr.bf16.mxu0 0
      %2227 = vmatmul.mubr.bf16.gmra.mrb[0].mxu0 %v1179
      %v2228 = vpop.f32.mrb[0].mxu0
      %v2229 = vadd.f32 0.0, %v2228
      %v2230 = vpop.f32.mrb[0].mxu0
      %v2231 = vpop.f32.mrb[0].mxu0
      %v2232 = vadd.f32 0.0, %v2231
      %v2233 = vpop.f32.mrb[0].mxu0
      %2234 = vmatprep.mubr.bf16.mxu0 0
      %2235 = vmatmul.mubr.bf16.gmra.mrb[0].mxu0 %v1180
      %v2236 = vpop.f32.mrb[0].mxu0
      %v2237 = vadd.f32 0.0, %v2236
      %v2238 = vpop.f32.mrb[0].mxu0
      %v2239 = vpop.f32.mrb[0].mxu0
      %v2240 = vadd.f32 0.0, %v2239
      %v2241 = vpop.f32.mrb[0].mxu0
      %2242 = vmatprep.mubr.bf16.mxu0 0
      %2243 = vmatmul.mubr.bf16.gmra.mrb[0].mxu0 %v1181
      %v2244 = vpop.f32.mrb[0].mxu0
      %v2245 = vadd.f32 0.0, %v2244
      %v2246 = vpop.f32.mrb[0].mxu0
      %v2247 = vpop.f32.mrb[0].mxu0
      %v2248 = vadd.f32 0.0, %v2247
      %v2249 = vpop.f32.mrb[0].mxu0
      %2250 = vmatprep.mubr.bf16.mxu0 0
      %2251 = vmatmul.mubr.bf16.gmra.mrb[0].mxu0 %v1182
      %v2252 = vpop.f32.mrb[0].mxu0
      %v2253 = vadd.f32 0.0, %v2252
      %v2254 = vpop.f32.mrb[0].mxu0
      %v2255 = vpop.f32.mrb[0].mxu0
      %v2256 = vadd.f32 0.0, %v2255
      %v2257 = vpop.f32.mrb[0].mxu0
      %2258 = vmatprep.mubr.bf16.mxu0 0
      %2259 = vmatmul.mubr.bf16.gmra.mrb[0].mxu0 %v1183
      %v2260 = vpop.f32.mrb[0].mxu0
      %v2261 = vadd.f32 0.0, %v2260
      %v2262 = vpop.f32.mrb[0].mxu0
      %v2263 = vpop.f32.mrb[0].mxu0
      %v2264 = vadd.f32 0.0, %v2263
      %v2265 = vpop.f32.mrb[0].mxu0
      %2266 = vmatprep.mubr.bf16.mxu0 0
      %2267 = vmatmul.mubr.bf16.gmra.mrb[0].mxu0 %v1184
      %v2268 = vpop.f32.mrb[0].mxu0
      %v2269 = vadd.f32 0.0, %v2268
      %v2270 = vpop.f32.mrb[0].mxu0
      %v2271 = vpop.f32.mrb[0].mxu0
      %v2272 = vadd.f32 0.0, %v2271
      %v2273 = vpop.f32.mrb[0].mxu0
      %2274 = vmatprep.mubr.bf16.mxu0 0
      %2275 = vmatmul.mubr.bf16.gmra.mrb[0].mxu0 %v1185
      %v2276 = vpop.f32.mrb[0].mxu0
      %v2277 = vadd.f32 0.0, %v2276
      %v2278 = vpop.f32.mrb[0].mxu0
      %v2279 = vpop.f32.mrb[0].mxu0
      %v2280 = vadd.f32 0.0, %v2279
      %v2281 = vpop.f32.mrb[0].mxu0
      %2282 = vmatprep.mubr.bf16.mxu0 0
      %2283 = vmatmul.mubr.bf16.gmra.mrb[0].mxu0 %v1186
      %v2284 = vpop.f32.mrb[0].mxu0
      %v2285 = vadd.f32 0.0, %v2284
      %v2286 = vpop.f32.mrb[0].mxu0
      %v2287 = vpop.f32.mrb[0].mxu0
      %v2288 = vadd.f32 0.0, %v2287
      %v2289 = vpop.f32.mrb[0].mxu0
      %2290 = vmatprep.mubr.bf16.mxu0 0
      %2291 = vmatmul.mubr.bf16.gmra.mrb[0].mxu0 %v1187
      %v2292 = vpop.f32.mrb[0].mxu0
      %v2293 = vadd.f32 0.0, %v2292
      %v2294 = vpop.f32.mrb[0].mxu0
      %v2295 = vpop.f32.mrb[0].mxu0
      %v2296 = vadd.f32 0.0, %v2295
      %v2297 = vpop.f32.mrb[0].mxu0
      %2298 = vmatprep.mubr.bf16.mxu0 0
      %2299 = vmatmul.mubr.bf16.gmra.mrb[0].mxu0 %v1188
      %v2300 = vpop.f32.mrb[0].mxu0
      %v2301 = vadd.f32 0.0, %v2300
      %v2302 = vpop.f32.mrb[0].mxu0
      %v2303 = vpop.f32.mrb[0].mxu0
      %v2304 = vadd.f32 0.0, %v2303
      %v2305 = vpop.f32.mrb[0].mxu0
      %2306 = vmatprep.mubr.bf16.mxu0 0
      %2307 = vmatmul.mubr.bf16.gmra.mrb[0].mxu0 %v1189
      %v2308 = vpop.f32.mrb[0].mxu0
      %v2309 = vadd.f32 0.0, %v2308
      %v2310 = vpop.f32.mrb[0].mxu0
      %v2311 = vpop.f32.mrb[0].mxu0
      %v2312 = vadd.f32 0.0, %v2311
      %v2313 = vpop.f32.mrb[0].mxu0
      %2314 = vmatprep.mubr.bf16.mxu0 0
      %2315 = vmatmul.mubr.bf16.gmra.mrb[0].mxu0 %v1190
      %v2316 = vpop.f32.mrb[0].mxu0
      %v2317 = vadd.f32 0.0, %v2316
      %v2318 = vpop.f32.mrb[0].mxu0
      %v2319 = vpop.f32.mrb[0].mxu0
      %v2320 = vadd.f32 0.0, %v2319
      %v2321 = vpop.f32.mrb[0].mxu0
      %2322 = vmatprep.mubr.bf16.mxu0 0
      %2323 = vmatmul.mubr.bf16.gmra.mrb[0].mxu0 %v1191
      %v2324 = vpop.f32.mrb[0].mxu0
      %v2325 = vadd.f32 0.0, %v2324
      %v2326 = vpop.f32.mrb[0].mxu0
      %v2327 = vpop.f32.mrb[0].mxu0
      %v2328 = vadd.f32 0.0, %v2327
      %v2329 = vpop.f32.mrb[0].mxu0
      %2330 = vmatprep.mubr.bf16.mxu0 0
      %2331 = vmatmul.mubr.bf16.gmra.mrb[0].mxu0 %v1192
      %v2332 = vpop.f32.mrb[0].mxu0
      %v2333 = vadd.f32 0.0, %v2332
      %v2334 = vpop.f32.mrb[0].mxu0
      %v2335 = vpop.f32.mrb[0].mxu0
      %v2336 = vadd.f32 0.0, %v2335
      %v2337 = vpop.f32.mrb[0].mxu0
      %2338 = vmatprep.mubr.bf16.mxu0 0
      %2339 = vmatmul.mubr.bf16.gmra.mrb[0].mxu0 %v1193
      %v2340 = vpop.f32.mrb[0].mxu0
      %v2341 = vadd.f32 0.0, %v2340
      %v2342 = vpop.f32.mrb[0].mxu0
      %v2343 = vpop.f32.mrb[0].mxu0
      %v2344 = vadd.f32 0.0, %v2343
      %v2345 = vpop.f32.mrb[0].mxu0
      %2346 = vmatprep.mubr.bf16.mxu0 0
      %2347 = vmatmul.mubr.bf16.gmra.mrb[0].mxu0 %v1194
      %v2348 = vpop.f32.mrb[0].mxu0
      %v2349 = vadd.f32 0.0, %v2348
      %v2350 = vpop.f32.mrb[0].mxu0
      %v2351 = vpop.f32.mrb[0].mxu0
      %v2352 = vadd.f32 0.0, %v2351
      %v2353 = vpop.f32.mrb[0].mxu0
      %2354 = vmatprep.mubr.bf16.mxu0 0
      %2355 = vmatmul.mubr.bf16.gmra.mrb[0].mxu0 %v1195
      %v2356 = vpop.f32.mrb[0].mxu0
      %v2357 = vadd.f32 0.0, %v2356
      %v2358 = vpop.f32.mrb[0].mxu0
      %v2359 = vpop.f32.mrb[0].mxu0
      %v2360 = vadd.f32 0.0, %v2359
      %v2361 = vpop.f32.mrb[0].mxu0
      %2362 = vmatprep.mubr.bf16.mxu0 0
      %2363 = vmatmul.mubr.bf16.gmra.mrb[0].mxu0 %v1196
      %v2364 = vpop.f32.mrb[0].mxu0
      %v2365 = vadd.f32 0.0, %v2364
      %v2366 = vpop.f32.mrb[0].mxu0
      %v2367 = vpop.f32.mrb[0].mxu0
      %v2368 = vadd.f32 0.0, %v2367
      %v2369 = vpop.f32.mrb[0].mxu0
      %2370 = vmatprep.mubr.bf16.mxu0 0
      %2371 = vmatmul.mubr.bf16.gmra.mrb[0].mxu0 %v1197
      %v2372 = vpop.f32.mrb[0].mxu0
      %v2373 = vadd.f32 0.0, %v2372
      %v2374 = vpop.f32.mrb[0].mxu0
      %v2375 = vpop.f32.mrb[0].mxu0
      %v2376 = vadd.f32 0.0, %v2375
      %v2377 = vpop.f32.mrb[0].mxu0
      %2378 = vmatprep.mubr.bf16.mxu0 0
      %2379 = vmatmul.mubr.bf16.gmra.mrb[0].mxu0 %v1198
      %v2380 = vpop.f32.mrb[0].mxu0
      %v2381 = vadd.f32 0.0, %v2380
      %v2382 = vpop.f32.mrb[0].mxu0
      %v2383 = vpop.f32.mrb[0].mxu0
      %v2384 = vadd.f32 0.0, %v2383
      %v2385 = vpop.f32.mrb[0].mxu0
      %2386 = vmatprep.mubr.bf16.mxu0 0
      %2387 = vmatmul.mubr.bf16.gmra.mrb[0].mxu0 %v1199
      %v2388 = vpop.f32.mrb[0].mxu0
      %v2389 = vadd.f32 0.0, %v2388
      %v2390 = vpop.f32.mrb[0].mxu0
      %v2391 = vpop.f32.mrb[0].mxu0
      %v2392 = vadd.f32 0.0, %v2391
      %v2393 = vpop.f32.mrb[0].mxu0
      %2394 = vmatprep.mubr.bf16.mxu0 0
      %2395 = vmatmul.mubr.bf16.gmra.mrb[0].mxu0 %v1200
      %v2396 = vpop.f32.mrb[0].mxu0
      %v2397 = vadd.f32 0.0, %v2396
      %v2398 = vpop.f32.mrb[0].mxu0
      %v2399 = vpop.f32.mrb[0].mxu0
      %v2400 = vadd.f32 0.0, %v2399
      %v2401 = vpop.f32.mrb[0].mxu0
      %2402 = vmatprep.mubr.bf16.mxu0 0
      %2403 = vmatmul.mubr.bf16.gmra.mrb[0].mxu0 %v1201
      %v2404 = vpop.f32.mrb[0].mxu0
      %v2405 = vadd.f32 0.0, %v2404
      %v2406 = vpop.f32.mrb[0].mxu0
      %v2407 = vpop.f32.mrb[0].mxu0
      %v2408 = vadd.f32 0.0, %v2407
      %v2409 = vpop.f32.mrb[0].mxu0
      %2410 = vmatprep.mubr.bf16.mxu0 0
      %2411 = vmatmul.mubr.bf16.gmra.mrb[0].mxu0 %v1202
      %v2412 = vpop.f32.mrb[0].mxu0
      %v2413 = vadd.f32 0.0, %v2412
      %v2414 = vpop.f32.mrb[0].mxu0
      %v2415 = vpop.f32.mrb[0].mxu0
      %v2416 = vadd.f32 0.0, %v2415
      %v2417 = vpop.f32.mrb[0].mxu0
      %2418 = vmatprep.mubr.bf16.mxu0 0
      %2419 = vmatmul.mubr.bf16.gmra.mrb[0].mxu0 %v1203
      %v2420 = vpop.f32.mrb[0].mxu0
      %v2421 = vadd.f32 0.0, %v2420
      %v2422 = vpop.f32.mrb[0].mxu0
      %v2423 = vpop.f32.mrb[0].mxu0
      %v2424 = vadd.f32 0.0, %v2423
      %v2425 = vpop.f32.mrb[0].mxu0
      %2426 = vmatprep.mubr.bf16.mxu0 0
      %2427 = vmatmul.mubr.bf16.gmra.mrb[0].mxu0 %v1204
      %v2428 = vpop.f32.mrb[0].mxu0
      %v2429 = vadd.f32 0.0, %v2428
      %v2430 = vpop.f32.mrb[0].mxu0
      %v2431 = vpop.f32.mrb[0].mxu0
      %v2432 = vadd.f32 0.0, %v2431
      %v2433 = vpop.f32.mrb[0].mxu0
      %2434 = vmatprep.mubr.bf16.mxu0 0
      %2435 = vmatmul.mubr.bf16.gmra.mrb[0].mxu0 %v1205
      %v2436 = vpop.f32.mrb[0].mxu0
      %v2437 = vadd.f32 0.0, %v2436
      %v2438 = vpop.f32.mrb[0].mxu0
      %v2439 = vpop.f32.mrb[0].mxu0
      %v2440 = vadd.f32 0.0, %v2439
      %v2441 = vpop.f32.mrb[0].mxu0
      %2442 = vmatprep.mubr.bf16.mxu0 0
      %2443 = vmatmul.mubr.bf16.gmra.mrb[0].mxu0 %v1206
      %v2444 = vpop.f32.mrb[0].mxu0
      %v2445 = vadd.f32 0.0, %v2444
      %v2446 = vpop.f32.mrb[0].mxu0
      %v2447 = vpop.f32.mrb[0].mxu0
      %v2448 = vadd.f32 0.0, %v2447
      %v2449 = vpop.f32.mrb[0].mxu0
      %2450 = vmatprep.mubr.bf16.mxu0 0
      %2451 = vmatmul.mubr.bf16.gmra.mrb[0].mxu0 %v1207
      %v2452 = vpop.f32.mrb[0].mxu0
      %v2453 = vadd.f32 0.0, %v2452
      %v2454 = vpop.f32.mrb[0].mxu0
      %v2455 = vpop.f32.mrb[0].mxu0
      %v2456 = vadd.f32 0.0, %v2455
      %v2457 = vpop.f32.mrb[0].mxu0
      %2458 = vmatprep.mubr.bf16.mxu0 0
      %2459 = vmatmul.mubr.bf16.gmra.mrb[0].mxu0 %v1208
      %v2460 = vpop.f32.mrb[0].mxu0
      %v2461 = vadd.f32 0.0, %v2460
      %v2462 = vpop.f32.mrb[0].mxu0
      %v2463 = vpop.f32.mrb[0].mxu0
      %v2464 = vadd.f32 0.0, %v2463
      %v2465 = vpop.f32.mrb[0].mxu0
      %2466 = vmatprep.mubr.bf16.mxu0 0
      %2467 = vmatmul.mubr.bf16.gmra.mrb[0].mxu0 %v1209
      %v2468 = vpop.f32.mrb[0].mxu0
      %v2469 = vadd.f32 0.0, %v2468
      %v2470 = vpop.f32.mrb[0].mxu0
      %v2471 = vpop.f32.mrb[0].mxu0
      %v2472 = vadd.f32 0.0, %v2471
      %v2473 = vpop.f32.mrb[0].mxu0
      %2474 = vmatprep.mubr.bf16.mxu0 0
      %2475 = vmatmul.mubr.bf16.gmra.mrb[0].mxu0 %v1210
      %v2476 = vpop.f32.mrb[0].mxu0
      %v2477 = vadd.f32 0.0, %v2476
      %v2478 = vpop.f32.mrb[0].mxu0
      %v2479 = vpop.f32.mrb[0].mxu0
      %v2480 = vadd.f32 0.0, %v2479
      %v2481 = vpop.f32.mrb[0].mxu0
      %2482 = vmatprep.mubr.bf16.mxu0 0
      %2483 = vmatmul.mubr.bf16.gmra.mrb[0].mxu0 %v1211
      %v2484 = vpop.f32.mrb[0].mxu0
      %v2485 = vadd.f32 0.0, %v2484
      %v2486 = vpop.f32.mrb[0].mxu0
      %v2487 = vpop.f32.mrb[0].mxu0
      %v2488 = vadd.f32 0.0, %v2487
      %v2489 = vpop.f32.mrb[0].mxu0
      %2490 = vmatprep.mubr.bf16.mxu0 0
      %2491 = vmatmul.mubr.bf16.gmra.mrb[0].mxu0 %v1212
      %v2492 = vpop.f32.mrb[0].mxu0
      %v2493 = vadd.f32 0.0, %v2492
      %v2494 = vpop.f32.mrb[0].mxu0
      %v2495 = vpop.f32.mrb[0].mxu0
      %v2496 = vadd.f32 0.0, %v2495
      %v2497 = vpop.f32.mrb[0].mxu0
      %2498 = vmatprep.mubr.bf16.mxu0 0
      %2499 = vmatmul.mubr.bf16.gmra.mrb[0].mxu0 %v1213
      %v2500 = vpop.f32.mrb[0].mxu0
      %v2501 = vadd.f32 0.0, %v2500
      %v2502 = vpop.f32.mrb[0].mxu0
      %v2503 = vpop.f32.mrb[0].mxu0
      %v2504 = vadd.f32 0.0, %v2503
      %v2505 = vpop.f32.mrb[0].mxu0
      %2506 = vmatprep.mubr.bf16.mxu0 0
      %2507 = vmatmul.mubr.bf16.gmra.mrb[0].mxu0 %v1214
      %v2508 = vpop.f32.mrb[0].mxu0
      %v2509 = vadd.f32 0.0, %v2508
      %v2510 = vpop.f32.mrb[0].mxu0
      %v2511 = vpop.f32.mrb[0].mxu0
      %v2512 = vadd.f32 0.0, %v2511
      %v2513 = vpop.f32.mrb[0].mxu0
      %2514 = vmatprep.mubr.bf16.mxu0 0
      %2515 = vmatmul.mubr.bf16.gmra.mrb[0].mxu0 %v1215
      %v2516 = vpop.f32.mrb[0].mxu0
      %v2517 = vadd.f32 0.0, %v2516
      %v2518 = vpop.f32.mrb[0].mxu0
      %v2519 = vpop.f32.mrb[0].mxu0
      %v2520 = vadd.f32 0.0, %v2519
      %v2521 = vpop.f32.mrb[0].mxu0
      %2522 = vmatprep.mubr.bf16.mxu0 0
      %2523 = vmatmul.mubr.bf16.gmra.mrb[0].mxu0 %v1216
      %v2524 = vpop.f32.mrb[0].mxu0
      %v2525 = vadd.f32 0.0, %v2524
      %v2526 = vpop.f32.mrb[0].mxu0
      %v2527 = vpop.f32.mrb[0].mxu0
      %v2528 = vadd.f32 0.0, %v2527
      %v2529 = vpop.f32.mrb[0].mxu0
      %2530 = vmatprep.mubr.bf16.mxu0 0
      %2531 = vmatmul.mubr.bf16.gmra.mrb[0].mxu0 %v1217
      %v2532 = vpop.f32.mrb[0].mxu0
      %v2533 = vadd.f32 0.0, %v2532
      %v2534 = vpop.f32.mrb[0].mxu0
      %v2535 = vpop.f32.mrb[0].mxu0
      %v2536 = vadd.f32 0.0, %v2535
      %v2537 = vpop.f32.mrb[0].mxu0
      %2538 = vmatprep.mubr.bf16.mxu0 0
      %2539 = vmatmul.mubr.bf16.gmra.mrb[0].mxu0 %v1218
      %v2540 = vpop.f32.mrb[0].mxu0
      %v2541 = vadd.f32 0.0, %v2540
      %v2542 = vpop.f32.mrb[0].mxu0
      %v2543 = vpop.f32.mrb[0].mxu0
      %v2544 = vadd.f32 0.0, %v2543
      %v2545 = vpop.f32.mrb[0].mxu0
      %2546 = vmatprep.mubr.bf16.mxu0 0
      %2547 = vmatmul.mubr.bf16.gmra.mrb[0].mxu0 %v1219
      %v2548 = vpop.f32.mrb[0].mxu0
      %v2549 = vadd.f32 0.0, %v2548
      %v2550 = vpop.f32.mrb[0].mxu0
      %v2551 = vpop.f32.mrb[0].mxu0
      %v2552 = vadd.f32 0.0, %v2551
      %v2553 = vpop.f32.mrb[0].mxu0
      %2554 = vmatprep.mubr.bf16.mxu0 0
      %2555 = vmatmul.mubr.bf16.gmra.mrb[0].mxu0 %v1220
      %v2556 = vpop.f32.mrb[0].mxu0
      %v2557 = vadd.f32 0.0, %v2556
      %v2558 = vpop.f32.mrb[0].mxu0
      %v2559 = vpop.f32.mrb[0].mxu0
      %v2560 = vadd.f32 0.0, %v2559
      %v2561 = vpop.f32.mrb[0].mxu0
      %2562 = vmatprep.mubr.bf16.mxu0 0
      %2563 = vmatmul.mubr.bf16.gmra.mrb[0].mxu0 %v1221
      %v2564 = vpop.f32.mrb[0].mxu0
      %v2565 = vadd.f32 0.0, %v2564
      %v2566 = vpop.f32.mrb[0].mxu0
      %v2567 = vpop.f32.mrb[0].mxu0
      %v2568 = vadd.f32 0.0, %v2567
      %v2569 = vpop.f32.mrb[0].mxu0
      %2570 = vmatprep.mubr.bf16.mxu0 0
      %2571 = vmatmul.mubr.bf16.gmra.mrb[0].mxu0 %v1222
      %v2572 = vpop.f32.mrb[0].mxu0
      %v2573 = vadd.f32 0.0, %v2572
      %v2574 = vpop.f32.mrb[0].mxu0
      %v2575 = vpop.f32.mrb[0].mxu0
      %v2576 = vadd.f32 0.0, %v2575
      %v2577 = vpop.f32.mrb[0].mxu0
      %2578 = vmatprep.mubr.bf16.mxu0 0
      %2579 = vmatmul.mubr.bf16.gmra.mrb[0].mxu0 %v1223
      %v2580 = vpop.f32.mrb[0].mxu0
      %v2581 = vadd.f32 0.0, %v2580
      %v2582 = vpop.f32.mrb[0].mxu0
      %v2583 = vpop.f32.mrb[0].mxu0
      %v2584 = vadd.f32 0.0, %v2583
      %v2585 = vpop.f32.mrb[0].mxu0
      %2586 = vmatprep.mubr.bf16.mxu0 0
      %2587 = vmatmul.mubr.bf16.gmra.mrb[0].mxu0 %v1224
      %v2588 = vpop.f32.mrb[0].mxu0
      %v2589 = vadd.f32 0.0, %v2588
      %v2590 = vpop.f32.mrb[0].mxu0
      %v2591 = vpop.f32.mrb[0].mxu0
      %v2592 = vadd.f32 0.0, %v2591
      %v2593 = vpop.f32.mrb[0].mxu0
      %2594 = vmatprep.mubr.bf16.mxu0 0
      %2595 = vmatmul.mubr.bf16.gmra.mrb[0].mxu0 %v1225
      %v2596 = vpop.f32.mrb[0].mxu0
      %v2597 = vadd.f32 0.0, %v2596
      %v2598 = vpop.f32.mrb[0].mxu0
      %v2599 = vpop.f32.mrb[0].mxu0
      %v2600 = vadd.f32 0.0, %v2599
      %v2601 = vpop.f32.mrb[0].mxu0
      %2602 = vdwg.mxu0
      %v2603 = vld [vmem:[%s2] sm:$0x1]
      %v2605 = vlaneseq
      %v2606 = vshrl.u32 %v2605, 7
      %v2607 = vsub.s32 0, %v2606
      %v2608 = vrot.slane %v2603, %v2607
      %v2610 = vmul.f32 %v1453, %v2608
      %v2611 = vmul.f32 %v1456, %v2608
      %v2612 = vmul.f32 %v1461, %v2608
      %v2613 = vmul.f32 %v1464, %v2608
      %v2614 = vmul.f32 %v1469, %v2608
      %v2615 = vmul.f32 %v1472, %v2608
      %v2616 = vmul.f32 %v1477, %v2608
      %v2617 = vmul.f32 %v1480, %v2608
      %v2618 = vmul.f32 %v1485, %v2608
      %v2619 = vmul.f32 %v1488, %v2608
      %v2620 = vmul.f32 %v1493, %v2608
      %v2621 = vmul.f32 %v1496, %v2608
      %v2622 = vmul.f32 %v1501, %v2608
      %v2623 = vmul.f32 %v1504, %v2608
      %v2624 = vmul.f32 %v1509, %v2608
      %v2625 = vmul.f32 %v1512, %v2608
      %v2626 = vmul.f32 %v1517, %v2608
      %v2627 = vmul.f32 %v1520, %v2608
      %v2628 = vmul.f32 %v1525, %v2608
      %v2629 = vmul.f32 %v1528, %v2608
      %v2630 = vmul.f32 %v1533, %v2608
      %v2631 = vmul.f32 %v1536, %v2608
      %v2632 = vmul.f32 %v1541, %v2608
      %v2633 = vmul.f32 %v1544, %v2608
      %v2634 = vmul.f32 %v1549, %v2608
      %v2635 = vmul.f32 %v1552, %v2608
      %v2636 = vmul.f32 %v1557, %v2608
      %v2637 = vmul.f32 %v1560, %v2608
      %v2638 = vmul.f32 %v1565, %v2608
      %v2639 = vmul.f32 %v1568, %v2608
      %v2640 = vmul.f32 %v1573, %v2608
      %v2641 = vmul.f32 %v1576, %v2608
      %v2642 = vmul.f32 %v1581, %v2608
      %v2643 = vmul.f32 %v1584, %v2608
      %v2644 = vmul.f32 %v1589, %v2608
      %v2645 = vmul.f32 %v1592, %v2608
      %v2646 = vmul.f32 %v1597, %v2608
      %v2647 = vmul.f32 %v1600, %v2608
      %v2648 = vmul.f32 %v1605, %v2608
      %v2649 = vmul.f32 %v1608, %v2608
      %v2650 = vmul.f32 %v1613, %v2608
      %v2651 = vmul.f32 %v1616, %v2608
      %v2652 = vmul.f32 %v1621, %v2608
      %v2653 = vmul.f32 %v1624, %v2608
      %v2654 = vmul.f32 %v1629, %v2608
      %v2655 = vmul.f32 %v1632, %v2608
      %v2656 = vmul.f32 %v1637, %v2608
      %v2657 = vmul.f32 %v1640, %v2608
      %v2658 = vmul.f32 %v1645, %v2608
      %v2659 = vmul.f32 %v1648, %v2608
      %v2660 = vmul.f32 %v1653, %v2608
      %v2661 = vmul.f32 %v1656, %v2608
      %v2662 = vmul.f32 %v1661, %v2608
      %v2663 = vmul.f32 %v1664, %v2608
      %v2664 = vmul.f32 %v1669, %v2608
      %v2665 = vmul.f32 %v1672, %v2608
      %v2666 = vmul.f32 %v1677, %v2608
      %v2667 = vmul.f32 %v1680, %v2608
      %v2668 = vmul.f32 %v1685, %v2608
      %v2669 = vmul.f32 %v1688, %v2608
      %v2670 = vmul.f32 %v1693, %v2608
      %v2671 = vmul.f32 %v1696, %v2608
      %v2672 = vmul.f32 %v1701, %v2608
      %v2673 = vmul.f32 %v1704, %v2608
      %v2674 = vmul.f32 %v1709, %v2608
      %v2675 = vmul.f32 %v1712, %v2608
      %v2676 = vmul.f32 %v1717, %v2608
      %v2677 = vmul.f32 %v1720, %v2608
      %v2678 = vmul.f32 %v1725, %v2608
      %v2679 = vmul.f32 %v1728, %v2608
      %v2680 = vmul.f32 %v1733, %v2608
      %v2681 = vmul.f32 %v1736, %v2608
      %v2682 = vmul.f32 %v1741, %v2608
      %v2683 = vmul.f32 %v1744, %v2608
      %v2684 = vmul.f32 %v1749, %v2608
      %v2685 = vmul.f32 %v1752, %v2608
      %v2686 = vmul.f32 %v1757, %v2608
      %v2687 = vmul.f32 %v1760, %v2608
      %v2688 = vmul.f32 %v1765, %v2608
      %v2689 = vmul.f32 %v1768, %v2608
      %v2690 = vmul.f32 %v1773, %v2608
      %v2691 = vmul.f32 %v1776, %v2608
      %v2692 = vmul.f32 %v1781, %v2608
      %v2693 = vmul.f32 %v1784, %v2608
      %v2694 = vmul.f32 %v1789, %v2608
      %v2695 = vmul.f32 %v1792, %v2608
      %v2696 = vmul.f32 %v1797, %v2608
      %v2697 = vmul.f32 %v1800, %v2608
      %v2698 = vmul.f32 %v1805, %v2608
      %v2699 = vmul.f32 %v1808, %v2608
      %v2700 = vmul.f32 %v1813, %v2608
      %v2701 = vmul.f32 %v1816, %v2608
      %v2702 = vmul.f32 %v1821, %v2608
      %v2703 = vmul.f32 %v1824, %v2608
      %v2704 = vmul.f32 %v1829, %v2608
      %v2705 = vmul.f32 %v1832, %v2608
      %v2706 = vmul.f32 %v1837, %v2608
      %v2707 = vmul.f32 %v1840, %v2608
      %v2708 = vmul.f32 %v1845, %v2608
      %v2709 = vmul.f32 %v1848, %v2608
      %v2710 = vmul.f32 %v1853, %v2608
      %v2711 = vmul.f32 %v1856, %v2608
      %v2712 = vmul.f32 %v1861, %v2608
      %v2713 = vmul.f32 %v1864, %v2608
      %v2714 = vmul.f32 %v1869, %v2608
      %v2715 = vmul.f32 %v1872, %v2608
      %v2716 = vmul.f32 %v1877, %v2608
      %v2717 = vmul.f32 %v1880, %v2608
      %v2718 = vmul.f32 %v1885, %v2608
      %v2719 = vmul.f32 %v1888, %v2608
      %v2720 = vmul.f32 %v1893, %v2608
      %v2721 = vmul.f32 %v1896, %v2608
      %v2722 = vmul.f32 %v1901, %v2608
      %v2723 = vmul.f32 %v1904, %v2608
      %v2724 = vmul.f32 %v1909, %v2608
      %v2725 = vmul.f32 %v1912, %v2608
      %v2726 = vmul.f32 %v1917, %v2608
      %v2727 = vmul.f32 %v1920, %v2608
      %v2728 = vmul.f32 %v1925, %v2608
      %v2729 = vmul.f32 %v1928, %v2608
      %v2730 = vmul.f32 %v1933, %v2608
      %v2731 = vmul.f32 %v1936, %v2608
      %v2732 = vmul.f32 %v1941, %v2608
      %v2733 = vmul.f32 %v1944, %v2608
      %v2734 = vmul.f32 %v1949, %v2608
      %v2735 = vmul.f32 %v1952, %v2608
      %v2736 = vmul.f32 %v1957, %v2608
      %v2737 = vmul.f32 %v1960, %v2608
      %v2738 = vmul.f32 %v1965, %v2608
      %v2739 = vmul.f32 %v1968, %v2608
      %v2740 = vmul.f32 %v1973, %v2608
      %v2741 = vmul.f32 %v1976, %v2608
      %v2742 = vmul.f32 %v1981, %v2608
      %v2743 = vmul.f32 %v1984, %v2608
      %v2744 = vmul.f32 %v1989, %v2608
      %v2745 = vmul.f32 %v1992, %v2608
      %v2746 = vmul.f32 %v1997, %v2608
      %v2747 = vmul.f32 %v2000, %v2608
      %v2748 = vmul.f32 %v2005, %v2608
      %v2749 = vmul.f32 %v2008, %v2608
      %v2750 = vmul.f32 %v2013, %v2608
      %v2751 = vmul.f32 %v2016, %v2608
      %v2752 = vmul.f32 %v2021, %v2608
      %v2753 = vmul.f32 %v2024, %v2608
      %v2754 = vmul.f32 %v2029, %v2608
      %v2755 = vmul.f32 %v2032, %v2608
      %v2756 = vmul.f32 %v2037, %v2608
      %v2757 = vmul.f32 %v2040, %v2608
      %v2758 = vmul.f32 %v2045, %v2608
      %v2759 = vmul.f32 %v2048, %v2608
      %v2760 = vmul.f32 %v2053, %v2608
      %v2761 = vmul.f32 %v2056, %v2608
      %v2762 = vmul.f32 %v2061, %v2608
      %v2763 = vmul.f32 %v2064, %v2608
      %v2764 = vmul.f32 %v2069, %v2608
      %v2765 = vmul.f32 %v2072, %v2608
      %v2766 = vmul.f32 %v2077, %v2608
      %v2767 = vmul.f32 %v2080, %v2608
      %v2768 = vmul.f32 %v2085, %v2608
      %v2769 = vmul.f32 %v2088, %v2608
      %v2770 = vmul.f32 %v2093, %v2608
      %v2771 = vmul.f32 %v2096, %v2608
      %v2772 = vmul.f32 %v2101, %v2608
      %v2773 = vmul.f32 %v2104, %v2608
      %v2774 = vmul.f32 %v2109, %v2608
      %v2775 = vmul.f32 %v2112, %v2608
      %v2776 = vmul.f32 %v2117, %v2608
      %v2777 = vmul.f32 %v2120, %v2608
      %v2778 = vmul.f32 %v2125, %v2608
      %v2779 = vmul.f32 %v2128, %v2608
      %v2780 = vmul.f32 %v2133, %v2608
      %v2781 = vmul.f32 %v2136, %v2608
      %v2782 = vmul.f32 %v2141, %v2608
      %v2783 = vmul.f32 %v2144, %v2608
      %v2784 = vmul.f32 %v2149, %v2608
      %v2785 = vmul.f32 %v2152, %v2608
      %v2786 = vmul.f32 %v2157, %v2608
      %v2787 = vmul.f32 %v2160, %v2608
      %v2788 = vmul.f32 %v2165, %v2608
      %v2789 = vmul.f32 %v2168, %v2608
      %v2790 = vmul.f32 %v2173, %v2608
      %v2791 = vmul.f32 %v2176, %v2608
      %v2792 = vmul.f32 %v2181, %v2608
      %v2793 = vmul.f32 %v2184, %v2608
      %v2794 = vmul.f32 %v2189, %v2608
      %v2795 = vmul.f32 %v2192, %v2608
      %v2796 = vmul.f32 %v2197, %v2608
      %v2797 = vmul.f32 %v2200, %v2608
      %v2798 = vmul.f32 %v2205, %v2608
      %v2799 = vmul.f32 %v2208, %v2608
      %v2800 = vmul.f32 %v2213, %v2608
      %v2801 = vmul.f32 %v2216, %v2608
      %v2802 = vmul.f32 %v2221, %v2608
      %v2803 = vmul.f32 %v2224, %v2608
      %v2804 = vmul.f32 %v2229, %v2608
      %v2805 = vmul.f32 %v2232, %v2608
      %v2806 = vmul.f32 %v2237, %v2608
      %v2807 = vmul.f32 %v2240, %v2608
      %v2808 = vmul.f32 %v2245, %v2608
      %v2809 = vmul.f32 %v2248, %v2608
      %v2810 = vmul.f32 %v2253, %v2608
      %v2811 = vmul.f32 %v2256, %v2608
      %v2812 = vmul.f32 %v2261, %v2608
      %v2813 = vmul.f32 %v2264, %v2608
      %v2814 = vmul.f32 %v2269, %v2608
      %v2815 = vmul.f32 %v2272, %v2608
      %v2816 = vmul.f32 %v2277, %v2608
      %v2817 = vmul.f32 %v2280, %v2608
      %v2818 = vmul.f32 %v2285, %v2608
      %v2819 = vmul.f32 %v2288, %v2608
      %v2820 = vmul.f32 %v2293, %v2608
      %v2821 = vmul.f32 %v2296, %v2608
      %v2822 = vmul.f32 %v2301, %v2608
      %v2823 = vmul.f32 %v2304, %v2608
      %v2824 = vmul.f32 %v2309, %v2608
      %v2825 = vmul.f32 %v2312, %v2608
      %v2826 = vmul.f32 %v2317, %v2608
      %v2827 = vmul.f32 %v2320, %v2608
      %v2828 = vmul.f32 %v2325, %v2608
      %v2829 = vmul.f32 %v2328, %v2608
      %v2830 = vmul.f32 %v2333, %v2608
      %v2831 = vmul.f32 %v2336, %v2608
      %v2832 = vmul.f32 %v2341, %v2608
      %v2833 = vmul.f32 %v2344, %v2608
      %v2834 = vmul.f32 %v2349, %v2608
      %v2835 = vmul.f32 %v2352, %v2608
      %v2836 = vmul.f32 %v2357, %v2608
      %v2837 = vmul.f32 %v2360, %v2608
      %v2838 = vmul.f32 %v2365, %v2608
      %v2839 = vmul.f32 %v2368, %v2608
      %v2840 = vmul.f32 %v2373, %v2608
      %v2841 = vmul.f32 %v2376, %v2608
      %v2842 = vmul.f32 %v2381, %v2608
      %v2843 = vmul.f32 %v2384, %v2608
      %v2844 = vmul.f32 %v2389, %v2608
      %v2845 = vmul.f32 %v2392, %v2608
      %v2846 = vmul.f32 %v2397, %v2608
      %v2847 = vmul.f32 %v2400, %v2608
      %v2848 = vmul.f32 %v2405, %v2608
      %v2849 = vmul.f32 %v2408, %v2608
      %v2850 = vmul.f32 %v2413, %v2608
      %v2851 = vmul.f32 %v2416, %v2608
      %v2852 = vmul.f32 %v2421, %v2608
      %v2853 = vmul.f32 %v2424, %v2608
      %v2854 = vmul.f32 %v2429, %v2608
      %v2855 = vmul.f32 %v2432, %v2608
      %v2856 = vmul.f32 %v2437, %v2608
      %v2857 = vmul.f32 %v2440, %v2608
      %v2858 = vmul.f32 %v2445, %v2608
      %v2859 = vmul.f32 %v2448, %v2608
      %v2860 = vmul.f32 %v2453, %v2608
      %v2861 = vmul.f32 %v2456, %v2608
      %v2862 = vmul.f32 %v2461, %v2608
      %v2863 = vmul.f32 %v2464, %v2608
      %v2864 = vmul.f32 %v2469, %v2608
      %v2865 = vmul.f32 %v2472, %v2608
      %v2866 = vmul.f32 %v2477, %v2608
      %v2867 = vmul.f32 %v2480, %v2608
      %v2868 = vmul.f32 %v2485, %v2608
      %v2869 = vmul.f32 %v2488, %v2608
      %v2870 = vmul.f32 %v2493, %v2608
      %v2871 = vmul.f32 %v2496, %v2608
      %v2872 = vmul.f32 %v2501, %v2608
      %v2873 = vmul.f32 %v2504, %v2608
      %v2874 = vmul.f32 %v2509, %v2608
      %v2875 = vmul.f32 %v2512, %v2608
      %v2876 = vmul.f32 %v2517, %v2608
      %v2877 = vmul.f32 %v2520, %v2608
      %v2878 = vmul.f32 %v2525, %v2608
      %v2879 = vmul.f32 %v2528, %v2608
      %v2880 = vmul.f32 %v2533, %v2608
      %v2881 = vmul.f32 %v2536, %v2608
      %v2882 = vmul.f32 %v2541, %v2608
      %v2883 = vmul.f32 %v2544, %v2608
      %v2884 = vmul.f32 %v2549, %v2608
      %v2885 = vmul.f32 %v2552, %v2608
      %v2886 = vmul.f32 %v2557, %v2608
      %v2887 = vmul.f32 %v2560, %v2608
      %v2888 = vmul.f32 %v2565, %v2608
      %v2889 = vmul.f32 %v2568, %v2608
      %v2890 = vmul.f32 %v2573, %v2608
      %v2891 = vmul.f32 %v2576, %v2608
      %v2892 = vmul.f32 %v2581, %v2608
      %v2893 = vmul.f32 %v2584, %v2608
      %v2894 = vmul.f32 %v2589, %v2608
      %v2895 = vmul.f32 %v2592, %v2608
      %v2896 = vmul.f32 %v2597, %v2608
      %v2897 = vmul.f32 %v2600, %v2608
      %v2898 = vld [vmem:[%s3] sm:$0x1]
      %v2900 = vlaneseq
      %v2901 = vshrl.u32 %v2900, 7
      %v2902 = vsub.s32 0, %v2901
      %v2903 = vrot.slane %v2898, %v2902
      %v2905 = vadd.f32 %v2610, %v2903
      %v2906 = vadd.f32 %v2611, %v2903
      %v2907 = vadd.f32 %v2612, %v2903
      %v2908 = vadd.f32 %v2613, %v2903
      %v2909 = vadd.f32 %v2614, %v2903
      %v2910 = vadd.f32 %v2615, %v2903
      %v2911 = vadd.f32 %v2616, %v2903
      %v2912 = vadd.f32 %v2617, %v2903
      %v2913 = vadd.f32 %v2618, %v2903
      %v2914 = vadd.f32 %v2619, %v2903
      %v2915 = vadd.f32 %v2620, %v2903
      %v2916 = vadd.f32 %v2621, %v2903
      %v2917 = vadd.f32 %v2622, %v2903
      %v2918 = vadd.f32 %v2623, %v2903
      %v2919 = vadd.f32 %v2624, %v2903
      %v2920 = vadd.f32 %v2625, %v2903
      %v2921 = vadd.f32 %v2626, %v2903
      %v2922 = vadd.f32 %v2627, %v2903
      %v2923 = vadd.f32 %v2628, %v2903
      %v2924 = vadd.f32 %v2629, %v2903
      %v2925 = vadd.f32 %v2630, %v2903
      %v2926 = vadd.f32 %v2631, %v2903
      %v2927 = vadd.f32 %v2632, %v2903
      %v2928 = vadd.f32 %v2633, %v2903
      %v2929 = vadd.f32 %v2634, %v2903
      %v2930 = vadd.f32 %v2635, %v2903
      %v2931 = vadd.f32 %v2636, %v2903
      %v2932 = vadd.f32 %v2637, %v2903
      %v2933 = vadd.f32 %v2638, %v2903
      %v2934 = vadd.f32 %v2639, %v2903
      %v2935 = vadd.f32 %v2640, %v2903
      %v2936 = vadd.f32 %v2641, %v2903
      %v2937 = vadd.f32 %v2642, %v2903
      %v2938 = vadd.f32 %v2643, %v2903
      %v2939 = vadd.f32 %v2644, %v2903
      %v2940 = vadd.f32 %v2645, %v2903
      %v2941 = vadd.f32 %v2646, %v2903
      %v2942 = vadd.f32 %v2647, %v2903
      %v2943 = vadd.f32 %v2648, %v2903
      %v2944 = vadd.f32 %v2649, %v2903
      %v2945 = vadd.f32 %v2650, %v2903
      %v2946 = vadd.f32 %v2651, %v2903
      %v2947 = vadd.f32 %v2652, %v2903
      %v2948 = vadd.f32 %v2653, %v2903
      %v2949 = vadd.f32 %v2654, %v2903
      %v2950 = vadd.f32 %v2655, %v2903
      %v2951 = vadd.f32 %v2656, %v2903
      %v2952 = vadd.f32 %v2657, %v2903
      %v2953 = vadd.f32 %v2658, %v2903
      %v2954 = vadd.f32 %v2659, %v2903
      %v2955 = vadd.f32 %v2660, %v2903
      %v2956 = vadd.f32 %v2661, %v2903
      %v2957 = vadd.f32 %v2662, %v2903
      %v2958 = vadd.f32 %v2663, %v2903
      %v2959 = vadd.f32 %v2664, %v2903
      %v2960 = vadd.f32 %v2665, %v2903
      %v2961 = vadd.f32 %v2666, %v2903
      %v2962 = vadd.f32 %v2667, %v2903
      %v2963 = vadd.f32 %v2668, %v2903
      %v2964 = vadd.f32 %v2669, %v2903
      %v2965 = vadd.f32 %v2670, %v2903
      %v2966 = vadd.f32 %v2671, %v2903
      %v2967 = vadd.f32 %v2672, %v2903
      %v2968 = vadd.f32 %v2673, %v2903
      %v2969 = vadd.f32 %v2674, %v2903
      %v2970 = vadd.f32 %v2675, %v2903
      %v2971 = vadd.f32 %v2676, %v2903
      %v2972 = vadd.f32 %v2677, %v2903
      %v2973 = vadd.f32 %v2678, %v2903
      %v2974 = vadd.f32 %v2679, %v2903
      %v2975 = vadd.f32 %v2680, %v2903
      %v2976 = vadd.f32 %v2681, %v2903
      %v2977 = vadd.f32 %v2682, %v2903
      %v2978 = vadd.f32 %v2683, %v2903
      %v2979 = vadd.f32 %v2684, %v2903
      %v2980 = vadd.f32 %v2685, %v2903
      %v2981 = vadd.f32 %v2686, %v2903
      %v2982 = vadd.f32 %v2687, %v2903
      %v2983 = vadd.f32 %v2688, %v2903
      %v2984 = vadd.f32 %v2689, %v2903
      %v2985 = vadd.f32 %v2690, %v2903
      %v2986 = vadd.f32 %v2691, %v2903
      %v2987 = vadd.f32 %v2692, %v2903
      %v2988 = vadd.f32 %v2693, %v2903
      %v2989 = vadd.f32 %v2694, %v2903
      %v2990 = vadd.f32 %v2695, %v2903
      %v2991 = vadd.f32 %v2696, %v2903
      %v2992 = vadd.f32 %v2697, %v2903
      %v2993 = vadd.f32 %v2698, %v2903
      %v2994 = vadd.f32 %v2699, %v2903
      %v2995 = vadd.f32 %v2700, %v2903
      %v2996 = vadd.f32 %v2701, %v2903
      %v2997 = vadd.f32 %v2702, %v2903
      %v2998 = vadd.f32 %v2703, %v2903
      %v2999 = vadd.f32 %v2704, %v2903
      %v3000 = vadd.f32 %v2705, %v2903
      %v3001 = vadd.f32 %v2706, %v2903
      %v3002 = vadd.f32 %v2707, %v2903
      %v3003 = vadd.f32 %v2708, %v2903
      %v3004 = vadd.f32 %v2709, %v2903
      %v3005 = vadd.f32 %v2710, %v2903
      %v3006 = vadd.f32 %v2711, %v2903
      %v3007 = vadd.f32 %v2712, %v2903
      %v3008 = vadd.f32 %v2713, %v2903
      %v3009 = vadd.f32 %v2714, %v2903
      %v3010 = vadd.f32 %v2715, %v2903
      %v3011 = vadd.f32 %v2716, %v2903
      %v3012 = vadd.f32 %v2717, %v2903
      %v3013 = vadd.f32 %v2718, %v2903
      %v3014 = vadd.f32 %v2719, %v2903
      %v3015 = vadd.f32 %v2720, %v2903
      %v3016 = vadd.f32 %v2721, %v2903
      %v3017 = vadd.f32 %v2722, %v2903
      %v3018 = vadd.f32 %v2723, %v2903
      %v3019 = vadd.f32 %v2724, %v2903
      %v3020 = vadd.f32 %v2725, %v2903
      %v3021 = vadd.f32 %v2726, %v2903
      %v3022 = vadd.f32 %v2727, %v2903
      %v3023 = vadd.f32 %v2728, %v2903
      %v3024 = vadd.f32 %v2729, %v2903
      %v3025 = vadd.f32 %v2730, %v2903
      %v3026 = vadd.f32 %v2731, %v2903
      %v3027 = vadd.f32 %v2732, %v2903
      %v3028 = vadd.f32 %v2733, %v2903
      %v3029 = vadd.f32 %v2734, %v2903
      %v3030 = vadd.f32 %v2735, %v2903
      %v3031 = vadd.f32 %v2736, %v2903
      %v3032 = vadd.f32 %v2737, %v2903
      %v3033 = vadd.f32 %v2738, %v2903
      %v3034 = vadd.f32 %v2739, %v2903
      %v3035 = vadd.f32 %v2740, %v2903
      %v3036 = vadd.f32 %v2741, %v2903
      %v3037 = vadd.f32 %v2742, %v2903
      %v3038 = vadd.f32 %v2743, %v2903
      %v3039 = vadd.f32 %v2744, %v2903
      %v3040 = vadd.f32 %v2745, %v2903
      %v3041 = vadd.f32 %v2746, %v2903
      %v3042 = vadd.f32 %v2747, %v2903
      %v3043 = vadd.f32 %v2748, %v2903
      %v3044 = vadd.f32 %v2749, %v2903
      %v3045 = vadd.f32 %v2750, %v2903
      %v3046 = vadd.f32 %v2751, %v2903
      %v3047 = vadd.f32 %v2752, %v2903
      %v3048 = vadd.f32 %v2753, %v2903
      %v3049 = vadd.f32 %v2754, %v2903
      %v3050 = vadd.f32 %v2755, %v2903
      %v3051 = vadd.f32 %v2756, %v2903
      %v3052 = vadd.f32 %v2757, %v2903
      %v3053 = vadd.f32 %v2758, %v2903
      %v3054 = vadd.f32 %v2759, %v2903
      %v3055 = vadd.f32 %v2760, %v2903
      %v3056 = vadd.f32 %v2761, %v2903
      %v3057 = vadd.f32 %v2762, %v2903
      %v3058 = vadd.f32 %v2763, %v2903
      %v3059 = vadd.f32 %v2764, %v2903
      %v3060 = vadd.f32 %v2765, %v2903
      %v3061 = vadd.f32 %v2766, %v2903
      %v3062 = vadd.f32 %v2767, %v2903
      %v3063 = vadd.f32 %v2768, %v2903
      %v3064 = vadd.f32 %v2769, %v2903
      %v3065 = vadd.f32 %v2770, %v2903
      %v3066 = vadd.f32 %v2771, %v2903
      %v3067 = vadd.f32 %v2772, %v2903
      %v3068 = vadd.f32 %v2773, %v2903
      %v3069 = vadd.f32 %v2774, %v2903
      %v3070 = vadd.f32 %v2775, %v2903
      %v3071 = vadd.f32 %v2776, %v2903
      %v3072 = vadd.f32 %v2777, %v2903
      %v3073 = vadd.f32 %v2778, %v2903
      %v3074 = vadd.f32 %v2779, %v2903
      %v3075 = vadd.f32 %v2780, %v2903
      %v3076 = vadd.f32 %v2781, %v2903
      %v3077 = vadd.f32 %v2782, %v2903
      %v3078 = vadd.f32 %v2783, %v2903
      %v3079 = vadd.f32 %v2784, %v2903
      %v3080 = vadd.f32 %v2785, %v2903
      %v3081 = vadd.f32 %v2786, %v2903
      %v3082 = vadd.f32 %v2787, %v2903
      %v3083 = vadd.f32 %v2788, %v2903
      %v3084 = vadd.f32 %v2789, %v2903
      %v3085 = vadd.f32 %v2790, %v2903
      %v3086 = vadd.f32 %v2791, %v2903
      %v3087 = vadd.f32 %v2792, %v2903
      %v3088 = vadd.f32 %v2793, %v2903
      %v3089 = vadd.f32 %v2794, %v2903
      %v3090 = vadd.f32 %v2795, %v2903
      %v3091 = vadd.f32 %v2796, %v2903
      %v3092 = vadd.f32 %v2797, %v2903
      %v3093 = vadd.f32 %v2798, %v2903
      %v3094 = vadd.f32 %v2799, %v2903
      %v3095 = vadd.f32 %v2800, %v2903
      %v3096 = vadd.f32 %v2801, %v2903
      %v3097 = vadd.f32 %v2802, %v2903
      %v3098 = vadd.f32 %v2803, %v2903
      %v3099 = vadd.f32 %v2804, %v2903
      %v3100 = vadd.f32 %v2805, %v2903
      %v3101 = vadd.f32 %v2806, %v2903
      %v3102 = vadd.f32 %v2807, %v2903
      %v3103 = vadd.f32 %v2808, %v2903
      %v3104 = vadd.f32 %v2809, %v2903
      %v3105 = vadd.f32 %v2810, %v2903
      %v3106 = vadd.f32 %v2811, %v2903
      %v3107 = vadd.f32 %v2812, %v2903
      %v3108 = vadd.f32 %v2813, %v2903
      %v3109 = vadd.f32 %v2814, %v2903
      %v3110 = vadd.f32 %v2815, %v2903
      %v3111 = vadd.f32 %v2816, %v2903
      %v3112 = vadd.f32 %v2817, %v2903
      %v3113 = vadd.f32 %v2818, %v2903
      %v3114 = vadd.f32 %v2819, %v2903
      %v3115 = vadd.f32 %v2820, %v2903
      %v3116 = vadd.f32 %v2821, %v2903
      %v3117 = vadd.f32 %v2822, %v2903
      %v3118 = vadd.f32 %v2823, %v2903
      %v3119 = vadd.f32 %v2824, %v2903
      %v3120 = vadd.f32 %v2825, %v2903
      %v3121 = vadd.f32 %v2826, %v2903
      %v3122 = vadd.f32 %v2827, %v2903
      %v3123 = vadd.f32 %v2828, %v2903
      %v3124 = vadd.f32 %v2829, %v2903
      %v3125 = vadd.f32 %v2830, %v2903
      %v3126 = vadd.f32 %v2831, %v2903
      %v3127 = vadd.f32 %v2832, %v2903
      %v3128 = vadd.f32 %v2833, %v2903
      %v3129 = vadd.f32 %v2834, %v2903
      %v3130 = vadd.f32 %v2835, %v2903
      %v3131 = vadd.f32 %v2836, %v2903
      %v3132 = vadd.f32 %v2837, %v2903
      %v3133 = vadd.f32 %v2838, %v2903
      %v3134 = vadd.f32 %v2839, %v2903
      %v3135 = vadd.f32 %v2840, %v2903
      %v3136 = vadd.f32 %v2841, %v2903
      %v3137 = vadd.f32 %v2842, %v2903
      %v3138 = vadd.f32 %v2843, %v2903
      %v3139 = vadd.f32 %v2844, %v2903
      %v3140 = vadd.f32 %v2845, %v2903
      %v3141 = vadd.f32 %v2846, %v2903
      %v3142 = vadd.f32 %v2847, %v2903
      %v3143 = vadd.f32 %v2848, %v2903
      %v3144 = vadd.f32 %v2849, %v2903
      %v3145 = vadd.f32 %v2850, %v2903
      %v3146 = vadd.f32 %v2851, %v2903
      %v3147 = vadd.f32 %v2852, %v2903
      %v3148 = vadd.f32 %v2853, %v2903
      %v3149 = vadd.f32 %v2854, %v2903
      %v3150 = vadd.f32 %v2855, %v2903
      %v3151 = vadd.f32 %v2856, %v2903
      %v3152 = vadd.f32 %v2857, %v2903
      %v3153 = vadd.f32 %v2858, %v2903
      %v3154 = vadd.f32 %v2859, %v2903
      %v3155 = vadd.f32 %v2860, %v2903
      %v3156 = vadd.f32 %v2861, %v2903
      %v3157 = vadd.f32 %v2862, %v2903
      %v3158 = vadd.f32 %v2863, %v2903
      %v3159 = vadd.f32 %v2864, %v2903
      %v3160 = vadd.f32 %v2865, %v2903
      %v3161 = vadd.f32 %v2866, %v2903
      %v3162 = vadd.f32 %v2867, %v2903
      %v3163 = vadd.f32 %v2868, %v2903
      %v3164 = vadd.f32 %v2869, %v2903
      %v3165 = vadd.f32 %v2870, %v2903
      %v3166 = vadd.f32 %v2871, %v2903
      %v3167 = vadd.f32 %v2872, %v2903
      %v3168 = vadd.f32 %v2873, %v2903
      %v3169 = vadd.f32 %v2874, %v2903
      %v3170 = vadd.f32 %v2875, %v2903
      %v3171 = vadd.f32 %v2876, %v2903
      %v3172 = vadd.f32 %v2877, %v2903
      %v3173 = vadd.f32 %v2878, %v2903
      %v3174 = vadd.f32 %v2879, %v2903
      %v3175 = vadd.f32 %v2880, %v2903
      %v3176 = vadd.f32 %v2881, %v2903
      %v3177 = vadd.f32 %v2882, %v2903
      %v3178 = vadd.f32 %v2883, %v2903
      %v3179 = vadd.f32 %v2884, %v2903
      %v3180 = vadd.f32 %v2885, %v2903
      %v3181 = vadd.f32 %v2886, %v2903
      %v3182 = vadd.f32 %v2887, %v2903
      %v3183 = vadd.f32 %v2888, %v2903
      %v3184 = vadd.f32 %v2889, %v2903
      %v3185 = vadd.f32 %v2890, %v2903
      %v3186 = vadd.f32 %v2891, %v2903
      %v3187 = vadd.f32 %v2892, %v2903
      %v3188 = vadd.f32 %v2893, %v2903
      %v3189 = vadd.f32 %v2894, %v2903
      %v3190 = vadd.f32 %v2895, %v2903
      %v3191 = vadd.f32 %v2896, %v2903
      %v3192 = vadd.f32 %v2897, %v2903
      %vm3193 = vcmp.gt.f32.partialorder %v2905, 0.0
      %vm3194 = vcmp.gt.f32.partialorder %v2906, 0.0
      %vm3195 = vcmp.gt.f32.partialorder %v2907, 0.0
      %vm3196 = vcmp.gt.f32.partialorder %v2908, 0.0
      %vm3197 = vcmp.gt.f32.partialorder %v2909, 0.0
      %vm3198 = vcmp.gt.f32.partialorder %v2910, 0.0
      %vm3199 = vcmp.gt.f32.partialorder %v2911, 0.0
      %vm3200 = vcmp.gt.f32.partialorder %v2912, 0.0
      %vm3201 = vcmp.gt.f32.partialorder %v2913, 0.0
      %vm3202 = vcmp.gt.f32.partialorder %v2914, 0.0
      %vm3203 = vcmp.gt.f32.partialorder %v2915, 0.0
      %vm3204 = vcmp.gt.f32.partialorder %v2916, 0.0
      %vm3205 = vcmp.gt.f32.partialorder %v2917, 0.0
      %vm3206 = vcmp.gt.f32.partialorder %v2918, 0.0
      %vm3207 = vcmp.gt.f32.partialorder %v2919, 0.0
      %vm3208 = vcmp.gt.f32.partialorder %v2920, 0.0
      %vm3209 = vcmp.gt.f32.partialorder %v2921, 0.0
      %vm3210 = vcmp.gt.f32.partialorder %v2922, 0.0
      %vm3211 = vcmp.gt.f32.partialorder %v2923, 0.0
      %vm3212 = vcmp.gt.f32.partialorder %v2924, 0.0
      %vm3213 = vcmp.gt.f32.partialorder %v2925, 0.0
      %vm3214 = vcmp.gt.f32.partialorder %v2926, 0.0
      %vm3215 = vcmp.gt.f32.partialorder %v2927, 0.0
      %vm3216 = vcmp.gt.f32.partialorder %v2928, 0.0
      %vm3217 = vcmp.gt.f32.partialorder %v2929, 0.0
      %vm3218 = vcmp.gt.f32.partialorder %v2930, 0.0
      %vm3219 = vcmp.gt.f32.partialorder %v2931, 0.0
      %vm3220 = vcmp.gt.f32.partialorder %v2932, 0.0
      %vm3221 = vcmp.gt.f32.partialorder %v2933, 0.0
      %vm3222 = vcmp.gt.f32.partialorder %v2934, 0.0
      %vm3223 = vcmp.gt.f32.partialorder %v2935, 0.0
      %vm3224 = vcmp.gt.f32.partialorder %v2936, 0.0
      %vm3225 = vcmp.gt.f32.partialorder %v2937, 0.0
      %vm3226 = vcmp.gt.f32.partialorder %v2938, 0.0
      %vm3227 = vcmp.gt.f32.partialorder %v2939, 0.0
      %vm3228 = vcmp.gt.f32.partialorder %v2940, 0.0
      %vm3229 = vcmp.gt.f32.partialorder %v2941, 0.0
      %vm3230 = vcmp.gt.f32.partialorder %v2942, 0.0
      %vm3231 = vcmp.gt.f32.partialorder %v2943, 0.0
      %vm3232 = vcmp.gt.f32.partialorder %v2944, 0.0
      %vm3233 = vcmp.gt.f32.partialorder %v2945, 0.0
      %vm3234 = vcmp.gt.f32.partialorder %v2946, 0.0
      %vm3235 = vcmp.gt.f32.partialorder %v2947, 0.0
      %vm3236 = vcmp.gt.f32.partialorder %v2948, 0.0
      %vm3237 = vcmp.gt.f32.partialorder %v2949, 0.0
      %vm3238 = vcmp.gt.f32.partialorder %v2950, 0.0
      %vm3239 = vcmp.gt.f32.partialorder %v2951, 0.0
      %vm3240 = vcmp.gt.f32.partialorder %v2952, 0.0
      %vm3241 = vcmp.gt.f32.partialorder %v2953, 0.0
      %vm3242 = vcmp.gt.f32.partialorder %v2954, 0.0
      %vm3243 = vcmp.gt.f32.partialorder %v2955, 0.0
      %vm3244 = vcmp.gt.f32.partialorder %v2956, 0.0
      %vm3245 = vcmp.gt.f32.partialorder %v2957, 0.0
      %vm3246 = vcmp.gt.f32.partialorder %v2958, 0.0
      %vm3247 = vcmp.gt.f32.partialorder %v2959, 0.0
      %vm3248 = vcmp.gt.f32.partialorder %v2960, 0.0
      %vm3249 = vcmp.gt.f32.partialorder %v2961, 0.0
      %vm3250 = vcmp.gt.f32.partialorder %v2962, 0.0
      %vm3251 = vcmp.gt.f32.partialorder %v2963, 0.0
      %vm3252 = vcmp.gt.f32.partialorder %v2964, 0.0
      %vm3253 = vcmp.gt.f32.partialorder %v2965, 0.0
      %vm3254 = vcmp.gt.f32.partialorder %v2966, 0.0
      %vm3255 = vcmp.gt.f32.partialorder %v2967, 0.0
      %vm3256 = vcmp.gt.f32.partialorder %v2968, 0.0
      %vm3257 = vcmp.gt.f32.partialorder %v2969, 0.0
      %vm3258 = vcmp.gt.f32.partialorder %v2970, 0.0
      %vm3259 = vcmp.gt.f32.partialorder %v2971, 0.0
      %vm3260 = vcmp.gt.f32.partialorder %v2972, 0.0
      %vm3261 = vcmp.gt.f32.partialorder %v2973, 0.0
      %vm3262 = vcmp.gt.f32.partialorder %v2974, 0.0
      %vm3263 = vcmp.gt.f32.partialorder %v2975, 0.0
      %vm3264 = vcmp.gt.f32.partialorder %v2976, 0.0
      %vm3265 = vcmp.gt.f32.partialorder %v2977, 0.0
      %vm3266 = vcmp.gt.f32.partialorder %v2978, 0.0
      %vm3267 = vcmp.gt.f32.partialorder %v2979, 0.0
      %vm3268 = vcmp.gt.f32.partialorder %v2980, 0.0
      %vm3269 = vcmp.gt.f32.partialorder %v2981, 0.0
      %vm3270 = vcmp.gt.f32.partialorder %v2982, 0.0
      %vm3271 = vcmp.gt.f32.partialorder %v2983, 0.0
      %vm3272 = vcmp.gt.f32.partialorder %v2984, 0.0
      %vm3273 = vcmp.gt.f32.partialorder %v2985, 0.0
      %vm3274 = vcmp.gt.f32.partialorder %v2986, 0.0
      %vm3275 = vcmp.gt.f32.partialorder %v2987, 0.0
      %vm3276 = vcmp.gt.f32.partialorder %v2988, 0.0
      %vm3277 = vcmp.gt.f32.partialorder %v2989, 0.0
      %vm3278 = vcmp.gt.f32.partialorder %v2990, 0.0
      %vm3279 = vcmp.gt.f32.partialorder %v2991, 0.0
      %vm3280 = vcmp.gt.f32.partialorder %v2992, 0.0
      %vm3281 = vcmp.gt.f32.partialorder %v2993, 0.0
      %vm3282 = vcmp.gt.f32.partialorder %v2994, 0.0
      %vm3283 = vcmp.gt.f32.partialorder %v2995, 0.0
      %vm3284 = vcmp.gt.f32.partialorder %v2996, 0.0
      %vm3285 = vcmp.gt.f32.partialorder %v2997, 0.0
      %vm3286 = vcmp.gt.f32.partialorder %v2998, 0.0
      %vm3287 = vcmp.gt.f32.partialorder %v2999, 0.0
      %vm3288 = vcmp.gt.f32.partialorder %v3000, 0.0
      %vm3289 = vcmp.gt.f32.partialorder %v3001, 0.0
      %vm3290 = vcmp.gt.f32.partialorder %v3002, 0.0
      %vm3291 = vcmp.gt.f32.partialorder %v3003, 0.0
      %vm3292 = vcmp.gt.f32.partialorder %v3004, 0.0
      %vm3293 = vcmp.gt.f32.partialorder %v3005, 0.0
      %vm3294 = vcmp.gt.f32.partialorder %v3006, 0.0
      %vm3295 = vcmp.gt.f32.partialorder %v3007, 0.0
      %vm3296 = vcmp.gt.f32.partialorder %v3008, 0.0
      %vm3297 = vcmp.gt.f32.partialorder %v3009, 0.0
      %vm3298 = vcmp.gt.f32.partialorder %v3010, 0.0
      %vm3299 = vcmp.gt.f32.partialorder %v3011, 0.0
      %vm3300 = vcmp.gt.f32.partialorder %v3012, 0.0
      %vm3301 = vcmp.gt.f32.partialorder %v3013, 0.0
      %vm3302 = vcmp.gt.f32.partialorder %v3014, 0.0
      %vm3303 = vcmp.gt.f32.partialorder %v3015, 0.0
      %vm3304 = vcmp.gt.f32.partialorder %v3016, 0.0
      %vm3305 = vcmp.gt.f32.partialorder %v3017, 0.0
      %vm3306 = vcmp.gt.f32.partialorder %v3018, 0.0
      %vm3307 = vcmp.gt.f32.partialorder %v3019, 0.0
      %vm3308 = vcmp.gt.f32.partialorder %v3020, 0.0
      %vm3309 = vcmp.gt.f32.partialorder %v3021, 0.0
      %vm3310 = vcmp.gt.f32.partialorder %v3022, 0.0
      %vm3311 = vcmp.gt.f32.partialorder %v3023, 0.0
      %vm3312 = vcmp.gt.f32.partialorder %v3024, 0.0
      %vm3313 = vcmp.gt.f32.partialorder %v3025, 0.0
      %vm3314 = vcmp.gt.f32.partialorder %v3026, 0.0
      %vm3315 = vcmp.gt.f32.partialorder %v3027, 0.0
      %vm3316 = vcmp.gt.f32.partialorder %v3028, 0.0
      %vm3317 = vcmp.gt.f32.partialorder %v3029, 0.0
      %vm3318 = vcmp.gt.f32.partialorder %v3030, 0.0
      %vm3319 = vcmp.gt.f32.partialorder %v3031, 0.0
      %vm3320 = vcmp.gt.f32.partialorder %v3032, 0.0
      %vm3321 = vcmp.gt.f32.partialorder %v3033, 0.0
      %vm3322 = vcmp.gt.f32.partialorder %v3034, 0.0
      %vm3323 = vcmp.gt.f32.partialorder %v3035, 0.0
      %vm3324 = vcmp.gt.f32.partialorder %v3036, 0.0
      %vm3325 = vcmp.gt.f32.partialorder %v3037, 0.0
      %vm3326 = vcmp.gt.f32.partialorder %v3038, 0.0
      %vm3327 = vcmp.gt.f32.partialorder %v3039, 0.0
      %vm3328 = vcmp.gt.f32.partialorder %v3040, 0.0
      %vm3329 = vcmp.gt.f32.partialorder %v3041, 0.0
      %vm3330 = vcmp.gt.f32.partialorder %v3042, 0.0
      %vm3331 = vcmp.gt.f32.partialorder %v3043, 0.0
      %vm3332 = vcmp.gt.f32.partialorder %v3044, 0.0
      %vm3333 = vcmp.gt.f32.partialorder %v3045, 0.0
      %vm3334 = vcmp.gt.f32.partialorder %v3046, 0.0
      %vm3335 = vcmp.gt.f32.partialorder %v3047, 0.0
      %vm3336 = vcmp.gt.f32.partialorder %v3048, 0.0
      %vm3337 = vcmp.gt.f32.partialorder %v3049, 0.0
      %vm3338 = vcmp.gt.f32.partialorder %v3050, 0.0
      %vm3339 = vcmp.gt.f32.partialorder %v3051, 0.0
      %vm3340 = vcmp.gt.f32.partialorder %v3052, 0.0
      %vm3341 = vcmp.gt.f32.partialorder %v3053, 0.0
      %vm3342 = vcmp.gt.f32.partialorder %v3054, 0.0
      %vm3343 = vcmp.gt.f32.partialorder %v3055, 0.0
      %vm3344 = vcmp.gt.f32.partialorder %v3056, 0.0
      %vm3345 = vcmp.gt.f32.partialorder %v3057, 0.0
      %vm3346 = vcmp.gt.f32.partialorder %v3058, 0.0
      %vm3347 = vcmp.gt.f32.partialorder %v3059, 0.0
      %vm3348 = vcmp.gt.f32.partialorder %v3060, 0.0
      %vm3349 = vcmp.gt.f32.partialorder %v3061, 0.0
      %vm3350 = vcmp.gt.f32.partialorder %v3062, 0.0
      %vm3351 = vcmp.gt.f32.partialorder %v3063, 0.0
      %vm3352 = vcmp.gt.f32.partialorder %v3064, 0.0
      %vm3353 = vcmp.gt.f32.partialorder %v3065, 0.0
      %vm3354 = vcmp.gt.f32.partialorder %v3066, 0.0
      %vm3355 = vcmp.gt.f32.partialorder %v3067, 0.0
      %vm3356 = vcmp.gt.f32.partialorder %v3068, 0.0
      %vm3357 = vcmp.gt.f32.partialorder %v3069, 0.0
      %vm3358 = vcmp.gt.f32.partialorder %v3070, 0.0
      %vm3359 = vcmp.gt.f32.partialorder %v3071, 0.0
      %vm3360 = vcmp.gt.f32.partialorder %v3072, 0.0
      %vm3361 = vcmp.gt.f32.partialorder %v3073, 0.0
      %vm3362 = vcmp.gt.f32.partialorder %v3074, 0.0
      %vm3363 = vcmp.gt.f32.partialorder %v3075, 0.0
      %vm3364 = vcmp.gt.f32.partialorder %v3076, 0.0
      %vm3365 = vcmp.gt.f32.partialorder %v3077, 0.0
      %vm3366 = vcmp.gt.f32.partialorder %v3078, 0.0
      %vm3367 = vcmp.gt.f32.partialorder %v3079, 0.0
      %vm3368 = vcmp.gt.f32.partialorder %v3080, 0.0
      %vm3369 = vcmp.gt.f32.partialorder %v3081, 0.0
      %vm3370 = vcmp.gt.f32.partialorder %v3082, 0.0
      %vm3371 = vcmp.gt.f32.partialorder %v3083, 0.0
      %vm3372 = vcmp.gt.f32.partialorder %v3084, 0.0
      %vm3373 = vcmp.gt.f32.partialorder %v3085, 0.0
      %vm3374 = vcmp.gt.f32.partialorder %v3086, 0.0
      %vm3375 = vcmp.gt.f32.partialorder %v3087, 0.0
      %vm3376 = vcmp.gt.f32.partialorder %v3088, 0.0
      %vm3377 = vcmp.gt.f32.partialorder %v3089, 0.0
      %vm3378 = vcmp.gt.f32.partialorder %v3090, 0.0
      %vm3379 = vcmp.gt.f32.partialorder %v3091, 0.0
      %vm3380 = vcmp.gt.f32.partialorder %v3092, 0.0
      %vm3381 = vcmp.gt.f32.partialorder %v3093, 0.0
      %vm3382 = vcmp.gt.f32.partialorder %v3094, 0.0
      %vm3383 = vcmp.gt.f32.partialorder %v3095, 0.0
      %vm3384 = vcmp.gt.f32.partialorder %v3096, 0.0
      %vm3385 = vcmp.gt.f32.partialorder %v3097, 0.0
      %vm3386 = vcmp.gt.f32.partialorder %v3098, 0.0
      %vm3387 = vcmp.gt.f32.partialorder %v3099, 0.0
      %vm3388 = vcmp.gt.f32.partialorder %v3100, 0.0
      %vm3389 = vcmp.gt.f32.partialorder %v3101, 0.0
      %vm3390 = vcmp.gt.f32.partialorder %v3102, 0.0
      %vm3391 = vcmp.gt.f32.partialorder %v3103, 0.0
      %vm3392 = vcmp.gt.f32.partialorder %v3104, 0.0
      %vm3393 = vcmp.gt.f32.partialorder %v3105, 0.0
      %vm3394 = vcmp.gt.f32.partialorder %v3106, 0.0
      %vm3395 = vcmp.gt.f32.partialorder %v3107, 0.0
      %vm3396 = vcmp.gt.f32.partialorder %v3108, 0.0
      %vm3397 = vcmp.gt.f32.partialorder %v3109, 0.0
      %vm3398 = vcmp.gt.f32.partialorder %v3110, 0.0
      %vm3399 = vcmp.gt.f32.partialorder %v3111, 0.0
      %vm3400 = vcmp.gt.f32.partialorder %v3112, 0.0
      %vm3401 = vcmp.gt.f32.partialorder %v3113, 0.0
      %vm3402 = vcmp.gt.f32.partialorder %v3114, 0.0
      %vm3403 = vcmp.gt.f32.partialorder %v3115, 0.0
      %vm3404 = vcmp.gt.f32.partialorder %v3116, 0.0
      %vm3405 = vcmp.gt.f32.partialorder %v3117, 0.0
      %vm3406 = vcmp.gt.f32.partialorder %v3118, 0.0
      %vm3407 = vcmp.gt.f32.partialorder %v3119, 0.0
      %vm3408 = vcmp.gt.f32.partialorder %v3120, 0.0
      %vm3409 = vcmp.gt.f32.partialorder %v3121, 0.0
      %vm3410 = vcmp.gt.f32.partialorder %v3122, 0.0
      %vm3411 = vcmp.gt.f32.partialorder %v3123, 0.0
      %vm3412 = vcmp.gt.f32.partialorder %v3124, 0.0
      %vm3413 = vcmp.gt.f32.partialorder %v3125, 0.0
      %vm3414 = vcmp.gt.f32.partialorder %v3126, 0.0
      %vm3415 = vcmp.gt.f32.partialorder %v3127, 0.0
      %vm3416 = vcmp.gt.f32.partialorder %v3128, 0.0
      %vm3417 = vcmp.gt.f32.partialorder %v3129, 0.0
      %vm3418 = vcmp.gt.f32.partialorder %v3130, 0.0
      %vm3419 = vcmp.gt.f32.partialorder %v3131, 0.0
      %vm3420 = vcmp.gt.f32.partialorder %v3132, 0.0
      %vm3421 = vcmp.gt.f32.partialorder %v3133, 0.0
      %vm3422 = vcmp.gt.f32.partialorder %v3134, 0.0
      %vm3423 = vcmp.gt.f32.partialorder %v3135, 0.0
      %vm3424 = vcmp.gt.f32.partialorder %v3136, 0.0
      %vm3425 = vcmp.gt.f32.partialorder %v3137, 0.0
      %vm3426 = vcmp.gt.f32.partialorder %v3138, 0.0
      %vm3427 = vcmp.gt.f32.partialorder %v3139, 0.0
      %vm3428 = vcmp.gt.f32.partialorder %v3140, 0.0
      %vm3429 = vcmp.gt.f32.partialorder %v3141, 0.0
      %vm3430 = vcmp.gt.f32.partialorder %v3142, 0.0
      %vm3431 = vcmp.gt.f32.partialorder %v3143, 0.0
      %vm3432 = vcmp.gt.f32.partialorder %v3144, 0.0
      %vm3433 = vcmp.gt.f32.partialorder %v3145, 0.0
      %vm3434 = vcmp.gt.f32.partialorder %v3146, 0.0
      %vm3435 = vcmp.gt.f32.partialorder %v3147, 0.0
      %vm3436 = vcmp.gt.f32.partialorder %v3148, 0.0
      %vm3437 = vcmp.gt.f32.partialorder %v3149, 0.0
      %vm3438 = vcmp.gt.f32.partialorder %v3150, 0.0
      %vm3439 = vcmp.gt.f32.partialorder %v3151, 0.0
      %vm3440 = vcmp.gt.f32.partialorder %v3152, 0.0
      %vm3441 = vcmp.gt.f32.partialorder %v3153, 0.0
      %vm3442 = vcmp.gt.f32.partialorder %v3154, 0.0
      %vm3443 = vcmp.gt.f32.partialorder %v3155, 0.0
      %vm3444 = vcmp.gt.f32.partialorder %v3156, 0.0
      %vm3445 = vcmp.gt.f32.partialorder %v3157, 0.0
      %vm3446 = vcmp.gt.f32.partialorder %v3158, 0.0
      %vm3447 = vcmp.gt.f32.partialorder %v3159, 0.0
      %vm3448 = vcmp.gt.f32.partialorder %v3160, 0.0
      %vm3449 = vcmp.gt.f32.partialorder %v3161, 0.0
      %vm3450 = vcmp.gt.f32.partialorder %v3162, 0.0
      %vm3451 = vcmp.gt.f32.partialorder %v3163, 0.0
      %vm3452 = vcmp.gt.f32.partialorder %v3164, 0.0
      %vm3453 = vcmp.gt.f32.partialorder %v3165, 0.0
      %vm3454 = vcmp.gt.f32.partialorder %v3166, 0.0
      %vm3455 = vcmp.gt.f32.partialorder %v3167, 0.0
      %vm3456 = vcmp.gt.f32.partialorder %v3168, 0.0
      %vm3457 = vcmp.gt.f32.partialorder %v3169, 0.0
      %vm3458 = vcmp.gt.f32.partialorder %v3170, 0.0
      %vm3459 = vcmp.gt.f32.partialorder %v3171, 0.0
      %vm3460 = vcmp.gt.f32.partialorder %v3172, 0.0
      %vm3461 = vcmp.gt.f32.partialorder %v3173, 0.0
      %vm3462 = vcmp.gt.f32.partialorder %v3174, 0.0
      %vm3463 = vcmp.gt.f32.partialorder %v3175, 0.0
      %vm3464 = vcmp.gt.f32.partialorder %v3176, 0.0
      %vm3465 = vcmp.gt.f32.partialorder %v3177, 0.0
      %vm3466 = vcmp.gt.f32.partialorder %v3178, 0.0
      %vm3467 = vcmp.gt.f32.partialorder %v3179, 0.0
      %vm3468 = vcmp.gt.f32.partialorder %v3180, 0.0
      %vm3469 = vcmp.gt.f32.partialorder %v3181, 0.0
      %vm3470 = vcmp.gt.f32.partialorder %v3182, 0.0
      %vm3471 = vcmp.gt.f32.partialorder %v3183, 0.0
      %vm3472 = vcmp.gt.f32.partialorder %v3184, 0.0
      %vm3473 = vcmp.gt.f32.partialorder %v3185, 0.0
      %vm3474 = vcmp.gt.f32.partialorder %v3186, 0.0
      %vm3475 = vcmp.gt.f32.partialorder %v3187, 0.0
      %vm3476 = vcmp.gt.f32.partialorder %v3188, 0.0
      %vm3477 = vcmp.gt.f32.partialorder %v3189, 0.0
      %vm3478 = vcmp.gt.f32.partialorder %v3190, 0.0
      %vm3479 = vcmp.gt.f32.partialorder %v3191, 0.0
      %vm3480 = vcmp.gt.f32.partialorder %v3192, 0.0
      %v3481 = vmin.f32 %v2905, 0.0
      %v3482 = vmin.f32 %v2906, 0.0
      %v3483 = vmin.f32 %v2907, 0.0
      %v3484 = vmin.f32 %v2908, 0.0
      %v3485 = vmin.f32 %v2909, 0.0
      %v3486 = vmin.f32 %v2910, 0.0
      %v3487 = vmin.f32 %v2911, 0.0
      %v3488 = vmin.f32 %v2912, 0.0
      %v3489 = vmin.f32 %v2913, 0.0
      %v3490 = vmin.f32 %v2914, 0.0
      %v3491 = vmin.f32 %v2915, 0.0
      %v3492 = vmin.f32 %v2916, 0.0
      %v3493 = vmin.f32 %v2917, 0.0
      %v3494 = vmin.f32 %v2918, 0.0
      %v3495 = vmin.f32 %v2919, 0.0
      %v3496 = vmin.f32 %v2920, 0.0
      %v3497 = vmin.f32 %v2921, 0.0
      %v3498 = vmin.f32 %v2922, 0.0
      %v3499 = vmin.f32 %v2923, 0.0
      %v3500 = vmin.f32 %v2924, 0.0
      %v3501 = vmin.f32 %v2925, 0.0
      %v3502 = vmin.f32 %v2926, 0.0
      %v3503 = vmin.f32 %v2927, 0.0
      %v3504 = vmin.f32 %v2928, 0.0
      %v3505 = vmin.f32 %v2929, 0.0
      %v3506 = vmin.f32 %v2930, 0.0
      %v3507 = vmin.f32 %v2931, 0.0
      %v3508 = vmin.f32 %v2932, 0.0
      %v3509 = vmin.f32 %v2933, 0.0
      %v3510 = vmin.f32 %v2934, 0.0
      %v3511 = vmin.f32 %v2935, 0.0
      %v3512 = vmin.f32 %v2936, 0.0
      %v3513 = vmin.f32 %v2937, 0.0
      %v3514 = vmin.f32 %v2938, 0.0
      %v3515 = vmin.f32 %v2939, 0.0
      %v3516 = vmin.f32 %v2940, 0.0
      %v3517 = vmin.f32 %v2941, 0.0
      %v3518 = vmin.f32 %v2942, 0.0
      %v3519 = vmin.f32 %v2943, 0.0
      %v3520 = vmin.f32 %v2944, 0.0
      %v3521 = vmin.f32 %v2945, 0.0
      %v3522 = vmin.f32 %v2946, 0.0
      %v3523 = vmin.f32 %v2947, 0.0
      %v3524 = vmin.f32 %v2948, 0.0
      %v3525 = vmin.f32 %v2949, 0.0
      %v3526 = vmin.f32 %v2950, 0.0
      %v3527 = vmin.f32 %v2951, 0.0
      %v3528 = vmin.f32 %v2952, 0.0
      %v3529 = vmin.f32 %v2953, 0.0
      %v3530 = vmin.f32 %v2954, 0.0
      %v3531 = vmin.f32 %v2955, 0.0
      %v3532 = vmin.f32 %v2956, 0.0
      %v3533 = vmin.f32 %v2957, 0.0
      %v3534 = vmin.f32 %v2958, 0.0
      %v3535 = vmin.f32 %v2959, 0.0
      %v3536 = vmin.f32 %v2960, 0.0
      %v3537 = vmin.f32 %v2961, 0.0
      %v3538 = vmin.f32 %v2962, 0.0
      %v3539 = vmin.f32 %v2963, 0.0
      %v3540 = vmin.f32 %v2964, 0.0
      %v3541 = vmin.f32 %v2965, 0.0
      %v3542 = vmin.f32 %v2966, 0.0
      %v3543 = vmin.f32 %v2967, 0.0
      %v3544 = vmin.f32 %v2968, 0.0
      %v3545 = vmin.f32 %v2969, 0.0
      %v3546 = vmin.f32 %v2970, 0.0
      %v3547 = vmin.f32 %v2971, 0.0
      %v3548 = vmin.f32 %v2972, 0.0
      %v3549 = vmin.f32 %v2973, 0.0
      %v3550 = vmin.f32 %v2974, 0.0
      %v3551 = vmin.f32 %v2975, 0.0
      %v3552 = vmin.f32 %v2976, 0.0
      %v3553 = vmin.f32 %v2977, 0.0
      %v3554 = vmin.f32 %v2978, 0.0
      %v3555 = vmin.f32 %v2979, 0.0
      %v3556 = vmin.f32 %v2980, 0.0
      %v3557 = vmin.f32 %v2981, 0.0
      %v3558 = vmin.f32 %v2982, 0.0
      %v3559 = vmin.f32 %v2983, 0.0
      %v3560 = vmin.f32 %v2984, 0.0
      %v3561 = vmin.f32 %v2985, 0.0
      %v3562 = vmin.f32 %v2986, 0.0
      %v3563 = vmin.f32 %v2987, 0.0
      %v3564 = vmin.f32 %v2988, 0.0
      %v3565 = vmin.f32 %v2989, 0.0
      %v3566 = vmin.f32 %v2990, 0.0
      %v3567 = vmin.f32 %v2991, 0.0
      %v3568 = vmin.f32 %v2992, 0.0
      %v3569 = vmin.f32 %v2993, 0.0
      %v3570 = vmin.f32 %v2994, 0.0
      %v3571 = vmin.f32 %v2995, 0.0
      %v3572 = vmin.f32 %v2996, 0.0
      %v3573 = vmin.f32 %v2997, 0.0
      %v3574 = vmin.f32 %v2998, 0.0
      %v3575 = vmin.f32 %v2999, 0.0
      %v3576 = vmin.f32 %v3000, 0.0
      %v3577 = vmin.f32 %v3001, 0.0
      %v3578 = vmin.f32 %v3002, 0.0
      %v3579 = vmin.f32 %v3003, 0.0
      %v3580 = vmin.f32 %v3004, 0.0
      %v3581 = vmin.f32 %v3005, 0.0
      %v3582 = vmin.f32 %v3006, 0.0
      %v3583 = vmin.f32 %v3007, 0.0
      %v3584 = vmin.f32 %v3008, 0.0
      %v3585 = vmin.f32 %v3009, 0.0
      %v3586 = vmin.f32 %v3010, 0.0
      %v3587 = vmin.f32 %v3011, 0.0
      %v3588 = vmin.f32 %v3012, 0.0
      %v3589 = vmin.f32 %v3013, 0.0
      %v3590 = vmin.f32 %v3014, 0.0
      %v3591 = vmin.f32 %v3015, 0.0
      %v3592 = vmin.f32 %v3016, 0.0
      %v3593 = vmin.f32 %v3017, 0.0
      %v3594 = vmin.f32 %v3018, 0.0
      %v3595 = vmin.f32 %v3019, 0.0
      %v3596 = vmin.f32 %v3020, 0.0
      %v3597 = vmin.f32 %v3021, 0.0
      %v3598 = vmin.f32 %v3022, 0.0
      %v3599 = vmin.f32 %v3023, 0.0
      %v3600 = vmin.f32 %v3024, 0.0
      %v3601 = vmin.f32 %v3025, 0.0
      %v3602 = vmin.f32 %v3026, 0.0
      %v3603 = vmin.f32 %v3027, 0.0
      %v3604 = vmin.f32 %v3028, 0.0
      %v3605 = vmin.f32 %v3029, 0.0
      %v3606 = vmin.f32 %v3030, 0.0
      %v3607 = vmin.f32 %v3031, 0.0
      %v3608 = vmin.f32 %v3032, 0.0
      %v3609 = vmin.f32 %v3033, 0.0
      %v3610 = vmin.f32 %v3034, 0.0
      %v3611 = vmin.f32 %v3035, 0.0
      %v3612 = vmin.f32 %v3036, 0.0
      %v3613 = vmin.f32 %v3037, 0.0
      %v3614 = vmin.f32 %v3038, 0.0
      %v3615 = vmin.f32 %v3039, 0.0
      %v3616 = vmin.f32 %v3040, 0.0
      %v3617 = vmin.f32 %v3041, 0.0
      %v3618 = vmin.f32 %v3042, 0.0
      %v3619 = vmin.f32 %v3043, 0.0
      %v3620 = vmin.f32 %v3044, 0.0
      %v3621 = vmin.f32 %v3045, 0.0
      %v3622 = vmin.f32 %v3046, 0.0
      %v3623 = vmin.f32 %v3047, 0.0
      %v3624 = vmin.f32 %v3048, 0.0
      %v3625 = vmin.f32 %v3049, 0.0
      %v3626 = vmin.f32 %v3050, 0.0
      %v3627 = vmin.f32 %v3051, 0.0
      %v3628 = vmin.f32 %v3052, 0.0
      %v3629 = vmin.f32 %v3053, 0.0
      %v3630 = vmin.f32 %v3054, 0.0
      %v3631 = vmin.f32 %v3055, 0.0
      %v3632 = vmin.f32 %v3056, 0.0
      %v3633 = vmin.f32 %v3057, 0.0
      %v3634 = vmin.f32 %v3058, 0.0
      %v3635 = vmin.f32 %v3059, 0.0
      %v3636 = vmin.f32 %v3060, 0.0
      %v3637 = vmin.f32 %v3061, 0.0
      %v3638 = vmin.f32 %v3062, 0.0
      %v3639 = vmin.f32 %v3063, 0.0
      %v3640 = vmin.f32 %v3064, 0.0
      %v3641 = vmin.f32 %v3065, 0.0
      %v3642 = vmin.f32 %v3066, 0.0
      %v3643 = vmin.f32 %v3067, 0.0
      %v3644 = vmin.f32 %v3068, 0.0
      %v3645 = vmin.f32 %v3069, 0.0
      %v3646 = vmin.f32 %v3070, 0.0
      %v3647 = vmin.f32 %v3071, 0.0
      %v3648 = vmin.f32 %v3072, 0.0
      %v3649 = vmin.f32 %v3073, 0.0
      %v3650 = vmin.f32 %v3074, 0.0
      %v3651 = vmin.f32 %v3075, 0.0
      %v3652 = vmin.f32 %v3076, 0.0
      %v3653 = vmin.f32 %v3077, 0.0
      %v3654 = vmin.f32 %v3078, 0.0
      %v3655 = vmin.f32 %v3079, 0.0
      %v3656 = vmin.f32 %v3080, 0.0
      %v3657 = vmin.f32 %v3081, 0.0
      %v3658 = vmin.f32 %v3082, 0.0
      %v3659 = vmin.f32 %v3083, 0.0
      %v3660 = vmin.f32 %v3084, 0.0
      %v3661 = vmin.f32 %v3085, 0.0
      %v3662 = vmin.f32 %v3086, 0.0
      %v3663 = vmin.f32 %v3087, 0.0
      %v3664 = vmin.f32 %v3088, 0.0
      %v3665 = vmin.f32 %v3089, 0.0
      %v3666 = vmin.f32 %v3090, 0.0
      %v3667 = vmin.f32 %v3091, 0.0
      %v3668 = vmin.f32 %v3092, 0.0
      %v3669 = vmin.f32 %v3093, 0.0
      %v3670 = vmin.f32 %v3094, 0.0
      %v3671 = vmin.f32 %v3095, 0.0
      %v3672 = vmin.f32 %v3096, 0.0
      %v3673 = vmin.f32 %v3097, 0.0
      %v3674 = vmin.f32 %v3098, 0.0
      %v3675 = vmin.f32 %v3099, 0.0
      %v3676 = vmin.f32 %v3100, 0.0
      %v3677 = vmin.f32 %v3101, 0.0
      %v3678 = vmin.f32 %v3102, 0.0
      %v3679 = vmin.f32 %v3103, 0.0
      %v3680 = vmin.f32 %v3104, 0.0
      %v3681 = vmin.f32 %v3105, 0.0
      %v3682 = vmin.f32 %v3106, 0.0
      %v3683 = vmin.f32 %v3107, 0.0
      %v3684 = vmin.f32 %v3108, 0.0
      %v3685 = vmin.f32 %v3109, 0.0
      %v3686 = vmin.f32 %v3110, 0.0
      %v3687 = vmin.f32 %v3111, 0.0
      %v3688 = vmin.f32 %v3112, 0.0
      %v3689 = vmin.f32 %v3113, 0.0
      %v3690 = vmin.f32 %v3114, 0.0
      %v3691 = vmin.f32 %v3115, 0.0
      %v3692 = vmin.f32 %v3116, 0.0
      %v3693 = vmin.f32 %v3117, 0.0
      %v3694 = vmin.f32 %v3118, 0.0
      %v3695 = vmin.f32 %v3119, 0.0
      %v3696 = vmin.f32 %v3120, 0.0
      %v3697 = vmin.f32 %v3121, 0.0
      %v3698 = vmin.f32 %v3122, 0.0
      %v3699 = vmin.f32 %v3123, 0.0
      %v3700 = vmin.f32 %v3124, 0.0
      %v3701 = vmin.f32 %v3125, 0.0
      %v3702 = vmin.f32 %v3126, 0.0
      %v3703 = vmin.f32 %v3127, 0.0
      %v3704 = vmin.f32 %v3128, 0.0
      %v3705 = vmin.f32 %v3129, 0.0
      %v3706 = vmin.f32 %v3130, 0.0
      %v3707 = vmin.f32 %v3131, 0.0
      %v3708 = vmin.f32 %v3132, 0.0
      %v3709 = vmin.f32 %v3133, 0.0
      %v3710 = vmin.f32 %v3134, 0.0
      %v3711 = vmin.f32 %v3135, 0.0
      %v3712 = vmin.f32 %v3136, 0.0
      %v3713 = vmin.f32 %v3137, 0.0
      %v3714 = vmin.f32 %v3138, 0.0
      %v3715 = vmin.f32 %v3139, 0.0
      %v3716 = vmin.f32 %v3140, 0.0
      %v3717 = vmin.f32 %v3141, 0.0
      %v3718 = vmin.f32 %v3142, 0.0
      %v3719 = vmin.f32 %v3143, 0.0
      %v3720 = vmin.f32 %v3144, 0.0
      %v3721 = vmin.f32 %v3145, 0.0
      %v3722 = vmin.f32 %v3146, 0.0
      %v3723 = vmin.f32 %v3147, 0.0
      %v3724 = vmin.f32 %v3148, 0.0
      %v3725 = vmin.f32 %v3149, 0.0
      %v3726 = vmin.f32 %v3150, 0.0
      %v3727 = vmin.f32 %v3151, 0.0
      %v3728 = vmin.f32 %v3152, 0.0
      %v3729 = vmin.f32 %v3153, 0.0
      %v3730 = vmin.f32 %v3154, 0.0
      %v3731 = vmin.f32 %v3155, 0.0
      %v3732 = vmin.f32 %v3156, 0.0
      %v3733 = vmin.f32 %v3157, 0.0
      %v3734 = vmin.f32 %v3158, 0.0
      %v3735 = vmin.f32 %v3159, 0.0
      %v3736 = vmin.f32 %v3160, 0.0
      %v3737 = vmin.f32 %v3161, 0.0
      %v3738 = vmin.f32 %v3162, 0.0
      %v3739 = vmin.f32 %v3163, 0.0
      %v3740 = vmin.f32 %v3164, 0.0
      %v3741 = vmin.f32 %v3165, 0.0
      %v3742 = vmin.f32 %v3166, 0.0
      %v3743 = vmin.f32 %v3167, 0.0
      %v3744 = vmin.f32 %v3168, 0.0
      %v3745 = vmin.f32 %v3169, 0.0
      %v3746 = vmin.f32 %v3170, 0.0
      %v3747 = vmin.f32 %v3171, 0.0
      %v3748 = vmin.f32 %v3172, 0.0
      %v3749 = vmin.f32 %v3173, 0.0
      %v3750 = vmin.f32 %v3174, 0.0
      %v3751 = vmin.f32 %v3175, 0.0
      %v3752 = vmin.f32 %v3176, 0.0
      %v3753 = vmin.f32 %v3177, 0.0
      %v3754 = vmin.f32 %v3178, 0.0
      %v3755 = vmin.f32 %v3179, 0.0
      %v3756 = vmin.f32 %v3180, 0.0
      %v3757 = vmin.f32 %v3181, 0.0
      %v3758 = vmin.f32 %v3182, 0.0
      %v3759 = vmin.f32 %v3183, 0.0
      %v3760 = vmin.f32 %v3184, 0.0
      %v3761 = vmin.f32 %v3185, 0.0
      %v3762 = vmin.f32 %v3186, 0.0
      %v3763 = vmin.f32 %v3187, 0.0
      %v3764 = vmin.f32 %v3188, 0.0
      %v3765 = vmin.f32 %v3189, 0.0
      %v3766 = vmin.f32 %v3190, 0.0
      %v3767 = vmin.f32 %v3191, 0.0
      %v3768 = vmin.f32 %v3192, 0.0
      %v3769 = vmul.f32 %v3481, 1.442695
      %v3770 = vpow.pop %v3769
      %v3771 = vmul.f32 %v3482, 1.442695
      %v3772 = vpow.pop %v3771
      %v3773 = vmul.f32 %v3483, 1.442695
      %v3774 = vpow.pop %v3773
      %v3775 = vmul.f32 %v3484, 1.442695
      %v3776 = vpow.pop %v3775
      %v3777 = vmul.f32 %v3485, 1.442695
      %v3778 = vpow.pop %v3777
      %v3779 = vmul.f32 %v3486, 1.442695
      %v3780 = vpow.pop %v3779
      %v3781 = vmul.f32 %v3487, 1.442695
      %v3782 = vpow.pop %v3781
      %v3783 = vmul.f32 %v3488, 1.442695
      %v3784 = vpow.pop %v3783
      %v3785 = vmul.f32 %v3489, 1.442695
      %v3786 = vpow.pop %v3785
      %v3787 = vmul.f32 %v3490, 1.442695
      %v3788 = vpow.pop %v3787
      %v3789 = vmul.f32 %v3491, 1.442695
      %v3790 = vpow.pop %v3789
      %v3791 = vmul.f32 %v3492, 1.442695
      %v3792 = vpow.pop %v3791
      %v3793 = vmul.f32 %v3493, 1.442695
      %v3794 = vpow.pop %v3793
      %v3795 = vmul.f32 %v3494, 1.442695
      %v3796 = vpow.pop %v3795
      %v3797 = vmul.f32 %v3495, 1.442695
      %v3798 = vpow.pop %v3797
      %v3799 = vmul.f32 %v3496, 1.442695
      %v3800 = vpow.pop %v3799
      %v3801 = vmul.f32 %v3497, 1.442695
      %v3802 = vpow.pop %v3801
      %v3803 = vmul.f32 %v3498, 1.442695
      %v3804 = vpow.pop %v3803
      %v3805 = vmul.f32 %v3499, 1.442695
      %v3806 = vpow.pop %v3805
      %v3807 = vmul.f32 %v3500, 1.442695
      %v3808 = vpow.pop %v3807
      %v3809 = vmul.f32 %v3501, 1.442695
      %v3810 = vpow.pop %v3809
      %v3811 = vmul.f32 %v3502, 1.442695
      %v3812 = vpow.pop %v3811
      %v3813 = vmul.f32 %v3503, 1.442695
      %v3814 = vpow.pop %v3813
      %v3815 = vmul.f32 %v3504, 1.442695
      %v3816 = vpow.pop %v3815
      %v3817 = vmul.f32 %v3505, 1.442695
      %v3818 = vpow.pop %v3817
      %v3819 = vmul.f32 %v3506, 1.442695
      %v3820 = vpow.pop %v3819
      %v3821 = vmul.f32 %v3507, 1.442695
      %v3822 = vpow.pop %v3821
      %v3823 = vmul.f32 %v3508, 1.442695
      %v3824 = vpow.pop %v3823
      %v3825 = vmul.f32 %v3509, 1.442695
      %v3826 = vpow.pop %v3825
      %v3827 = vmul.f32 %v3510, 1.442695
      %v3828 = vpow.pop %v3827
      %v3829 = vmul.f32 %v3511, 1.442695
      %v3830 = vpow.pop %v3829
      %v3831 = vmul.f32 %v3512, 1.442695
      %v3832 = vpow.pop %v3831
      %v3833 = vmul.f32 %v3513, 1.442695
      %v3834 = vpow.pop %v3833
      %v3835 = vmul.f32 %v3514, 1.442695
      %v3836 = vpow.pop %v3835
      %v3837 = vmul.f32 %v3515, 1.442695
      %v3838 = vpow.pop %v3837
      %v3839 = vmul.f32 %v3516, 1.442695
      %v3840 = vpow.pop %v3839
      %v3841 = vmul.f32 %v3517, 1.442695
      %v3842 = vpow.pop %v3841
      %v3843 = vmul.f32 %v3518, 1.442695
      %v3844 = vpow.pop %v3843
      %v3845 = vmul.f32 %v3519, 1.442695
      %v3846 = vpow.pop %v3845
      %v3847 = vmul.f32 %v3520, 1.442695
      %v3848 = vpow.pop %v3847
      %v3849 = vmul.f32 %v3521, 1.442695
      %v3850 = vpow.pop %v3849
      %v3851 = vmul.f32 %v3522, 1.442695
      %v3852 = vpow.pop %v3851
      %v3853 = vmul.f32 %v3523, 1.442695
      %v3854 = vpow.pop %v3853
      %v3855 = vmul.f32 %v3524, 1.442695
      %v3856 = vpow.pop %v3855
      %v3857 = vmul.f32 %v3525, 1.442695
      %v3858 = vpow.pop %v3857
      %v3859 = vmul.f32 %v3526, 1.442695
      %v3860 = vpow.pop %v3859
      %v3861 = vmul.f32 %v3527, 1.442695
      %v3862 = vpow.pop %v3861
      %v3863 = vmul.f32 %v3528, 1.442695
      %v3864 = vpow.pop %v3863
      %v3865 = vmul.f32 %v3529, 1.442695
      %v3866 = vpow.pop %v3865
      %v3867 = vmul.f32 %v3530, 1.442695
      %v3868 = vpow.pop %v3867
      %v3869 = vmul.f32 %v3531, 1.442695
      %v3870 = vpow.pop %v3869
      %v3871 = vmul.f32 %v3532, 1.442695
      %v3872 = vpow.pop %v3871
      %v3873 = vmul.f32 %v3533, 1.442695
      %v3874 = vpow.pop %v3873
      %v3875 = vmul.f32 %v3534, 1.442695
      %v3876 = vpow.pop %v3875
      %v3877 = vmul.f32 %v3535, 1.442695
      %v3878 = vpow.pop %v3877
      %v3879 = vmul.f32 %v3536, 1.442695
      %v3880 = vpow.pop %v3879
      %v3881 = vmul.f32 %v3537, 1.442695
      %v3882 = vpow.pop %v3881
      %v3883 = vmul.f32 %v3538, 1.442695
      %v3884 = vpow.pop %v3883
      %v3885 = vmul.f32 %v3539, 1.442695
      %v3886 = vpow.pop %v3885
      %v3887 = vmul.f32 %v3540, 1.442695
      %v3888 = vpow.pop %v3887
      %v3889 = vmul.f32 %v3541, 1.442695
      %v3890 = vpow.pop %v3889
      %v3891 = vmul.f32 %v3542, 1.442695
      %v3892 = vpow.pop %v3891
      %v3893 = vmul.f32 %v3543, 1.442695
      %v3894 = vpow.pop %v3893
      %v3895 = vmul.f32 %v3544, 1.442695
      %v3896 = vpow.pop %v3895
      %v3897 = vmul.f32 %v3545, 1.442695
      %v3898 = vpow.pop %v3897
      %v3899 = vmul.f32 %v3546, 1.442695
      %v3900 = vpow.pop %v3899
      %v3901 = vmul.f32 %v3547, 1.442695
      %v3902 = vpow.pop %v3901
      %v3903 = vmul.f32 %v3548, 1.442695
      %v3904 = vpow.pop %v3903
      %v3905 = vmul.f32 %v3549, 1.442695
      %v3906 = vpow.pop %v3905
      %v3907 = vmul.f32 %v3550, 1.442695
      %v3908 = vpow.pop %v3907
      %v3909 = vmul.f32 %v3551, 1.442695
      %v3910 = vpow.pop %v3909
      %v3911 = vmul.f32 %v3552, 1.442695
      %v3912 = vpow.pop %v3911
      %v3913 = vmul.f32 %v3553, 1.442695
      %v3914 = vpow.pop %v3913
      %v3915 = vmul.f32 %v3554, 1.442695
      %v3916 = vpow.pop %v3915
      %v3917 = vmul.f32 %v3555, 1.442695
      %v3918 = vpow.pop %v3917
      %v3919 = vmul.f32 %v3556, 1.442695
      %v3920 = vpow.pop %v3919
      %v3921 = vmul.f32 %v3557, 1.442695
      %v3922 = vpow.pop %v3921
      %v3923 = vmul.f32 %v3558, 1.442695
      %v3924 = vpow.pop %v3923
      %v3925 = vmul.f32 %v3559, 1.442695
      %v3926 = vpow.pop %v3925
      %v3927 = vmul.f32 %v3560, 1.442695
      %v3928 = vpow.pop %v3927
      %v3929 = vmul.f32 %v3561, 1.442695
      %v3930 = vpow.pop %v3929
      %v3931 = vmul.f32 %v3562, 1.442695
      %v3932 = vpow.pop %v3931
      %v3933 = vmul.f32 %v3563, 1.442695
      %v3934 = vpow.pop %v3933
      %v3935 = vmul.f32 %v3564, 1.442695
      %v3936 = vpow.pop %v3935
      %v3937 = vmul.f32 %v3565, 1.442695
      %v3938 = vpow.pop %v3937
      %v3939 = vmul.f32 %v3566, 1.442695
      %v3940 = vpow.pop %v3939
      %v3941 = vmul.f32 %v3567, 1.442695
      %v3942 = vpow.pop %v3941
      %v3943 = vmul.f32 %v3568, 1.442695
      %v3944 = vpow.pop %v3943
      %v3945 = vmul.f32 %v3569, 1.442695
      %v3946 = vpow.pop %v3945
      %v3947 = vmul.f32 %v3570, 1.442695
      %v3948 = vpow.pop %v3947
      %v3949 = vmul.f32 %v3571, 1.442695
      %v3950 = vpow.pop %v3949
      %v3951 = vmul.f32 %v3572, 1.442695
      %v3952 = vpow.pop %v3951
      %v3953 = vmul.f32 %v3573, 1.442695
      %v3954 = vpow.pop %v3953
      %v3955 = vmul.f32 %v3574, 1.442695
      %v3956 = vpow.pop %v3955
      %v3957 = vmul.f32 %v3575, 1.442695
      %v3958 = vpow.pop %v3957
      %v3959 = vmul.f32 %v3576, 1.442695
      %v3960 = vpow.pop %v3959
      %v3961 = vmul.f32 %v3577, 1.442695
      %v3962 = vpow.pop %v3961
      %v3963 = vmul.f32 %v3578, 1.442695
      %v3964 = vpow.pop %v3963
      %v3965 = vmul.f32 %v3579, 1.442695
      %v3966 = vpow.pop %v3965
      %v3967 = vmul.f32 %v3580, 1.442695
      %v3968 = vpow.pop %v3967
      %v3969 = vmul.f32 %v3581, 1.442695
      %v3970 = vpow.pop %v3969
      %v3971 = vmul.f32 %v3582, 1.442695
      %v3972 = vpow.pop %v3971
      %v3973 = vmul.f32 %v3583, 1.442695
      %v3974 = vpow.pop %v3973
      %v3975 = vmul.f32 %v3584, 1.442695
      %v3976 = vpow.pop %v3975
      %v3977 = vmul.f32 %v3585, 1.442695
      %v3978 = vpow.pop %v3977
      %v3979 = vmul.f32 %v3586, 1.442695
      %v3980 = vpow.pop %v3979
      %v3981 = vmul.f32 %v3587, 1.442695
      %v3982 = vpow.pop %v3981
      %v3983 = vmul.f32 %v3588, 1.442695
      %v3984 = vpow.pop %v3983
      %v3985 = vmul.f32 %v3589, 1.442695
      %v3986 = vpow.pop %v3985
      %v3987 = vmul.f32 %v3590, 1.442695
      %v3988 = vpow.pop %v3987
      %v3989 = vmul.f32 %v3591, 1.442695
      %v3990 = vpow.pop %v3989
      %v3991 = vmul.f32 %v3592, 1.442695
      %v3992 = vpow.pop %v3991
      %v3993 = vmul.f32 %v3593, 1.442695
      %v3994 = vpow.pop %v3993
      %v3995 = vmul.f32 %v3594, 1.442695
      %v3996 = vpow.pop %v3995
      %v3997 = vmul.f32 %v3595, 1.442695
      %v3998 = vpow.pop %v3997
      %v3999 = vmul.f32 %v3596, 1.442695
      %v4000 = vpow.pop %v3999
      %v4001 = vmul.f32 %v3597, 1.442695
      %v4002 = vpow.pop %v4001
      %v4003 = vmul.f32 %v3598, 1.442695
      %v4004 = vpow.pop %v4003
      %v4005 = vmul.f32 %v3599, 1.442695
      %v4006 = vpow.pop %v4005
      %v4007 = vmul.f32 %v3600, 1.442695
      %v4008 = vpow.pop %v4007
      %v4009 = vmul.f32 %v3601, 1.442695
      %v4010 = vpow.pop %v4009
      %v4011 = vmul.f32 %v3602, 1.442695
      %v4012 = vpow.pop %v4011
      %v4013 = vmul.f32 %v3603, 1.442695
      %v4014 = vpow.pop %v4013
      %v4015 = vmul.f32 %v3604, 1.442695
      %v4016 = vpow.pop %v4015
      %v4017 = vmul.f32 %v3605, 1.442695
      %v4018 = vpow.pop %v4017
      %v4019 = vmul.f32 %v3606, 1.442695
      %v4020 = vpow.pop %v4019
      %v4021 = vmul.f32 %v3607, 1.442695
      %v4022 = vpow.pop %v4021
      %v4023 = vmul.f32 %v3608, 1.442695
      %v4024 = vpow.pop %v4023
      %v4025 = vmul.f32 %v3609, 1.442695
      %v4026 = vpow.pop %v4025
      %v4027 = vmul.f32 %v3610, 1.442695
      %v4028 = vpow.pop %v4027
      %v4029 = vmul.f32 %v3611, 1.442695
      %v4030 = vpow.pop %v4029
      %v4031 = vmul.f32 %v3612, 1.442695
      %v4032 = vpow.pop %v4031
      %v4033 = vmul.f32 %v3613, 1.442695
      %v4034 = vpow.pop %v4033
      %v4035 = vmul.f32 %v3614, 1.442695
      %v4036 = vpow.pop %v4035
      %v4037 = vmul.f32 %v3615, 1.442695
      %v4038 = vpow.pop %v4037
      %v4039 = vmul.f32 %v3616, 1.442695
      %v4040 = vpow.pop %v4039
      %v4041 = vmul.f32 %v3617, 1.442695
      %v4042 = vpow.pop %v4041
      %v4043 = vmul.f32 %v3618, 1.442695
      %v4044 = vpow.pop %v4043
      %v4045 = vmul.f32 %v3619, 1.442695
      %v4046 = vpow.pop %v4045
      %v4047 = vmul.f32 %v3620, 1.442695
      %v4048 = vpow.pop %v4047
      %v4049 = vmul.f32 %v3621, 1.442695
      %v4050 = vpow.pop %v4049
      %v4051 = vmul.f32 %v3622, 1.442695
      %v4052 = vpow.pop %v4051
      %v4053 = vmul.f32 %v3623, 1.442695
      %v4054 = vpow.pop %v4053
      %v4055 = vmul.f32 %v3624, 1.442695
      %v4056 = vpow.pop %v4055
      %v4057 = vmul.f32 %v3625, 1.442695
      %v4058 = vpow.pop %v4057
      %v4059 = vmul.f32 %v3626, 1.442695
      %v4060 = vpow.pop %v4059
      %v4061 = vmul.f32 %v3627, 1.442695
      %v4062 = vpow.pop %v4061
      %v4063 = vmul.f32 %v3628, 1.442695
      %v4064 = vpow.pop %v4063
      %v4065 = vmul.f32 %v3629, 1.442695
      %v4066 = vpow.pop %v4065
      %v4067 = vmul.f32 %v3630, 1.442695
      %v4068 = vpow.pop %v4067
      %v4069 = vmul.f32 %v3631, 1.442695
      %v4070 = vpow.pop %v4069
      %v4071 = vmul.f32 %v3632, 1.442695
      %v4072 = vpow.pop %v4071
      %v4073 = vmul.f32 %v3633, 1.442695
      %v4074 = vpow.pop %v4073
      %v4075 = vmul.f32 %v3634, 1.442695
      %v4076 = vpow.pop %v4075
      %v4077 = vmul.f32 %v3635, 1.442695
      %v4078 = vpow.pop %v4077
      %v4079 = vmul.f32 %v3636, 1.442695
      %v4080 = vpow.pop %v4079
      %v4081 = vmul.f32 %v3637, 1.442695
      %v4082 = vpow.pop %v4081
      %v4083 = vmul.f32 %v3638, 1.442695
      %v4084 = vpow.pop %v4083
      %v4085 = vmul.f32 %v3639, 1.442695
      %v4086 = vpow.pop %v4085
      %v4087 = vmul.f32 %v3640, 1.442695
      %v4088 = vpow.pop %v4087
      %v4089 = vmul.f32 %v3641, 1.442695
      %v4090 = vpow.pop %v4089
      %v4091 = vmul.f32 %v3642, 1.442695
      %v4092 = vpow.pop %v4091
      %v4093 = vmul.f32 %v3643, 1.442695
      %v4094 = vpow.pop %v4093
      %v4095 = vmul.f32 %v3644, 1.442695
      %v4096 = vpow.pop %v4095
      %v4097 = vmul.f32 %v3645, 1.442695
      %v4098 = vpow.pop %v4097
      %v4099 = vmul.f32 %v3646, 1.442695
      %v4100 = vpow.pop %v4099
      %v4101 = vmul.f32 %v3647, 1.442695
      %v4102 = vpow.pop %v4101
      %v4103 = vmul.f32 %v3648, 1.442695
      %v4104 = vpow.pop %v4103
      %v4105 = vmul.f32 %v3649, 1.442695
      %v4106 = vpow.pop %v4105
      %v4107 = vmul.f32 %v3650, 1.442695
      %v4108 = vpow.pop %v4107
      %v4109 = vmul.f32 %v3651, 1.442695
      %v4110 = vpow.pop %v4109
      %v4111 = vmul.f32 %v3652, 1.442695
      %v4112 = vpow.pop %v4111
      %v4113 = vmul.f32 %v3653, 1.442695
      %v4114 = vpow.pop %v4113
      %v4115 = vmul.f32 %v3654, 1.442695
      %v4116 = vpow.pop %v4115
      %v4117 = vmul.f32 %v3655, 1.442695
      %v4118 = vpow.pop %v4117
      %v4119 = vmul.f32 %v3656, 1.442695
      %v4120 = vpow.pop %v4119
      %v4121 = vmul.f32 %v3657, 1.442695
      %v4122 = vpow.pop %v4121
      %v4123 = vmul.f32 %v3658, 1.442695
      %v4124 = vpow.pop %v4123
      %v4125 = vmul.f32 %v3659, 1.442695
      %v4126 = vpow.pop %v4125
      %v4127 = vmul.f32 %v3660, 1.442695
      %v4128 = vpow.pop %v4127
      %v4129 = vmul.f32 %v3661, 1.442695
      %v4130 = vpow.pop %v4129
      %v4131 = vmul.f32 %v3662, 1.442695
      %v4132 = vpow.pop %v4131
      %v4133 = vmul.f32 %v3663, 1.442695
      %v4134 = vpow.pop %v4133
      %v4135 = vmul.f32 %v3664, 1.442695
      %v4136 = vpow.pop %v4135
      %v4137 = vmul.f32 %v3665, 1.442695
      %v4138 = vpow.pop %v4137
      %v4139 = vmul.f32 %v3666, 1.442695
      %v4140 = vpow.pop %v4139
      %v4141 = vmul.f32 %v3667, 1.442695
      %v4142 = vpow.pop %v4141
      %v4143 = vmul.f32 %v3668, 1.442695
      %v4144 = vpow.pop %v4143
      %v4145 = vmul.f32 %v3669, 1.442695
      %v4146 = vpow.pop %v4145
      %v4147 = vmul.f32 %v3670, 1.442695
      %v4148 = vpow.pop %v4147
      %v4149 = vmul.f32 %v3671, 1.442695
      %v4150 = vpow.pop %v4149
      %v4151 = vmul.f32 %v3672, 1.442695
      %v4152 = vpow.pop %v4151
      %v4153 = vmul.f32 %v3673, 1.442695
      %v4154 = vpow.pop %v4153
      %v4155 = vmul.f32 %v3674, 1.442695
      %v4156 = vpow.pop %v4155
      %v4157 = vmul.f32 %v3675, 1.442695
      %v4158 = vpow.pop %v4157
      %v4159 = vmul.f32 %v3676, 1.442695
      %v4160 = vpow.pop %v4159
      %v4161 = vmul.f32 %v3677, 1.442695
      %v4162 = vpow.pop %v4161
      %v4163 = vmul.f32 %v3678, 1.442695
      %v4164 = vpow.pop %v4163
      %v4165 = vmul.f32 %v3679, 1.442695
      %v4166 = vpow.pop %v4165
      %v4167 = vmul.f32 %v3680, 1.442695
      %v4168 = vpow.pop %v4167
      %v4169 = vmul.f32 %v3681, 1.442695
      %v4170 = vpow.pop %v4169
      %v4171 = vmul.f32 %v3682, 1.442695
      %v4172 = vpow.pop %v4171
      %v4173 = vmul.f32 %v3683, 1.442695
      %v4174 = vpow.pop %v4173
      %v4175 = vmul.f32 %v3684, 1.442695
      %v4176 = vpow.pop %v4175
      %v4177 = vmul.f32 %v3685, 1.442695
      %v4178 = vpow.pop %v4177
      %v4179 = vmul.f32 %v3686, 1.442695
      %v4180 = vpow.pop %v4179
      %v4181 = vmul.f32 %v3687, 1.442695
      %v4182 = vpow.pop %v4181
      %v4183 = vmul.f32 %v3688, 1.442695
      %v4184 = vpow.pop %v4183
      %v4185 = vmul.f32 %v3689, 1.442695
      %v4186 = vpow.pop %v4185
      %v4187 = vmul.f32 %v3690, 1.442695
      %v4188 = vpow.pop %v4187
      %v4189 = vmul.f32 %v3691, 1.442695
      %v4190 = vpow.pop %v4189
      %v4191 = vmul.f32 %v3692, 1.442695
      %v4192 = vpow.pop %v4191
      %v4193 = vmul.f32 %v3693, 1.442695
      %v4194 = vpow.pop %v4193
      %v4195 = vmul.f32 %v3694, 1.442695
      %v4196 = vpow.pop %v4195
      %v4197 = vmul.f32 %v3695, 1.442695
      %v4198 = vpow.pop %v4197
      %v4199 = vmul.f32 %v3696, 1.442695
      %v4200 = vpow.pop %v4199
      %v4201 = vmul.f32 %v3697, 1.442695
      %v4202 = vpow.pop %v4201
      %v4203 = vmul.f32 %v3698, 1.442695
      %v4204 = vpow.pop %v4203
      %v4205 = vmul.f32 %v3699, 1.442695
      %v4206 = vpow.pop %v4205
      %v4207 = vmul.f32 %v3700, 1.442695
      %v4208 = vpow.pop %v4207
      %v4209 = vmul.f32 %v3701, 1.442695
      %v4210 = vpow.pop %v4209
      %v4211 = vmul.f32 %v3702, 1.442695
      %v4212 = vpow.pop %v4211
      %v4213 = vmul.f32 %v3703, 1.442695
      %v4214 = vpow.pop %v4213
      %v4215 = vmul.f32 %v3704, 1.442695
      %v4216 = vpow.pop %v4215
      %v4217 = vmul.f32 %v3705, 1.442695
      %v4218 = vpow.pop %v4217
      %v4219 = vmul.f32 %v3706, 1.442695
      %v4220 = vpow.pop %v4219
      %v4221 = vmul.f32 %v3707, 1.442695
      %v4222 = vpow.pop %v4221
      %v4223 = vmul.f32 %v3708, 1.442695
      %v4224 = vpow.pop %v4223
      %v4225 = vmul.f32 %v3709, 1.442695
      %v4226 = vpow.pop %v4225
      %v4227 = vmul.f32 %v3710, 1.442695
      %v4228 = vpow.pop %v4227
      %v4229 = vmul.f32 %v3711, 1.442695
      %v4230 = vpow.pop %v4229
      %v4231 = vmul.f32 %v3712, 1.442695
      %v4232 = vpow.pop %v4231
      %v4233 = vmul.f32 %v3713, 1.442695
      %v4234 = vpow.pop %v4233
      %v4235 = vmul.f32 %v3714, 1.442695
      %v4236 = vpow.pop %v4235
      %v4237 = vmul.f32 %v3715, 1.442695
      %v4238 = vpow.pop %v4237
      %v4239 = vmul.f32 %v3716, 1.442695
      %v4240 = vpow.pop %v4239
      %v4241 = vmul.f32 %v3717, 1.442695
      %v4242 = vpow.pop %v4241
      %v4243 = vmul.f32 %v3718, 1.442695
      %v4244 = vpow.pop %v4243
      %v4245 = vmul.f32 %v3719, 1.442695
      %v4246 = vpow.pop %v4245
      %v4247 = vmul.f32 %v3720, 1.442695
      %v4248 = vpow.pop %v4247
      %v4249 = vmul.f32 %v3721, 1.442695
      %v4250 = vpow.pop %v4249
      %v4251 = vmul.f32 %v3722, 1.442695
      %v4252 = vpow.pop %v4251
      %v4253 = vmul.f32 %v3723, 1.442695
      %v4254 = vpow.pop %v4253
      %v4255 = vmul.f32 %v3724, 1.442695
      %v4256 = vpow.pop %v4255
      %v4257 = vmul.f32 %v3725, 1.442695
      %v4258 = vpow.pop %v4257
      %v4259 = vmul.f32 %v3726, 1.442695
      %v4260 = vpow.pop %v4259
      %v4261 = vmul.f32 %v3727, 1.442695
      %v4262 = vpow.pop %v4261
      %v4263 = vmul.f32 %v3728, 1.442695
      %v4264 = vpow.pop %v4263
      %v4265 = vmul.f32 %v3729, 1.442695
      %v4266 = vpow.pop %v4265
      %v4267 = vmul.f32 %v3730, 1.442695
      %v4268 = vpow.pop %v4267
      %v4269 = vmul.f32 %v3731, 1.442695
      %v4270 = vpow.pop %v4269
      %v4271 = vmul.f32 %v3732, 1.442695
      %v4272 = vpow.pop %v4271
      %v4273 = vmul.f32 %v3733, 1.442695
      %v4274 = vpow.pop %v4273
      %v4275 = vmul.f32 %v3734, 1.442695
      %v4276 = vpow.pop %v4275
      %v4277 = vmul.f32 %v3735, 1.442695
      %v4278 = vpow.pop %v4277
      %v4279 = vmul.f32 %v3736, 1.442695
      %v4280 = vpow.pop %v4279
      %v4281 = vmul.f32 %v3737, 1.442695
      %v4282 = vpow.pop %v4281
      %v4283 = vmul.f32 %v3738, 1.442695
      %v4284 = vpow.pop %v4283
      %v4285 = vmul.f32 %v3739, 1.442695
      %v4286 = vpow.pop %v4285
      %v4287 = vmul.f32 %v3740, 1.442695
      %v4288 = vpow.pop %v4287
      %v4289 = vmul.f32 %v3741, 1.442695
      %v4290 = vpow.pop %v4289
      %v4291 = vmul.f32 %v3742, 1.442695
      %v4292 = vpow.pop %v4291
      %v4293 = vmul.f32 %v3743, 1.442695
      %v4294 = vpow.pop %v4293
      %v4295 = vmul.f32 %v3744, 1.442695
      %v4296 = vpow.pop %v4295
      %v4297 = vmul.f32 %v3745, 1.442695
      %v4298 = vpow.pop %v4297
      %v4299 = vmul.f32 %v3746, 1.442695
      %v4300 = vpow.pop %v4299
      %v4301 = vmul.f32 %v3747, 1.442695
      %v4302 = vpow.pop %v4301
      %v4303 = vmul.f32 %v3748, 1.442695
      %v4304 = vpow.pop %v4303
      %v4305 = vmul.f32 %v3749, 1.442695
      %v4306 = vpow.pop %v4305
      %v4307 = vmul.f32 %v3750, 1.442695
      %v4308 = vpow.pop %v4307
      %v4309 = vmul.f32 %v3751, 1.442695
      %v4310 = vpow.pop %v4309
      %v4311 = vmul.f32 %v3752, 1.442695
      %v4312 = vpow.pop %v4311
      %v4313 = vmul.f32 %v3753, 1.442695
      %v4314 = vpow.pop %v4313
      %v4315 = vmul.f32 %v3754, 1.442695
      %v4316 = vpow.pop %v4315
      %v4317 = vmul.f32 %v3755, 1.442695
      %v4318 = vpow.pop %v4317
      %v4319 = vmul.f32 %v3756, 1.442695
      %v4320 = vpow.pop %v4319
      %v4321 = vmul.f32 %v3757, 1.442695
      %v4322 = vpow.pop %v4321
      %v4323 = vmul.f32 %v3758, 1.442695
      %v4324 = vpow.pop %v4323
      %v4325 = vmul.f32 %v3759, 1.442695
      %v4326 = vpow.pop %v4325
      %v4327 = vmul.f32 %v3760, 1.442695
      %v4328 = vpow.pop %v4327
      %v4329 = vmul.f32 %v3761, 1.442695
      %v4330 = vpow.pop %v4329
      %v4331 = vmul.f32 %v3762, 1.442695
      %v4332 = vpow.pop %v4331
      %v4333 = vmul.f32 %v3763, 1.442695
      %v4334 = vpow.pop %v4333
      %v4335 = vmul.f32 %v3764, 1.442695
      %v4336 = vpow.pop %v4335
      %v4337 = vmul.f32 %v3765, 1.442695
      %v4338 = vpow.pop %v4337
      %v4339 = vmul.f32 %v3766, 1.442695
      %v4340 = vpow.pop %v4339
      %v4341 = vmul.f32 %v3767, 1.442695
      %v4342 = vpow.pop %v4341
      %v4343 = vmul.f32 %v3768, 1.442695
      %v4344 = vpow.pop %v4343
      %v4345 = vsub.f32 %v3770, 1.0
      %v4346 = vsub.f32 %v3772, 1.0
      %v4347 = vsub.f32 %v3774, 1.0
      %v4348 = vsub.f32 %v3776, 1.0
      %v4349 = vsub.f32 %v3778, 1.0
      %v4350 = vsub.f32 %v3780, 1.0
      %v4351 = vsub.f32 %v3782, 1.0
      %v4352 = vsub.f32 %v3784, 1.0
      %v4353 = vsub.f32 %v3786, 1.0
      %v4354 = vsub.f32 %v3788, 1.0
      %v4355 = vsub.f32 %v3790, 1.0
      %v4356 = vsub.f32 %v3792, 1.0
      %v4357 = vsub.f32 %v3794, 1.0
      %v4358 = vsub.f32 %v3796, 1.0
      %v4359 = vsub.f32 %v3798, 1.0
      %v4360 = vsub.f32 %v3800, 1.0
      %v4361 = vsub.f32 %v3802, 1.0
      %v4362 = vsub.f32 %v3804, 1.0
      %v4363 = vsub.f32 %v3806, 1.0
      %v4364 = vsub.f32 %v3808, 1.0
      %v4365 = vsub.f32 %v3810, 1.0
      %v4366 = vsub.f32 %v3812, 1.0
      %v4367 = vsub.f32 %v3814, 1.0
      %v4368 = vsub.f32 %v3816, 1.0
      %v4369 = vsub.f32 %v3818, 1.0
      %v4370 = vsub.f32 %v3820, 1.0
      %v4371 = vsub.f32 %v3822, 1.0
      %v4372 = vsub.f32 %v3824, 1.0
      %v4373 = vsub.f32 %v3826, 1.0
      %v4374 = vsub.f32 %v3828, 1.0
      %v4375 = vsub.f32 %v3830, 1.0
      %v4376 = vsub.f32 %v3832, 1.0
      %v4377 = vsub.f32 %v3834, 1.0
      %v4378 = vsub.f32 %v3836, 1.0
      %v4379 = vsub.f32 %v3838, 1.0
      %v4380 = vsub.f32 %v3840, 1.0
      %v4381 = vsub.f32 %v3842, 1.0
      %v4382 = vsub.f32 %v3844, 1.0
      %v4383 = vsub.f32 %v3846, 1.0
      %v4384 = vsub.f32 %v3848, 1.0
      %v4385 = vsub.f32 %v3850, 1.0
      %v4386 = vsub.f32 %v3852, 1.0
      %v4387 = vsub.f32 %v3854, 1.0
      %v4388 = vsub.f32 %v3856, 1.0
      %v4389 = vsub.f32 %v3858, 1.0
      %v4390 = vsub.f32 %v3860, 1.0
      %v4391 = vsub.f32 %v3862, 1.0
      %v4392 = vsub.f32 %v3864, 1.0
      %v4393 = vsub.f32 %v3866, 1.0
      %v4394 = vsub.f32 %v3868, 1.0
      %v4395 = vsub.f32 %v3870, 1.0
      %v4396 = vsub.f32 %v3872, 1.0
      %v4397 = vsub.f32 %v3874, 1.0
      %v4398 = vsub.f32 %v3876, 1.0
      %v4399 = vsub.f32 %v3878, 1.0
      %v4400 = vsub.f32 %v3880, 1.0
      %v4401 = vsub.f32 %v3882, 1.0
      %v4402 = vsub.f32 %v3884, 1.0
      %v4403 = vsub.f32 %v3886, 1.0
      %v4404 = vsub.f32 %v3888, 1.0
      %v4405 = vsub.f32 %v3890, 1.0
      %v4406 = vsub.f32 %v3892, 1.0
      %v4407 = vsub.f32 %v3894, 1.0
      %v4408 = vsub.f32 %v3896, 1.0
      %v4409 = vsub.f32 %v3898, 1.0
      %v4410 = vsub.f32 %v3900, 1.0
      %v4411 = vsub.f32 %v3902, 1.0
      %v4412 = vsub.f32 %v3904, 1.0
      %v4413 = vsub.f32 %v3906, 1.0
      %v4414 = vsub.f32 %v3908, 1.0
      %v4415 = vsub.f32 %v3910, 1.0
      %v4416 = vsub.f32 %v3912, 1.0
      %v4417 = vsub.f32 %v3914, 1.0
      %v4418 = vsub.f32 %v3916, 1.0
      %v4419 = vsub.f32 %v3918, 1.0
      %v4420 = vsub.f32 %v3920, 1.0
      %v4421 = vsub.f32 %v3922, 1.0
      %v4422 = vsub.f32 %v3924, 1.0
      %v4423 = vsub.f32 %v3926, 1.0
      %v4424 = vsub.f32 %v3928, 1.0
      %v4425 = vsub.f32 %v3930, 1.0
      %v4426 = vsub.f32 %v3932, 1.0
      %v4427 = vsub.f32 %v3934, 1.0
      %v4428 = vsub.f32 %v3936, 1.0
      %v4429 = vsub.f32 %v3938, 1.0
      %v4430 = vsub.f32 %v3940, 1.0
      %v4431 = vsub.f32 %v3942, 1.0
      %v4432 = vsub.f32 %v3944, 1.0
      %v4433 = vsub.f32 %v3946, 1.0
      %v4434 = vsub.f32 %v3948, 1.0
      %v4435 = vsub.f32 %v3950, 1.0
      %v4436 = vsub.f32 %v3952, 1.0
      %v4437 = vsub.f32 %v3954, 1.0
      %v4438 = vsub.f32 %v3956, 1.0
      %v4439 = vsub.f32 %v3958, 1.0
      %v4440 = vsub.f32 %v3960, 1.0
      %v4441 = vsub.f32 %v3962, 1.0
      %v4442 = vsub.f32 %v3964, 1.0
      %v4443 = vsub.f32 %v3966, 1.0
      %v4444 = vsub.f32 %v3968, 1.0
      %v4445 = vsub.f32 %v3970, 1.0
      %v4446 = vsub.f32 %v3972, 1.0
      %v4447 = vsub.f32 %v3974, 1.0
      %v4448 = vsub.f32 %v3976, 1.0
      %v4449 = vsub.f32 %v3978, 1.0
      %v4450 = vsub.f32 %v3980, 1.0
      %v4451 = vsub.f32 %v3982, 1.0
      %v4452 = vsub.f32 %v3984, 1.0
      %v4453 = vsub.f32 %v3986, 1.0
      %v4454 = vsub.f32 %v3988, 1.0
      %v4455 = vsub.f32 %v3990, 1.0
      %v4456 = vsub.f32 %v3992, 1.0
      %v4457 = vsub.f32 %v3994, 1.0
      %v4458 = vsub.f32 %v3996, 1.0
      %v4459 = vsub.f32 %v3998, 1.0
      %v4460 = vsub.f32 %v4000, 1.0
      %v4461 = vsub.f32 %v4002, 1.0
      %v4462 = vsub.f32 %v4004, 1.0
      %v4463 = vsub.f32 %v4006, 1.0
      %v4464 = vsub.f32 %v4008, 1.0
      %v4465 = vsub.f32 %v4010, 1.0
      %v4466 = vsub.f32 %v4012, 1.0
      %v4467 = vsub.f32 %v4014, 1.0
      %v4468 = vsub.f32 %v4016, 1.0
      %v4469 = vsub.f32 %v4018, 1.0
      %v4470 = vsub.f32 %v4020, 1.0
      %v4471 = vsub.f32 %v4022, 1.0
      %v4472 = vsub.f32 %v4024, 1.0
      %v4473 = vsub.f32 %v4026, 1.0
      %v4474 = vsub.f32 %v4028, 1.0
      %v4475 = vsub.f32 %v4030, 1.0
      %v4476 = vsub.f32 %v4032, 1.0
      %v4477 = vsub.f32 %v4034, 1.0
      %v4478 = vsub.f32 %v4036, 1.0
      %v4479 = vsub.f32 %v4038, 1.0
      %v4480 = vsub.f32 %v4040, 1.0
      %v4481 = vsub.f32 %v4042, 1.0
      %v4482 = vsub.f32 %v4044, 1.0
      %v4483 = vsub.f32 %v4046, 1.0
      %v4484 = vsub.f32 %v4048, 1.0
      %v4485 = vsub.f32 %v4050, 1.0
      %v4486 = vsub.f32 %v4052, 1.0
      %v4487 = vsub.f32 %v4054, 1.0
      %v4488 = vsub.f32 %v4056, 1.0
      %v4489 = vsub.f32 %v4058, 1.0
      %v4490 = vsub.f32 %v4060, 1.0
      %v4491 = vsub.f32 %v4062, 1.0
      %v4492 = vsub.f32 %v4064, 1.0
      %v4493 = vsub.f32 %v4066, 1.0
      %v4494 = vsub.f32 %v4068, 1.0
      %v4495 = vsub.f32 %v4070, 1.0
      %v4496 = vsub.f32 %v4072, 1.0
      %v4497 = vsub.f32 %v4074, 1.0
      %v4498 = vsub.f32 %v4076, 1.0
      %v4499 = vsub.f32 %v4078, 1.0
      %v4500 = vsub.f32 %v4080, 1.0
      %v4501 = vsub.f32 %v4082, 1.0
      %v4502 = vsub.f32 %v4084, 1.0
      %v4503 = vsub.f32 %v4086, 1.0
      %v4504 = vsub.f32 %v4088, 1.0
      %v4505 = vsub.f32 %v4090, 1.0
      %v4506 = vsub.f32 %v4092, 1.0
      %v4507 = vsub.f32 %v4094, 1.0
      %v4508 = vsub.f32 %v4096, 1.0
      %v4509 = vsub.f32 %v4098, 1.0
      %v4510 = vsub.f32 %v4100, 1.0
      %v4511 = vsub.f32 %v4102, 1.0
      %v4512 = vsub.f32 %v4104, 1.0
      %v4513 = vsub.f32 %v4106, 1.0
      %v4514 = vsub.f32 %v4108, 1.0
      %v4515 = vsub.f32 %v4110, 1.0
      %v4516 = vsub.f32 %v4112, 1.0
      %v4517 = vsub.f32 %v4114, 1.0
      %v4518 = vsub.f32 %v4116, 1.0
      %v4519 = vsub.f32 %v4118, 1.0
      %v4520 = vsub.f32 %v4120, 1.0
      %v4521 = vsub.f32 %v4122, 1.0
      %v4522 = vsub.f32 %v4124, 1.0
      %v4523 = vsub.f32 %v4126, 1.0
      %v4524 = vsub.f32 %v4128, 1.0
      %v4525 = vsub.f32 %v4130, 1.0
      %v4526 = vsub.f32 %v4132, 1.0
      %v4527 = vsub.f32 %v4134, 1.0
      %v4528 = vsub.f32 %v4136, 1.0
      %v4529 = vsub.f32 %v4138, 1.0
      %v4530 = vsub.f32 %v4140, 1.0
      %v4531 = vsub.f32 %v4142, 1.0
      %v4532 = vsub.f32 %v4144, 1.0
      %v4533 = vsub.f32 %v4146, 1.0
      %v4534 = vsub.f32 %v4148, 1.0
      %v4535 = vsub.f32 %v4150, 1.0
      %v4536 = vsub.f32 %v4152, 1.0
      %v4537 = vsub.f32 %v4154, 1.0
      %v4538 = vsub.f32 %v4156, 1.0
      %v4539 = vsub.f32 %v4158, 1.0
      %v4540 = vsub.f32 %v4160, 1.0
      %v4541 = vsub.f32 %v4162, 1.0
      %v4542 = vsub.f32 %v4164, 1.0
      %v4543 = vsub.f32 %v4166, 1.0
      %v4544 = vsub.f32 %v4168, 1.0
      %v4545 = vsub.f32 %v4170, 1.0
      %v4546 = vsub.f32 %v4172, 1.0
      %v4547 = vsub.f32 %v4174, 1.0
      %v4548 = vsub.f32 %v4176, 1.0
      %v4549 = vsub.f32 %v4178, 1.0
      %v4550 = vsub.f32 %v4180, 1.0
      %v4551 = vsub.f32 %v4182, 1.0
      %v4552 = vsub.f32 %v4184, 1.0
      %v4553 = vsub.f32 %v4186, 1.0
      %v4554 = vsub.f32 %v4188, 1.0
      %v4555 = vsub.f32 %v4190, 1.0
      %v4556 = vsub.f32 %v4192, 1.0
      %v4557 = vsub.f32 %v4194, 1.0
      %v4558 = vsub.f32 %v4196, 1.0
      %v4559 = vsub.f32 %v4198, 1.0
      %v4560 = vsub.f32 %v4200, 1.0
      %v4561 = vsub.f32 %v4202, 1.0
      %v4562 = vsub.f32 %v4204, 1.0
      %v4563 = vsub.f32 %v4206, 1.0
      %v4564 = vsub.f32 %v4208, 1.0
      %v4565 = vsub.f32 %v4210, 1.0
      %v4566 = vsub.f32 %v4212, 1.0
      %v4567 = vsub.f32 %v4214, 1.0
      %v4568 = vsub.f32 %v4216, 1.0
      %v4569 = vsub.f32 %v4218, 1.0
      %v4570 = vsub.f32 %v4220, 1.0
      %v4571 = vsub.f32 %v4222, 1.0
      %v4572 = vsub.f32 %v4224, 1.0
      %v4573 = vsub.f32 %v4226, 1.0
      %v4574 = vsub.f32 %v4228, 1.0
      %v4575 = vsub.f32 %v4230, 1.0
      %v4576 = vsub.f32 %v4232, 1.0
      %v4577 = vsub.f32 %v4234, 1.0
      %v4578 = vsub.f32 %v4236, 1.0
      %v4579 = vsub.f32 %v4238, 1.0
      %v4580 = vsub.f32 %v4240, 1.0
      %v4581 = vsub.f32 %v4242, 1.0
      %v4582 = vsub.f32 %v4244, 1.0
      %v4583 = vsub.f32 %v4246, 1.0
      %v4584 = vsub.f32 %v4248, 1.0
      %v4585 = vsub.f32 %v4250, 1.0
      %v4586 = vsub.f32 %v4252, 1.0
      %v4587 = vsub.f32 %v4254, 1.0
      %v4588 = vsub.f32 %v4256, 1.0
      %v4589 = vsub.f32 %v4258, 1.0
      %v4590 = vsub.f32 %v4260, 1.0
      %v4591 = vsub.f32 %v4262, 1.0
      %v4592 = vsub.f32 %v4264, 1.0
      %v4593 = vsub.f32 %v4266, 1.0
      %v4594 = vsub.f32 %v4268, 1.0
      %v4595 = vsub.f32 %v4270, 1.0
      %v4596 = vsub.f32 %v4272, 1.0
      %v4597 = vsub.f32 %v4274, 1.0
      %v4598 = vsub.f32 %v4276, 1.0
      %v4599 = vsub.f32 %v4278, 1.0
      %v4600 = vsub.f32 %v4280, 1.0
      %v4601 = vsub.f32 %v4282, 1.0
      %v4602 = vsub.f32 %v4284, 1.0
      %v4603 = vsub.f32 %v4286, 1.0
      %v4604 = vsub.f32 %v4288, 1.0
      %v4605 = vsub.f32 %v4290, 1.0
      %v4606 = vsub.f32 %v4292, 1.0
      %v4607 = vsub.f32 %v4294, 1.0
      %v4608 = vsub.f32 %v4296, 1.0
      %v4609 = vsub.f32 %v4298, 1.0
      %v4610 = vsub.f32 %v4300, 1.0
      %v4611 = vsub.f32 %v4302, 1.0
      %v4612 = vsub.f32 %v4304, 1.0
      %v4613 = vsub.f32 %v4306, 1.0
      %v4614 = vsub.f32 %v4308, 1.0
      %v4615 = vsub.f32 %v4310, 1.0
      %v4616 = vsub.f32 %v4312, 1.0
      %v4617 = vsub.f32 %v4314, 1.0
      %v4618 = vsub.f32 %v4316, 1.0
      %v4619 = vsub.f32 %v4318, 1.0
      %v4620 = vsub.f32 %v4320, 1.0
      %v4621 = vsub.f32 %v4322, 1.0
      %v4622 = vsub.f32 %v4324, 1.0
      %v4623 = vsub.f32 %v4326, 1.0
      %v4624 = vsub.f32 %v4328, 1.0
      %v4625 = vsub.f32 %v4330, 1.0
      %v4626 = vsub.f32 %v4332, 1.0
      %v4627 = vsub.f32 %v4334, 1.0
      %v4628 = vsub.f32 %v4336, 1.0
      %v4629 = vsub.f32 %v4338, 1.0
      %v4630 = vsub.f32 %v4340, 1.0
      %v4631 = vsub.f32 %v4342, 1.0
      %v4632 = vsub.f32 %v4344, 1.0
      %v4633 = vsel %vm3193, %v2905, %v4345
      %v4634 = vsel %vm3194, %v2906, %v4346
      %v4635 = vsel %vm3195, %v2907, %v4347
      %v4636 = vsel %vm3196, %v2908, %v4348
      %v4637 = vsel %vm3197, %v2909, %v4349
      %v4638 = vsel %vm3198, %v2910, %v4350
      %v4639 = vsel %vm3199, %v2911, %v4351
      %v4640 = vsel %vm3200, %v2912, %v4352
      %v4641 = vsel %vm3201, %v2913, %v4353
      %v4642 = vsel %vm3202, %v2914, %v4354
      %v4643 = vsel %vm3203, %v2915, %v4355
      %v4644 = vsel %vm3204, %v2916, %v4356
      %v4645 = vsel %vm3205, %v2917, %v4357
      %v4646 = vsel %vm3206, %v2918, %v4358
      %v4647 = vsel %vm3207, %v2919, %v4359
      %v4648 = vsel %vm3208, %v2920, %v4360
      %v4649 = vsel %vm3209, %v2921, %v4361
      %v4650 = vsel %vm3210, %v2922, %v4362
      %v4651 = vsel %vm3211, %v2923, %v4363
      %v4652 = vsel %vm3212, %v2924, %v4364
      %v4653 = vsel %vm3213, %v2925, %v4365
      %v4654 = vsel %vm3214, %v2926, %v4366
      %v4655 = vsel %vm3215, %v2927, %v4367
      %v4656 = vsel %vm3216, %v2928, %v4368
      %v4657 = vsel %vm3217, %v2929, %v4369
      %v4658 = vsel %vm3218, %v2930, %v4370
      %v4659 = vsel %vm3219, %v2931, %v4371
      %v4660 = vsel %vm3220, %v2932, %v4372
      %v4661 = vsel %vm3221, %v2933, %v4373
      %v4662 = vsel %vm3222, %v2934, %v4374
      %v4663 = vsel %vm3223, %v2935, %v4375
      %v4664 = vsel %vm3224, %v2936, %v4376
      %v4665 = vsel %vm3225, %v2937, %v4377
      %v4666 = vsel %vm3226, %v2938, %v4378
      %v4667 = vsel %vm3227, %v2939, %v4379
      %v4668 = vsel %vm3228, %v2940, %v4380
      %v4669 = vsel %vm3229, %v2941, %v4381
      %v4670 = vsel %vm3230, %v2942, %v4382
      %v4671 = vsel %vm3231, %v2943, %v4383
      %v4672 = vsel %vm3232, %v2944, %v4384
      %v4673 = vsel %vm3233, %v2945, %v4385
      %v4674 = vsel %vm3234, %v2946, %v4386
      %v4675 = vsel %vm3235, %v2947, %v4387
      %v4676 = vsel %vm3236, %v2948, %v4388
      %v4677 = vsel %vm3237, %v2949, %v4389
      %v4678 = vsel %vm3238, %v2950, %v4390
      %v4679 = vsel %vm3239, %v2951, %v4391
      %v4680 = vsel %vm3240, %v2952, %v4392
      %v4681 = vsel %vm3241, %v2953, %v4393
      %v4682 = vsel %vm3242, %v2954, %v4394
      %v4683 = vsel %vm3243, %v2955, %v4395
      %v4684 = vsel %vm3244, %v2956, %v4396
      %v4685 = vsel %vm3245, %v2957, %v4397
      %v4686 = vsel %vm3246, %v2958, %v4398
      %v4687 = vsel %vm3247, %v2959, %v4399
      %v4688 = vsel %vm3248, %v2960, %v4400
      %v4689 = vsel %vm3249, %v2961, %v4401
      %v4690 = vsel %vm3250, %v2962, %v4402
      %v4691 = vsel %vm3251, %v2963, %v4403
      %v4692 = vsel %vm3252, %v2964, %v4404
      %v4693 = vsel %vm3253, %v2965, %v4405
      %v4694 = vsel %vm3254, %v2966, %v4406
      %v4695 = vsel %vm3255, %v2967, %v4407
      %v4696 = vsel %vm3256, %v2968, %v4408
      %v4697 = vsel %vm3257, %v2969, %v4409
      %v4698 = vsel %vm3258, %v2970, %v4410
      %v4699 = vsel %vm3259, %v2971, %v4411
      %v4700 = vsel %vm3260, %v2972, %v4412
      %v4701 = vsel %vm3261, %v2973, %v4413
      %v4702 = vsel %vm3262, %v2974, %v4414
      %v4703 = vsel %vm3263, %v2975, %v4415
      %v4704 = vsel %vm3264, %v2976, %v4416
      %v4705 = vsel %vm3265, %v2977, %v4417
      %v4706 = vsel %vm3266, %v2978, %v4418
      %v4707 = vsel %vm3267, %v2979, %v4419
      %v4708 = vsel %vm3268, %v2980, %v4420
      %v4709 = vsel %vm3269, %v2981, %v4421
      %v4710 = vsel %vm3270, %v2982, %v4422
      %v4711 = vsel %vm3271, %v2983, %v4423
      %v4712 = vsel %vm3272, %v2984, %v4424
      %v4713 = vsel %vm3273, %v2985, %v4425
      %v4714 = vsel %vm3274, %v2986, %v4426
      %v4715 = vsel %vm3275, %v2987, %v4427
      %v4716 = vsel %vm3276, %v2988, %v4428
      %v4717 = vsel %vm3277, %v2989, %v4429
      %v4718 = vsel %vm3278, %v2990, %v4430
      %v4719 = vsel %vm3279, %v2991, %v4431
      %v4720 = vsel %vm3280, %v2992, %v4432
      %v4721 = vsel %vm3281, %v2993, %v4433
      %v4722 = vsel %vm3282, %v2994, %v4434
      %v4723 = vsel %vm3283, %v2995, %v4435
      %v4724 = vsel %vm3284, %v2996, %v4436
      %v4725 = vsel %vm3285, %v2997, %v4437
      %v4726 = vsel %vm3286, %v2998, %v4438
      %v4727 = vsel %vm3287, %v2999, %v4439
      %v4728 = vsel %vm3288, %v3000, %v4440
      %v4729 = vsel %vm3289, %v3001, %v4441
      %v4730 = vsel %vm3290, %v3002, %v4442
      %v4731 = vsel %vm3291, %v3003, %v4443
      %v4732 = vsel %vm3292, %v3004, %v4444
      %v4733 = vsel %vm3293, %v3005, %v4445
      %v4734 = vsel %vm3294, %v3006, %v4446
      %v4735 = vsel %vm3295, %v3007, %v4447
      %v4736 = vsel %vm3296, %v3008, %v4448
      %v4737 = vsel %vm3297, %v3009, %v4449
      %v4738 = vsel %vm3298, %v3010, %v4450
      %v4739 = vsel %vm3299, %v3011, %v4451
      %v4740 = vsel %vm3300, %v3012, %v4452
      %v4741 = vsel %vm3301, %v3013, %v4453
      %v4742 = vsel %vm3302, %v3014, %v4454
      %v4743 = vsel %vm3303, %v3015, %v4455
      %v4744 = vsel %vm3304, %v3016, %v4456
      %v4745 = vsel %vm3305, %v3017, %v4457
      %v4746 = vsel %vm3306, %v3018, %v4458
      %v4747 = vsel %vm3307, %v3019, %v4459
      %v4748 = vsel %vm3308, %v3020, %v4460
      %v4749 = vsel %vm3309, %v3021, %v4461
      %v4750 = vsel %vm3310, %v3022, %v4462
      %v4751 = vsel %vm3311, %v3023, %v4463
      %v4752 = vsel %vm3312, %v3024, %v4464
      %v4753 = vsel %vm3313, %v3025, %v4465
      %v4754 = vsel %vm3314, %v3026, %v4466
      %v4755 = vsel %vm3315, %v3027, %v4467
      %v4756 = vsel %vm3316, %v3028, %v4468
      %v4757 = vsel %vm3317, %v3029, %v4469
      %v4758 = vsel %vm3318, %v3030, %v4470
      %v4759 = vsel %vm3319, %v3031, %v4471
      %v4760 = vsel %vm3320, %v3032, %v4472
      %v4761 = vsel %vm3321, %v3033, %v4473
      %v4762 = vsel %vm3322, %v3034, %v4474
      %v4763 = vsel %vm3323, %v3035, %v4475
      %v4764 = vsel %vm3324, %v3036, %v4476
      %v4765 = vsel %vm3325, %v3037, %v4477
      %v4766 = vsel %vm3326, %v3038, %v4478
      %v4767 = vsel %vm3327, %v3039, %v4479
      %v4768 = vsel %vm3328, %v3040, %v4480
      %v4769 = vsel %vm3329, %v3041, %v4481
      %v4770 = vsel %vm3330, %v3042, %v4482
      %v4771 = vsel %vm3331, %v3043, %v4483
      %v4772 = vsel %vm3332, %v3044, %v4484
      %v4773 = vsel %vm3333, %v3045, %v4485
      %v4774 = vsel %vm3334, %v3046, %v4486
      %v4775 = vsel %vm3335, %v3047, %v4487
      %v4776 = vsel %vm3336, %v3048, %v4488
      %v4777 = vsel %vm3337, %v3049, %v4489
      %v4778 = vsel %vm3338, %v3050, %v4490
      %v4779 = vsel %vm3339, %v3051, %v4491
      %v4780 = vsel %vm3340, %v3052, %v4492
      %v4781 = vsel %vm3341, %v3053, %v4493
      %v4782 = vsel %vm3342, %v3054, %v4494
      %v4783 = vsel %vm3343, %v3055, %v4495
      %v4784 = vsel %vm3344, %v3056, %v4496
      %v4785 = vsel %vm3345, %v3057, %v4497
      %v4786 = vsel %vm3346, %v3058, %v4498
      %v4787 = vsel %vm3347, %v3059, %v4499
      %v4788 = vsel %vm3348, %v3060, %v4500
      %v4789 = vsel %vm3349, %v3061, %v4501
      %v4790 = vsel %vm3350, %v3062, %v4502
      %v4791 = vsel %vm3351, %v3063, %v4503
      %v4792 = vsel %vm3352, %v3064, %v4504
      %v4793 = vsel %vm3353, %v3065, %v4505
      %v4794 = vsel %vm3354, %v3066, %v4506
      %v4795 = vsel %vm3355, %v3067, %v4507
      %v4796 = vsel %vm3356, %v3068, %v4508
      %v4797 = vsel %vm3357, %v3069, %v4509
      %v4798 = vsel %vm3358, %v3070, %v4510
      %v4799 = vsel %vm3359, %v3071, %v4511
      %v4800 = vsel %vm3360, %v3072, %v4512
      %v4801 = vsel %vm3361, %v3073, %v4513
      %v4802 = vsel %vm3362, %v3074, %v4514
      %v4803 = vsel %vm3363, %v3075, %v4515
      %v4804 = vsel %vm3364, %v3076, %v4516
      %v4805 = vsel %vm3365, %v3077, %v4517
      %v4806 = vsel %vm3366, %v3078, %v4518
      %v4807 = vsel %vm3367, %v3079, %v4519
      %v4808 = vsel %vm3368, %v3080, %v4520
      %v4809 = vsel %vm3369, %v3081, %v4521
      %v4810 = vsel %vm3370, %v3082, %v4522
      %v4811 = vsel %vm3371, %v3083, %v4523
      %v4812 = vsel %vm3372, %v3084, %v4524
      %v4813 = vsel %vm3373, %v3085, %v4525
      %v4814 = vsel %vm3374, %v3086, %v4526
      %v4815 = vsel %vm3375, %v3087, %v4527
      %v4816 = vsel %vm3376, %v3088, %v4528
      %v4817 = vsel %vm3377, %v3089, %v4529
      %v4818 = vsel %vm3378, %v3090, %v4530
      %v4819 = vsel %vm3379, %v3091, %v4531
      %v4820 = vsel %vm3380, %v3092, %v4532
      %v4821 = vsel %vm3381, %v3093, %v4533
      %v4822 = vsel %vm3382, %v3094, %v4534
      %v4823 = vsel %vm3383, %v3095, %v4535
      %v4824 = vsel %vm3384, %v3096, %v4536
      %v4825 = vsel %vm3385, %v3097, %v4537
      %v4826 = vsel %vm3386, %v3098, %v4538
      %v4827 = vsel %vm3387, %v3099, %v4539
      %v4828 = vsel %vm3388, %v3100, %v4540
      %v4829 = vsel %vm3389, %v3101, %v4541
      %v4830 = vsel %vm3390, %v3102, %v4542
      %v4831 = vsel %vm3391, %v3103, %v4543
      %v4832 = vsel %vm3392, %v3104, %v4544
      %v4833 = vsel %vm3393, %v3105, %v4545
      %v4834 = vsel %vm3394, %v3106, %v4546
      %v4835 = vsel %vm3395, %v3107, %v4547
      %v4836 = vsel %vm3396, %v3108, %v4548
      %v4837 = vsel %vm3397, %v3109, %v4549
      %v4838 = vsel %vm3398, %v3110, %v4550
      %v4839 = vsel %vm3399, %v3111, %v4551
      %v4840 = vsel %vm3400, %v3112, %v4552
      %v4841 = vsel %vm3401, %v3113, %v4553
      %v4842 = vsel %vm3402, %v3114, %v4554
      %v4843 = vsel %vm3403, %v3115, %v4555
      %v4844 = vsel %vm3404, %v3116, %v4556
      %v4845 = vsel %vm3405, %v3117, %v4557
      %v4846 = vsel %vm3406, %v3118, %v4558
      %v4847 = vsel %vm3407, %v3119, %v4559
      %v4848 = vsel %vm3408, %v3120, %v4560
      %v4849 = vsel %vm3409, %v3121, %v4561
      %v4850 = vsel %vm3410, %v3122, %v4562
      %v4851 = vsel %vm3411, %v3123, %v4563
      %v4852 = vsel %vm3412, %v3124, %v4564
      %v4853 = vsel %vm3413, %v3125, %v4565
      %v4854 = vsel %vm3414, %v3126, %v4566
      %v4855 = vsel %vm3415, %v3127, %v4567
      %v4856 = vsel %vm3416, %v3128, %v4568
      %v4857 = vsel %vm3417, %v3129, %v4569
      %v4858 = vsel %vm3418, %v3130, %v4570
      %v4859 = vsel %vm3419, %v3131, %v4571
      %v4860 = vsel %vm3420, %v3132, %v4572
      %v4861 = vsel %vm3421, %v3133, %v4573
      %v4862 = vsel %vm3422, %v3134, %v4574
      %v4863 = vsel %vm3423, %v3135, %v4575
      %v4864 = vsel %vm3424, %v3136, %v4576
      %v4865 = vsel %vm3425, %v3137, %v4577
      %v4866 = vsel %vm3426, %v3138, %v4578
      %v4867 = vsel %vm3427, %v3139, %v4579
      %v4868 = vsel %vm3428, %v3140, %v4580
      %v4869 = vsel %vm3429, %v3141, %v4581
      %v4870 = vsel %vm3430, %v3142, %v4582
      %v4871 = vsel %vm3431, %v3143, %v4583
      %v4872 = vsel %vm3432, %v3144, %v4584
      %v4873 = vsel %vm3433, %v3145, %v4585
      %v4874 = vsel %vm3434, %v3146, %v4586
      %v4875 = vsel %vm3435, %v3147, %v4587
      %v4876 = vsel %vm3436, %v3148, %v4588
      %v4877 = vsel %vm3437, %v3149, %v4589
      %v4878 = vsel %vm3438, %v3150, %v4590
      %v4879 = vsel %vm3439, %v3151, %v4591
      %v4880 = vsel %vm3440, %v3152, %v4592
      %v4881 = vsel %vm3441, %v3153, %v4593
      %v4882 = vsel %vm3442, %v3154, %v4594
      %v4883 = vsel %vm3443, %v3155, %v4595
      %v4884 = vsel %vm3444, %v3156, %v4596
      %v4885 = vsel %vm3445, %v3157, %v4597
      %v4886 = vsel %vm3446, %v3158, %v4598
      %v4887 = vsel %vm3447, %v3159, %v4599
      %v4888 = vsel %vm3448, %v3160, %v4600
      %v4889 = vsel %vm3449, %v3161, %v4601
      %v4890 = vsel %vm3450, %v3162, %v4602
      %v4891 = vsel %vm3451, %v3163, %v4603
      %v4892 = vsel %vm3452, %v3164, %v4604
      %v4893 = vsel %vm3453, %v3165, %v4605
      %v4894 = vsel %vm3454, %v3166, %v4606
      %v4895 = vsel %vm3455, %v3167, %v4607
      %v4896 = vsel %vm3456, %v3168, %v4608
      %v4897 = vsel %vm3457, %v3169, %v4609
      %v4898 = vsel %vm3458, %v3170, %v4610
      %v4899 = vsel %vm3459, %v3171, %v4611
      %v4900 = vsel %vm3460, %v3172, %v4612
      %v4901 = vsel %vm3461, %v3173, %v4613
      %v4902 = vsel %vm3462, %v3174, %v4614
      %v4903 = vsel %vm3463, %v3175, %v4615
      %v4904 = vsel %vm3464, %v3176, %v4616
      %v4905 = vsel %vm3465, %v3177, %v4617
      %v4906 = vsel %vm3466, %v3178, %v4618
      %v4907 = vsel %vm3467, %v3179, %v4619
      %v4908 = vsel %vm3468, %v3180, %v4620
      %v4909 = vsel %vm3469, %v3181, %v4621
      %v4910 = vsel %vm3470, %v3182, %v4622
      %v4911 = vsel %vm3471, %v3183, %v4623
      %v4912 = vsel %vm3472, %v3184, %v4624
      %v4913 = vsel %vm3473, %v3185, %v4625
      %v4914 = vsel %vm3474, %v3186, %v4626
      %v4915 = vsel %vm3475, %v3187, %v4627
      %v4916 = vsel %vm3476, %v3188, %v4628
      %v4917 = vsel %vm3477, %v3189, %v4629
      %v4918 = vsel %vm3478, %v3190, %v4630
      %v4919 = vsel %vm3479, %v3191, %v4631
      %v4920 = vsel %vm3480, %v3192, %v4632
      %vm4921 = vcmask 130048
      %v4922 = vsel %vm4921, %v4633, -inf
      %v4923 = vsel %vm4921, %v4705, -inf
      %v4924 = vmax.f32 %v4922, %v4923
      %v4925 = vsel %vm4921, %v4777, -inf
      %v4926 = vmax.f32 %v4924, %v4925
      %v4927 = vsel %vm4921, %v4849, -inf
      %v4928 = vmax.f32 %v4926, %v4927
      %v4929 = vsel %vm4921, %v4634, -inf
      %v4930 = vsel %vm4921, %v4706, -inf
      %v4931 = vmax.f32 %v4929, %v4930
      %v4932 = vsel %vm4921, %v4778, -inf
      %v4933 = vmax.f32 %v4931, %v4932
      %v4934 = vsel %vm4921, %v4850, -inf
      %v4935 = vmax.f32 %v4933, %v4934
      %v4936 = vsel %vm4921, %v4635, -inf
      %v4937 = vsel %vm4921, %v4707, -inf
      %v4938 = vmax.f32 %v4936, %v4937
      %v4939 = vsel %vm4921, %v4779, -inf
      %v4940 = vmax.f32 %v4938, %v4939
      %v4941 = vsel %vm4921, %v4851, -inf
      %v4942 = vmax.f32 %v4940, %v4941
      %v4943 = vsel %vm4921, %v4636, -inf
      %v4944 = vsel %vm4921, %v4708, -inf
      %v4945 = vmax.f32 %v4943, %v4944
      %v4946 = vsel %vm4921, %v4780, -inf
      %v4947 = vmax.f32 %v4945, %v4946
      %v4948 = vsel %vm4921, %v4852, -inf
      %v4949 = vmax.f32 %v4947, %v4948
      %v4950 = vsel %vm4921, %v4637, -inf
      %v4951 = vsel %vm4921, %v4709, -inf
      %v4952 = vmax.f32 %v4950, %v4951
      %v4953 = vsel %vm4921, %v4781, -inf
      %v4954 = vmax.f32 %v4952, %v4953
      %v4955 = vsel %vm4921, %v4853, -inf
      %v4956 = vmax.f32 %v4954, %v4955
      %v4957 = vsel %vm4921, %v4638, -inf
      %v4958 = vsel %vm4921, %v4710, -inf
      %v4959 = vmax.f32 %v4957, %v4958
      %v4960 = vsel %vm4921, %v4782, -inf
      %v4961 = vmax.f32 %v4959, %v4960
      %v4962 = vsel %vm4921, %v4854, -inf
      %v4963 = vmax.f32 %v4961, %v4962
      %v4964 = vsel %vm4921, %v4639, -inf
      %v4965 = vsel %vm4921, %v4711, -inf
      %v4966 = vmax.f32 %v4964, %v4965
      %v4967 = vsel %vm4921, %v4783, -inf
      %v4968 = vmax.f32 %v4966, %v4967
      %v4969 = vsel %vm4921, %v4855, -inf
      %v4970 = vmax.f32 %v4968, %v4969
      %v4971 = vsel %vm4921, %v4640, -inf
      %v4972 = vsel %vm4921, %v4712, -inf
      %v4973 = vmax.f32 %v4971, %v4972
      %v4974 = vsel %vm4921, %v4784, -inf
      %v4975 = vmax.f32 %v4973, %v4974
      %v4976 = vsel %vm4921, %v4856, -inf
      %v4977 = vmax.f32 %v4975, %v4976
      %v4978 = vsel %vm4921, %v4641, -inf
      %v4979 = vsel %vm4921, %v4713, -inf
      %v4980 = vmax.f32 %v4978, %v4979
      %v4981 = vsel %vm4921, %v4785, -inf
      %v4982 = vmax.f32 %v4980, %v4981
      %v4983 = vsel %vm4921, %v4857, -inf
      %v4984 = vmax.f32 %v4982, %v4983
      %v4985 = vsel %vm4921, %v4642, -inf
      %v4986 = vsel %vm4921, %v4714, -inf
      %v4987 = vmax.f32 %v4985, %v4986
      %v4988 = vsel %vm4921, %v4786, -inf
      %v4989 = vmax.f32 %v4987, %v4988
      %v4990 = vsel %vm4921, %v4858, -inf
      %v4991 = vmax.f32 %v4989, %v4990
      %v4992 = vsel %vm4921, %v4643, -inf
      %v4993 = vsel %vm4921, %v4715, -inf
      %v4994 = vmax.f32 %v4992, %v4993
      %v4995 = vsel %vm4921, %v4787, -inf
      %v4996 = vmax.f32 %v4994, %v4995
      %v4997 = vsel %vm4921, %v4859, -inf
      %v4998 = vmax.f32 %v4996, %v4997
      %v4999 = vsel %vm4921, %v4644, -inf
      %v5000 = vsel %vm4921, %v4716, -inf
      %v5001 = vmax.f32 %v4999, %v5000
      %v5002 = vsel %vm4921, %v4788, -inf
      %v5003 = vmax.f32 %v5001, %v5002
      %v5004 = vsel %vm4921, %v4860, -inf
      %v5005 = vmax.f32 %v5003, %v5004
      %v5006 = vsel %vm4921, %v4645, -inf
      %v5007 = vsel %vm4921, %v4717, -inf
      %v5008 = vmax.f32 %v5006, %v5007
      %v5009 = vsel %vm4921, %v4789, -inf
      %v5010 = vmax.f32 %v5008, %v5009
      %v5011 = vsel %vm4921, %v4861, -inf
      %v5012 = vmax.f32 %v5010, %v5011
      %v5013 = vsel %vm4921, %v4646, -inf
      %v5014 = vsel %vm4921, %v4718, -inf
      %v5015 = vmax.f32 %v5013, %v5014
      %v5016 = vsel %vm4921, %v4790, -inf
      %v5017 = vmax.f32 %v5015, %v5016
      %v5018 = vsel %vm4921, %v4862, -inf
      %v5019 = vmax.f32 %v5017, %v5018
      %v5020 = vsel %vm4921, %v4647, -inf
      %v5021 = vsel %vm4921, %v4719, -inf
      %v5022 = vmax.f32 %v5020, %v5021
      %v5023 = vsel %vm4921, %v4791, -inf
      %v5024 = vmax.f32 %v5022, %v5023
      %v5025 = vsel %vm4921, %v4863, -inf
      %v5026 = vmax.f32 %v5024, %v5025
      %v5027 = vsel %vm4921, %v4648, -inf
      %v5028 = vsel %vm4921, %v4720, -inf
      %v5029 = vmax.f32 %v5027, %v5028
      %v5030 = vsel %vm4921, %v4792, -inf
      %v5031 = vmax.f32 %v5029, %v5030
      %v5032 = vsel %vm4921, %v4864, -inf
      %v5033 = vmax.f32 %v5031, %v5032
      %v5034 = vsel %vm4921, %v4649, -inf
      %v5035 = vsel %vm4921, %v4721, -inf
      %v5036 = vmax.f32 %v5034, %v5035
      %v5037 = vsel %vm4921, %v4793, -inf
      %v5038 = vmax.f32 %v5036, %v5037
      %v5039 = vsel %vm4921, %v4865, -inf
      %v5040 = vmax.f32 %v5038, %v5039
      %v5041 = vsel %vm4921, %v4650, -inf
      %v5042 = vsel %vm4921, %v4722, -inf
      %v5043 = vmax.f32 %v5041, %v5042
      %v5044 = vsel %vm4921, %v4794, -inf
      %v5045 = vmax.f32 %v5043, %v5044
      %v5046 = vsel %vm4921, %v4866, -inf
      %v5047 = vmax.f32 %v5045, %v5046
      %v5048 = vsel %vm4921, %v4651, -inf
      %v5049 = vsel %vm4921, %v4723, -inf
      %v5050 = vmax.f32 %v5048, %v5049
      %v5051 = vsel %vm4921, %v4795, -inf
      %v5052 = vmax.f32 %v5050, %v5051
      %v5053 = vsel %vm4921, %v4867, -inf
      %v5054 = vmax.f32 %v5052, %v5053
      %v5055 = vsel %vm4921, %v4652, -inf
      %v5056 = vsel %vm4921, %v4724, -inf
      %v5057 = vmax.f32 %v5055, %v5056
      %v5058 = vsel %vm4921, %v4796, -inf
      %v5059 = vmax.f32 %v5057, %v5058
      %v5060 = vsel %vm4921, %v4868, -inf
      %v5061 = vmax.f32 %v5059, %v5060
      %v5062 = vsel %vm4921, %v4653, -inf
      %v5063 = vsel %vm4921, %v4725, -inf
      %v5064 = vmax.f32 %v5062, %v5063
      %v5065 = vsel %vm4921, %v4797, -inf
      %v5066 = vmax.f32 %v5064, %v5065
      %v5067 = vsel %vm4921, %v4869, -inf
      %v5068 = vmax.f32 %v5066, %v5067
      %v5069 = vsel %vm4921, %v4654, -inf
      %v5070 = vsel %vm4921, %v4726, -inf
      %v5071 = vmax.f32 %v5069, %v5070
      %v5072 = vsel %vm4921, %v4798, -inf
      %v5073 = vmax.f32 %v5071, %v5072
      %v5074 = vsel %vm4921, %v4870, -inf
      %v5075 = vmax.f32 %v5073, %v5074
      %v5076 = vsel %vm4921, %v4655, -inf
      %v5077 = vsel %vm4921, %v4727, -inf
      %v5078 = vmax.f32 %v5076, %v5077
      %v5079 = vsel %vm4921, %v4799, -inf
      %v5080 = vmax.f32 %v5078, %v5079
      %v5081 = vsel %vm4921, %v4871, -inf
      %v5082 = vmax.f32 %v5080, %v5081
      %v5083 = vsel %vm4921, %v4656, -inf
      %v5084 = vsel %vm4921, %v4728, -inf
      %v5085 = vmax.f32 %v5083, %v5084
      %v5086 = vsel %vm4921, %v4800, -inf
      %v5087 = vmax.f32 %v5085, %v5086
      %v5088 = vsel %vm4921, %v4872, -inf
      %v5089 = vmax.f32 %v5087, %v5088
      %v5090 = vsel %vm4921, %v4657, -inf
      %v5091 = vsel %vm4921, %v4729, -inf
      %v5092 = vmax.f32 %v5090, %v5091
      %v5093 = vsel %vm4921, %v4801, -inf
      %v5094 = vmax.f32 %v5092, %v5093
      %v5095 = vsel %vm4921, %v4873, -inf
      %v5096 = vmax.f32 %v5094, %v5095
      %v5097 = vsel %vm4921, %v4658, -inf
      %v5098 = vsel %vm4921, %v4730, -inf
      %v5099 = vmax.f32 %v5097, %v5098
      %v5100 = vsel %vm4921, %v4802, -inf
      %v5101 = vmax.f32 %v5099, %v5100
      %v5102 = vsel %vm4921, %v4874, -inf
      %v5103 = vmax.f32 %v5101, %v5102
      %v5104 = vsel %vm4921, %v4659, -inf
      %v5105 = vsel %vm4921, %v4731, -inf
      %v5106 = vmax.f32 %v5104, %v5105
      %v5107 = vsel %vm4921, %v4803, -inf
      %v5108 = vmax.f32 %v5106, %v5107
      %v5109 = vsel %vm4921, %v4875, -inf
      %v5110 = vmax.f32 %v5108, %v5109
      %v5111 = vsel %vm4921, %v4660, -inf
      %v5112 = vsel %vm4921, %v4732, -inf
      %v5113 = vmax.f32 %v5111, %v5112
      %v5114 = vsel %vm4921, %v4804, -inf
      %v5115 = vmax.f32 %v5113, %v5114
      %v5116 = vsel %vm4921, %v4876, -inf
      %v5117 = vmax.f32 %v5115, %v5116
      %v5118 = vsel %vm4921, %v4661, -inf
      %v5119 = vsel %vm4921, %v4733, -inf
      %v5120 = vmax.f32 %v5118, %v5119
      %v5121 = vsel %vm4921, %v4805, -inf
      %v5122 = vmax.f32 %v5120, %v5121
      %v5123 = vsel %vm4921, %v4877, -inf
      %v5124 = vmax.f32 %v5122, %v5123
      %v5125 = vsel %vm4921, %v4662, -inf
      %v5126 = vsel %vm4921, %v4734, -inf
      %v5127 = vmax.f32 %v5125, %v5126
      %v5128 = vsel %vm4921, %v4806, -inf
      %v5129 = vmax.f32 %v5127, %v5128
      %v5130 = vsel %vm4921, %v4878, -inf
      %v5131 = vmax.f32 %v5129, %v5130
      %v5132 = vsel %vm4921, %v4663, -inf
      %v5133 = vsel %vm4921, %v4735, -inf
      %v5134 = vmax.f32 %v5132, %v5133
      %v5135 = vsel %vm4921, %v4807, -inf
      %v5136 = vmax.f32 %v5134, %v5135
      %v5137 = vsel %vm4921, %v4879, -inf
      %v5138 = vmax.f32 %v5136, %v5137
      %v5139 = vsel %vm4921, %v4664, -inf
      %v5140 = vsel %vm4921, %v4736, -inf
      %v5141 = vmax.f32 %v5139, %v5140
      %v5142 = vsel %vm4921, %v4808, -inf
      %v5143 = vmax.f32 %v5141, %v5142
      %v5144 = vsel %vm4921, %v4880, -inf
      %v5145 = vmax.f32 %v5143, %v5144
      %v5146 = vsel %vm4921, %v4665, -inf
      %v5147 = vsel %vm4921, %v4737, -inf
      %v5148 = vmax.f32 %v5146, %v5147
      %v5149 = vsel %vm4921, %v4809, -inf
      %v5150 = vmax.f32 %v5148, %v5149
      %v5151 = vsel %vm4921, %v4881, -inf
      %v5152 = vmax.f32 %v5150, %v5151
      %v5153 = vsel %vm4921, %v4666, -inf
      %v5154 = vsel %vm4921, %v4738, -inf
      %v5155 = vmax.f32 %v5153, %v5154
      %v5156 = vsel %vm4921, %v4810, -inf
      %v5157 = vmax.f32 %v5155, %v5156
      %v5158 = vsel %vm4921, %v4882, -inf
      %v5159 = vmax.f32 %v5157, %v5158
      %v5160 = vsel %vm4921, %v4667, -inf
      %v5161 = vsel %vm4921, %v4739, -inf
      %v5162 = vmax.f32 %v5160, %v5161
      %v5163 = vsel %vm4921, %v4811, -inf
      %v5164 = vmax.f32 %v5162, %v5163
      %v5165 = vsel %vm4921, %v4883, -inf
      %v5166 = vmax.f32 %v5164, %v5165
      %v5167 = vsel %vm4921, %v4668, -inf
      %v5168 = vsel %vm4921, %v4740, -inf
      %v5169 = vmax.f32 %v5167, %v5168
      %v5170 = vsel %vm4921, %v4812, -inf
      %v5171 = vmax.f32 %v5169, %v5170
      %v5172 = vsel %vm4921, %v4884, -inf
      %v5173 = vmax.f32 %v5171, %v5172
      %v5174 = vsel %vm4921, %v4669, -inf
      %v5175 = vsel %vm4921, %v4741, -inf
      %v5176 = vmax.f32 %v5174, %v5175
      %v5177 = vsel %vm4921, %v4813, -inf
      %v5178 = vmax.f32 %v5176, %v5177
      %v5179 = vsel %vm4921, %v4885, -inf
      %v5180 = vmax.f32 %v5178, %v5179
      %v5181 = vsel %vm4921, %v4670, -inf
      %v5182 = vsel %vm4921, %v4742, -inf
      %v5183 = vmax.f32 %v5181, %v5182
      %v5184 = vsel %vm4921, %v4814, -inf
      %v5185 = vmax.f32 %v5183, %v5184
      %v5186 = vsel %vm4921, %v4886, -inf
      %v5187 = vmax.f32 %v5185, %v5186
      %v5188 = vsel %vm4921, %v4671, -inf
      %v5189 = vsel %vm4921, %v4743, -inf
      %v5190 = vmax.f32 %v5188, %v5189
      %v5191 = vsel %vm4921, %v4815, -inf
      %v5192 = vmax.f32 %v5190, %v5191
      %v5193 = vsel %vm4921, %v4887, -inf
      %v5194 = vmax.f32 %v5192, %v5193
      %v5195 = vsel %vm4921, %v4672, -inf
      %v5196 = vsel %vm4921, %v4744, -inf
      %v5197 = vmax.f32 %v5195, %v5196
      %v5198 = vsel %vm4921, %v4816, -inf
      %v5199 = vmax.f32 %v5197, %v5198
      %v5200 = vsel %vm4921, %v4888, -inf
      %v5201 = vmax.f32 %v5199, %v5200
      %v5202 = vsel %vm4921, %v4673, -inf
      %v5203 = vsel %vm4921, %v4745, -inf
      %v5204 = vmax.f32 %v5202, %v5203
      %v5205 = vsel %vm4921, %v4817, -inf
      %v5206 = vmax.f32 %v5204, %v5205
      %v5207 = vsel %vm4921, %v4889, -inf
      %v5208 = vmax.f32 %v5206, %v5207
      %v5209 = vsel %vm4921, %v4674, -inf
      %v5210 = vsel %vm4921, %v4746, -inf
      %v5211 = vmax.f32 %v5209, %v5210
      %v5212 = vsel %vm4921, %v4818, -inf
      %v5213 = vmax.f32 %v5211, %v5212
      %v5214 = vsel %vm4921, %v4890, -inf
      %v5215 = vmax.f32 %v5213, %v5214
      %v5216 = vsel %vm4921, %v4675, -inf
      %v5217 = vsel %vm4921, %v4747, -inf
      %v5218 = vmax.f32 %v5216, %v5217
      %v5219 = vsel %vm4921, %v4819, -inf
      %v5220 = vmax.f32 %v5218, %v5219
      %v5221 = vsel %vm4921, %v4891, -inf
      %v5222 = vmax.f32 %v5220, %v5221
      %v5223 = vsel %vm4921, %v4676, -inf
      %v5224 = vsel %vm4921, %v4748, -inf
      %v5225 = vmax.f32 %v5223, %v5224
      %v5226 = vsel %vm4921, %v4820, -inf
      %v5227 = vmax.f32 %v5225, %v5226
      %v5228 = vsel %vm4921, %v4892, -inf
      %v5229 = vmax.f32 %v5227, %v5228
      %v5230 = vsel %vm4921, %v4677, -inf
      %v5231 = vsel %vm4921, %v4749, -inf
      %v5232 = vmax.f32 %v5230, %v5231
      %v5233 = vsel %vm4921, %v4821, -inf
      %v5234 = vmax.f32 %v5232, %v5233
      %v5235 = vsel %vm4921, %v4893, -inf
      %v5236 = vmax.f32 %v5234, %v5235
      %v5237 = vsel %vm4921, %v4678, -inf
      %v5238 = vsel %vm4921, %v4750, -inf
      %v5239 = vmax.f32 %v5237, %v5238
      %v5240 = vsel %vm4921, %v4822, -inf
      %v5241 = vmax.f32 %v5239, %v5240
      %v5242 = vsel %vm4921, %v4894, -inf
      %v5243 = vmax.f32 %v5241, %v5242
      %v5244 = vsel %vm4921, %v4679, -inf
      %v5245 = vsel %vm4921, %v4751, -inf
      %v5246 = vmax.f32 %v5244, %v5245
      %v5247 = vsel %vm4921, %v4823, -inf
      %v5248 = vmax.f32 %v5246, %v5247
      %v5249 = vsel %vm4921, %v4895, -inf
      %v5250 = vmax.f32 %v5248, %v5249
      %v5251 = vsel %vm4921, %v4680, -inf
      %v5252 = vsel %vm4921, %v4752, -inf
      %v5253 = vmax.f32 %v5251, %v5252
      %v5254 = vsel %vm4921, %v4824, -inf
      %v5255 = vmax.f32 %v5253, %v5254
      %v5256 = vsel %vm4921, %v4896, -inf
      %v5257 = vmax.f32 %v5255, %v5256
      %v5258 = vsel %vm4921, %v4681, -inf
      %v5259 = vsel %vm4921, %v4753, -inf
      %v5260 = vmax.f32 %v5258, %v5259
      %v5261 = vsel %vm4921, %v4825, -inf
      %v5262 = vmax.f32 %v5260, %v5261
      %v5263 = vsel %vm4921, %v4897, -inf
      %v5264 = vmax.f32 %v5262, %v5263
      %v5265 = vsel %vm4921, %v4682, -inf
      %v5266 = vsel %vm4921, %v4754, -inf
      %v5267 = vmax.f32 %v5265, %v5266
      %v5268 = vsel %vm4921, %v4826, -inf
      %v5269 = vmax.f32 %v5267, %v5268
      %v5270 = vsel %vm4921, %v4898, -inf
      %v5271 = vmax.f32 %v5269, %v5270
      %v5272 = vsel %vm4921, %v4683, -inf
      %v5273 = vsel %vm4921, %v4755, -inf
      %v5274 = vmax.f32 %v5272, %v5273
      %v5275 = vsel %vm4921, %v4827, -inf
      %v5276 = vmax.f32 %v5274, %v5275
      %v5277 = vsel %vm4921, %v4899, -inf
      %v5278 = vmax.f32 %v5276, %v5277
      %v5279 = vsel %vm4921, %v4684, -inf
      %v5280 = vsel %vm4921, %v4756, -inf
      %v5281 = vmax.f32 %v5279, %v5280
      %v5282 = vsel %vm4921, %v4828, -inf
      %v5283 = vmax.f32 %v5281, %v5282
      %v5284 = vsel %vm4921, %v4900, -inf
      %v5285 = vmax.f32 %v5283, %v5284
      %v5286 = vsel %vm4921, %v4685, -inf
      %v5287 = vsel %vm4921, %v4757, -inf
      %v5288 = vmax.f32 %v5286, %v5287
      %v5289 = vsel %vm4921, %v4829, -inf
      %v5290 = vmax.f32 %v5288, %v5289
      %v5291 = vsel %vm4921, %v4901, -inf
      %v5292 = vmax.f32 %v5290, %v5291
      %v5293 = vsel %vm4921, %v4686, -inf
      %v5294 = vsel %vm4921, %v4758, -inf
      %v5295 = vmax.f32 %v5293, %v5294
      %v5296 = vsel %vm4921, %v4830, -inf
      %v5297 = vmax.f32 %v5295, %v5296
      %v5298 = vsel %vm4921, %v4902, -inf
      %v5299 = vmax.f32 %v5297, %v5298
      %v5300 = vsel %vm4921, %v4687, -inf
      %v5301 = vsel %vm4921, %v4759, -inf
      %v5302 = vmax.f32 %v5300, %v5301
      %v5303 = vsel %vm4921, %v4831, -inf
      %v5304 = vmax.f32 %v5302, %v5303
      %v5305 = vsel %vm4921, %v4903, -inf
      %v5306 = vmax.f32 %v5304, %v5305
      %v5307 = vsel %vm4921, %v4688, -inf
      %v5308 = vsel %vm4921, %v4760, -inf
      %v5309 = vmax.f32 %v5307, %v5308
      %v5310 = vsel %vm4921, %v4832, -inf
      %v5311 = vmax.f32 %v5309, %v5310
      %v5312 = vsel %vm4921, %v4904, -inf
      %v5313 = vmax.f32 %v5311, %v5312
      %v5314 = vsel %vm4921, %v4689, -inf
      %v5315 = vsel %vm4921, %v4761, -inf
      %v5316 = vmax.f32 %v5314, %v5315
      %v5317 = vsel %vm4921, %v4833, -inf
      %v5318 = vmax.f32 %v5316, %v5317
      %v5319 = vsel %vm4921, %v4905, -inf
      %v5320 = vmax.f32 %v5318, %v5319
      %v5321 = vsel %vm4921, %v4690, -inf
      %v5322 = vsel %vm4921, %v4762, -inf
      %v5323 = vmax.f32 %v5321, %v5322
      %v5324 = vsel %vm4921, %v4834, -inf
      %v5325 = vmax.f32 %v5323, %v5324
      %v5326 = vsel %vm4921, %v4906, -inf
      %v5327 = vmax.f32 %v5325, %v5326
      %v5328 = vsel %vm4921, %v4691, -inf
      %v5329 = vsel %vm4921, %v4763, -inf
      %v5330 = vmax.f32 %v5328, %v5329
      %v5331 = vsel %vm4921, %v4835, -inf
      %v5332 = vmax.f32 %v5330, %v5331
      %v5333 = vsel %vm4921, %v4907, -inf
      %v5334 = vmax.f32 %v5332, %v5333
      %v5335 = vsel %vm4921, %v4692, -inf
      %v5336 = vsel %vm4921, %v4764, -inf
      %v5337 = vmax.f32 %v5335, %v5336
      %v5338 = vsel %vm4921, %v4836, -inf
      %v5339 = vmax.f32 %v5337, %v5338
      %v5340 = vsel %vm4921, %v4908, -inf
      %v5341 = vmax.f32 %v5339, %v5340
      %v5342 = vsel %vm4921, %v4693, -inf
      %v5343 = vsel %vm4921, %v4765, -inf
      %v5344 = vmax.f32 %v5342, %v5343
      %v5345 = vsel %vm4921, %v4837, -inf
      %v5346 = vmax.f32 %v5344, %v5345
      %v5347 = vsel %vm4921, %v4909, -inf
      %v5348 = vmax.f32 %v5346, %v5347
      %v5349 = vsel %vm4921, %v4694, -inf
      %v5350 = vsel %vm4921, %v4766, -inf
      %v5351 = vmax.f32 %v5349, %v5350
      %v5352 = vsel %vm4921, %v4838, -inf
      %v5353 = vmax.f32 %v5351, %v5352
      %v5354 = vsel %vm4921, %v4910, -inf
      %v5355 = vmax.f32 %v5353, %v5354
      %v5356 = vsel %vm4921, %v4695, -inf
      %v5357 = vsel %vm4921, %v4767, -inf
      %v5358 = vmax.f32 %v5356, %v5357
      %v5359 = vsel %vm4921, %v4839, -inf
      %v5360 = vmax.f32 %v5358, %v5359
      %v5361 = vsel %vm4921, %v4911, -inf
      %v5362 = vmax.f32 %v5360, %v5361
      %v5363 = vsel %vm4921, %v4696, -inf
      %v5364 = vsel %vm4921, %v4768, -inf
      %v5365 = vmax.f32 %v5363, %v5364
      %v5366 = vsel %vm4921, %v4840, -inf
      %v5367 = vmax.f32 %v5365, %v5366
      %v5368 = vsel %vm4921, %v4912, -inf
      %v5369 = vmax.f32 %v5367, %v5368
      %v5370 = vsel %vm4921, %v4697, -inf
      %v5371 = vsel %vm4921, %v4769, -inf
      %v5372 = vmax.f32 %v5370, %v5371
      %v5373 = vsel %vm4921, %v4841, -inf
      %v5374 = vmax.f32 %v5372, %v5373
      %v5375 = vsel %vm4921, %v4913, -inf
      %v5376 = vmax.f32 %v5374, %v5375
      %v5377 = vsel %vm4921, %v4698, -inf
      %v5378 = vsel %vm4921, %v4770, -inf
      %v5379 = vmax.f32 %v5377, %v5378
      %v5380 = vsel %vm4921, %v4842, -inf
      %v5381 = vmax.f32 %v5379, %v5380
      %v5382 = vsel %vm4921, %v4914, -inf
      %v5383 = vmax.f32 %v5381, %v5382
      %v5384 = vsel %vm4921, %v4699, -inf
      %v5385 = vsel %vm4921, %v4771, -inf
      %v5386 = vmax.f32 %v5384, %v5385
      %v5387 = vsel %vm4921, %v4843, -inf
      %v5388 = vmax.f32 %v5386, %v5387
      %v5389 = vsel %vm4921, %v4915, -inf
      %v5390 = vmax.f32 %v5388, %v5389
      %v5391 = vsel %vm4921, %v4700, -inf
      %v5392 = vsel %vm4921, %v4772, -inf
      %v5393 = vmax.f32 %v5391, %v5392
      %v5394 = vsel %vm4921, %v4844, -inf
      %v5395 = vmax.f32 %v5393, %v5394
      %v5396 = vsel %vm4921, %v4916, -inf
      %v5397 = vmax.f32 %v5395, %v5396
      %v5398 = vsel %vm4921, %v4701, -inf
      %v5399 = vsel %vm4921, %v4773, -inf
      %v5400 = vmax.f32 %v5398, %v5399
      %v5401 = vsel %vm4921, %v4845, -inf
      %v5402 = vmax.f32 %v5400, %v5401
      %v5403 = vsel %vm4921, %v4917, -inf
      %v5404 = vmax.f32 %v5402, %v5403
      %v5405 = vsel %vm4921, %v4702, -inf
      %v5406 = vsel %vm4921, %v4774, -inf
      %v5407 = vmax.f32 %v5405, %v5406
      %v5408 = vsel %vm4921, %v4846, -inf
      %v5409 = vmax.f32 %v5407, %v5408
      %v5410 = vsel %vm4921, %v4918, -inf
      %v5411 = vmax.f32 %v5409, %v5410
      %v5412 = vsel %vm4921, %v4703, -inf
      %v5413 = vsel %vm4921, %v4775, -inf
      %v5414 = vmax.f32 %v5412, %v5413
      %v5415 = vsel %vm4921, %v4847, -inf
      %v5416 = vmax.f32 %v5414, %v5415
      %v5417 = vsel %vm4921, %v4919, -inf
      %v5418 = vmax.f32 %v5416, %v5417
      %v5419 = vsel %vm4921, %v4704, -inf
      %v5420 = vsel %vm4921, %v4776, -inf
      %v5421 = vmax.f32 %v5419, %v5420
      %v5422 = vsel %vm4921, %v4848, -inf
      %v5423 = vmax.f32 %v5421, %v5422
      %v5424 = vsel %vm4921, %v4920, -inf
      %v5425 = vmax.f32 %v5423, %v5424
      %5426 = vst.msk [vmem:[%s199] sm:$0xff] %vm4921, %v4928
      %5427 = vst.msk [vmem:[%s199 + $0x8] sm:$0xff] %vm4921, %v4935
      %5428 = vst.msk [vmem:[%s199 + $0x10] sm:$0xff] %vm4921, %v4942
      %5429 = vst.msk [vmem:[%s199 + $0x18] sm:$0xff] %vm4921, %v4949
      %5430 = vst.msk [vmem:[%s199 + $0x20] sm:$0xff] %vm4921, %v4956
      %5431 = vst.msk [vmem:[%s199 + $0x28] sm:$0xff] %vm4921, %v4963
      %5432 = vst.msk [vmem:[%s199 + $0x30] sm:$0xff] %vm4921, %v4970
      %5433 = vst.msk [vmem:[%s199 + $0x38] sm:$0xff] %vm4921, %v4977
      %5434 = vst.msk [vmem:[%s199 + $0x40] sm:$0xff] %vm4921, %v4984
      %5435 = vst.msk [vmem:[%s199 + $0x48] sm:$0xff] %vm4921, %v4991
      %5436 = vst.msk [vmem:[%s199 + $0x50] sm:$0xff] %vm4921, %v4998
      %5437 = vst.msk [vmem:[%s199 + $0x58] sm:$0xff] %vm4921, %v5005
      %5438 = vst.msk [vmem:[%s199 + $0x60] sm:$0xff] %vm4921, %v5012
      %5439 = vst.msk [vmem:[%s199 + $0x68] sm:$0xff] %vm4921, %v5019
      %5440 = vst.msk [vmem:[%s199 + $0x70] sm:$0xff] %vm4921, %v5026
      %5441 = vst.msk [vmem:[%s199 + $0x78] sm:$0xff] %vm4921, %v5033
      %5442 = vst.msk [vmem:[%s199 + $0x80] sm:$0xff] %vm4921, %v5040
      %5443 = vst.msk [vmem:[%s199 + $0x88] sm:$0xff] %vm4921, %v5047
      %5444 = vst.msk [vmem:[%s199 + $0x90] sm:$0xff] %vm4921, %v5054
      %5445 = vst.msk [vmem:[%s199 + $0x98] sm:$0xff] %vm4921, %v5061
      %5446 = vst.msk [vmem:[%s199 + $0xa0] sm:$0xff] %vm4921, %v5068
      %5447 = vst.msk [vmem:[%s199 + $0xa8] sm:$0xff] %vm4921, %v5075
      %5448 = vst.msk [vmem:[%s199 + $0xb0] sm:$0xff] %vm4921, %v5082
      %5449 = vst.msk [vmem:[%s199 + $0xb8] sm:$0xff] %vm4921, %v5089
      %5450 = vst.msk [vmem:[%s199 + $0xc0] sm:$0xff] %vm4921, %v5096
      %5451 = vst.msk [vmem:[%s199 + $0xc8] sm:$0xff] %vm4921, %v5103
      %5452 = vst.msk [vmem:[%s199 + $0xd0] sm:$0xff] %vm4921, %v5110
      %5453 = vst.msk [vmem:[%s199 + $0xd8] sm:$0xff] %vm4921, %v5117
      %5454 = vst.msk [vmem:[%s199 + $0xe0] sm:$0xff] %vm4921, %v5124
      %5455 = vst.msk [vmem:[%s199 + $0xe8] sm:$0xff] %vm4921, %v5131
      %5456 = vst.msk [vmem:[%s199 + $0xf0] sm:$0xff] %vm4921, %v5138
      %5457 = vst.msk [vmem:[%s199 + $0xf8] sm:$0xff] %vm4921, %v5145
      %5458 = vst.msk [vmem:[%s199 + $0x100] sm:$0xff] %vm4921, %v5152
      %5459 = vst.msk [vmem:[%s199 + $0x108] sm:$0xff] %vm4921, %v5159
      %5460 = vst.msk [vmem:[%s199 + $0x110] sm:$0xff] %vm4921, %v5166
      %5461 = vst.msk [vmem:[%s199 + $0x118] sm:$0xff] %vm4921, %v5173
      %5462 = vst.msk [vmem:[%s199 + $0x120] sm:$0xff] %vm4921, %v5180
      %5463 = vst.msk [vmem:[%s199 + $0x128] sm:$0xff] %vm4921, %v5187
      %5464 = vst.msk [vmem:[%s199 + $0x130] sm:$0xff] %vm4921, %v5194
      %5465 = vst.msk [vmem:[%s199 + $0x138] sm:$0xff] %vm4921, %v5201
      %5466 = vst.msk [vmem:[%s199 + $0x140] sm:$0xff] %vm4921, %v5208
      %5467 = vst.msk [vmem:[%s199 + $0x148] sm:$0xff] %vm4921, %v5215
      %5468 = vst.msk [vmem:[%s199 + $0x150] sm:$0xff] %vm4921, %v5222
      %5469 = vst.msk [vmem:[%s199 + $0x158] sm:$0xff] %vm4921, %v5229
      %5470 = vst.msk [vmem:[%s199 + $0x160] sm:$0xff] %vm4921, %v5236
      %5471 = vst.msk [vmem:[%s199 + $0x168] sm:$0xff] %vm4921, %v5243
      %5472 = vst.msk [vmem:[%s199 + $0x170] sm:$0xff] %vm4921, %v5250
      %5473 = vst.msk [vmem:[%s199 + $0x178] sm:$0xff] %vm4921, %v5257
      %5474 = vst.msk [vmem:[%s199 + $0x180] sm:$0xff] %vm4921, %v5264
      %5475 = vst.msk [vmem:[%s199 + $0x188] sm:$0xff] %vm4921, %v5271
      %5476 = vst.msk [vmem:[%s199 + $0x190] sm:$0xff] %vm4921, %v5278
      %5477 = vst.msk [vmem:[%s199 + $0x198] sm:$0xff] %vm4921, %v5285
      %5478 = vst.msk [vmem:[%s199 + $0x1a0] sm:$0xff] %vm4921, %v5292
      %5479 = vst.msk [vmem:[%s199 + $0x1a8] sm:$0xff] %vm4921, %v5299
      %5480 = vst.msk [vmem:[%s199 + $0x1b0] sm:$0xff] %vm4921, %v5306
      %5481 = vst.msk [vmem:[%s199 + $0x1b8] sm:$0xff] %vm4921, %v5313
      %5482 = vst.msk [vmem:[%s199 + $0x1c0] sm:$0xff] %vm4921, %v5320
      %5483 = vst.msk [vmem:[%s199 + $0x1c8] sm:$0xff] %vm4921, %v5327
      %5484 = vst.msk [vmem:[%s199 + $0x1d0] sm:$0xff] %vm4921, %v5334
      %5485 = vst.msk [vmem:[%s199 + $0x1d8] sm:$0xff] %vm4921, %v5341
      %5486 = vst.msk [vmem:[%s199 + $0x1e0] sm:$0xff] %vm4921, %v5348
      %5487 = vst.msk [vmem:[%s199 + $0x1e8] sm:$0xff] %vm4921, %v5355
      %5488 = vst.msk [vmem:[%s199 + $0x1f0] sm:$0xff] %vm4921, %v5362
      %5489 = vst.msk [vmem:[%s199 + $0x1f8] sm:$0xff] %vm4921, %v5369
      %5490 = vst.msk [vmem:[%s199 + $0x200] sm:$0xff] %vm4921, %v5376
      %5491 = vst.msk [vmem:[%s199 + $0x208] sm:$0xff] %vm4921, %v5383
      %5492 = vst.msk [vmem:[%s199 + $0x210] sm:$0xff] %vm4921, %v5390
      %5493 = vst.msk [vmem:[%s199 + $0x218] sm:$0xff] %vm4921, %v5397
      %5494 = vst.msk [vmem:[%s199 + $0x220] sm:$0xff] %vm4921, %v5404
      %5495 = vst.msk [vmem:[%s199 + $0x228] sm:$0xff] %vm4921, %v5411
      %5496 = vst.msk [vmem:[%s199 + $0x230] sm:$0xff] %vm4921, %v5418
      %5497 = vst.msk [vmem:[%s199 + $0x238] sm:$0xff] %vm4921, %v5425
      %s5498 = smul.u32 72, %s15
      %p5499 = scmp.lt.s32.totalorder %s5498, 143
      %s5500 = scalar_select %p5499, %s5498, 143
      %s5501 = smul.addr %s5500, 8
      %s5502 = scalar_lea.vmem %s4, %s5501
      // Predicated region
      $region37: #{terry_crews_forward.2} parent=35 // pred_check
        %p5503 = pneg %p122
      $region38: #{terry_crews_forward.2} parent=35 // pred_check_branch
        %5505 = sbr.rel (%p5503) target = $region40
      $region39: #{terry_crews_forward.2} parent=35 // pred_region
        %s5506 = smul.u32 72, %s15
      $region40: #{terry_crews_forward.2} parent=35 // pred_fallthru
        _
    $region36: #{terry_crews_forward.2} parent=5 // pred_fallthru
      _
    %p5507 = scmp.le.s32.totalorder 2, %s10
    // Predicated region
    $region41: #{terry_crews_forward.2} parent=5 // pred_check
      %p5508 = pneg %p5507
    $region42: #{terry_crews_forward.2} parent=5 // pred_check_branch
      %5510 = sbr.rel (%p5508) target = $region44
    $region43: #{terry_crews_forward.2} parent=5 // pred_region
      %s5511 = ssub.s32 %s10, 2
      // Predicated region
      $region45: #{terry_crews_forward.2} parent=43 // pred_check
        %p5512 = pneg %p128
      $region46: #{terry_crews_forward.2} parent=43 // pred_check_branch
        %5514 = sbr.rel (%p5512) target = $region48
      $region47: #{terry_crews_forward.2} parent=43 // pred_region
        %s5515 = smul.u32 72, %s16
        %p5516 = scmp.lt.s32.totalorder %s5515, 143
        %s5517 = scalar_select %p5516, %s5515, 143
        %s5518 = smul.addr %s5517, 8
        %s5519 = scalar_lea.vmem %s4, %s5518
      $region48: #{terry_crews_forward.2} parent=43 // pred_fallthru
        _
    $region44: #{terry_crews_forward.2} parent=5 // pred_fallthru
      _
  $region6: #{terry_crews_forward.2} parent=0 // loop_footer
    %s14 = sadd.s32 1, %s10
  $region7: #{terry_crews_forward.2} parent=0 // loop_footer_branch
    %9 = sbr.rel target = $region3
  $region8: #{terry_crews_forward.2} parent=0 // loop_exit
    _

// kernel: terry_crews_forward.3
$region0: #{terry_crews_forward.3}
  #allocation0 [shape = 'u32[]', space=smem, size = 0x4, offset = 0x4, fixed_abs, tag = 'smem constant byte address 0x4 - core index']
  #allocation1 [shape = 'u32[144,128]{1,0:T(1,128)}', space=vmem, size = 0x12000, scoped, tag = 'internal scratch']
  %s0 = inlined_call_operand.vmem [shape: bf16[1152,256], index: 0, kind: input, shape index: {}]
  %s1 = inlined_call_operand.vmem [shape: bf16[256,32], index: 1, kind: input, shape index: {}]
  %s2 = inlined_call_operand.vmem [shape: f32[1,32], index: 2, kind: input, shape index: {}]
  %s3 = inlined_call_operand.vmem [shape: f32[1,32], index: 3, kind: input, shape index: {}]
  %s4 = inlined_call_operand.vmem [shape: f32[32,8], index: 4, kind: input, shape index: {}]
  %s5 = inlined_call_operand.vmem [shape: f32[1,8], index: 5, kind: input, shape index: {}]
  %s6 = inlined_call_operand.vmem [shape: f32[1,8], index: 6, kind: input, shape index: {}]
  %s7 = inlined_call_operand.vmem [shape: f32[8,128], index: 7, kind: input, shape index: {}]
  %s8 = inlined_call_operand.vmem [shape: f32[1,128], index: 8, kind: input, shape index: {}]
  %s9 = inlined_call_operand.hbm [shape: f32[2,1,128], index: 9, kind: output, shape index: {}]
  %s10 = sld [smem:[#allocation0]]
  $region69: #{terry_crews_forward.3} parent=0
    _
  %s12 = ssub.s32 1, %s10
  %s13 = scalar_select 0, %s12, %s10
  $region1: #{terry_crews_forward.3} parent=0
    #allocation2 [shape = 'u8[1024]{0}', space=vmem, size = 0x400, scoped, tag = 'output window, operand 0']
    #allocation3 [shape = 's32[2]{0}', space=sflag, size = 0x8, scoped, tag = 'scoped memory for terry_crews_forward.3']
    %14 = vsyncpa [#allocation3], 0
    %s15 = scalar_lea.sflag [#allocation3], 1
    %16 = vsyncpa %s15, 0
    loop: start=0, step=1, limit=4
    $region2: #{terry_crews_forward.3} parent=1 // loop_pre_header
      _
    $region3: #{terry_crews_forward.3} parent=1 // loop_header
      %s18 = sphi 0, %s22
      %p19 = scmp.ge.s32.totalorder %s18, 4
      %s28 = sphi 0, %s30
      %s31 = sphi 0, %s28
      %s32 = sphi 0, %s31
      %s48 = sphi 0, %s32
      %s52 = sphi 0, %s52
      %s54 = sphi 0, %s52
      %s55 = sphi 0, %s54
      %s69 = sphi 0, %s55
      %s73 = sphi 0, %s73
      %s75 = sphi 0, %s73
      %s76 = sphi 0, %s75
      %s90 = sphi 0, %s76
      %s94 = sphi 0, %s94
      %s96 = sphi 0, %s94
      %s97 = sphi 0, %s96
      %s111 = sphi 0, %s97
      %s115 = sphi 0, %s115
      %s117 = sphi 0, %s115
      %s118 = sphi 0, %s117
      %s132 = sphi 0, %s118
      %s136 = sphi 0, %s136
      %s138 = sphi 0, %s136
      %s139 = sphi 0, %s138
      %s153 = sphi 0, %s139
      %s157 = sphi 0, %s157
      %s159 = sphi 0, %s157
      %s160 = sphi 0, %s159
      %s174 = sphi 0, %s160
      %s178 = sphi 0, %s178
      %s180 = sphi 0, %s178
      %s181 = sphi 0, %s180
      %s195 = sphi 0, %s181
      %s199 = sphi 0, %s199
      %s201 = sphi 0, %s199
      %s202 = sphi 0, %s201
      %s216 = sphi 0, %s202
      %s222 = sphi 0, %s224
      %s225 = sphi 0, %s222
      %s226 = sphi 0, %s225
      %s242 = sphi 0, %s226
    $region4: #{terry_crews_forward.3} parent=1 // loop_header_branch
      %21 = sbr.rel (%p19) target = $region8
    $region5: #{terry_crews_forward.3} parent=1 // loop_body
      %s23 = ssub.s32 %s18, 1
      %s24 = ssub.s32 %s18, 2
      %s25 = sadd.s32 %s18, 1
      %s26 = ssub.s32 %s18, %s25
      %p27 = scmp.eq.s32.totalorder %s26, 0
      %s29 = sadd.s32 %s28, 1
      %s30 = scalar_select %p27, %s28, %s29
      %p33 = pneg %p27
      %p34 = scmp.eq.s32.totalorder %s18, 1
      %p35 = por %p33, %p34
      %p36 = scmp.ne.s32.totalorder %s28, %s31
      %p37 = scmp.eq.s32.totalorder %s18, 0
      %p38 = por %p36, %p37
      %p39 = scmp.ne.s32.totalorder %s28, %s31
      %p40 = scmp.eq.s32.totalorder %s23, 1
      %p41 = por %p39, %p40
      %p42 = scmp.ne.s32.totalorder %s31, %s32
      %p43 = scmp.eq.s32.totalorder %s23, 0
      %p44 = por %p42, %p43
      %p45 = scmp.ne.s32.totalorder %s31, %s32
      %p46 = scmp.eq.s32.totalorder %s24, 1
      %p47 = por %p45, %p46
      %p49 = scmp.ne.s32.totalorder %s32, %s48
      %p50 = scmp.eq.s32.totalorder %s24, 0
      %p51 = por %p49, %p50
      %s53 = sadd.s32 %s52, 1
      %p56 = scmp.eq.s32.totalorder %s18, 1
      %p57 = scmp.ne.s32.totalorder %s52, %s54
      %p58 = scmp.eq.s32.totalorder %s18, 0
      %p59 = por %p57, %p58
      %p60 = scmp.ne.s32.totalorder %s52, %s54
      %p61 = scmp.eq.s32.totalorder %s23, 1
      %p62 = por %p60, %p61
      %p63 = scmp.ne.s32.totalorder %s54, %s55
      %p64 = scmp.eq.s32.totalorder %s23, 0
      %p65 = por %p63, %p64
      %p66 = scmp.ne.s32.totalorder %s54, %s55
      %p67 = scmp.eq.s32.totalorder %s24, 1
      %p68 = por %p66, %p67
      %p70 = scmp.ne.s32.totalorder %s55, %s69
      %p71 = scmp.eq.s32.totalorder %s24, 0
      %p72 = por %p70, %p71
      %s74 = sadd.s32 %s73, 1
      %p77 = scmp.eq.s32.totalorder %s18, 1
      %p78 = scmp.ne.s32.totalorder %s73, %s75
      %p79 = scmp.eq.s32.totalorder %s18, 0
      %p80 = por %p78, %p79
      %p81 = scmp.ne.s32.totalorder %s73, %s75
      %p82 = scmp.eq.s32.totalorder %s23, 1
      %p83 = por %p81, %p82
      %p84 = scmp.ne.s32.totalorder %s75, %s76
      %p85 = scmp.eq.s32.totalorder %s23, 0
      %p86 = por %p84, %p85
      %p87 = scmp.ne.s32.totalorder %s75, %s76
      %p88 = scmp.eq.s32.totalorder %s24, 1
      %p89 = por %p87, %p88
      %p91 = scmp.ne.s32.totalorder %s76, %s90
      %p92 = scmp.eq.s32.totalorder %s24, 0
      %p93 = por %p91, %p92
      %s95 = sadd.s32 %s94, 1
      %p98 = scmp.eq.s32.totalorder %s18, 1
      %p99 = scmp.ne.s32.totalorder %s94, %s96
      %p100 = scmp.eq.s32.totalorder %s18, 0
      %p101 = por %p99, %p100
      %p102 = scmp.ne.s32.totalorder %s94, %s96
      %p103 = scmp.eq.s32.totalorder %s23, 1
      %p104 = por %p102, %p103
      %p105 = scmp.ne.s32.totalorder %s96, %s97
      %p106 = scmp.eq.s32.totalorder %s23, 0
      %p107 = por %p105, %p106
      %p108 = scmp.ne.s32.totalorder %s96, %s97
      %p109 = scmp.eq.s32.totalorder %s24, 1
      %p110 = por %p108, %p109
      %p112 = scmp.ne.s32.totalorder %s97, %s111
      %p113 = scmp.eq.s32.totalorder %s24, 0
      %p114 = por %p112, %p113
      %s116 = sadd.s32 %s115, 1
      %p119 = scmp.eq.s32.totalorder %s18, 1
      %p120 = scmp.ne.s32.totalorder %s115, %s117
      %p121 = scmp.eq.s32.totalorder %s18, 0
      %p122 = por %p120, %p121
      %p123 = scmp.ne.s32.totalorder %s115, %s117
      %p124 = scmp.eq.s32.totalorder %s23, 1
      %p125 = por %p123, %p124
      %p126 = scmp.ne.s32.totalorder %s117, %s118
      %p127 = scmp.eq.s32.totalorder %s23, 0
      %p128 = por %p126, %p127
      %p129 = scmp.ne.s32.totalorder %s117, %s118
      %p130 = scmp.eq.s32.totalorder %s24, 1
      %p131 = por %p129, %p130
      %p133 = scmp.ne.s32.totalorder %s118, %s132
      %p134 = scmp.eq.s32.totalorder %s24, 0
      %p135 = por %p133, %p134
      %s137 = sadd.s32 %s136, 1
      %p140 = scmp.eq.s32.totalorder %s18, 1
      %p141 = scmp.ne.s32.totalorder %s136, %s138
      %p142 = scmp.eq.s32.totalorder %s18, 0
      %p143 = por %p141, %p142
      %p144 = scmp.ne.s32.totalorder %s136, %s138
      %p145 = scmp.eq.s32.totalorder %s23, 1
      %p146 = por %p144, %p145
      %p147 = scmp.ne.s32.totalorder %s138, %s139
      %p148 = scmp.eq.s32.totalorder %s23, 0
      %p149 = por %p147, %p148
      %p150 = scmp.ne.s32.totalorder %s138, %s139
      %p151 = scmp.eq.s32.totalorder %s24, 1
      %p152 = por %p150, %p151
      %p154 = scmp.ne.s32.totalorder %s139, %s153
      %p155 = scmp.eq.s32.totalorder %s24, 0
      %p156 = por %p154, %p155
      %s158 = sadd.s32 %s157, 1
      %p161 = scmp.eq.s32.totalorder %s18, 1
      %p162 = scmp.ne.s32.totalorder %s157, %s159
      %p163 = scmp.eq.s32.totalorder %s18, 0
      %p164 = por %p162, %p163
      %p165 = scmp.ne.s32.totalorder %s157, %s159
      %p166 = scmp.eq.s32.totalorder %s23, 1
      %p167 = por %p165, %p166
      %p168 = scmp.ne.s32.totalorder %s159, %s160
      %p169 = scmp.eq.s32.totalorder %s23, 0
      %p170 = por %p168, %p169
      %p171 = scmp.ne.s32.totalorder %s159, %s160
      %p172 = scmp.eq.s32.totalorder %s24, 1
      %p173 = por %p171, %p172
      %p175 = scmp.ne.s32.totalorder %s160, %s174
      %p176 = scmp.eq.s32.totalorder %s24, 0
      %p177 = por %p175, %p176
      %s179 = sadd.s32 %s178, 1
      %p182 = scmp.eq.s32.totalorder %s18, 1
      %p183 = scmp.ne.s32.totalorder %s178, %s180
      %p184 = scmp.eq.s32.totalorder %s18, 0
      %p185 = por %p183, %p184
      %p186 = scmp.ne.s32.totalorder %s178, %s180
      %p187 = scmp.eq.s32.totalorder %s23, 1
      %p188 = por %p186, %p187
      %p189 = scmp.ne.s32.totalorder %s180, %s181
      %p190 = scmp.eq.s32.totalorder %s23, 0
      %p191 = por %p189, %p190
      %p192 = scmp.ne.s32.totalorder %s180, %s181
      %p193 = scmp.eq.s32.totalorder %s24, 1
      %p194 = por %p192, %p193
      %p196 = scmp.ne.s32.totalorder %s181, %s195
      %p197 = scmp.eq.s32.totalorder %s24, 0
      %p198 = por %p196, %p197
      %s200 = sadd.s32 %s199, 1
      %p203 = scmp.eq.s32.totalorder %s18, 1
      %p204 = scmp.ne.s32.totalorder %s199, %s201
      %p205 = scmp.eq.s32.totalorder %s18, 0
      %p206 = por %p204, %p205
      %p207 = scmp.ne.s32.totalorder %s199, %s201
      %p208 = scmp.eq.s32.totalorder %s23, 1
      %p209 = por %p207, %p208
      %p210 = scmp.ne.s32.totalorder %s201, %s202
      %p211 = scmp.eq.s32.totalorder %s23, 0
      %p212 = por %p210, %p211
      %p213 = scmp.ne.s32.totalorder %s201, %s202
      %p214 = scmp.eq.s32.totalorder %s24, 1
      %p215 = por %p213, %p214
      %p217 = scmp.ne.s32.totalorder %s202, %s216
      %p218 = scmp.eq.s32.totalorder %s24, 0
      %p219 = por %p217, %p218
      %s220 = ssub.s32 %s18, %s25
      %p221 = scmp.eq.s32.totalorder %s220, 0
      %s223 = sadd.s32 %s222, 1
      %s224 = scalar_select %p221, %s222, %s223
      %p227 = pneg %p221
      %p228 = scmp.eq.s32.totalorder %s18, 1
      %p229 = por %p227, %p228
      %p230 = scmp.ne.s32.totalorder %s222, %s225
      %p231 = scmp.eq.s32.totalorder %s18, 0
      %p232 = por %p230, %p231
      %p233 = scmp.ne.s32.totalorder %s222, %s225
      %p234 = scmp.eq.s32.totalorder %s23, 1
      %p235 = por %p233, %p234
      %p236 = scmp.ne.s32.totalorder %s225, %s226
      %p237 = scmp.eq.s32.totalorder %s23, 0
      %p238 = por %p236, %p237
      %p239 = scmp.ne.s32.totalorder %s225, %s226
      %p240 = scmp.eq.s32.totalorder %s24, 1
      %p241 = por %p239, %p240
      %p243 = scmp.ne.s32.totalorder %s226, %s242
      %p244 = scmp.eq.s32.totalorder %s24, 0
      %p245 = por %p243, %p244
      %p246 = scmp.le.s32.totalorder 1, %s18
      %p247 = scmp.lt.s32.totalorder %s18, 3
      %p248 = pnand %p246, %p247
      %p249 = pneg %p248
      // Predicated region
      $region9: #{terry_crews_forward.3} parent=5 // pred_check
        _
      $region10: #{terry_crews_forward.3} parent=5 // pred_check_branch
        %251 = sbr.rel (%p248) target = $region12
      $region11: #{terry_crews_forward.3} parent=5 // pred_region
        %s252 = ssub.s32 %s18, 1
        // Predicated region
        $region13: #{terry_crews_forward.3} parent=11 // pred_check
          %p253 = pneg %p65
        $region14: #{terry_crews_forward.3} parent=11 // pred_check_branch
          %255 = sbr.rel (%p253) target = $region16
        $region15: #{terry_crews_forward.3} parent=11 // pred_region
          _
        $region16: #{terry_crews_forward.3} parent=11 // pred_fallthru
          _
        // Predicated region
        $region17: #{terry_crews_forward.3} parent=11 // pred_check
          %p256 = pneg %p86
        $region18: #{terry_crews_forward.3} parent=11 // pred_check_branch
          %258 = sbr.rel (%p256) target = $region20
        $region19: #{terry_crews_forward.3} parent=11 // pred_region
          _
        $region20: #{terry_crews_forward.3} parent=11 // pred_fallthru
          _
        // Predicated region
        $region21: #{terry_crews_forward.3} parent=11 // pred_check
          %p259 = pneg %p107
        $region22: #{terry_crews_forward.3} parent=11 // pred_check_branch
          %261 = sbr.rel (%p259) target = $region24
        $region23: #{terry_crews_forward.3} parent=11 // pred_region
          _
        $region24: #{terry_crews_forward.3} parent=11 // pred_fallthru
          _
        // Predicated region
        $region25: #{terry_crews_forward.3} parent=11 // pred_check
          %p262 = pneg %p128
        $region26: #{terry_crews_forward.3} parent=11 // pred_check_branch
          %264 = sbr.rel (%p262) target = $region28
        $region27: #{terry_crews_forward.3} parent=11 // pred_region
          _
        $region28: #{terry_crews_forward.3} parent=11 // pred_fallthru
          _
        // Predicated region
        $region29: #{terry_crews_forward.3} parent=11 // pred_check
          %p265 = pneg %p149
        $region30: #{terry_crews_forward.3} parent=11 // pred_check_branch
          %267 = sbr.rel (%p265) target = $region32
        $region31: #{terry_crews_forward.3} parent=11 // pred_region
          _
        $region32: #{terry_crews_forward.3} parent=11 // pred_fallthru
          _
        // Predicated region
        $region33: #{terry_crews_forward.3} parent=11 // pred_check
          %p268 = pneg %p170
        $region34: #{terry_crews_forward.3} parent=11 // pred_check_branch
          %270 = sbr.rel (%p268) target = $region36
        $region35: #{terry_crews_forward.3} parent=11 // pred_region
          _
        $region36: #{terry_crews_forward.3} parent=11 // pred_fallthru
          _
        // Predicated region
        $region37: #{terry_crews_forward.3} parent=11 // pred_check
          %p271 = pneg %p191
        $region38: #{terry_crews_forward.3} parent=11 // pred_check_branch
          %273 = sbr.rel (%p271) target = $region40
        $region39: #{terry_crews_forward.3} parent=11 // pred_region
          _
        $region40: #{terry_crews_forward.3} parent=11 // pred_fallthru
          _
        // Predicated region
        $region41: #{terry_crews_forward.3} parent=11 // pred_check
          %p274 = pneg %p212
        $region42: #{terry_crews_forward.3} parent=11 // pred_check_branch
          %276 = sbr.rel (%p274) target = $region44
        $region43: #{terry_crews_forward.3} parent=11 // pred_region
          _
        $region44: #{terry_crews_forward.3} parent=11 // pred_fallthru
          _
      $region12: #{terry_crews_forward.3} parent=5 // pred_fallthru
        _
      %p277 = scmp.lt.s32.totalorder %s18, 2
      // Predicated region
      $region45: #{terry_crews_forward.3} parent=5 // pred_check
        %p278 = pneg %p277
      $region46: #{terry_crews_forward.3} parent=5 // pred_check_branch
        %280 = sbr.rel (%p278) target = $region48
      $region47: #{terry_crews_forward.3} parent=5 // pred_region
        // Predicated region
        $region49: #{terry_crews_forward.3} parent=47 // pred_check
          %p281 = pneg %p38
        $region50: #{terry_crews_forward.3} parent=47 // pred_check_branch
          %283 = sbr.rel (%p281) target = $region52
        $region51: #{terry_crews_forward.3} parent=47 // pred_region
          %s284 = smul.u32 72, %s18
          %p285 = scmp.lt.s32.totalorder %s284, 143
          %s286 = scalar_select %p285, %s284, 143
          %s287 = smul.addr %s286, 2
          %s288 = smul.addr %s287, 4
          %s289 = scalar_lea.vmem %s0, %s288
          %s290 = smul.u32 72, %s18
        $region52: #{terry_crews_forward.3} parent=47 // pred_fallthru
          _
      $region48: #{terry_crews_forward.3} parent=5 // pred_fallthru
        _
      %p291 = scmp.le.s32.totalorder 1, %s18
      %p292 = scmp.lt.s32.totalorder %s18, 3
      %p293 = pnand %p291, %p292
      %p294 = pneg %p293
      // Predicated region
      $region53: #{terry_crews_forward.3} parent=5 // pred_check
        _
      $region54: #{terry_crews_forward.3} parent=5 // pred_check_branch
        %296 = sbr.rel (%p293) target = $region56
      $region55: #{terry_crews_forward.3} parent=5 // pred_region
        %s297 = ssub.s32 %s18, 1
        %s298 = smul.u32 72, %s23
        %p299 = scmp.lt.s32.totalorder %s298, 143
        %s300 = scalar_select %p299, %s298, 143
        %s301 = smul.addr %s300, 2
        %s302 = smul.addr %s301, 4
        %s303 = scalar_lea.vmem %s0, %s302
        %p304 = pneg %p44
        %p305 = pneg %p41
        %p306 = pneg %p65
        %p307 = pneg %p62
        %p308 = pneg %p86
        %p309 = pneg %p83
        %p310 = pneg %p107
        %p311 = pneg %p104
        %p312 = pneg %p128
        %p313 = pneg %p125
        %p314 = pneg %p149
        %p315 = pneg %p146
        %p316 = pneg %p170
        %p317 = pneg %p167
        %p318 = pneg %p191
        %p319 = pneg %p188
        %p320 = pneg %p212
        %p321 = pneg %p209
        %p322 = pneg %p238
        %p323 = pneg %p235
        %s324 = sand.u32 %s225, 1
        %s325 = scalar_lea.sflag [#allocation3], %s324
        %s326 = sand.u32 %s225, 1
        %s327 = scalar_lea.vmem [#allocation2], %s326
        %s328 = smul.u32 72, %s23
        %p329 = scmp.lt.s32.totalorder %s328, 143
        %s330 = scalar_select %p329, %s328, 143
        %s331 = smul.addr %s330, 2
        %s332 = smul.addr %s331, 4
        %s333 = scalar_lea.vmem %s0, %s332
        %s334 = smul.u32 72, %s23
        %v336 = vld [vmem:[%s333] sm:$0xff]
        %v337 = vld [vmem:[%s333 + $0x8] sm:$0xff]
        %v338 = vld [vmem:[%s333 + $0x10] sm:$0xff]
        %v339 = vld [vmem:[%s333 + $0x18] sm:$0xff]
        %v340 = vld [vmem:[%s333 + $0x20] sm:$0xff]
        %v341 = vld [vmem:[%s333 + $0x28] sm:$0xff]
        %v342 = vld [vmem:[%s333 + $0x30] sm:$0xff]
        %v343 = vld [vmem:[%s333 + $0x38] sm:$0xff]
        %v344 = vld [vmem:[%s333 + $0x40] sm:$0xff]
        %v345 = vld [vmem:[%s333 + $0x48] sm:$0xff]
        %v346 = vld [vmem:[%s333 + $0x50] sm:$0xff]
        %v347 = vld [vmem:[%s333 + $0x58] sm:$0xff]
        %v348 = vld [vmem:[%s333 + $0x60] sm:$0xff]
        %v349 = vld [vmem:[%s333 + $0x68] sm:$0xff]
        %v350 = vld [vmem:[%s333 + $0x70] sm:$0xff]
        %v351 = vld [vmem:[%s333 + $0x78] sm:$0xff]
        %v352 = vld [vmem:[%s333 + $0x80] sm:$0xff]
        %v353 = vld [vmem:[%s333 + $0x88] sm:$0xff]
        %v354 = vld [vmem:[%s333 + $0x90] sm:$0xff]
        %v355 = vld [vmem:[%s333 + $0x98] sm:$0xff]
        %v356 = vld [vmem:[%s333 + $0xa0] sm:$0xff]
        %v357 = vld [vmem:[%s333 + $0xa8] sm:$0xff]
        %v358 = vld [vmem:[%s333 + $0xb0] sm:$0xff]
        %v359 = vld [vmem:[%s333 + $0xb8] sm:$0xff]
        %v360 = vld [vmem:[%s333 + $0xc0] sm:$0xff]
        %v361 = vld [vmem:[%s333 + $0xc8] sm:$0xff]
        %v362 = vld [vmem:[%s333 + $0xd0] sm:$0xff]
        %v363 = vld [vmem:[%s333 + $0xd8] sm:$0xff]
        %v364 = vld [vmem:[%s333 + $0xe0] sm:$0xff]
        %v365 = vld [vmem:[%s333 + $0xe8] sm:$0xff]
        %v366 = vld [vmem:[%s333 + $0xf0] sm:$0xff]
        %v367 = vld [vmem:[%s333 + $0xf8] sm:$0xff]
        %v368 = vld [vmem:[%s333 + $0x100] sm:$0xff]
        %v369 = vld [vmem:[%s333 + $0x108] sm:$0xff]
        %v370 = vld [vmem:[%s333 + $0x110] sm:$0xff]
        %v371 = vld [vmem:[%s333 + $0x118] sm:$0xff]
        %v372 = vld [vmem:[%s333 + $0x120] sm:$0xff]
        %v373 = vld [vmem:[%s333 + $0x128] sm:$0xff]
        %v374 = vld [vmem:[%s333 + $0x130] sm:$0xff]
        %v375 = vld [vmem:[%s333 + $0x138] sm:$0xff]
        %v376 = vld [vmem:[%s333 + $0x140] sm:$0xff]
        %v377 = vld [vmem:[%s333 + $0x148] sm:$0xff]
        %v378 = vld [vmem:[%s333 + $0x150] sm:$0xff]
        %v379 = vld [vmem:[%s333 + $0x158] sm:$0xff]
        %v380 = vld [vmem:[%s333 + $0x160] sm:$0xff]
        %v381 = vld [vmem:[%s333 + $0x168] sm:$0xff]
        %v382 = vld [vmem:[%s333 + $0x170] sm:$0xff]
        %v383 = vld [vmem:[%s333 + $0x178] sm:$0xff]
        %v384 = vld [vmem:[%s333 + $0x180] sm:$0xff]
        %v385 = vld [vmem:[%s333 + $0x188] sm:$0xff]
        %v386 = vld [vmem:[%s333 + $0x190] sm:$0xff]
        %v387 = vld [vmem:[%s333 + $0x198] sm:$0xff]
        %v388 = vld [vmem:[%s333 + $0x1a0] sm:$0xff]
        %v389 = vld [vmem:[%s333 + $0x1a8] sm:$0xff]
        %v390 = vld [vmem:[%s333 + $0x1b0] sm:$0xff]
        %v391 = vld [vmem:[%s333 + $0x1b8] sm:$0xff]
        %v392 = vld [vmem:[%s333 + $0x1c0] sm:$0xff]
        %v393 = vld [vmem:[%s333 + $0x1c8] sm:$0xff]
        %v394 = vld [vmem:[%s333 + $0x1d0] sm:$0xff]
        %v395 = vld [vmem:[%s333 + $0x1d8] sm:$0xff]
        %v396 = vld [vmem:[%s333 + $0x1e0] sm:$0xff]
        %v397 = vld [vmem:[%s333 + $0x1e8] sm:$0xff]
        %v398 = vld [vmem:[%s333 + $0x1f0] sm:$0xff]
        %v399 = vld [vmem:[%s333 + $0x1f8] sm:$0xff]
        %v400 = vld [vmem:[%s333 + $0x200] sm:$0xff]
        %v401 = vld [vmem:[%s333 + $0x208] sm:$0xff]
        %v402 = vld [vmem:[%s333 + $0x210] sm:$0xff]
        %v403 = vld [vmem:[%s333 + $0x218] sm:$0xff]
        %v404 = vld [vmem:[%s333 + $0x220] sm:$0xff]
        %v405 = vld [vmem:[%s333 + $0x228] sm:$0xff]
        %v406 = vld [vmem:[%s333 + $0x230] sm:$0xff]
        %v407 = vld [vmem:[%s333 + $0x238] sm:$0xff]
        %v408 = vld [vmem:[%s1] sm:$0xf]
        %v409 = vld [vmem:[%s1 + $0x4] sm:$0xf]
        %v410 = vld [vmem:[%s1 + $0x8] sm:$0xf]
        %v411 = vld [vmem:[%s1 + $0xc] sm:$0xf]
        %v412 = vld [vmem:[%s1 + $0x10] sm:$0xf]
        %v413 = vld [vmem:[%s1 + $0x14] sm:$0xf]
        %v414 = vld [vmem:[%s1 + $0x18] sm:$0xf]
        %v415 = vld [vmem:[%s1 + $0x1c] sm:$0xf]
        %v416 = vld [vmem:[%s1 + $0x20] sm:$0xf]
        %v417 = vld [vmem:[%s1 + $0x24] sm:$0xf]
        %v418 = vld [vmem:[%s1 + $0x28] sm:$0xf]
        %v419 = vld [vmem:[%s1 + $0x2c] sm:$0xf]
        %v420 = vld [vmem:[%s1 + $0x30] sm:$0xf]
        %v421 = vld [vmem:[%s1 + $0x34] sm:$0xf]
        %v422 = vld [vmem:[%s1 + $0x38] sm:$0xf]
        %v423 = vld [vmem:[%s1 + $0x3c] sm:$0xf]
        %v424 = vld [vmem:[%s1 + $0x40] sm:$0xf]
        %v425 = vld [vmem:[%s1 + $0x44] sm:$0xf]
        %v426 = vld [vmem:[%s1 + $0x48] sm:$0xf]
        %v427 = vld [vmem:[%s1 + $0x4c] sm:$0xf]
        %v428 = vld [vmem:[%s1 + $0x50] sm:$0xf]
        %v429 = vld [vmem:[%s1 + $0x54] sm:$0xf]
        %v430 = vld [vmem:[%s1 + $0x58] sm:$0xf]
        %v431 = vld [vmem:[%s1 + $0x5c] sm:$0xf]
        %v432 = vld [vmem:[%s1 + $0x60] sm:$0xf]
        %v433 = vld [vmem:[%s1 + $0x64] sm:$0xf]
        %v434 = vld [vmem:[%s1 + $0x68] sm:$0xf]
        %v435 = vld [vmem:[%s1 + $0x6c] sm:$0xf]
        %v436 = vld [vmem:[%s1 + $0x70] sm:$0xf]
        %v437 = vld [vmem:[%s1 + $0x74] sm:$0xf]
        %v438 = vld [vmem:[%s1 + $0x78] sm:$0xf]
        %v439 = vld [vmem:[%s1 + $0x7c] sm:$0xf]
        %v512 = vunpack.c.l.b16 %v336
        %v513 = vunpack.c.h.b16 %v336
        %v514 = vunpack.c.l.b16 %v337
        %v515 = vunpack.c.h.b16 %v337
        %v516 = vunpack.c.l.b16 %v338
        %v517 = vunpack.c.h.b16 %v338
        %v518 = vunpack.c.l.b16 %v339
        %v519 = vunpack.c.h.b16 %v339
        %v520 = vunpack.c.l.b16 %v340
        %v521 = vunpack.c.h.b16 %v340
        %v522 = vunpack.c.l.b16 %v341
        %v523 = vunpack.c.h.b16 %v341
        %v524 = vunpack.c.l.b16 %v342
        %v525 = vunpack.c.h.b16 %v342
        %v526 = vunpack.c.l.b16 %v343
        %v527 = vunpack.c.h.b16 %v343
        %v528 = vunpack.c.l.b16 %v344
        %v529 = vunpack.c.h.b16 %v344
        %v530 = vunpack.c.l.b16 %v345
        %v531 = vunpack.c.h.b16 %v345
        %v532 = vunpack.c.l.b16 %v346
        %v533 = vunpack.c.h.b16 %v346
        %v534 = vunpack.c.l.b16 %v347
        %v535 = vunpack.c.h.b16 %v347
        %v536 = vunpack.c.l.b16 %v348
        %v537 = vunpack.c.h.b16 %v348
        %v538 = vunpack.c.l.b16 %v349
        %v539 = vunpack.c.h.b16 %v349
        %v540 = vunpack.c.l.b16 %v350
        %v541 = vunpack.c.h.b16 %v350
        %v542 = vunpack.c.l.b16 %v351
        %v543 = vunpack.c.h.b16 %v351
        %v544 = vunpack.c.l.b16 %v352
        %v545 = vunpack.c.h.b16 %v352
        %v546 = vunpack.c.l.b16 %v353
        %v547 = vunpack.c.h.b16 %v353
        %v548 = vunpack.c.l.b16 %v354
        %v549 = vunpack.c.h.b16 %v354
        %v550 = vunpack.c.l.b16 %v355
        %v551 = vunpack.c.h.b16 %v355
        %v552 = vunpack.c.l.b16 %v356
        %v553 = vunpack.c.h.b16 %v356
        %v554 = vunpack.c.l.b16 %v357
        %v555 = vunpack.c.h.b16 %v357
        %v556 = vunpack.c.l.b16 %v358
        %v557 = vunpack.c.h.b16 %v358
        %v558 = vunpack.c.l.b16 %v359
        %v559 = vunpack.c.h.b16 %v359
        %v560 = vunpack.c.l.b16 %v360
        %v561 = vunpack.c.h.b16 %v360
        %v562 = vunpack.c.l.b16 %v361
        %v563 = vunpack.c.h.b16 %v361
        %v564 = vunpack.c.l.b16 %v362
        %v565 = vunpack.c.h.b16 %v362
        %v566 = vunpack.c.l.b16 %v363
        %v567 = vunpack.c.h.b16 %v363
        %v568 = vunpack.c.l.b16 %v364
        %v569 = vunpack.c.h.b16 %v364
        %v570 = vunpack.c.l.b16 %v365
        %v571 = vunpack.c.h.b16 %v365
        %v572 = vunpack.c.l.b16 %v366
        %v573 = vunpack.c.h.b16 %v366
        %v574 = vunpack.c.l.b16 %v367
        %v575 = vunpack.c.h.b16 %v367
        %v576 = vunpack.c.l.b16 %v368
        %v577 = vunpack.c.h.b16 %v368
        %v578 = vunpack.c.l.b16 %v369
        %v579 = vunpack.c.h.b16 %v369
        %v580 = vunpack.c.l.b16 %v370
        %v581 = vunpack.c.h.b16 %v370
        %v582 = vunpack.c.l.b16 %v371
        %v583 = vunpack.c.h.b16 %v371
        %v584 = vunpack.c.l.b16 %v372
        %v585 = vunpack.c.h.b16 %v372
        %v586 = vunpack.c.l.b16 %v373
        %v587 = vunpack.c.h.b16 %v373
        %v588 = vunpack.c.l.b16 %v374
        %v589 = vunpack.c.h.b16 %v374
        %v590 = vunpack.c.l.b16 %v375
        %v591 = vunpack.c.h.b16 %v375
        %v592 = vunpack.c.l.b16 %v376
        %v593 = vunpack.c.h.b16 %v376
        %v594 = vunpack.c.l.b16 %v377
        %v595 = vunpack.c.h.b16 %v377
        %v596 = vunpack.c.l.b16 %v378
        %v597 = vunpack.c.h.b16 %v378
        %v598 = vunpack.c.l.b16 %v379
        %v599 = vunpack.c.h.b16 %v379
        %v600 = vunpack.c.l.b16 %v380
        %v601 = vunpack.c.h.b16 %v380
        %v602 = vunpack.c.l.b16 %v381
        %v603 = vunpack.c.h.b16 %v381
        %v604 = vunpack.c.l.b16 %v382
        %v605 = vunpack.c.h.b16 %v382
        %v606 = vunpack.c.l.b16 %v383
        %v607 = vunpack.c.h.b16 %v383
        %v608 = vunpack.c.l.b16 %v384
        %v609 = vunpack.c.h.b16 %v384
        %v610 = vunpack.c.l.b16 %v385
        %v611 = vunpack.c.h.b16 %v385
        %v612 = vunpack.c.l.b16 %v386
        %v613 = vunpack.c.h.b16 %v386
        %v614 = vunpack.c.l.b16 %v387
        %v615 = vunpack.c.h.b16 %v387
        %v616 = vunpack.c.l.b16 %v388
        %v617 = vunpack.c.h.b16 %v388
        %v618 = vunpack.c.l.b16 %v389
        %v619 = vunpack.c.h.b16 %v389
        %v620 = vunpack.c.l.b16 %v390
        %v621 = vunpack.c.h.b16 %v390
        %v622 = vunpack.c.l.b16 %v391
        %v623 = vunpack.c.h.b16 %v391
        %v624 = vunpack.c.l.b16 %v392
        %v625 = vunpack.c.h.b16 %v392
        %v626 = vunpack.c.l.b16 %v393
        %v627 = vunpack.c.h.b16 %v393
        %v628 = vunpack.c.l.b16 %v394
        %v629 = vunpack.c.h.b16 %v394
        %v630 = vunpack.c.l.b16 %v395
        %v631 = vunpack.c.h.b16 %v395
        %v632 = vunpack.c.l.b16 %v396
        %v633 = vunpack.c.h.b16 %v396
        %v634 = vunpack.c.l.b16 %v397
        %v635 = vunpack.c.h.b16 %v397
        %v636 = vunpack.c.l.b16 %v398
        %v637 = vunpack.c.h.b16 %v398
        %v638 = vunpack.c.l.b16 %v399
        %v639 = vunpack.c.h.b16 %v399
        %v640 = vunpack.c.l.b16 %v400
        %v641 = vunpack.c.h.b16 %v400
        %v642 = vunpack.c.l.b16 %v401
        %v643 = vunpack.c.h.b16 %v401
        %v644 = vunpack.c.l.b16 %v402
        %v645 = vunpack.c.h.b16 %v402
        %v646 = vunpack.c.l.b16 %v403
        %v647 = vunpack.c.h.b16 %v403
        %v648 = vunpack.c.l.b16 %v404
        %v649 = vunpack.c.h.b16 %v404
        %v650 = vunpack.c.l.b16 %v405
        %v651 = vunpack.c.h.b16 %v405
        %v652 = vunpack.c.l.b16 %v406
        %v653 = vunpack.c.h.b16 %v406
        %v654 = vunpack.c.l.b16 %v407
        %v655 = vunpack.c.h.b16 %v407
        %v656 = vpack.c.b16 %v514, %v512
        %v657 = vpack.c.b16 %v515, %v513
        %v658 = vpack.c.b16 %v518, %v516
        %v659 = vpack.c.b16 %v519, %v517
        %v660 = vpack.c.b16 %v522, %v520
        %v661 = vpack.c.b16 %v523, %v521
        %v662 = vpack.c.b16 %v526, %v524
        %v663 = vpack.c.b16 %v527, %v525
        %v664 = vpack.c.b16 %v530, %v528
        %v665 = vpack.c.b16 %v531, %v529
        %v666 = vpack.c.b16 %v534, %v532
        %v667 = vpack.c.b16 %v535, %v533
        %v668 = vpack.c.b16 %v538, %v536
        %v669 = vpack.c.b16 %v539, %v537
        %v670 = vpack.c.b16 %v542, %v540
        %v671 = vpack.c.b16 %v543, %v541
        %v672 = vpack.c.b16 %v546, %v544
        %v673 = vpack.c.b16 %v547, %v545
        %v674 = vpack.c.b16 %v550, %v548
        %v675 = vpack.c.b16 %v551, %v549
        %v676 = vpack.c.b16 %v554, %v552
        %v677 = vpack.c.b16 %v555, %v553
        %v678 = vpack.c.b16 %v558, %v556
        %v679 = vpack.c.b16 %v559, %v557
        %v680 = vpack.c.b16 %v562, %v560
        %v681 = vpack.c.b16 %v563, %v561
        %v682 = vpack.c.b16 %v566, %v564
        %v683 = vpack.c.b16 %v567, %v565
        %v684 = vpack.c.b16 %v570, %v568
        %v685 = vpack.c.b16 %v571, %v569
        %v686 = vpack.c.b16 %v574, %v572
        %v687 = vpack.c.b16 %v575, %v573
        %v688 = vpack.c.b16 %v578, %v576
        %v689 = vpack.c.b16 %v579, %v577
        %v690 = vpack.c.b16 %v582, %v580
        %v691 = vpack.c.b16 %v583, %v581
        %v692 = vpack.c.b16 %v586, %v584
        %v693 = vpack.c.b16 %v587, %v585
        %v694 = vpack.c.b16 %v590, %v588
        %v695 = vpack.c.b16 %v591, %v589
        %v696 = vpack.c.b16 %v594, %v592
        %v697 = vpack.c.b16 %v595, %v593
        %v698 = vpack.c.b16 %v598, %v596
        %v699 = vpack.c.b16 %v599, %v597
        %v700 = vpack.c.b16 %v602, %v600
        %v701 = vpack.c.b16 %v603, %v601
        %v702 = vpack.c.b16 %v606, %v604
        %v703 = vpack.c.b16 %v607, %v605
        %v704 = vpack.c.b16 %v610, %v608
        %v705 = vpack.c.b16 %v611, %v609
        %v706 = vpack.c.b16 %v614, %v612
        %v707 = vpack.c.b16 %v615, %v613
        %v708 = vpack.c.b16 %v618, %v616
        %v709 = vpack.c.b16 %v619, %v617
        %v710 = vpack.c.b16 %v622, %v620
        %v711 = vpack.c.b16 %v623, %v621
        %v712 = vpack.c.b16 %v626, %v624
        %v713 = vpack.c.b16 %v627, %v625
        %v714 = vpack.c.b16 %v630, %v628
        %v715 = vpack.c.b16 %v631, %v629
        %v716 = vpack.c.b16 %v634, %v632
        %v717 = vpack.c.b16 %v635, %v633
        %v718 = vpack.c.b16 %v638, %v636
        %v719 = vpack.c.b16 %v639, %v637
        %v720 = vpack.c.b16 %v642, %v640
        %v721 = vpack.c.b16 %v643, %v641
        %v722 = vpack.c.b16 %v646, %v644
        %v723 = vpack.c.b16 %v647, %v645
        %v724 = vpack.c.b16 %v650, %v648
        %v725 = vpack.c.b16 %v651, %v649
        %v726 = vpack.c.b16 %v654, %v652
        %v727 = vpack.c.b16 %v655, %v653
        %v832 = vunpack.c.l.b16 %v408
        %v833 = vunpack.c.l.b16 %v409
        %v834 = vunpack.c.l.b16 %v410
        %v835 = vunpack.c.l.b16 %v411
        %v836 = vunpack.c.l.b16 %v412
        %v837 = vunpack.c.l.b16 %v413
        %v838 = vunpack.c.l.b16 %v414
        %v839 = vunpack.c.l.b16 %v415
        %v840 = vunpack.c.l.b16 %v416
        %v841 = vunpack.c.l.b16 %v417
        %v842 = vunpack.c.l.b16 %v418
        %v843 = vunpack.c.l.b16 %v419
        %v844 = vunpack.c.l.b16 %v420
        %v845 = vunpack.c.l.b16 %v421
        %v846 = vunpack.c.l.b16 %v422
        %v847 = vunpack.c.l.b16 %v423
        %v848 = vunpack.c.l.b16 %v424
        %v849 = vunpack.c.l.b16 %v425
        %v850 = vunpack.c.l.b16 %v426
        %v851 = vunpack.c.l.b16 %v427
        %v852 = vunpack.c.l.b16 %v428
        %v853 = vunpack.c.l.b16 %v429
        %v854 = vunpack.c.l.b16 %v430
        %v855 = vunpack.c.l.b16 %v431
        %v856 = vunpack.c.l.b16 %v432
        %v857 = vunpack.c.l.b16 %v433
        %v858 = vunpack.c.l.b16 %v434
        %v859 = vunpack.c.l.b16 %v435
        %v860 = vunpack.c.l.b16 %v436
        %v861 = vunpack.c.l.b16 %v437
        %v862 = vunpack.c.l.b16 %v438
        %v863 = vunpack.c.l.b16 %v439
        %v864 = vpack.c.b16 %v833, %v832
        %v865 = vpack.c.b16 %v835, %v834
        %v866 = vpack.c.b16 %v837, %v836
        %v867 = vpack.c.b16 %v839, %v838
        %v868 = vpack.c.b16 %v841, %v840
        %v869 = vpack.c.b16 %v843, %v842
        %v870 = vpack.c.b16 %v845, %v844
        %v871 = vpack.c.b16 %v847, %v846
        %v872 = vpack.c.b16 %v849, %v848
        %v873 = vpack.c.b16 %v851, %v850
        %v874 = vpack.c.b16 %v853, %v852
        %v875 = vpack.c.b16 %v855, %v854
        %v876 = vpack.c.b16 %v857, %v856
        %v877 = vpack.c.b16 %v859, %v858
        %v878 = vpack.c.b16 %v861, %v860
        %v879 = vpack.c.b16 %v863, %v862
        %896 = vmatprep.subr.bf16.mxu0 0
        %897 = vmatpush1.bf16.msra.mxu0 %v864
        %898 = vmatprep.subr.bf16.mxu0 0
        %899 = vmatpush1.bf16.msra.mxu0 %v865
        %900 = vmatprep.subr.bf16.mxu0 0
        %901 = vmatpush1.bf16.msra.mxu0 %v866
        %902 = vmatprep.subr.bf16.mxu0 0
        %903 = vmatpush1.bf16.msra.mxu0 %v867
        %904 = vmatprep.subr.bf16.mxu0 0
        %905 = vmatpush1.bf16.msra.mxu0 %v868
        %906 = vmatprep.subr.bf16.mxu0 0
        %907 = vmatpush1.bf16.msra.mxu0 %v869
        %908 = vmatprep.subr.bf16.mxu0 0
        %909 = vmatpush1.bf16.msra.mxu0 %v870
        %910 = vmatprep.subr.bf16.mxu0 0
        %911 = vmatpush1.bf16.msra.mxu0 %v871
        %912 = vmatprep.subr.bf16.mxu0 0
        %913 = vmatpush1.bf16.msra.mxu0 %v872
        %914 = vmatprep.subr.bf16.mxu0 0
        %915 = vmatpush1.bf16.msra.mxu0 %v873
        %916 = vmatprep.subr.bf16.mxu0 0
        %917 = vmatpush1.bf16.msra.mxu0 %v874
        %918 = vmatprep.subr.bf16.mxu0 0
        %919 = vmatpush1.bf16.msra.mxu0 %v875
        %920 = vmatprep.subr.bf16.mxu0 0
        %921 = vmatpush1.bf16.msra.mxu0 %v876
        %922 = vmatprep.subr.bf16.mxu0 0
        %923 = vmatpush1.bf16.msra.mxu0 %v877
        %924 = vmatprep.subr.bf16.mxu0 0
        %925 = vmatpush1.bf16.msra.mxu0 %v878
        %926 = vmatprep.subr.bf16.mxu0 0
        %927 = vmatpush1.bf16.msra.mxu0 %v879
        %928 = vmatprep.mubr.bf16.mxu0 %v657
        %929 = vmatmul.mubr.bf16.gmra.mrb[0].mxu0 %v656
        %v930 = vpop.f32.mrb[0].mxu0
        %v931 = vadd.f32 0.0, %v930
        %v932 = vpop.f32.mrb[0].mxu0
        %v933 = vpop.f32.mrb[0].mxu0
        %v934 = vadd.f32 0.0, %v933
        %v935 = vpop.f32.mrb[0].mxu0
        %936 = vmatprep.mubr.bf16.mxu0 %v659
        %937 = vmatmul.mubr.bf16.gmra.mrb[0].mxu0 %v658
        %v938 = vpop.f32.mrb[0].mxu0
        %v939 = vadd.f32 0.0, %v938
        %v940 = vpop.f32.mrb[0].mxu0
        %v941 = vpop.f32.mrb[0].mxu0
        %v942 = vadd.f32 0.0, %v941
        %v943 = vpop.f32.mrb[0].mxu0
        %944 = vmatprep.mubr.bf16.mxu0 %v661
        %945 = vmatmul.mubr.bf16.gmra.mrb[0].mxu0 %v660
        %v946 = vpop.f32.mrb[0].mxu0
        %v947 = vadd.f32 0.0, %v946
        %v948 = vpop.f32.mrb[0].mxu0
        %v949 = vpop.f32.mrb[0].mxu0
        %v950 = vadd.f32 0.0, %v949
        %v951 = vpop.f32.mrb[0].mxu0
        %952 = vmatprep.mubr.bf16.mxu0 %v663
        %953 = vmatmul.mubr.bf16.gmra.mrb[0].mxu0 %v662
        %v954 = vpop.f32.mrb[0].mxu0
        %v955 = vadd.f32 0.0, %v954
        %v956 = vpop.f32.mrb[0].mxu0
        %v957 = vpop.f32.mrb[0].mxu0
        %v958 = vadd.f32 0.0, %v957
        %v959 = vpop.f32.mrb[0].mxu0
        %960 = vmatprep.mubr.bf16.mxu0 %v665
        %961 = vmatmul.mubr.bf16.gmra.mrb[0].mxu0 %v664
        %v962 = vpop.f32.mrb[0].mxu0
        %v963 = vadd.f32 0.0, %v962
        %v964 = vpop.f32.mrb[0].mxu0
        %v965 = vpop.f32.mrb[0].mxu0
        %v966 = vadd.f32 0.0, %v965
        %v967 = vpop.f32.mrb[0].mxu0
        %968 = vmatprep.mubr.bf16.mxu0 %v667
        %969 = vmatmul.mubr.bf16.gmra.mrb[0].mxu0 %v666
        %v970 = vpop.f32.mrb[0].mxu0
        %v971 = vadd.f32 0.0, %v970
        %v972 = vpop.f32.mrb[0].mxu0
        %v973 = vpop.f32.mrb[0].mxu0
        %v974 = vadd.f32 0.0, %v973
        %v975 = vpop.f32.mrb[0].mxu0
        %976 = vmatprep.mubr.bf16.mxu0 %v669
        %977 = vmatmul.mubr.bf16.gmra.mrb[0].mxu0 %v668
        %v978 = vpop.f32.mrb[0].mxu0
        %v979 = vadd.f32 0.0, %v978
        %v980 = vpop.f32.mrb[0].mxu0
        %v981 = vpop.f32.mrb[0].mxu0
        %v982 = vadd.f32 0.0, %v981
        %v983 = vpop.f32.mrb[0].mxu0
        %984 = vmatprep.mubr.bf16.mxu0 %v671
        %985 = vmatmul.mubr.bf16.gmra.mrb[0].mxu0 %v670
        %v986 = vpop.f32.mrb[0].mxu0
        %v987 = vadd.f32 0.0, %v986
        %v988 = vpop.f32.mrb[0].mxu0
        %v989 = vpop.f32.mrb[0].mxu0
        %v990 = vadd.f32 0.0, %v989
        %v991 = vpop.f32.mrb[0].mxu0
        %992 = vmatprep.mubr.bf16.mxu0 %v673
        %993 = vmatmul.mubr.bf16.gmra.mrb[0].mxu0 %v672
        %v994 = vpop.f32.mrb[0].mxu0
        %v995 = vadd.f32 0.0, %v994
        %v996 = vpop.f32.mrb[0].mxu0
        %v997 = vpop.f32.mrb[0].mxu0
        %v998 = vadd.f32 0.0, %v997
        %v999 = vpop.f32.mrb[0].mxu0
        %1000 = vmatprep.mubr.bf16.mxu0 %v675
        %1001 = vmatmul.mubr.bf16.gmra.mrb[0].mxu0 %v674
        %v1002 = vpop.f32.mrb[0].mxu0
        %v1003 = vadd.f32 0.0, %v1002
        %v1004 = vpop.f32.mrb[0].mxu0
        %v1005 = vpop.f32.mrb[0].mxu0
        %v1006 = vadd.f32 0.0, %v1005
        %v1007 = vpop.f32.mrb[0].mxu0
        %1008 = vmatprep.mubr.bf16.mxu0 %v677
        %1009 = vmatmul.mubr.bf16.gmra.mrb[0].mxu0 %v676
        %v1010 = vpop.f32.mrb[0].mxu0
        %v1011 = vadd.f32 0.0, %v1010
        %v1012 = vpop.f32.mrb[0].mxu0
        %v1013 = vpop.f32.mrb[0].mxu0
        %v1014 = vadd.f32 0.0, %v1013
        %v1015 = vpop.f32.mrb[0].mxu0
        %1016 = vmatprep.mubr.bf16.mxu0 %v679
        %1017 = vmatmul.mubr.bf16.gmra.mrb[0].mxu0 %v678
        %v1018 = vpop.f32.mrb[0].mxu0
        %v1019 = vadd.f32 0.0, %v1018
        %v1020 = vpop.f32.mrb[0].mxu0
        %v1021 = vpop.f32.mrb[0].mxu0
        %v1022 = vadd.f32 0.0, %v1021
        %v1023 = vpop.f32.mrb[0].mxu0
        %1024 = vmatprep.mubr.bf16.mxu0 %v681
        %1025 = vmatmul.mubr.bf16.gmra.mrb[0].mxu0 %v680
        %v1026 = vpop.f32.mrb[0].mxu0
        %v1027 = vadd.f32 0.0, %v1026
        %v1028 = vpop.f32.mrb[0].mxu0
        %v1029 = vpop.f32.mrb[0].mxu0
        %v1030 = vadd.f32 0.0, %v1029
        %v1031 = vpop.f32.mrb[0].mxu0
        %1032 = vmatprep.mubr.bf16.mxu0 %v683
        %1033 = vmatmul.mubr.bf16.gmra.mrb[0].mxu0 %v682
        %v1034 = vpop.f32.mrb[0].mxu0
        %v1035 = vadd.f32 0.0, %v1034
        %v1036 = vpop.f32.mrb[0].mxu0
        %v1037 = vpop.f32.mrb[0].mxu0
        %v1038 = vadd.f32 0.0, %v1037
        %v1039 = vpop.f32.mrb[0].mxu0
        %1040 = vmatprep.mubr.bf16.mxu0 %v685
        %1041 = vmatmul.mubr.bf16.gmra.mrb[0].mxu0 %v684
        %v1042 = vpop.f32.mrb[0].mxu0
        %v1043 = vadd.f32 0.0, %v1042
        %v1044 = vpop.f32.mrb[0].mxu0
        %v1045 = vpop.f32.mrb[0].mxu0
        %v1046 = vadd.f32 0.0, %v1045
        %v1047 = vpop.f32.mrb[0].mxu0
        %1048 = vmatprep.mubr.bf16.mxu0 %v687
        %1049 = vmatmul.mubr.bf16.gmra.mrb[0].mxu0 %v686
        %v1050 = vpop.f32.mrb[0].mxu0
        %v1051 = vadd.f32 0.0, %v1050
        %v1052 = vpop.f32.mrb[0].mxu0
        %v1053 = vpop.f32.mrb[0].mxu0
        %v1054 = vadd.f32 0.0, %v1053
        %v1055 = vpop.f32.mrb[0].mxu0
        %1056 = vmatprep.mubr.bf16.mxu0 %v689
        %1057 = vmatmul.mubr.bf16.gmra.mrb[0].mxu0 %v688
        %v1058 = vpop.f32.mrb[0].mxu0
        %v1059 = vadd.f32 0.0, %v1058
        %v1060 = vpop.f32.mrb[0].mxu0
        %v1061 = vpop.f32.mrb[0].mxu0
        %v1062 = vadd.f32 0.0, %v1061
        %v1063 = vpop.f32.mrb[0].mxu0
        %1064 = vmatprep.mubr.bf16.mxu0 %v691
        %1065 = vmatmul.mubr.bf16.gmra.mrb[0].mxu0 %v690
        %v1066 = vpop.f32.mrb[0].mxu0
        %v1067 = vadd.f32 0.0, %v1066
        %v1068 = vpop.f32.mrb[0].mxu0
        %v1069 = vpop.f32.mrb[0].mxu0
        %v1070 = vadd.f32 0.0, %v1069
        %v1071 = vpop.f32.mrb[0].mxu0
        %1072 = vmatprep.mubr.bf16.mxu0 %v693
        %1073 = vmatmul.mubr.bf16.gmra.mrb[0].mxu0 %v692
        %v1074 = vpop.f32.mrb[0].mxu0
        %v1075 = vadd.f32 0.0, %v1074
        %v1076 = vpop.f32.mrb[0].mxu0
        %v1077 = vpop.f32.mrb[0].mxu0
        %v1078 = vadd.f32 0.0, %v1077
        %v1079 = vpop.f32.mrb[0].mxu0
        %1080 = vmatprep.mubr.bf16.mxu0 %v695
        %1081 = vmatmul.mubr.bf16.gmra.mrb[0].mxu0 %v694
        %v1082 = vpop.f32.mrb[0].mxu0
        %v1083 = vadd.f32 0.0, %v1082
        %v1084 = vpop.f32.mrb[0].mxu0
        %v1085 = vpop.f32.mrb[0].mxu0
        %v1086 = vadd.f32 0.0, %v1085
        %v1087 = vpop.f32.mrb[0].mxu0
        %1088 = vmatprep.mubr.bf16.mxu0 %v697
        %1089 = vmatmul.mubr.bf16.gmra.mrb[0].mxu0 %v696
        %v1090 = vpop.f32.mrb[0].mxu0
        %v1091 = vadd.f32 0.0, %v1090
        %v1092 = vpop.f32.mrb[0].mxu0
        %v1093 = vpop.f32.mrb[0].mxu0
        %v1094 = vadd.f32 0.0, %v1093
        %v1095 = vpop.f32.mrb[0].mxu0
        %1096 = vmatprep.mubr.bf16.mxu0 %v699
        %1097 = vmatmul.mubr.bf16.gmra.mrb[0].mxu0 %v698
        %v1098 = vpop.f32.mrb[0].mxu0
        %v1099 = vadd.f32 0.0, %v1098
        %v1100 = vpop.f32.mrb[0].mxu0
        %v1101 = vpop.f32.mrb[0].mxu0
        %v1102 = vadd.f32 0.0, %v1101
        %v1103 = vpop.f32.mrb[0].mxu0
        %1104 = vmatprep.mubr.bf16.mxu0 %v701
        %1105 = vmatmul.mubr.bf16.gmra.mrb[0].mxu0 %v700
        %v1106 = vpop.f32.mrb[0].mxu0
        %v1107 = vadd.f32 0.0, %v1106
        %v1108 = vpop.f32.mrb[0].mxu0
        %v1109 = vpop.f32.mrb[0].mxu0
        %v1110 = vadd.f32 0.0, %v1109
        %v1111 = vpop.f32.mrb[0].mxu0
        %1112 = vmatprep.mubr.bf16.mxu0 %v703
        %1113 = vmatmul.mubr.bf16.gmra.mrb[0].mxu0 %v702
        %v1114 = vpop.f32.mrb[0].mxu0
        %v1115 = vadd.f32 0.0, %v1114
        %v1116 = vpop.f32.mrb[0].mxu0
        %v1117 = vpop.f32.mrb[0].mxu0
        %v1118 = vadd.f32 0.0, %v1117
        %v1119 = vpop.f32.mrb[0].mxu0
        %1120 = vmatprep.mubr.bf16.mxu0 %v705
        %1121 = vmatmul.mubr.bf16.gmra.mrb[0].mxu0 %v704
        %v1122 = vpop.f32.mrb[0].mxu0
        %v1123 = vadd.f32 0.0, %v1122
        %v1124 = vpop.f32.mrb[0].mxu0
        %v1125 = vpop.f32.mrb[0].mxu0
        %v1126 = vadd.f32 0.0, %v1125
        %v1127 = vpop.f32.mrb[0].mxu0
        %1128 = vmatprep.mubr.bf16.mxu0 %v707
        %1129 = vmatmul.mubr.bf16.gmra.mrb[0].mxu0 %v706
        %v1130 = vpop.f32.mrb[0].mxu0
        %v1131 = vadd.f32 0.0, %v1130
        %v1132 = vpop.f32.mrb[0].mxu0
        %v1133 = vpop.f32.mrb[0].mxu0
        %v1134 = vadd.f32 0.0, %v1133
        %v1135 = vpop.f32.mrb[0].mxu0
        %1136 = vmatprep.mubr.bf16.mxu0 %v709
        %1137 = vmatmul.mubr.bf16.gmra.mrb[0].mxu0 %v708
        %v1138 = vpop.f32.mrb[0].mxu0
        %v1139 = vadd.f32 0.0, %v1138
        %v1140 = vpop.f32.mrb[0].mxu0
        %v1141 = vpop.f32.mrb[0].mxu0
        %v1142 = vadd.f32 0.0, %v1141
        %v1143 = vpop.f32.mrb[0].mxu0
        %1144 = vmatprep.mubr.bf16.mxu0 %v711
        %1145 = vmatmul.mubr.bf16.gmra.mrb[0].mxu0 %v710
        %v1146 = vpop.f32.mrb[0].mxu0
        %v1147 = vadd.f32 0.0, %v1146
        %v1148 = vpop.f32.mrb[0].mxu0
        %v1149 = vpop.f32.mrb[0].mxu0
        %v1150 = vadd.f32 0.0, %v1149
        %v1151 = vpop.f32.mrb[0].mxu0
        %1152 = vmatprep.mubr.bf16.mxu0 %v713
        %1153 = vmatmul.mubr.bf16.gmra.mrb[0].mxu0 %v712
        %v1154 = vpop.f32.mrb[0].mxu0
        %v1155 = vadd.f32 0.0, %v1154
        %v1156 = vpop.f32.mrb[0].mxu0
        %v1157 = vpop.f32.mrb[0].mxu0
        %v1158 = vadd.f32 0.0, %v1157
        %v1159 = vpop.f32.mrb[0].mxu0
        %1160 = vmatprep.mubr.bf16.mxu0 %v715
        %1161 = vmatmul.mubr.bf16.gmra.mrb[0].mxu0 %v714
        %v1162 = vpop.f32.mrb[0].mxu0
        %v1163 = vadd.f32 0.0, %v1162
        %v1164 = vpop.f32.mrb[0].mxu0
        %v1165 = vpop.f32.mrb[0].mxu0
        %v1166 = vadd.f32 0.0, %v1165
        %v1167 = vpop.f32.mrb[0].mxu0
        %1168 = vmatprep.mubr.bf16.mxu0 %v717
        %1169 = vmatmul.mubr.bf16.gmra.mrb[0].mxu0 %v716
        %v1170 = vpop.f32.mrb[0].mxu0
        %v1171 = vadd.f32 0.0, %v1170
        %v1172 = vpop.f32.mrb[0].mxu0
        %v1173 = vpop.f32.mrb[0].mxu0
        %v1174 = vadd.f32 0.0, %v1173
        %v1175 = vpop.f32.mrb[0].mxu0
        %1176 = vmatprep.mubr.bf16.mxu0 %v719
        %1177 = vmatmul.mubr.bf16.gmra.mrb[0].mxu0 %v718
        %v1178 = vpop.f32.mrb[0].mxu0
        %v1179 = vadd.f32 0.0, %v1178
        %v1180 = vpop.f32.mrb[0].mxu0
        %v1181 = vpop.f32.mrb[0].mxu0
        %v1182 = vadd.f32 0.0, %v1181
        %v1183 = vpop.f32.mrb[0].mxu0
        %1184 = vmatprep.mubr.bf16.mxu0 %v721
        %1185 = vmatmul.mubr.bf16.gmra.mrb[0].mxu0 %v720
        %v1186 = vpop.f32.mrb[0].mxu0
        %v1187 = vadd.f32 0.0, %v1186
        %v1188 = vpop.f32.mrb[0].mxu0
        %v1189 = vpop.f32.mrb[0].mxu0
        %v1190 = vadd.f32 0.0, %v1189
        %v1191 = vpop.f32.mrb[0].mxu0
        %1192 = vmatprep.mubr.bf16.mxu0 %v723
        %1193 = vmatmul.mubr.bf16.gmra.mrb[0].mxu0 %v722
        %v1194 = vpop.f32.mrb[0].mxu0
        %v1195 = vadd.f32 0.0, %v1194
        %v1196 = vpop.f32.mrb[0].mxu0
        %v1197 = vpop.f32.mrb[0].mxu0
        %v1198 = vadd.f32 0.0, %v1197
        %v1199 = vpop.f32.mrb[0].mxu0
        %1200 = vmatprep.mubr.bf16.mxu0 %v725
        %1201 = vmatmul.mubr.bf16.gmra.mrb[0].mxu0 %v724
        %v1202 = vpop.f32.mrb[0].mxu0
        %v1203 = vadd.f32 0.0, %v1202
        %v1204 = vpop.f32.mrb[0].mxu0
        %v1205 = vpop.f32.mrb[0].mxu0
        %v1206 = vadd.f32 0.0, %v1205
        %v1207 = vpop.f32.mrb[0].mxu0
        %1208 = vmatprep.mubr.bf16.mxu0 %v727
        %1209 = vmatmul.mubr.bf16.gmra.mrb[0].mxu0 %v726
        %v1210 = vpop.f32.mrb[0].mxu0
        %v1211 = vadd.f32 0.0, %v1210
        %v1212 = vpop.f32.mrb[0].mxu0
        %v1213 = vpop.f32.mrb[0].mxu0
        %v1214 = vadd.f32 0.0, %v1213
        %v1215 = vpop.f32.mrb[0].mxu0
        %1216 = vdwg.mxu0
        %v1217 = vld [vmem:[%s2] sm:$0x1]
        %v1219 = vlaneseq
        %v1220 = vshrl.u32 %v1219, 7
        %v1221 = vsub.s32 0, %v1220
        %v1222 = vrot.slane %v1217, %v1221
        %v1224 = vmul.f32 %v931, %v1222
        %v1225 = vmul.f32 %v934, %v1222
        %v1226 = vmul.f32 %v939, %v1222
        %v1227 = vmul.f32 %v942, %v1222
        %v1228 = vmul.f32 %v947, %v1222
        %v1229 = vmul.f32 %v950, %v1222
        %v1230 = vmul.f32 %v955, %v1222
        %v1231 = vmul.f32 %v958, %v1222
        %v1232 = vmul.f32 %v963, %v1222
        %v1233 = vmul.f32 %v966, %v1222
        %v1234 = vmul.f32 %v971, %v1222
        %v1235 = vmul.f32 %v974, %v1222
        %v1236 = vmul.f32 %v979, %v1222
        %v1237 = vmul.f32 %v982, %v1222
        %v1238 = vmul.f32 %v987, %v1222
        %v1239 = vmul.f32 %v990, %v1222
        %v1240 = vmul.f32 %v995, %v1222
        %v1241 = vmul.f32 %v998, %v1222
        %v1242 = vmul.f32 %v1003, %v1222
        %v1243 = vmul.f32 %v1006, %v1222
        %v1244 = vmul.f32 %v1011, %v1222
        %v1245 = vmul.f32 %v1014, %v1222
        %v1246 = vmul.f32 %v1019, %v1222
        %v1247 = vmul.f32 %v1022, %v1222
        %v1248 = vmul.f32 %v1027, %v1222
        %v1249 = vmul.f32 %v1030, %v1222
        %v1250 = vmul.f32 %v1035, %v1222
        %v1251 = vmul.f32 %v1038, %v1222
        %v1252 = vmul.f32 %v1043, %v1222
        %v1253 = vmul.f32 %v1046, %v1222
        %v1254 = vmul.f32 %v1051, %v1222
        %v1255 = vmul.f32 %v1054, %v1222
        %v1256 = vmul.f32 %v1059, %v1222
        %v1257 = vmul.f32 %v1062, %v1222
        %v1258 = vmul.f32 %v1067, %v1222
        %v1259 = vmul.f32 %v1070, %v1222
        %v1260 = vmul.f32 %v1075, %v1222
        %v1261 = vmul.f32 %v1078, %v1222
        %v1262 = vmul.f32 %v1083, %v1222
        %v1263 = vmul.f32 %v1086, %v1222
        %v1264 = vmul.f32 %v1091, %v1222
        %v1265 = vmul.f32 %v1094, %v1222
        %v1266 = vmul.f32 %v1099, %v1222
        %v1267 = vmul.f32 %v1102, %v1222
        %v1268 = vmul.f32 %v1107, %v1222
        %v1269 = vmul.f32 %v1110, %v1222
        %v1270 = vmul.f32 %v1115, %v1222
        %v1271 = vmul.f32 %v1118, %v1222
        %v1272 = vmul.f32 %v1123, %v1222
        %v1273 = vmul.f32 %v1126, %v1222
        %v1274 = vmul.f32 %v1131, %v1222
        %v1275 = vmul.f32 %v1134, %v1222
        %v1276 = vmul.f32 %v1139, %v1222
        %v1277 = vmul.f32 %v1142, %v1222
        %v1278 = vmul.f32 %v1147, %v1222
        %v1279 = vmul.f32 %v1150, %v1222
        %v1280 = vmul.f32 %v1155, %v1222
        %v1281 = vmul.f32 %v1158, %v1222
        %v1282 = vmul.f32 %v1163, %v1222
        %v1283 = vmul.f32 %v1166, %v1222
        %v1284 = vmul.f32 %v1171, %v1222
        %v1285 = vmul.f32 %v1174, %v1222
        %v1286 = vmul.f32 %v1179, %v1222
        %v1287 = vmul.f32 %v1182, %v1222
        %v1288 = vmul.f32 %v1187, %v1222
        %v1289 = vmul.f32 %v1190, %v1222
        %v1290 = vmul.f32 %v1195, %v1222
        %v1291 = vmul.f32 %v1198, %v1222
        %v1292 = vmul.f32 %v1203, %v1222
        %v1293 = vmul.f32 %v1206, %v1222
        %v1294 = vmul.f32 %v1211, %v1222
        %v1295 = vmul.f32 %v1214, %v1222
        %v1296 = vld [vmem:[%s3] sm:$0x1]
        %v1298 = vlaneseq
        %v1299 = vshrl.u32 %v1298, 7
        %v1300 = vsub.s32 0, %v1299
        %v1301 = vrot.slane %v1296, %v1300
        %v1303 = vadd.f32 %v1224, %v1301
        %v1304 = vadd.f32 %v1225, %v1301
        %v1305 = vadd.f32 %v1226, %v1301
        %v1306 = vadd.f32 %v1227, %v1301
        %v1307 = vadd.f32 %v1228, %v1301
        %v1308 = vadd.f32 %v1229, %v1301
        %v1309 = vadd.f32 %v1230, %v1301
        %v1310 = vadd.f32 %v1231, %v1301
        %v1311 = vadd.f32 %v1232, %v1301
        %v1312 = vadd.f32 %v1233, %v1301
        %v1313 = vadd.f32 %v1234, %v1301
        %v1314 = vadd.f32 %v1235, %v1301
        %v1315 = vadd.f32 %v1236, %v1301
        %v1316 = vadd.f32 %v1237, %v1301
        %v1317 = vadd.f32 %v1238, %v1301
        %v1318 = vadd.f32 %v1239, %v1301
        %v1319 = vadd.f32 %v1240, %v1301
        %v1320 = vadd.f32 %v1241, %v1301
        %v1321 = vadd.f32 %v1242, %v1301
        %v1322 = vadd.f32 %v1243, %v1301
        %v1323 = vadd.f32 %v1244, %v1301
        %v1324 = vadd.f32 %v1245, %v1301
        %v1325 = vadd.f32 %v1246, %v1301
        %v1326 = vadd.f32 %v1247, %v1301
        %v1327 = vadd.f32 %v1248, %v1301
        %v1328 = vadd.f32 %v1249, %v1301
        %v1329 = vadd.f32 %v1250, %v1301
        %v1330 = vadd.f32 %v1251, %v1301
        %v1331 = vadd.f32 %v1252, %v1301
        %v1332 = vadd.f32 %v1253, %v1301
        %v1333 = vadd.f32 %v1254, %v1301
        %v1334 = vadd.f32 %v1255, %v1301
        %v1335 = vadd.f32 %v1256, %v1301
        %v1336 = vadd.f32 %v1257, %v1301
        %v1337 = vadd.f32 %v1258, %v1301
        %v1338 = vadd.f32 %v1259, %v1301
        %v1339 = vadd.f32 %v1260, %v1301
        %v1340 = vadd.f32 %v1261, %v1301
        %v1341 = vadd.f32 %v1262, %v1301
        %v1342 = vadd.f32 %v1263, %v1301
        %v1343 = vadd.f32 %v1264, %v1301
        %v1344 = vadd.f32 %v1265, %v1301
        %v1345 = vadd.f32 %v1266, %v1301
        %v1346 = vadd.f32 %v1267, %v1301
        %v1347 = vadd.f32 %v1268, %v1301
        %v1348 = vadd.f32 %v1269, %v1301
        %v1349 = vadd.f32 %v1270, %v1301
        %v1350 = vadd.f32 %v1271, %v1301
        %v1351 = vadd.f32 %v1272, %v1301
        %v1352 = vadd.f32 %v1273, %v1301
        %v1353 = vadd.f32 %v1274, %v1301
        %v1354 = vadd.f32 %v1275, %v1301
        %v1355 = vadd.f32 %v1276, %v1301
        %v1356 = vadd.f32 %v1277, %v1301
        %v1357 = vadd.f32 %v1278, %v1301
        %v1358 = vadd.f32 %v1279, %v1301
        %v1359 = vadd.f32 %v1280, %v1301
        %v1360 = vadd.f32 %v1281, %v1301
        %v1361 = vadd.f32 %v1282, %v1301
        %v1362 = vadd.f32 %v1283, %v1301
        %v1363 = vadd.f32 %v1284, %v1301
        %v1364 = vadd.f32 %v1285, %v1301
        %v1365 = vadd.f32 %v1286, %v1301
        %v1366 = vadd.f32 %v1287, %v1301
        %v1367 = vadd.f32 %v1288, %v1301
        %v1368 = vadd.f32 %v1289, %v1301
        %v1369 = vadd.f32 %v1290, %v1301
        %v1370 = vadd.f32 %v1291, %v1301
        %v1371 = vadd.f32 %v1292, %v1301
        %v1372 = vadd.f32 %v1293, %v1301
        %v1373 = vadd.f32 %v1294, %v1301
        %v1374 = vadd.f32 %v1295, %v1301
        %vm1375 = vcmp.gt.f32.partialorder %v1303, 0.0
        %vm1376 = vcmp.gt.f32.partialorder %v1304, 0.0
        %vm1377 = vcmp.gt.f32.partialorder %v1305, 0.0
        %vm1378 = vcmp.gt.f32.partialorder %v1306, 0.0
        %vm1379 = vcmp.gt.f32.partialorder %v1307, 0.0
        %vm1380 = vcmp.gt.f32.partialorder %v1308, 0.0
        %vm1381 = vcmp.gt.f32.partialorder %v1309, 0.0
        %vm1382 = vcmp.gt.f32.partialorder %v1310, 0.0
        %vm1383 = vcmp.gt.f32.partialorder %v1311, 0.0
        %vm1384 = vcmp.gt.f32.partialorder %v1312, 0.0
        %vm1385 = vcmp.gt.f32.partialorder %v1313, 0.0
        %vm1386 = vcmp.gt.f32.partialorder %v1314, 0.0
        %vm1387 = vcmp.gt.f32.partialorder %v1315, 0.0
        %vm1388 = vcmp.gt.f32.partialorder %v1316, 0.0
        %vm1389 = vcmp.gt.f32.partialorder %v1317, 0.0
        %vm1390 = vcmp.gt.f32.partialorder %v1318, 0.0
        %vm1391 = vcmp.gt.f32.partialorder %v1319, 0.0
        %vm1392 = vcmp.gt.f32.partialorder %v1320, 0.0
        %vm1393 = vcmp.gt.f32.partialorder %v1321, 0.0
        %vm1394 = vcmp.gt.f32.partialorder %v1322, 0.0
        %vm1395 = vcmp.gt.f32.partialorder %v1323, 0.0
        %vm1396 = vcmp.gt.f32.partialorder %v1324, 0.0
        %vm1397 = vcmp.gt.f32.partialorder %v1325, 0.0
        %vm1398 = vcmp.gt.f32.partialorder %v1326, 0.0
        %vm1399 = vcmp.gt.f32.partialorder %v1327, 0.0
        %vm1400 = vcmp.gt.f32.partialorder %v1328, 0.0
        %vm1401 = vcmp.gt.f32.partialorder %v1329, 0.0
        %vm1402 = vcmp.gt.f32.partialorder %v1330, 0.0
        %vm1403 = vcmp.gt.f32.partialorder %v1331, 0.0
        %vm1404 = vcmp.gt.f32.partialorder %v1332, 0.0
        %vm1405 = vcmp.gt.f32.partialorder %v1333, 0.0
        %vm1406 = vcmp.gt.f32.partialorder %v1334, 0.0
        %vm1407 = vcmp.gt.f32.partialorder %v1335, 0.0
        %vm1408 = vcmp.gt.f32.partialorder %v1336, 0.0
        %vm1409 = vcmp.gt.f32.partialorder %v1337, 0.0
        %vm1410 = vcmp.gt.f32.partialorder %v1338, 0.0
        %vm1411 = vcmp.gt.f32.partialorder %v1339, 0.0
        %vm1412 = vcmp.gt.f32.partialorder %v1340, 0.0
        %vm1413 = vcmp.gt.f32.partialorder %v1341, 0.0
        %vm1414 = vcmp.gt.f32.partialorder %v1342, 0.0
        %vm1415 = vcmp.gt.f32.partialorder %v1343, 0.0
        %vm1416 = vcmp.gt.f32.partialorder %v1344, 0.0
        %vm1417 = vcmp.gt.f32.partialorder %v1345, 0.0
        %vm1418 = vcmp.gt.f32.partialorder %v1346, 0.0
        %vm1419 = vcmp.gt.f32.partialorder %v1347, 0.0
        %vm1420 = vcmp.gt.f32.partialorder %v1348, 0.0
        %vm1421 = vcmp.gt.f32.partialorder %v1349, 0.0
        %vm1422 = vcmp.gt.f32.partialorder %v1350, 0.0
        %vm1423 = vcmp.gt.f32.partialorder %v1351, 0.0
        %vm1424 = vcmp.gt.f32.partialorder %v1352, 0.0
        %vm1425 = vcmp.gt.f32.partialorder %v1353, 0.0
        %vm1426 = vcmp.gt.f32.partialorder %v1354, 0.0
        %vm1427 = vcmp.gt.f32.partialorder %v1355, 0.0
        %vm1428 = vcmp.gt.f32.partialorder %v1356, 0.0
        %vm1429 = vcmp.gt.f32.partialorder %v1357, 0.0
        %vm1430 = vcmp.gt.f32.partialorder %v1358, 0.0
        %vm1431 = vcmp.gt.f32.partialorder %v1359, 0.0
        %vm1432 = vcmp.gt.f32.partialorder %v1360, 0.0
        %vm1433 = vcmp.gt.f32.partialorder %v1361, 0.0
        %vm1434 = vcmp.gt.f32.partialorder %v1362, 0.0
        %vm1435 = vcmp.gt.f32.partialorder %v1363, 0.0
        %vm1436 = vcmp.gt.f32.partialorder %v1364, 0.0
        %vm1437 = vcmp.gt.f32.partialorder %v1365, 0.0
        %vm1438 = vcmp.gt.f32.partialorder %v1366, 0.0
        %vm1439 = vcmp.gt.f32.partialorder %v1367, 0.0
        %vm1440 = vcmp.gt.f32.partialorder %v1368, 0.0
        %vm1441 = vcmp.gt.f32.partialorder %v1369, 0.0
        %vm1442 = vcmp.gt.f32.partialorder %v1370, 0.0
        %vm1443 = vcmp.gt.f32.partialorder %v1371, 0.0
        %vm1444 = vcmp.gt.f32.partialorder %v1372, 0.0
        %vm1445 = vcmp.gt.f32.partialorder %v1373, 0.0
        %vm1446 = vcmp.gt.f32.partialorder %v1374, 0.0
        %v1447 = vmin.f32 %v1303, 0.0
        %v1448 = vmin.f32 %v1304, 0.0
        %v1449 = vmin.f32 %v1305, 0.0
        %v1450 = vmin.f32 %v1306, 0.0
        %v1451 = vmin.f32 %v1307, 0.0
        %v1452 = vmin.f32 %v1308, 0.0
        %v1453 = vmin.f32 %v1309, 0.0
        %v1454 = vmin.f32 %v1310, 0.0
        %v1455 = vmin.f32 %v1311, 0.0
        %v1456 = vmin.f32 %v1312, 0.0
        %v1457 = vmin.f32 %v1313, 0.0
        %v1458 = vmin.f32 %v1314, 0.0
        %v1459 = vmin.f32 %v1315, 0.0
        %v1460 = vmin.f32 %v1316, 0.0
        %v1461 = vmin.f32 %v1317, 0.0
        %v1462 = vmin.f32 %v1318, 0.0
        %v1463 = vmin.f32 %v1319, 0.0
        %v1464 = vmin.f32 %v1320, 0.0
        %v1465 = vmin.f32 %v1321, 0.0
        %v1466 = vmin.f32 %v1322, 0.0
        %v1467 = vmin.f32 %v1323, 0.0
        %v1468 = vmin.f32 %v1324, 0.0
        %v1469 = vmin.f32 %v1325, 0.0
        %v1470 = vmin.f32 %v1326, 0.0
        %v1471 = vmin.f32 %v1327, 0.0
        %v1472 = vmin.f32 %v1328, 0.0
        %v1473 = vmin.f32 %v1329, 0.0
        %v1474 = vmin.f32 %v1330, 0.0
        %v1475 = vmin.f32 %v1331, 0.0
        %v1476 = vmin.f32 %v1332, 0.0
        %v1477 = vmin.f32 %v1333, 0.0
        %v1478 = vmin.f32 %v1334, 0.0
        %v1479 = vmin.f32 %v1335, 0.0
        %v1480 = vmin.f32 %v1336, 0.0
        %v1481 = vmin.f32 %v1337, 0.0
        %v1482 = vmin.f32 %v1338, 0.0
        %v1483 = vmin.f32 %v1339, 0.0
        %v1484 = vmin.f32 %v1340, 0.0
        %v1485 = vmin.f32 %v1341, 0.0
        %v1486 = vmin.f32 %v1342, 0.0
        %v1487 = vmin.f32 %v1343, 0.0
        %v1488 = vmin.f32 %v1344, 0.0
        %v1489 = vmin.f32 %v1345, 0.0
        %v1490 = vmin.f32 %v1346, 0.0
        %v1491 = vmin.f32 %v1347, 0.0
        %v1492 = vmin.f32 %v1348, 0.0
        %v1493 = vmin.f32 %v1349, 0.0
        %v1494 = vmin.f32 %v1350, 0.0
        %v1495 = vmin.f32 %v1351, 0.0
        %v1496 = vmin.f32 %v1352, 0.0
        %v1497 = vmin.f32 %v1353, 0.0
        %v1498 = vmin.f32 %v1354, 0.0
        %v1499 = vmin.f32 %v1355, 0.0
        %v1500 = vmin.f32 %v1356, 0.0
        %v1501 = vmin.f32 %v1357, 0.0
        %v1502 = vmin.f32 %v1358, 0.0
        %v1503 = vmin.f32 %v1359, 0.0
        %v1504 = vmin.f32 %v1360, 0.0
        %v1505 = vmin.f32 %v1361, 0.0
        %v1506 = vmin.f32 %v1362, 0.0
        %v1507 = vmin.f32 %v1363, 0.0
        %v1508 = vmin.f32 %v1364, 0.0
        %v1509 = vmin.f32 %v1365, 0.0
        %v1510 = vmin.f32 %v1366, 0.0
        %v1511 = vmin.f32 %v1367, 0.0
        %v1512 = vmin.f32 %v1368, 0.0
        %v1513 = vmin.f32 %v1369, 0.0
        %v1514 = vmin.f32 %v1370, 0.0
        %v1515 = vmin.f32 %v1371, 0.0
        %v1516 = vmin.f32 %v1372, 0.0
        %v1517 = vmin.f32 %v1373, 0.0
        %v1518 = vmin.f32 %v1374, 0.0
        %v1519 = vmul.f32 %v1447, 1.442695
        %v1520 = vpow.pop %v1519
        %v1521 = vmul.f32 %v1448, 1.442695
        %v1522 = vpow.pop %v1521
        %v1523 = vmul.f32 %v1449, 1.442695
        %v1524 = vpow.pop %v1523
        %v1525 = vmul.f32 %v1450, 1.442695
        %v1526 = vpow.pop %v1525
        %v1527 = vmul.f32 %v1451, 1.442695
        %v1528 = vpow.pop %v1527
        %v1529 = vmul.f32 %v1452, 1.442695
        %v1530 = vpow.pop %v1529
        %v1531 = vmul.f32 %v1453, 1.442695
        %v1532 = vpow.pop %v1531
        %v1533 = vmul.f32 %v1454, 1.442695
        %v1534 = vpow.pop %v1533
        %v1535 = vmul.f32 %v1455, 1.442695
        %v1536 = vpow.pop %v1535
        %v1537 = vmul.f32 %v1456, 1.442695
        %v1538 = vpow.pop %v1537
        %v1539 = vmul.f32 %v1457, 1.442695
        %v1540 = vpow.pop %v1539
        %v1541 = vmul.f32 %v1458, 1.442695
        %v1542 = vpow.pop %v1541
        %v1543 = vmul.f32 %v1459, 1.442695
        %v1544 = vpow.pop %v1543
        %v1545 = vmul.f32 %v1460, 1.442695
        %v1546 = vpow.pop %v1545
        %v1547 = vmul.f32 %v1461, 1.442695
        %v1548 = vpow.pop %v1547
        %v1549 = vmul.f32 %v1462, 1.442695
        %v1550 = vpow.pop %v1549
        %v1551 = vmul.f32 %v1463, 1.442695
        %v1552 = vpow.pop %v1551
        %v1553 = vmul.f32 %v1464, 1.442695
        %v1554 = vpow.pop %v1553
        %v1555 = vmul.f32 %v1465, 1.442695
        %v1556 = vpow.pop %v1555
        %v1557 = vmul.f32 %v1466, 1.442695
        %v1558 = vpow.pop %v1557
        %v1559 = vmul.f32 %v1467, 1.442695
        %v1560 = vpow.pop %v1559
        %v1561 = vmul.f32 %v1468, 1.442695
        %v1562 = vpow.pop %v1561
        %v1563 = vmul.f32 %v1469, 1.442695
        %v1564 = vpow.pop %v1563
        %v1565 = vmul.f32 %v1470, 1.442695
        %v1566 = vpow.pop %v1565
        %v1567 = vmul.f32 %v1471, 1.442695
        %v1568 = vpow.pop %v1567
        %v1569 = vmul.f32 %v1472, 1.442695
        %v1570 = vpow.pop %v1569
        %v1571 = vmul.f32 %v1473, 1.442695
        %v1572 = vpow.pop %v1571
        %v1573 = vmul.f32 %v1474, 1.442695
        %v1574 = vpow.pop %v1573
        %v1575 = vmul.f32 %v1475, 1.442695
        %v1576 = vpow.pop %v1575
        %v1577 = vmul.f32 %v1476, 1.442695
        %v1578 = vpow.pop %v1577
        %v1579 = vmul.f32 %v1477, 1.442695
        %v1580 = vpow.pop %v1579
        %v1581 = vmul.f32 %v1478, 1.442695
        %v1582 = vpow.pop %v1581
        %v1583 = vmul.f32 %v1479, 1.442695
        %v1584 = vpow.pop %v1583
        %v1585 = vmul.f32 %v1480, 1.442695
        %v1586 = vpow.pop %v1585
        %v1587 = vmul.f32 %v1481, 1.442695
        %v1588 = vpow.pop %v1587
        %v1589 = vmul.f32 %v1482, 1.442695
        %v1590 = vpow.pop %v1589
        %v1591 = vmul.f32 %v1483, 1.442695
        %v1592 = vpow.pop %v1591
        %v1593 = vmul.f32 %v1484, 1.442695
        %v1594 = vpow.pop %v1593
        %v1595 = vmul.f32 %v1485, 1.442695
        %v1596 = vpow.pop %v1595
        %v1597 = vmul.f32 %v1486, 1.442695
        %v1598 = vpow.pop %v1597
        %v1599 = vmul.f32 %v1487, 1.442695
        %v1600 = vpow.pop %v1599
        %v1601 = vmul.f32 %v1488, 1.442695
        %v1602 = vpow.pop %v1601
        %v1603 = vmul.f32 %v1489, 1.442695
        %v1604 = vpow.pop %v1603
        %v1605 = vmul.f32 %v1490, 1.442695
        %v1606 = vpow.pop %v1605
        %v1607 = vmul.f32 %v1491, 1.442695
        %v1608 = vpow.pop %v1607
        %v1609 = vmul.f32 %v1492, 1.442695
        %v1610 = vpow.pop %v1609
        %v1611 = vmul.f32 %v1493, 1.442695
        %v1612 = vpow.pop %v1611
        %v1613 = vmul.f32 %v1494, 1.442695
        %v1614 = vpow.pop %v1613
        %v1615 = vmul.f32 %v1495, 1.442695
        %v1616 = vpow.pop %v1615
        %v1617 = vmul.f32 %v1496, 1.442695
        %v1618 = vpow.pop %v1617
        %v1619 = vmul.f32 %v1497, 1.442695
        %v1620 = vpow.pop %v1619
        %v1621 = vmul.f32 %v1498, 1.442695
        %v1622 = vpow.pop %v1621
        %v1623 = vmul.f32 %v1499, 1.442695
        %v1624 = vpow.pop %v1623
        %v1625 = vmul.f32 %v1500, 1.442695
        %v1626 = vpow.pop %v1625
        %v1627 = vmul.f32 %v1501, 1.442695
        %v1628 = vpow.pop %v1627
        %v1629 = vmul.f32 %v1502, 1.442695
        %v1630 = vpow.pop %v1629
        %v1631 = vmul.f32 %v1503, 1.442695
        %v1632 = vpow.pop %v1631
        %v1633 = vmul.f32 %v1504, 1.442695
        %v1634 = vpow.pop %v1633
        %v1635 = vmul.f32 %v1505, 1.442695
        %v1636 = vpow.pop %v1635
        %v1637 = vmul.f32 %v1506, 1.442695
        %v1638 = vpow.pop %v1637
        %v1639 = vmul.f32 %v1507, 1.442695
        %v1640 = vpow.pop %v1639
        %v1641 = vmul.f32 %v1508, 1.442695
        %v1642 = vpow.pop %v1641
        %v1643 = vmul.f32 %v1509, 1.442695
        %v1644 = vpow.pop %v1643
        %v1645 = vmul.f32 %v1510, 1.442695
        %v1646 = vpow.pop %v1645
        %v1647 = vmul.f32 %v1511, 1.442695
        %v1648 = vpow.pop %v1647
        %v1649 = vmul.f32 %v1512, 1.442695
        %v1650 = vpow.pop %v1649
        %v1651 = vmul.f32 %v1513, 1.442695
        %v1652 = vpow.pop %v1651
        %v1653 = vmul.f32 %v1514, 1.442695
        %v1654 = vpow.pop %v1653
        %v1655 = vmul.f32 %v1515, 1.442695
        %v1656 = vpow.pop %v1655
        %v1657 = vmul.f32 %v1516, 1.442695
        %v1658 = vpow.pop %v1657
        %v1659 = vmul.f32 %v1517, 1.442695
        %v1660 = vpow.pop %v1659
        %v1661 = vmul.f32 %v1518, 1.442695
        %v1662 = vpow.pop %v1661
        %v1663 = vsub.f32 %v1520, 1.0
        %v1664 = vsub.f32 %v1522, 1.0
        %v1665 = vsub.f32 %v1524, 1.0
        %v1666 = vsub.f32 %v1526, 1.0
        %v1667 = vsub.f32 %v1528, 1.0
        %v1668 = vsub.f32 %v1530, 1.0
        %v1669 = vsub.f32 %v1532, 1.0
        %v1670 = vsub.f32 %v1534, 1.0
        %v1671 = vsub.f32 %v1536, 1.0
        %v1672 = vsub.f32 %v1538, 1.0
        %v1673 = vsub.f32 %v1540, 1.0
        %v1674 = vsub.f32 %v1542, 1.0
        %v1675 = vsub.f32 %v1544, 1.0
        %v1676 = vsub.f32 %v1546, 1.0
        %v1677 = vsub.f32 %v1548, 1.0
        %v1678 = vsub.f32 %v1550, 1.0
        %v1679 = vsub.f32 %v1552, 1.0
        %v1680 = vsub.f32 %v1554, 1.0
        %v1681 = vsub.f32 %v1556, 1.0
        %v1682 = vsub.f32 %v1558, 1.0
        %v1683 = vsub.f32 %v1560, 1.0
        %v1684 = vsub.f32 %v1562, 1.0
        %v1685 = vsub.f32 %v1564, 1.0
        %v1686 = vsub.f32 %v1566, 1.0
        %v1687 = vsub.f32 %v1568, 1.0
        %v1688 = vsub.f32 %v1570, 1.0
        %v1689 = vsub.f32 %v1572, 1.0
        %v1690 = vsub.f32 %v1574, 1.0
        %v1691 = vsub.f32 %v1576, 1.0
        %v1692 = vsub.f32 %v1578, 1.0
        %v1693 = vsub.f32 %v1580, 1.0
        %v1694 = vsub.f32 %v1582, 1.0
        %v1695 = vsub.f32 %v1584, 1.0
        %v1696 = vsub.f32 %v1586, 1.0
        %v1697 = vsub.f32 %v1588, 1.0
        %v1698 = vsub.f32 %v1590, 1.0
        %v1699 = vsub.f32 %v1592, 1.0
        %v1700 = vsub.f32 %v1594, 1.0
        %v1701 = vsub.f32 %v1596, 1.0
        %v1702 = vsub.f32 %v1598, 1.0
        %v1703 = vsub.f32 %v1600, 1.0
        %v1704 = vsub.f32 %v1602, 1.0
        %v1705 = vsub.f32 %v1604, 1.0
        %v1706 = vsub.f32 %v1606, 1.0
        %v1707 = vsub.f32 %v1608, 1.0
        %v1708 = vsub.f32 %v1610, 1.0
        %v1709 = vsub.f32 %v1612, 1.0
        %v1710 = vsub.f32 %v1614, 1.0
        %v1711 = vsub.f32 %v1616, 1.0
        %v1712 = vsub.f32 %v1618, 1.0
        %v1713 = vsub.f32 %v1620, 1.0
        %v1714 = vsub.f32 %v1622, 1.0
        %v1715 = vsub.f32 %v1624, 1.0
        %v1716 = vsub.f32 %v1626, 1.0
        %v1717 = vsub.f32 %v1628, 1.0
        %v1718 = vsub.f32 %v1630, 1.0
        %v1719 = vsub.f32 %v1632, 1.0
        %v1720 = vsub.f32 %v1634, 1.0
        %v1721 = vsub.f32 %v1636, 1.0
        %v1722 = vsub.f32 %v1638, 1.0
        %v1723 = vsub.f32 %v1640, 1.0
        %v1724 = vsub.f32 %v1642, 1.0
        %v1725 = vsub.f32 %v1644, 1.0
        %v1726 = vsub.f32 %v1646, 1.0
        %v1727 = vsub.f32 %v1648, 1.0
        %v1728 = vsub.f32 %v1650, 1.0
        %v1729 = vsub.f32 %v1652, 1.0
        %v1730 = vsub.f32 %v1654, 1.0
        %v1731 = vsub.f32 %v1656, 1.0
        %v1732 = vsub.f32 %v1658, 1.0
        %v1733 = vsub.f32 %v1660, 1.0
        %v1734 = vsub.f32 %v1662, 1.0
        %v1735 = vsel %vm1375, %v1303, %v1663
        %v1736 = vsel %vm1376, %v1304, %v1664
        %v1737 = vsel %vm1377, %v1305, %v1665
        %v1738 = vsel %vm1378, %v1306, %v1666
        %v1739 = vsel %vm1379, %v1307, %v1667
        %v1740 = vsel %vm1380, %v1308, %v1668
        %v1741 = vsel %vm1381, %v1309, %v1669
        %v1742 = vsel %vm1382, %v1310, %v1670
        %v1743 = vsel %vm1383, %v1311, %v1671
        %v1744 = vsel %vm1384, %v1312, %v1672
        %v1745 = vsel %vm1385, %v1313, %v1673
        %v1746 = vsel %vm1386, %v1314, %v1674
        %v1747 = vsel %vm1387, %v1315, %v1675
        %v1748 = vsel %vm1388, %v1316, %v1676
        %v1749 = vsel %vm1389, %v1317, %v1677
        %v1750 = vsel %vm1390, %v1318, %v1678
        %v1751 = vsel %vm1391, %v1319, %v1679
        %v1752 = vsel %vm1392, %v1320, %v1680
        %v1753 = vsel %vm1393, %v1321, %v1681
        %v1754 = vsel %vm1394, %v1322, %v1682
        %v1755 = vsel %vm1395, %v1323, %v1683
        %v1756 = vsel %vm1396, %v1324, %v1684
        %v1757 = vsel %vm1397, %v1325, %v1685
        %v1758 = vsel %vm1398, %v1326, %v1686
        %v1759 = vsel %vm1399, %v1327, %v1687
        %v1760 = vsel %vm1400, %v1328, %v1688
        %v1761 = vsel %vm1401, %v1329, %v1689
        %v1762 = vsel %vm1402, %v1330, %v1690
        %v1763 = vsel %vm1403, %v1331, %v1691
        %v1764 = vsel %vm1404, %v1332, %v1692
        %v1765 = vsel %vm1405, %v1333, %v1693
        %v1766 = vsel %vm1406, %v1334, %v1694
        %v1767 = vsel %vm1407, %v1335, %v1695
        %v1768 = vsel %vm1408, %v1336, %v1696
        %v1769 = vsel %vm1409, %v1337, %v1697
        %v1770 = vsel %vm1410, %v1338, %v1698
        %v1771 = vsel %vm1411, %v1339, %v1699
        %v1772 = vsel %vm1412, %v1340, %v1700
        %v1773 = vsel %vm1413, %v1341, %v1701
        %v1774 = vsel %vm1414, %v1342, %v1702
        %v1775 = vsel %vm1415, %v1343, %v1703
        %v1776 = vsel %vm1416, %v1344, %v1704
        %v1777 = vsel %vm1417, %v1345, %v1705
        %v1778 = vsel %vm1418, %v1346, %v1706
        %v1779 = vsel %vm1419, %v1347, %v1707
        %v1780 = vsel %vm1420, %v1348, %v1708
        %v1781 = vsel %vm1421, %v1349, %v1709
        %v1782 = vsel %vm1422, %v1350, %v1710
        %v1783 = vsel %vm1423, %v1351, %v1711
        %v1784 = vsel %vm1424, %v1352, %v1712
        %v1785 = vsel %vm1425, %v1353, %v1713
        %v1786 = vsel %vm1426, %v1354, %v1714
        %v1787 = vsel %vm1427, %v1355, %v1715
        %v1788 = vsel %vm1428, %v1356, %v1716
        %v1789 = vsel %vm1429, %v1357, %v1717
        %v1790 = vsel %vm1430, %v1358, %v1718
        %v1791 = vsel %vm1431, %v1359, %v1719
        %v1792 = vsel %vm1432, %v1360, %v1720
        %v1793 = vsel %vm1433, %v1361, %v1721
        %v1794 = vsel %vm1434, %v1362, %v1722
        %v1795 = vsel %vm1435, %v1363, %v1723
        %v1796 = vsel %vm1436, %v1364, %v1724
        %v1797 = vsel %vm1437, %v1365, %v1725
        %v1798 = vsel %vm1438, %v1366, %v1726
        %v1799 = vsel %vm1439, %v1367, %v1727
        %v1800 = vsel %vm1440, %v1368, %v1728
        %v1801 = vsel %vm1441, %v1369, %v1729
        %v1802 = vsel %vm1442, %v1370, %v1730
        %v1803 = vsel %vm1443, %v1371, %v1731
        %v1804 = vsel %vm1444, %v1372, %v1732
        %v1805 = vsel %vm1445, %v1373, %v1733
        %v1806 = vsel %vm1446, %v1374, %v1734
        %vm1807 = vcmask 261120
        %v1808 = vsel %vm1807, %v1735, -inf
        %v1809 = vsel %vm1807, %v1736, -inf
        %v1810 = vsel %vm1807, %v1737, -inf
        %v1811 = vsel %vm1807, %v1738, -inf
        %v1812 = vsel %vm1807, %v1739, -inf
        %v1813 = vmax.f32 %v1808, %v1812
        %v1814 = vsel %vm1807, %v1740, -inf
        %v1815 = vmax.f32 %v1809, %v1814
        %v1816 = vsel %vm1807, %v1741, -inf
        %v1817 = vmax.f32 %v1810, %v1816
        %v1818 = vsel %vm1807, %v1742, -inf
        %v1819 = vmax.f32 %v1811, %v1818
        %v1820 = vsel %vm1807, %v1743, -inf
        %v1821 = vmax.f32 %v1813, %v1820
        %v1822 = vsel %vm1807, %v1744, -inf
        %v1823 = vmax.f32 %v1815, %v1822
        %v1824 = vsel %vm1807, %v1745, -inf
        %v1825 = vmax.f32 %v1817, %v1824
        %v1826 = vsel %vm1807, %v1746, -inf
        %v1827 = vmax.f32 %v1819, %v1826
        %v1828 = vsel %vm1807, %v1747, -inf
        %v1829 = vmax.f32 %v1821, %v1828
        %v1830 = vsel %vm1807, %v1748, -inf
        %v1831 = vmax.f32 %v1823, %v1830
        %v1832 = vsel %vm1807, %v1749, -inf
        %v1833 = vmax.f32 %v1825, %v1832
        %v1834 = vsel %vm1807, %v1750, -inf
        %v1835 = vmax.f32 %v1827, %v1834
        %v1836 = vsel %vm1807, %v1751, -inf
        %v1837 = vmax.f32 %v1829, %v1836
        %v1838 = vsel %vm1807, %v1752, -inf
        %v1839 = vmax.f32 %v1831, %v1838
        %v1840 = vsel %vm1807, %v1753, -inf
        %v1841 = vmax.f32 %v1833, %v1840
        %v1842 = vsel %vm1807, %v1754, -inf
        %v1843 = vmax.f32 %v1835, %v1842
        %v1844 = vsel %vm1807, %v1755, -inf
        %v1845 = vmax.f32 %v1837, %v1844
        %v1846 = vsel %vm1807, %v1756, -inf
        %v1847 = vmax.f32 %v1839, %v1846
        %v1848 = vsel %vm1807, %v1757, -inf
        %v1849 = vmax.f32 %v1841, %v1848
        %v1850 = vsel %vm1807, %v1758, -inf
        %v1851 = vmax.f32 %v1843, %v1850
        %v1852 = vsel %vm1807, %v1759, -inf
        %v1853 = vmax.f32 %v1845, %v1852
        %v1854 = vsel %vm1807, %v1760, -inf
        %v1855 = vmax.f32 %v1847, %v1854
        %v1856 = vsel %vm1807, %v1761, -inf
        %v1857 = vmax.f32 %v1849, %v1856
        %v1858 = vsel %vm1807, %v1762, -inf
        %v1859 = vmax.f32 %v1851, %v1858
        %v1860 = vsel %vm1807, %v1763, -inf
        %v1861 = vmax.f32 %v1853, %v1860
        %v1862 = vsel %vm1807, %v1764, -inf
        %v1863 = vmax.f32 %v1855, %v1862
        %v1864 = vsel %vm1807, %v1765, -inf
        %v1865 = vmax.f32 %v1857, %v1864
        %v1866 = vsel %vm1807, %v1766, -inf
        %v1867 = vmax.f32 %v1859, %v1866
        %v1868 = vsel %vm1807, %v1767, -inf
        %v1869 = vmax.f32 %v1861, %v1868
        %v1870 = vsel %vm1807, %v1768, -inf
        %v1871 = vmax.f32 %v1863, %v1870
        %v1872 = vsel %vm1807, %v1769, -inf
        %v1873 = vmax.f32 %v1865, %v1872
        %v1874 = vsel %vm1807, %v1770, -inf
        %v1875 = vmax.f32 %v1867, %v1874
        %v1876 = vsel %vm1807, %v1771, -inf
        %v1877 = vmax.f32 %v1869, %v1876
        %v1878 = vsel %vm1807, %v1772, -inf
        %v1879 = vmax.f32 %v1871, %v1878
        %v1880 = vsel %vm1807, %v1773, -inf
        %v1881 = vmax.f32 %v1873, %v1880
        %v1882 = vsel %vm1807, %v1774, -inf
        %v1883 = vmax.f32 %v1875, %v1882
        %v1884 = vsel %vm1807, %v1775, -inf
        %v1885 = vmax.f32 %v1877, %v1884
        %v1886 = vsel %vm1807, %v1776, -inf
        %v1887 = vmax.f32 %v1879, %v1886
        %v1888 = vsel %vm1807, %v1777, -inf
        %v1889 = vmax.f32 %v1881, %v1888
        %v1890 = vsel %vm1807, %v1778, -inf
        %v1891 = vmax.f32 %v1883, %v1890
        %v1892 = vsel %vm1807, %v1779, -inf
        %v1893 = vmax.f32 %v1885, %v1892
        %v1894 = vsel %vm1807, %v1780, -inf
        %v1895 = vmax.f32 %v1887, %v1894
        %v1896 = vsel %vm1807, %v1781, -inf
        %v1897 = vmax.f32 %v1889, %v1896
        %v1898 = vsel %vm1807, %v1782, -inf
        %v1899 = vmax.f32 %v1891, %v1898
        %v1900 = vsel %vm1807, %v1783, -inf
        %v1901 = vmax.f32 %v1893, %v1900
        %v1902 = vsel %vm1807, %v1784, -inf
        %v1903 = vmax.f32 %v1895, %v1902
        %v1904 = vsel %vm1807, %v1785, -inf
        %v1905 = vmax.f32 %v1897, %v1904
        %v1906 = vsel %vm1807, %v1786, -inf
        %v1907 = vmax.f32 %v1899, %v1906
        %v1908 = vsel %vm1807, %v1787, -inf
        %v1909 = vmax.f32 %v1901, %v1908
        %v1910 = vsel %vm1807, %v1788, -inf
        %v1911 = vmax.f32 %v1903, %v1910
        %v1912 = vsel %vm1807, %v1789, -inf
        %v1913 = vmax.f32 %v1905, %v1912
        %v1914 = vsel %vm1807, %v1790, -inf
        %v1915 = vmax.f32 %v1907, %v1914
        %v1916 = vsel %vm1807, %v1791, -inf
        %v1917 = vmax.f32 %v1909, %v1916
        %v1918 = vsel %vm1807, %v1792, -inf
        %v1919 = vmax.f32 %v1911, %v1918
        %v1920 = vsel %vm1807, %v1793, -inf
        %v1921 = vmax.f32 %v1913, %v1920
        %v1922 = vsel %vm1807, %v1794, -inf
        %v1923 = vmax.f32 %v1915, %v1922
        %v1924 = vsel %vm1807, %v1795, -inf
        %v1925 = vmax.f32 %v1917, %v1924
        %v1926 = vsel %vm1807, %v1796, -inf
        %v1927 = vmax.f32 %v1919, %v1926
        %v1928 = vsel %vm1807, %v1797, -inf
        %v1929 = vmax.f32 %v1921, %v1928
        %v1930 = vsel %vm1807, %v1798, -inf
        %v1931 = vmax.f32 %v1923, %v1930
        %v1932 = vsel %vm1807, %v1799, -inf
        %v1933 = vmax.f32 %v1925, %v1932
        %v1934 = vsel %vm1807, %v1800, -inf
        %v1935 = vmax.f32 %v1927, %v1934
        %v1936 = vsel %vm1807, %v1801, -inf
        %v1937 = vmax.f32 %v1929, %v1936
        %v1938 = vsel %vm1807, %v1802, -inf
        %v1939 = vmax.f32 %v1931, %v1938
        %v1940 = vsel %vm1807, %v1803, -inf
        %v1941 = vmax.f32 %v1933, %v1940
        %v1942 = vsel %vm1807, %v1804, -inf
        %v1943 = vmax.f32 %v1935, %v1942
        %v1944 = vsel %vm1807, %v1805, -inf
        %v1945 = vmax.f32 %v1937, %v1944
        %v1946 = vsel %vm1807, %v1806, -inf
        %v1947 = vmax.f32 %v1939, %v1946
        %v1948 = vmax.f32 %v1941, %v1943
        %v1949 = vmax.f32 %v1945, %v1947
        %v1950 = vmax.f32 %v1948, %v1949
        %v1951 = vrot.slane %v1950, 4
        %v1952 = vmax.f32 %v1950, %v1951
        %v1953 = vrot.slane %v1952, 2
        %v1954 = vmax.f32 %v1952, %v1953
        %v1955 = vrot.slane %v1954, 1
        %v1956 = vmax.f32 %v1954, %v1955
        %v1957 = vld [vmem:[%s4] sm:$0xff]
        %v1958 = vld [vmem:[%s4 + $0x8] sm:$0xff]
        %v1959 = vld [vmem:[%s4 + $0x10] sm:$0xff]
        %v1960 = vld [vmem:[%s4 + $0x18] sm:$0xff]
        %v1962 = vsel %vm1807, %v1956, 0
        %1964 = vmatprep.subr.mxu0 0.0
        %1965 = vmatpush1.msra.mxu0 %v1957
        %1966 = vmatprep.subr.mxu0 0.0
        %1967 = vmatpush1.msra.mxu0 %v1958
        %1968 = vmatprep.subr.mxu0 0.0
        %1969 = vmatpush1.msra.mxu0 %v1959
        %1970 = vmatprep.subr.mxu0 0.0
        %1971 = vmatpush1.msra.mxu0 %v1960
        %1972 = vmatprep.subr.mxu0 0.0
        %1973 = vmatpush1.msra.mxu0 0.0
        %1974 = vmatprep.subr.mxu0 0.0
        %1975 = vmatpush1.msra.mxu0 0.0
        %1976 = vmatprep.subr.mxu0 0.0
        %1977 = vmatpush1.msra.mxu0 0.0
        %1978 = vmatprep.subr.mxu0 0.0
        %1979 = vmatpush1.msra.mxu0 0.0
        %1980 = vmatprep.subr.mxu0 0.0
        %1981 = vmatpush1.msra.mxu0 0.0
        %1982 = vmatprep.subr.mxu0 0.0
        %1983 = vmatpush1.msra.mxu0 0.0
        %1984 = vmatprep.subr.mxu0 0.0
        %1985 = vmatpush1.msra.mxu0 0.0
        %1986 = vmatprep.subr.mxu0 0.0
        %1987 = vmatpush1.msra.mxu0 0.0
        %1988 = vmatprep.subr.mxu0 0.0
        %1989 = vmatpush1.msra.mxu0 0.0
        %1990 = vmatprep.subr.mxu0 0.0
        %1991 = vmatpush1.msra.mxu0 0.0
        %1992 = vmatprep.subr.mxu0 0.0
        %1993 = vmatpush1.msra.mxu0 0.0
        %1994 = vmatprep.subr.mxu0 0.0
        %1995 = vmatpush1.msra.mxu0 0.0
        %1996 = vmatprep.subr.mxu0 0.0
        %1997 = vmatpush1.msra.mxu0 0.0
        %1998 = vmatprep.subr.mxu0 0.0
        %1999 = vmatpush1.msra.mxu0 0.0
        %2000 = vmatprep.subr.mxu0 0.0
        %2001 = vmatpush1.msra.mxu0 0.0
        %2002 = vmatprep.subr.mxu0 0.0
        %2003 = vmatpush1.msra.mxu0 0.0
        %2004 = vmatprep.subr.mxu0 0.0
        %2005 = vmatpush1.msra.mxu0 0.0
        %2006 = vmatprep.subr.mxu0 0.0
        %2007 = vmatpush1.msra.mxu0 0.0
        %2008 = vmatprep.subr.mxu0 0.0
        %2009 = vmatpush1.msra.mxu0 0.0
        %2010 = vmatprep.subr.mxu0 0.0
        %2011 = vmatpush1.msra.mxu0 0.0
        %2012 = vmatprep.subr.mxu0 0.0
        %2013 = vmatpush1.msra.mxu0 0.0
        %2014 = vmatprep.subr.mxu0 0.0
        %2015 = vmatpush1.msra.mxu0 0.0
        %2016 = vmatprep.subr.mxu0 0.0
        %2017 = vmatpush1.msra.mxu0 0.0
        %2018 = vmatprep.subr.mxu0 0.0
        %2019 = vmatpush1.msra.mxu0 0.0
        %2020 = vmatprep.subr.mxu0 0.0
        %2021 = vmatpush1.msra.mxu0 0.0
        %2022 = vmatprep.subr.mxu0 0.0
        %2023 = vmatpush1.msra.mxu0 0.0
        %2024 = vmatprep.subr.mxu0 0.0
        %2025 = vmatpush1.msra.mxu0 0.0
        %2026 = vmatprep.subr.mxu0 0.0
        %2027 = vmatpush1.msra.mxu0 0.0
        %2028 = vmatprep.mubr.f32.mxu0 0.0
        %2029 = vmatmul.mubr.f32.gmra.mrb[0].mxu0 %v1962
        %v2030 = vpop.f32.mrb[0].mxu0
        %v2031 = vadd.f32 0.0, %v2030
        %v2032 = vpop.f32.mrb[0].mxu0
        %2033 = vdwg.mxu0
        %v2034 = vld [vmem:[%s5] sm:$0x1]
        %v2035 = vmul.f32 %v2031, %v2034
        %v2036 = vld [vmem:[%s6] sm:$0x1]
        %v2037 = vadd.f32 %v2035, %v2036
        %vm2038 = vcmp.gt.f32.partialorder %v2037, 0.0
        %v2039 = vmin.f32 %v2037, 0.0
        %v2040 = vmul.f32 %v2039, 1.442695
        %v2041 = vpow.pop %v2040
        %v2042 = vsub.f32 %v2041, 1.0
        %v2043 = vsel %vm2038, %v2037, %v2042
        %v2044 = vld [vmem:[%s7] sm:$0xff]
        %v2045 = vld [vmem:[%s8] sm:$0x1]
        %vm2046 = vcmask 64512
        %v2048 = vsel %vm2046, %v2043, 0
        %2050 = vmatprep.subr.mxu0 0.0
        %2051 = vmatpush1.msra.mxu0 %v2044
        %2052 = vmatprep.subr.mxu0 0.0
        %2053 = vmatpush1.msra.mxu0 0.0
        %2054 = vmatprep.subr.mxu0 0.0
        %2055 = vmatpush1.msra.mxu0 0.0
        %2056 = vmatprep.subr.mxu0 0.0
        %2057 = vmatpush1.msra.mxu0 0.0
        %2058 = vmatprep.subr.mxu0 0.0
        %2059 = vmatpush1.msra.mxu0 0.0
        %2060 = vmatprep.subr.mxu0 0.0
        %2061 = vmatpush1.msra.mxu0 0.0
        %2062 = vmatprep.subr.mxu0 0.0
        %2063 = vmatpush1.msra.mxu0 0.0
        %2064 = vmatprep.subr.mxu0 0.0
        %2065 = vmatpush1.msra.mxu0 0.0
        %2066 = vmatprep.subr.mxu0 0.0
        %2067 = vmatpush1.msra.mxu0 0.0
        %2068 = vmatprep.subr.mxu0 0.0
        %2069 = vmatpush1.msra.mxu0 0.0
        %2070 = vmatprep.subr.mxu0 0.0
        %2071 = vmatpush1.msra.mxu0 0.0
        %2072 = vmatprep.subr.mxu0 0.0
        %2073 = vmatpush1.msra.mxu0 0.0
        %2074 = vmatprep.subr.mxu0 0.0
        %2075 = vmatpush1.msra.mxu0 0.0
        %2076 = vmatprep.subr.mxu0 0.0
        %2077 = vmatpush1.msra.mxu0 0.0
        %2078 = vmatprep.subr.mxu0 0.0
        %2079 = vmatpush1.msra.mxu0 0.0
        %2080 = vmatprep.subr.mxu0 0.0
        %2081 = vmatpush1.msra.mxu0 0.0
        %2082 = vmatprep.subr.mxu0 0.0
        %2083 = vmatpush1.msra.mxu0 0.0
        %2084 = vmatprep.subr.mxu0 0.0
        %2085 = vmatpush1.msra.mxu0 0.0
        %2086 = vmatprep.subr.mxu0 0.0
        %2087 = vmatpush1.msra.mxu0 0.0
        %2088 = vmatprep.subr.mxu0 0.0
        %2089 = vmatpush1.msra.mxu0 0.0
        %2090 = vmatprep.subr.mxu0 0.0
        %2091 = vmatpush1.msra.mxu0 0.0
        %2092 = vmatprep.subr.mxu0 0.0
        %2093 = vmatpush1.msra.mxu0 0.0
        %2094 = vmatprep.subr.mxu0 0.0
        %2095 = vmatpush1.msra.mxu0 0.0
        %2096 = vmatprep.subr.mxu0 0.0
        %2097 = vmatpush1.msra.mxu0 0.0
        %2098 = vmatprep.subr.mxu0 0.0
        %2099 = vmatpush1.msra.mxu0 0.0
        %2100 = vmatprep.subr.mxu0 0.0
        %2101 = vmatpush1.msra.mxu0 0.0
        %2102 = vmatprep.subr.mxu0 0.0
        %2103 = vmatpush1.msra.mxu0 0.0
        %2104 = vmatprep.subr.mxu0 0.0
        %2105 = vmatpush1.msra.mxu0 0.0
        %2106 = vmatprep.subr.mxu0 0.0
        %2107 = vmatpush1.msra.mxu0 0.0
        %2108 = vmatprep.subr.mxu0 0.0
        %2109 = vmatpush1.msra.mxu0 0.0
        %2110 = vmatprep.subr.mxu0 0.0
        %2111 = vmatpush1.msra.mxu0 0.0
        %2112 = vmatprep.subr.mxu0 0.0
        %2113 = vmatpush1.msra.mxu0 0.0
        %2114 = vmatprep.mubr.f32.mxu0 0.0
        %2115 = vmatmul.mubr.f32.gmra.mrb[0].mxu0 %v2048
        %v2116 = vpop.f32.mrb[0].mxu0
        %v2117 = vadd.f32 %v2045, %v2116
        %v2118 = vpop.f32.mrb[0].mxu0
        %2119 = vdwg.mxu0
        %2120 = vst [vmem:[%s327] sm:$0x1] %v2117
        %s2121 = sand.u32 %s225, 1
        %s2122 = scalar_lea.sflag [#allocation3], %s2121
        %s2123 = sand.u32 %s225, 1
        %s2124 = scalar_lea.vmem [#allocation2], %s2123
        // Predicated region
        $region57: #{terry_crews_forward.3} parent=55 // pred_check
          %p2125 = pneg %p235
        $region58: #{terry_crews_forward.3} parent=55 // pred_check_branch
          %2127 = sbr.rel (%p2125) target = $region60
        $region59: #{terry_crews_forward.3} parent=55 // pred_region
          %s2129 = ssub.s32 16, 16
          %2130 = vsyncadd %s2122, %s2129
          %s2131 = smul.addr %s23, 16
          %s2132 = scalar_lea.hbm %s9, %s2131
          %s2134 = sshll.u32 %s2124, 4
          %s2135 = int_to_ptr.vmem [resolvable:$true] %s2134
          %2137 = dma.vmem_to_hbm [thread:$0]  %s2135, 16, %s2132, %s2122
        $region60: #{terry_crews_forward.3} parent=55 // pred_fallthru
          _
      $region56: #{terry_crews_forward.3} parent=5 // pred_fallthru
        _
      %p2138 = scmp.le.s32.totalorder 2, %s18
      // Predicated region
      $region61: #{terry_crews_forward.3} parent=5 // pred_check
        %p2139 = pneg %p2138
      $region62: #{terry_crews_forward.3} parent=5 // pred_check_branch
        %2141 = sbr.rel (%p2139) target = $region64
      $region63: #{terry_crews_forward.3} parent=5 // pred_region
        %s2142 = ssub.s32 %s18, 2
        // Predicated region
        $region65: #{terry_crews_forward.3} parent=63 // pred_check
          %p2143 = pneg %p241
        $region66: #{terry_crews_forward.3} parent=63 // pred_check_branch
          %2145 = sbr.rel (%p2143) target = $region68
        $region67: #{terry_crews_forward.3} parent=63 // pred_region
          %s2146 = sand.u32 %s226, 1
          %s2147 = scalar_lea.sflag [#allocation3], %s2146
          %s2148 = sand.u32 %s226, 1
          %s2149 = scalar_lea.vmem [#allocation2], %s2148
          %2150 = dma.done %s2147, 16
        $region68: #{terry_crews_forward.3} parent=63 // pred_fallthru
          _
      $region64: #{terry_crews_forward.3} parent=5 // pred_fallthru
        _
    $region6: #{terry_crews_forward.3} parent=1 // loop_footer
      %s22 = sadd.s32 1, %s18
    $region7: #{terry_crews_forward.3} parent=1 // loop_footer_branch
      %17 = sbr.rel target = $region3
    $region8: #{terry_crews_forward.3} parent=1 // loop_exit
      _
    %2151 = vsyncpa [#allocation3], 1
    %s2152 = scalar_lea.sflag [#allocation3], 1
    %2153 = vsyncpa %s2152, 1

</llo_original>
